<compile_context>
chip_gen: v7x
topology: tpu7x:2x2x1
jax: 0.10.0
libtpu: 0.0.40
codegen_flags: <defaults>
</compile_context>

<pallas_src>
import functools

import jax
import jax.numpy as jnp
from jax.experimental import pallas as pl
from jax.experimental.pallas import tpu as pltpu


# 3x3 taps in (dy, dx) row-major order; must match _pack_conv_weight.
_TAPS = tuple((dy, dx) for dy in (-1, 0, 1) for dx in (-1, 0, 1))


# ---------------------------------------------------------------------------
# Kernel
# ---------------------------------------------------------------------------
def _convgru_kernel(x_ref, h0_ref, wx_ref, bx_ref, wih_h_ref, whh_h_ref,
                    mask_ref, o_ref, h_scr, *, C, H, W, Tt):
    """One (batch row b, time block tb) grid step of the ConvGRU recurrence.

    Grid is (B, num_time_blocks).  Axis 0 ("parallel") is safe to shard
    across TensorCores; axis 1 MUST remain the innermost, sequentially
    iterated ("arbitrary") axis because `h_scr` carries the hidden state
    across it.  Do NOT reorder the grid or change its dimension_semantics.

    x_ref:     (1, Tt, C, HW)  input frames of this time block
    h0_ref:    (1, C, HW)      initial hidden state (read at block 0 only)
    wx_ref:    (3C, 9C)        x-halves of both convs, im2col-packed, stacked
    bx_ref:    (3C, 1)         [b_ih; b_hh]
    wih_h_ref: (2C, 9C)        h-half of the ih conv (gates)
    whh_h_ref: (C, 9C)         (r*h)-half of the hh conv (candidate)
    mask_ref:  (9, HW) f32     per-tap zero-padding validity masks (0/1)
    o_ref:     (1, Tt, C, HW)  outputs (h_t for every step)
    h_scr:     (C, HW) f32     VMEM-resident hidden state across time blocks
    """
    HW = H * W
    tb = pl.program_id(1)

    @pl.when(tb == 0)
    def _init():
        h_scr[...] = h0_ref[0]

    # Constant operands: loaded once per grid step, DMA'd once for the grid.
    masks = mask_ref[...]                                   # (9, HW)
    mask_rows = [masks[t:t + 1, :] for t in range(9)]       # each (1, HW)
    shifts = [dy * W + dx for dy, dx in _TAPS]
    wx = wx_ref[...]
    bx = bx_ref[...]
    wih_h = wih_h_ref[...]
    whh_h = whh_h_ref[...]

    def im2col(a):
        # a: (Cin, HW) -> (9*Cin, HW); rows tap-major / channel-minor,
        # matching _pack_conv_weight.  Each tap is a circular lane rotation
        # (pltpu.roll == jnp.roll semantics: out[f] = in[(f - shift) % HW])
        # times the zero-padding validity mask, which also zeroes any
        # wrapped-around lanes -> identical to a zero-padded shift.
        cols = []
        for t in range(9):
            s = shifts[t]                 # want out[:, f] = a[:, f + s]
            rolled = a if s == 0 else pltpu.roll(a, (-s) % HW, axis=1)
            cols.append(rolled * mask_rows[t])
        return jnp.concatenate(cols, axis=0)

    def sigmoid(v):                       # explicit EUP-friendly lowering
        return 1.0 / (1.0 + jnp.exp(-v))

    h = h_scr[...]                        # (C, HW) f32, lives in vregs
    # Fully unrolled time loop over the Tt frames of this block (static trip
    # count -> static VMEM indices, LLO-visible schedule).
    for i in range(Tt):
        x_t = x_ref[0, i]                                     # (C, HW)
        col_x = im2col(x_t)               # shared by both convolutions
        col_h = im2col(h)

        # x contribution of BOTH convs in one MXU call:
        #   rows [:2C] -> ih gates, rows [2C:] -> hh candidate.
        xconv = jnp.dot(wx, col_x, preferred_element_type=jnp.float32) + bx

        gates = sigmoid(
            xconv[:2 * C]
            + jnp.dot(wih_h, col_h, preferred_element_type=jnp.float32))
        r = gates[:C]
        z = gates[C:]

        col_rh = im2col(r * h)
        c = jnp.tanh(
            xconv[2 * C:]
            + jnp.dot(whh_h, col_rh, preferred_element_type=jnp.float32))

        h = (1.0 - z) * h + z * c
        o_ref[0, i] = h.astype(o_ref.dtype)

    h_scr[...] = h                        # persist for the next time block


# ---------------------------------------------------------------------------
# Wrapper
# ---------------------------------------------------------------------------
def _pack_conv_weight(w):
    """(Cout, Cin, 3, 3) -> (Cout, 9*Cin) with tap-major / channel-minor cols."""
    cout, cin, kh, kw = w.shape
    return jnp.transpose(w, (0, 2, 3, 1)).reshape(cout, kh * kw * cin)


def _tap_masks(H, W):
    """(9, H*W) f32 validity masks for the 3x3 zero-padded conv taps."""
    p = jnp.arange(H * W, dtype=jnp.int32)
    row, col = p // W, p % W
    masks = []
    for dy, dx in _TAPS:
        masks.append((row + dy >= 0) & (row + dy < H) &
                     (col + dx >= 0) & (col + dx < W))
    return jnp.stack(masks).astype(jnp.float32)


def _convgru_time_series(x, h0, w_ih, b_ih, w_hh, b_hh, *, time_block=8):
    """x: (B, T, C, H, W); h0: (B, C, H, W).  Returns (o, h_T)."""
    B, T, C, H, W = x.shape
    HW = H * W

    # Split each conv into its x- and h- input-channel halves so im2col(x) is
    # computed once per frame and shared by both convolutions.
    w_ih_x, w_ih_h = w_ih[:, :C], w_ih[:, C:]
    w_hh_x, w_hh_h = w_hh[:, :C], w_hh[:, C:]
    wx = jnp.concatenate([_pack_conv_weight(w_ih_x),
                          _pack_conv_weight(w_hh_x)], axis=0)       # (3C, 9C)
    bx = jnp.concatenate([b_ih, b_hh]).reshape(3 * C, 1)            # (3C, 1)
    wih_h = _pack_conv_weight(w_ih_h).astype(jnp.float32)           # (2C, 9C)
    whh_h = _pack_conv_weight(w_hh_h).astype(jnp.float32)           # (C, 9C)
    wx = wx.astype(jnp.float32)
    bx = bx.astype(jnp.float32)
    masks = _tap_masks(H, W)                                        # (9, HW)

    # Block several time steps per grid step to amortize per-step pipeline
    # overhead; pad T up to a multiple (padded frames are discarded).
    Tt = max(1, min(time_block, T))
    n_tb = pl.cdiv(T, Tt)
    Tp = n_tb * Tt

    xf = x.reshape(B, T, C, HW).astype(jnp.float32)
    if Tp != T:
        xf = jnp.pad(xf, ((0, 0), (0, Tp - T), (0, 0), (0, 0)))
    h0f = h0.reshape(B, C, HW).astype(jnp.float32)

    kernel = functools.partial(_convgru_kernel, C=C, H=H, W=W, Tt=Tt)

    o = pl.pallas_call(
        kernel,
        out_shape=jax.ShapeDtypeStruct((B, Tp, C, HW), jnp.float32),
        grid_spec=pltpu.PrefetchScalarGridSpec(
            num_scalar_prefetch=0,
            grid=(B, n_tb),
            in_specs=[
                pl.BlockSpec((1, Tt, C, HW), lambda b, t: (b, t, 0, 0)),
                pl.BlockSpec((1, C, HW), lambda b, t: (b, 0, 0)),
                pl.BlockSpec(wx.shape, lambda b, t: (0, 0)),
                pl.BlockSpec(bx.shape, lambda b, t: (0, 0)),
                pl.BlockSpec(wih_h.shape, lambda b, t: (0, 0)),
                pl.BlockSpec(whh_h.shape, lambda b, t: (0, 0)),
                pl.BlockSpec(masks.shape, lambda b, t: (0, 0)),
            ],
            out_specs=pl.BlockSpec((1, Tt, C, HW), lambda b, t: (b, t, 0, 0)),
            scratch_shapes=[pltpu.VMEM((C, HW), jnp.float32)],
        ),
        # NOTE: the time-block axis carries the hidden state in h_scr and MUST
        # stay "arbitrary" and innermost; batch stays "parallel" (dual-TC).
        compiler_params=pltpu.CompilerParams(
            dimension_semantics=("parallel", "arbitrary")),
    )(xf, h0f, wx, bx, wih_h, whh_h, masks)

    o = o[:, :T]
    hT = o[:, T - 1]                       # final hidden state == last output
    return (o.reshape(B, T, C, H, W).astype(x.dtype),
            hT.reshape(B, C, H, W).astype(x.dtype))


def convgru_forward(x, h, w_ih, b_ih, w_hh, b_hh):
    """Semantics of ConvGRU.forward.

    x: (B, C, H, W) or (B, T, C, H, W); h: (B, C, H, W) or None.
    Returns (o, h_final) exactly like the PyTorch module.
    """
    if h is None:
        h = jnp.zeros(
            (x.shape[0], x.shape[-3], x.shape[-2], x.shape[-1]), x.dtype)
    if x.ndim == 5:
        return _convgru_time_series(x, h, w_ih, b_ih, w_hh, b_hh)
    o, hT = _convgru_time_series(x[:, None], h, w_ih, b_ih, w_hh, b_hh)
    return o[:, 0], hT


# ---------------------------------------------------------------------------
# Pure-JAX reference (for the correctness check in __main__)
# ---------------------------------------------------------------------------
def _conv2d_ref(x, w, b):
    y = jax.lax.conv_general_dilated(
        x, w, window_strides=(1, 1), padding=((1, 1), (1, 1)),
        dimension_numbers=("NCHW", "OIHW", "NCHW"),
        precision=jax.lax.Precision.HIGHEST)
    return y + b[None, :, None, None]


def _convgru_ref_step(x, h, w_ih, b_ih, w_hh, b_hh):
    C = w_hh.shape[0]
    gates = jax.nn.sigmoid(
        _conv2d_ref(jnp.concatenate([x, h], axis=1), w_ih, b_ih))
    r, z = gates[:, :C], gates[:, C:]
    c = jnp.tanh(_conv2d_ref(jnp.concatenate([x, r * h], axis=1), w_hh, b_hh))
    return (1.0 - z) * h + z * c


def _convgru_reference(x, h, w_ih, b_ih, w_hh, b_hh):
    if h is None:
        h = jnp.zeros(
            (x.shape[0], x.shape[-3], x.shape[-2], x.shape[-1]), x.dtype)
    if x.ndim == 5:
        outs = []
        for t in range(x.shape[1]):
            h = _convgru_ref_step(x[:, t], h, w_ih, b_ih, w_hh, b_hh)
            outs.append(h)
        return jnp.stack(outs, axis=1), h
    h = _convgru_ref_step(x, h, w_ih, b_ih, w_hh, b_hh)
    return h, h


# ---------------------------------------------------------------------------
# Test harness
# ---------------------------------------------------------------------------
if __name__ == "__main__":
    key = jax.random.PRNGKey(0)
    kx, kh, kw1, kb1, kw2, kb2 = jax.random.split(key, 6)

    C, B, T, H, W = 4, 2, 8, 16, 16

    w_ih = 0.15 * jax.random.normal(kw1, (2 * C, 2 * C, 3, 3), jnp.float32)
    b_ih = 0.10 * jax.random.normal(kb1, (2 * C,), jnp.float32)
    w_hh = 0.15 * jax.random.normal(kw2, (C, 2 * C, 3, 3), jnp.float32)
    b_hh = 0.10 * jax.random.normal(kb2, (C,), jnp.float32)

    # Tightened vs the previous 3e-2: the kernel is all-f32 (MXU f32 matmul,
    # EUP transcendentals), so tap-shift / mask bugs cannot hide.
    def _check(a, b, name, tol=2e-4):
        err = float(jnp.max(jnp.abs(a - b)))
        assert err < tol, f"{name}: max abs error {err:.3e} >= {tol:.0e}"

    # 5-D time-series path (h=None -> zero-initialized hidden state).
    x5 = jax.random.normal(kx, (B, T, C, H, W), jnp.float32)
    o5, h5 = convgru_forward(x5, None, w_ih, b_ih, w_hh, b_hh)
    o5 = jax.block_until_ready(o5)
    h5 = jax.block_until_ready(h5)
    assert o5.shape == (B, T, C, H, W) and h5.shape == (B, C, H, W)
    ref_o5, ref_h5 = _convgru_reference(x5, None, w_ih, b_ih, w_hh, b_hh)
    _check(o5, ref_o5, "o (time series)")
    _check(h5, ref_h5, "h (time series)")

    # 4-D single-frame path with an explicit hidden state.
    x4 = x5[:, 0]
    h0 = jax.random.normal(kh, (B, C, H, W), jnp.float32)
    o4, h4 = convgru_forward(x4, h0, w_ih, b_ih, w_hh, b_hh)
    o4 = jax.block_until_ready(o4)
    assert o4.shape == (B, C, H, W) and h4.shape == (B, C, H, W)
    ref_o4, ref_h4 = _convgru_reference(x4, h0, w_ih, b_ih, w_hh, b_hh)
    _check(o4, ref_o4, "o (single frame)")
    _check(h4, ref_h4, "h (single frame)")

    # Multi-block + T-padding path: T=12 with time_block=8 -> 2 time blocks,
    # exercising the VMEM-carried hidden state across grid steps.
    x12 = jax.random.normal(kh, (B, 12, C, H, W), jnp.float32)
    o12, h12 = convgru_forward(x12, None, w_ih, b_ih, w_hh, b_hh)
    o12 = jax.block_until_ready(o12)
    ref_o12, ref_h12 = _convgru_reference(x12, None, w_ih, b_ih, w_hh, b_hh)
    _check(o12, ref_o12, "o (multi time block)")
    _check(h12, ref_h12, "h (multi time block)")

    print("KERNEL_OK")
</pallas_src>

<mosaic_0001>
module attributes {stable_mosaic.version = 11 : i64} {
  func.func @_convgru_kernel(%arg0: i32, %arg1: i32, %arg2: memref<1x8x4x256xf32, #tpu.memory_space<vmem>>, %arg3: memref<1x4x256xf32, #tpu.memory_space<vmem>>, %arg4: memref<12x36xf32, #tpu.memory_space<vmem>>, %arg5: memref<12x1xf32, #tpu.memory_space<vmem>>, %arg6: memref<8x36xf32, #tpu.memory_space<vmem>>, %arg7: memref<4x36xf32, #tpu.memory_space<vmem>>, %arg8: memref<9x256xf32, #tpu.memory_space<vmem>>, %arg9: memref<1x8x4x256xf32, #tpu.memory_space<vmem>>, %arg10: memref<4x256xf32, #tpu.memory_space<vmem>>) attributes {dimension_semantics = [#tpu.dimension_semantics<parallel>, #tpu.dimension_semantics<arbitrary>], iteration_bounds = array<i64: 2, 1>, scalar_prefetch = 0 : i64, scratch_operands = 1 : i64, tpu.core_type = #tpu.core_type<tc>, window_params = [{transform_indices = @transform_0, window_bounds = array<i64: 1, 8, 4, 256>}, {transform_indices = @transform_1, window_bounds = array<i64: 1, 4, 256>}, {pipeline_mode = #tpu.pipeline_mode<synchronous>, transform_indices = @transform_2, window_bounds = array<i64: 12, 36>}, {pipeline_mode = #tpu.pipeline_mode<synchronous>, transform_indices = @transform_3, window_bounds = array<i64: 12, 1>}, {pipeline_mode = #tpu.pipeline_mode<synchronous>, transform_indices = @transform_4, window_bounds = array<i64: 8, 36>}, {pipeline_mode = #tpu.pipeline_mode<synchronous>, transform_indices = @transform_5, window_bounds = array<i64: 4, 36>}, {pipeline_mode = #tpu.pipeline_mode<synchronous>, transform_indices = @transform_6, window_bounds = array<i64: 9, 256>}, {transform_indices = @transform_7, window_bounds = array<i64: 1, 8, 4, 256>}]} {
    %c0_i32 = arith.constant 0 : i32
    %0 = arith.cmpi eq, %arg1, %c0_i32 : i32
    %1 = arith.extui %0 : i1 to i32
    %c0_i32_0 = arith.constant 0 : i32
    %2 = arith.cmpi ne, %1, %c0_i32_0 : i32
    scf.if %2 {
      %c0_310 = arith.constant 0 : index
      %c0_311 = arith.constant 0 : index
      %c0_312 = arith.constant 0 : index
      %907 = vector.load %arg3[%c0_310, %c0_311, %c0_312] : memref<1x4x256xf32, #tpu.memory_space<vmem>>, vector<1x4x256xf32>
      %908 = vector.shape_cast %907 : vector<1x4x256xf32> to vector<4x256xf32>
      %c0_313 = arith.constant 0 : index
      %c0_314 = arith.constant 0 : index
      %909 = vector.load %arg10[%c0_313, %c0_314] : memref<4x256xf32, #tpu.memory_space<vmem>>, vector<4x256xf32>
      tpu.vector_store %arg10[%c0_313, %c0_314], %908 {strides = array<i32>} : memref<4x256xf32, #tpu.memory_space<vmem>>, vector<4x256xf32>,
    } else {
    }
    %c0 = arith.constant 0 : index
    %c0_1 = arith.constant 0 : index
    %3 = vector.load %arg8[%c0, %c0_1] : memref<9x256xf32, #tpu.memory_space<vmem>>, vector<9x256xf32>
    %4 = vector.extract_strided_slice %3 {offsets = [0, 0], sizes = [1, 256], strides = [1, 1]} : vector<9x256xf32> to vector<1x256xf32>
    %5 = vector.extract_strided_slice %3 {offsets = [1, 0], sizes = [1, 256], strides = [1, 1]} : vector<9x256xf32> to vector<1x256xf32>
    %6 = vector.extract_strided_slice %3 {offsets = [2, 0], sizes = [1, 256], strides = [1, 1]} : vector<9x256xf32> to vector<1x256xf32>
    %7 = vector.extract_strided_slice %3 {offsets = [3, 0], sizes = [1, 256], strides = [1, 1]} : vector<9x256xf32> to vector<1x256xf32>
    %8 = vector.extract_strided_slice %3 {offsets = [4, 0], sizes = [1, 256], strides = [1, 1]} : vector<9x256xf32> to vector<1x256xf32>
    %9 = vector.extract_strided_slice %3 {offsets = [5, 0], sizes = [1, 256], strides = [1, 1]} : vector<9x256xf32> to vector<1x256xf32>
    %10 = vector.extract_strided_slice %3 {offsets = [6, 0], sizes = [1, 256], strides = [1, 1]} : vector<9x256xf32> to vector<1x256xf32>
    %11 = vector.extract_strided_slice %3 {offsets = [7, 0], sizes = [1, 256], strides = [1, 1]} : vector<9x256xf32> to vector<1x256xf32>
    %12 = vector.extract_strided_slice %3 {offsets = [8, 0], sizes = [1, 256], strides = [1, 1]} : vector<9x256xf32> to vector<1x256xf32>
    %c0_2 = arith.constant 0 : index
    %c0_3 = arith.constant 0 : index
    %13 = vector.load %arg4[%c0_2, %c0_3] : memref<12x36xf32, #tpu.memory_space<vmem>>, vector<12x36xf32>
    %c0_4 = arith.constant 0 : index
    %c0_5 = arith.constant 0 : index
    %14 = vector.load %arg5[%c0_4, %c0_5] : memref<12x1xf32, #tpu.memory_space<vmem>>, vector<12x1xf32>
    %c0_6 = arith.constant 0 : index
    %c0_7 = arith.constant 0 : index
    %15 = vector.load %arg6[%c0_6, %c0_7] : memref<8x36xf32, #tpu.memory_space<vmem>>, vector<8x36xf32>
    %c0_8 = arith.constant 0 : index
    %c0_9 = arith.constant 0 : index
    %16 = vector.load %arg7[%c0_8, %c0_9] : memref<4x36xf32, #tpu.memory_space<vmem>>, vector<4x36xf32>
    %c0_10 = arith.constant 0 : index
    %c0_11 = arith.constant 0 : index
    %17 = vector.load %arg10[%c0_10, %c0_11] : memref<4x256xf32, #tpu.memory_space<vmem>>, vector<4x256xf32>
    %c0_12 = arith.constant 0 : index
    %c0_13 = arith.constant 0 : index
    %c0_14 = arith.constant 0 : index
    %c0_15 = arith.constant 0 : index
    %18 = vector.load %arg2[%c0_12, %c0_13, %c0_14, %c0_15] : memref<1x8x4x256xf32, #tpu.memory_space<vmem>>, vector<1x1x4x256xf32>
    %19 = vector.shape_cast %18 : vector<1x1x4x256xf32> to vector<4x256xf32>
    %c17_i32 = arith.constant 17 : i32
    %20 = tpu.dynamic_rotate %19 by %c17_i32 dim 1 : vector<4x256xf32>, i32 -> vector<4x256xf32>
    %21 = vector.broadcast %4 : vector<1x256xf32> to vector<4x256xf32>
    %22 = arith.mulf %20, %21 : vector<4x256xf32>
    %c16_i32 = arith.constant 16 : i32
    %23 = tpu.dynamic_rotate %19 by %c16_i32 dim 1 : vector<4x256xf32>, i32 -> vector<4x256xf32>
    %24 = vector.broadcast %5 : vector<1x256xf32> to vector<4x256xf32>
    %25 = arith.mulf %23, %24 : vector<4x256xf32>
    %c15_i32 = arith.constant 15 : i32
    %26 = tpu.dynamic_rotate %19 by %c15_i32 dim 1 : vector<4x256xf32>, i32 -> vector<4x256xf32>
    %27 = vector.broadcast %6 : vector<1x256xf32> to vector<4x256xf32>
    %28 = arith.mulf %26, %27 : vector<4x256xf32>
    %c1_i32 = arith.constant 1 : i32
    %29 = tpu.dynamic_rotate %19 by %c1_i32 dim 1 : vector<4x256xf32>, i32 -> vector<4x256xf32>
    %30 = vector.broadcast %7 : vector<1x256xf32> to vector<4x256xf32>
    %31 = arith.mulf %29, %30 : vector<4x256xf32>
    %32 = vector.broadcast %8 : vector<1x256xf32> to vector<4x256xf32>
    %33 = arith.mulf %19, %32 : vector<4x256xf32>
    %c255_i32 = arith.constant 255 : i32
    %34 = tpu.dynamic_rotate %19 by %c255_i32 dim 1 : vector<4x256xf32>, i32 -> vector<4x256xf32>
    %35 = vector.broadcast %9 : vector<1x256xf32> to vector<4x256xf32>
    %36 = arith.mulf %34, %35 : vector<4x256xf32>
    %c241_i32 = arith.constant 241 : i32
    %37 = tpu.dynamic_rotate %19 by %c241_i32 dim 1 : vector<4x256xf32>, i32 -> vector<4x256xf32>
    %38 = vector.broadcast %10 : vector<1x256xf32> to vector<4x256xf32>
    %39 = arith.mulf %37, %38 : vector<4x256xf32>
    %c240_i32 = arith.constant 240 : i32
    %40 = tpu.dynamic_rotate %19 by %c240_i32 dim 1 : vector<4x256xf32>, i32 -> vector<4x256xf32>
    %41 = vector.broadcast %11 : vector<1x256xf32> to vector<4x256xf32>
    %42 = arith.mulf %40, %41 : vector<4x256xf32>
    %c239_i32 = arith.constant 239 : i32
    %43 = tpu.dynamic_rotate %19 by %c239_i32 dim 1 : vector<4x256xf32>, i32 -> vector<4x256xf32>
    %44 = vector.broadcast %12 : vector<1x256xf32> to vector<4x256xf32>
    %45 = arith.mulf %43, %44 : vector<4x256xf32>
    %46 = tpu.concatenate %22, %25, %28, %31, %33, %36, %39, %42, %45 in 0 : vector<4x256xf32>, vector<4x256xf32>, vector<4x256xf32>, vector<4x256xf32>, vector<4x256xf32>, vector<4x256xf32>, vector<4x256xf32>, vector<4x256xf32>, vector<4x256xf32> -> vector<36x256xf32>
    %c17_i32_16 = arith.constant 17 : i32
    %47 = tpu.dynamic_rotate %17 by %c17_i32_16 dim 1 : vector<4x256xf32>, i32 -> vector<4x256xf32>
    %48 = vector.broadcast %4 : vector<1x256xf32> to vector<4x256xf32>
    %49 = arith.mulf %47, %48 : vector<4x256xf32>
    %c16_i32_17 = arith.constant 16 : i32
    %50 = tpu.dynamic_rotate %17 by %c16_i32_17 dim 1 : vector<4x256xf32>, i32 -> vector<4x256xf32>
    %51 = vector.broadcast %5 : vector<1x256xf32> to vector<4x256xf32>
    %52 = arith.mulf %50, %51 : vector<4x256xf32>
    %c15_i32_18 = arith.constant 15 : i32
    %53 = tpu.dynamic_rotate %17 by %c15_i32_18 dim 1 : vector<4x256xf32>, i32 -> vector<4x256xf32>
    %54 = vector.broadcast %6 : vector<1x256xf32> to vector<4x256xf32>
    %55 = arith.mulf %53, %54 : vector<4x256xf32>
    %c1_i32_19 = arith.constant 1 : i32
    %56 = tpu.dynamic_rotate %17 by %c1_i32_19 dim 1 : vector<4x256xf32>, i32 -> vector<4x256xf32>
    %57 = vector.broadcast %7 : vector<1x256xf32> to vector<4x256xf32>
    %58 = arith.mulf %56, %57 : vector<4x256xf32>
    %59 = vector.broadcast %8 : vector<1x256xf32> to vector<4x256xf32>
    %60 = arith.mulf %17, %59 : vector<4x256xf32>
    %c255_i32_20 = arith.constant 255 : i32
    %61 = tpu.dynamic_rotate %17 by %c255_i32_20 dim 1 : vector<4x256xf32>, i32 -> vector<4x256xf32>
    %62 = vector.broadcast %9 : vector<1x256xf32> to vector<4x256xf32>
    %63 = arith.mulf %61, %62 : vector<4x256xf32>
    %c241_i32_21 = arith.constant 241 : i32
    %64 = tpu.dynamic_rotate %17 by %c241_i32_21 dim 1 : vector<4x256xf32>, i32 -> vector<4x256xf32>
    %65 = vector.broadcast %10 : vector<1x256xf32> to vector<4x256xf32>
    %66 = arith.mulf %64, %65 : vector<4x256xf32>
    %c240_i32_22 = arith.constant 240 : i32
    %67 = tpu.dynamic_rotate %17 by %c240_i32_22 dim 1 : vector<4x256xf32>, i32 -> vector<4x256xf32>
    %68 = vector.broadcast %11 : vector<1x256xf32> to vector<4x256xf32>
    %69 = arith.mulf %67, %68 : vector<4x256xf32>
    %c239_i32_23 = arith.constant 239 : i32
    %70 = tpu.dynamic_rotate %17 by %c239_i32_23 dim 1 : vector<4x256xf32>, i32 -> vector<4x256xf32>
    %71 = vector.broadcast %12 : vector<1x256xf32> to vector<4x256xf32>
    %72 = arith.mulf %70, %71 : vector<4x256xf32>
    %73 = tpu.concatenate %49, %52, %55, %58, %60, %63, %66, %69, %72 in 0 : vector<4x256xf32>, vector<4x256xf32>, vector<4x256xf32>, vector<4x256xf32>, vector<4x256xf32>, vector<4x256xf32>, vector<4x256xf32>, vector<4x256xf32>, vector<4x256xf32> -> vector<36x256xf32>
    %cst = arith.constant dense<0.000000e+00> : vector<12x256xf32>
    %74 = tpu.matmul %13, %46, %cst {dimension_numbers = #tpu.dot_dimension_numbers<[1], [0], [0], [1], [0, 0, 1, 1], [], []>} : vector<12x36xf32>, vector<36x256xf32>, vector<12x256xf32> -> vector<12x256xf32>
    %75 = vector.broadcast %14 : vector<12x1xf32> to vector<12x256xf32>
    %76 = arith.addf %74, %75 : vector<12x256xf32>
    %77 = vector.extract_strided_slice %76 {offsets = [0, 0], sizes = [8, 256], strides = [1, 1]} : vector<12x256xf32> to vector<8x256xf32>
    %cst_24 = arith.constant dense<0.000000e+00> : vector<8x256xf32>
    %78 = tpu.matmul %15, %73, %cst_24 {dimension_numbers = #tpu.dot_dimension_numbers<[1], [0], [0], [1], [0, 0, 1, 1], [], []>} : vector<8x36xf32>, vector<36x256xf32>, vector<8x256xf32> -> vector<8x256xf32>
    %79 = arith.addf %77, %78 : vector<8x256xf32>
    %cst_25 = arith.constant 0.000000e+00 : f32
    %80 = vector.broadcast %cst_25 : f32 to vector<8x256xf32>
    %81 = arith.subf %80, %79 : vector<8x256xf32>
    %82 = math.exp %81 : vector<8x256xf32>
    %cst_26 = arith.constant 1.000000e+00 : f32
    %83 = vector.broadcast %cst_26 : f32 to vector<8x256xf32>
    %84 = arith.addf %83, %82 : vector<8x256xf32>
    %cst_27 = arith.constant 1.000000e+00 : f32
    %85 = vector.broadcast %cst_27 : f32 to vector<8x256xf32>
    %86 = arith.divf %85, %84 : vector<8x256xf32>
    %87 = vector.extract_strided_slice %86 {offsets = [0, 0], sizes = [4, 256], strides = [1, 1]} : vector<8x256xf32> to vector<4x256xf32>
    %88 = vector.extract_strided_slice %86 {offsets = [4, 0], sizes = [4, 256], strides = [1, 1]} : vector<8x256xf32> to vector<4x256xf32>
    %89 = arith.mulf %87, %17 : vector<4x256xf32>
    %c17_i32_28 = arith.constant 17 : i32
    %90 = tpu.dynamic_rotate %89 by %c17_i32_28 dim 1 : vector<4x256xf32>, i32 -> vector<4x256xf32>
    %91 = vector.broadcast %4 : vector<1x256xf32> to vector<4x256xf32>
    %92 = arith.mulf %90, %91 : vector<4x256xf32>
    %c16_i32_29 = arith.constant 16 : i32
    %93 = tpu.dynamic_rotate %89 by %c16_i32_29 dim 1 : vector<4x256xf32>, i32 -> vector<4x256xf32>
    %94 = vector.broadcast %5 : vector<1x256xf32> to vector<4x256xf32>
    %95 = arith.mulf %93, %94 : vector<4x256xf32>
    %c15_i32_30 = arith.constant 15 : i32
    %96 = tpu.dynamic_rotate %89 by %c15_i32_30 dim 1 : vector<4x256xf32>, i32 -> vector<4x256xf32>
    %97 = vector.broadcast %6 : vector<1x256xf32> to vector<4x256xf32>
    %98 = arith.mulf %96, %97 : vector<4x256xf32>
    %c1_i32_31 = arith.constant 1 : i32
    %99 = tpu.dynamic_rotate %89 by %c1_i32_31 dim 1 : vector<4x256xf32>, i32 -> vector<4x256xf32>
    %100 = vector.broadcast %7 : vector<1x256xf32> to vector<4x256xf32>
    %101 = arith.mulf %99, %100 : vector<4x256xf32>
    %102 = vector.broadcast %8 : vector<1x256xf32> to vector<4x256xf32>
    %103 = arith.mulf %89, %102 : vector<4x256xf32>
    %c255_i32_32 = arith.constant 255 : i32
    %104 = tpu.dynamic_rotate %89 by %c255_i32_32 dim 1 : vector<4x256xf32>, i32 -> vector<4x256xf32>
    %105 = vector.broadcast %9 : vector<1x256xf32> to vector<4x256xf32>
    %106 = arith.mulf %104, %105 : vector<4x256xf32>
    %c241_i32_33 = arith.constant 241 : i32
    %107 = tpu.dynamic_rotate %89 by %c241_i32_33 dim 1 : vector<4x256xf32>, i32 -> vector<4x256xf32>
    %108 = vector.broadcast %10 : vector<1x256xf32> to vector<4x256xf32>
    %109 = arith.mulf %107, %108 : vector<4x256xf32>
    %c240_i32_34 = arith.constant 240 : i32
    %110 = tpu.dynamic_rotate %89 by %c240_i32_34 dim 1 : vector<4x256xf32>, i32 -> vector<4x256xf32>
    %111 = vector.broadcast %11 : vector<1x256xf32> to vector<4x256xf32>
    %112 = arith.mulf %110, %111 : vector<4x256xf32>
    %c239_i32_35 = arith.constant 239 : i32
    %113 = tpu.dynamic_rotate %89 by %c239_i32_35 dim 1 : vector<4x256xf32>, i32 -> vector<4x256xf32>
    %114 = vector.broadcast %12 : vector<1x256xf32> to vector<4x256xf32>
    %115 = arith.mulf %113, %114 : vector<4x256xf32>
    %116 = tpu.concatenate %92, %95, %98, %101, %103, %106, %109, %112, %115 in 0 : vector<4x256xf32>, vector<4x256xf32>, vector<4x256xf32>, vector<4x256xf32>, vector<4x256xf32>, vector<4x256xf32>, vector<4x256xf32>, vector<4x256xf32>, vector<4x256xf32> -> vector<36x256xf32>
    %117 = vector.extract_strided_slice %76 {offsets = [8, 0], sizes = [4, 256], strides = [1, 1]} : vector<12x256xf32> to vector<4x256xf32>
    %cst_36 = arith.constant dense<0.000000e+00> : vector<4x256xf32>
    %118 = tpu.matmul %16, %116, %cst_36 {dimension_numbers = #tpu.dot_dimension_numbers<[1], [0], [0], [1], [0, 0, 1, 1], [], []>} : vector<4x36xf32>, vector<36x256xf32>, vector<4x256xf32> -> vector<4x256xf32>
    %119 = arith.addf %117, %118 : vector<4x256xf32>
    %120 = math.tanh %119 : vector<4x256xf32>
    %cst_37 = arith.constant 1.000000e+00 : f32
    %121 = vector.broadcast %cst_37 : f32 to vector<4x256xf32>
    %122 = arith.subf %121, %88 : vector<4x256xf32>
    %123 = arith.mulf %122, %17 : vector<4x256xf32>
    %124 = arith.mulf %88, %120 : vector<4x256xf32>
    %125 = arith.addf %123, %124 : vector<4x256xf32>
    %c0_38 = arith.constant 0 : index
    %c0_39 = arith.constant 0 : index
    %c0_40 = arith.constant 0 : index
    %c0_41 = arith.constant 0 : index
    %126 = vector.load %arg9[%c0_38, %c0_39, %c0_40, %c0_41] : memref<1x8x4x256xf32, #tpu.memory_space<vmem>>, vector<1x1x4x256xf32>
    %127 = vector.shape_cast %126 : vector<1x1x4x256xf32> to vector<4x256xf32>
    %128 = vector.shape_cast %125 : vector<4x256xf32> to vector<1x1x4x256xf32>
    tpu.vector_store %arg9[%c0_38, %c0_39, %c0_40, %c0_41], %128 {strides = array<i32>} : memref<1x8x4x256xf32, #tpu.memory_space<vmem>>, vector<1x1x4x256xf32>,
    %c0_42 = arith.constant 0 : index
    %c1 = arith.constant 1 : index
    %c0_43 = arith.constant 0 : index
    %c0_44 = arith.constant 0 : index
    %129 = vector.load %arg2[%c0_42, %c1, %c0_43, %c0_44] : memref<1x8x4x256xf32, #tpu.memory_space<vmem>>, vector<1x1x4x256xf32>
    %130 = vector.shape_cast %129 : vector<1x1x4x256xf32> to vector<4x256xf32>
    %c17_i32_45 = arith.constant 17 : i32
    %131 = tpu.dynamic_rotate %130 by %c17_i32_45 dim 1 : vector<4x256xf32>, i32 -> vector<4x256xf32>
    %132 = vector.broadcast %4 : vector<1x256xf32> to vector<4x256xf32>
    %133 = arith.mulf %131, %132 : vector<4x256xf32>
    %c16_i32_46 = arith.constant 16 : i32
    %134 = tpu.dynamic_rotate %130 by %c16_i32_46 dim 1 : vector<4x256xf32>, i32 -> vector<4x256xf32>
    %135 = vector.broadcast %5 : vector<1x256xf32> to vector<4x256xf32>
    %136 = arith.mulf %134, %135 : vector<4x256xf32>
    %c15_i32_47 = arith.constant 15 : i32
    %137 = tpu.dynamic_rotate %130 by %c15_i32_47 dim 1 : vector<4x256xf32>, i32 -> vector<4x256xf32>
    %138 = vector.broadcast %6 : vector<1x256xf32> to vector<4x256xf32>
    %139 = arith.mulf %137, %138 : vector<4x256xf32>
    %c1_i32_48 = arith.constant 1 : i32
    %140 = tpu.dynamic_rotate %130 by %c1_i32_48 dim 1 : vector<4x256xf32>, i32 -> vector<4x256xf32>
    %141 = vector.broadcast %7 : vector<1x256xf32> to vector<4x256xf32>
    %142 = arith.mulf %140, %141 : vector<4x256xf32>
    %143 = vector.broadcast %8 : vector<1x256xf32> to vector<4x256xf32>
    %144 = arith.mulf %130, %143 : vector<4x256xf32>
    %c255_i32_49 = arith.constant 255 : i32
    %145 = tpu.dynamic_rotate %130 by %c255_i32_49 dim 1 : vector<4x256xf32>, i32 -> vector<4x256xf32>
    %146 = vector.broadcast %9 : vector<1x256xf32> to vector<4x256xf32>
    %147 = arith.mulf %145, %146 : vector<4x256xf32>
    %c241_i32_50 = arith.constant 241 : i32
    %148 = tpu.dynamic_rotate %130 by %c241_i32_50 dim 1 : vector<4x256xf32>, i32 -> vector<4x256xf32>
    %149 = vector.broadcast %10 : vector<1x256xf32> to vector<4x256xf32>
    %150 = arith.mulf %148, %149 : vector<4x256xf32>
    %c240_i32_51 = arith.constant 240 : i32
    %151 = tpu.dynamic_rotate %130 by %c240_i32_51 dim 1 : vector<4x256xf32>, i32 -> vector<4x256xf32>
    %152 = vector.broadcast %11 : vector<1x256xf32> to vector<4x256xf32>
    %153 = arith.mulf %151, %152 : vector<4x256xf32>
    %c239_i32_52 = arith.constant 239 : i32
    %154 = tpu.dynamic_rotate %130 by %c239_i32_52 dim 1 : vector<4x256xf32>, i32 -> vector<4x256xf32>
    %155 = vector.broadcast %12 : vector<1x256xf32> to vector<4x256xf32>
    %156 = arith.mulf %154, %155 : vector<4x256xf32>
    %157 = tpu.concatenate %133, %136, %139, %142, %144, %147, %150, %153, %156 in 0 : vector<4x256xf32>, vector<4x256xf32>, vector<4x256xf32>, vector<4x256xf32>, vector<4x256xf32>, vector<4x256xf32>, vector<4x256xf32>, vector<4x256xf32>, vector<4x256xf32> -> vector<36x256xf32>
    %c17_i32_53 = arith.constant 17 : i32
    %158 = tpu.dynamic_rotate %125 by %c17_i32_53 dim 1 : vector<4x256xf32>, i32 -> vector<4x256xf32>
    %159 = vector.broadcast %4 : vector<1x256xf32> to vector<4x256xf32>
    %160 = arith.mulf %158, %159 : vector<4x256xf32>
    %c16_i32_54 = arith.constant 16 : i32
    %161 = tpu.dynamic_rotate %125 by %c16_i32_54 dim 1 : vector<4x256xf32>, i32 -> vector<4x256xf32>
    %162 = vector.broadcast %5 : vector<1x256xf32> to vector<4x256xf32>
    %163 = arith.mulf %161, %162 : vector<4x256xf32>
    %c15_i32_55 = arith.constant 15 : i32
    %164 = tpu.dynamic_rotate %125 by %c15_i32_55 dim 1 : vector<4x256xf32>, i32 -> vector<4x256xf32>
    %165 = vector.broadcast %6 : vector<1x256xf32> to vector<4x256xf32>
    %166 = arith.mulf %164, %165 : vector<4x256xf32>
    %c1_i32_56 = arith.constant 1 : i32
    %167 = tpu.dynamic_rotate %125 by %c1_i32_56 dim 1 : vector<4x256xf32>, i32 -> vector<4x256xf32>
    %168 = vector.broadcast %7 : vector<1x256xf32> to vector<4x256xf32>
    %169 = arith.mulf %167, %168 : vector<4x256xf32>
    %170 = vector.broadcast %8 : vector<1x256xf32> to vector<4x256xf32>
    %171 = arith.mulf %125, %170 : vector<4x256xf32>
    %c255_i32_57 = arith.constant 255 : i32
    %172 = tpu.dynamic_rotate %125 by %c255_i32_57 dim 1 : vector<4x256xf32>, i32 -> vector<4x256xf32>
    %173 = vector.broadcast %9 : vector<1x256xf32> to vector<4x256xf32>
    %174 = arith.mulf %172, %173 : vector<4x256xf32>
    %c241_i32_58 = arith.constant 241 : i32
    %175 = tpu.dynamic_rotate %125 by %c241_i32_58 dim 1 : vector<4x256xf32>, i32 -> vector<4x256xf32>
    %176 = vector.broadcast %10 : vector<1x256xf32> to vector<4x256xf32>
    %177 = arith.mulf %175, %176 : vector<4x256xf32>
    %c240_i32_59 = arith.constant 240 : i32
    %178 = tpu.dynamic_rotate %125 by %c240_i32_59 dim 1 : vector<4x256xf32>, i32 -> vector<4x256xf32>
    %179 = vector.broadcast %11 : vector<1x256xf32> to vector<4x256xf32>
    %180 = arith.mulf %178, %179 : vector<4x256xf32>
    %c239_i32_60 = arith.constant 239 : i32
    %181 = tpu.dynamic_rotate %125 by %c239_i32_60 dim 1 : vector<4x256xf32>, i32 -> vector<4x256xf32>
    %182 = vector.broadcast %12 : vector<1x256xf32> to vector<4x256xf32>
    %183 = arith.mulf %181, %182 : vector<4x256xf32>
    %184 = tpu.concatenate %160, %163, %166, %169, %171, %174, %177, %180, %183 in 0 : vector<4x256xf32>, vector<4x256xf32>, vector<4x256xf32>, vector<4x256xf32>, vector<4x256xf32>, vector<4x256xf32>, vector<4x256xf32>, vector<4x256xf32>, vector<4x256xf32> -> vector<36x256xf32>
    %cst_61 = arith.constant dense<0.000000e+00> : vector<12x256xf32>
    %185 = tpu.matmul %13, %157, %cst_61 {dimension_numbers = #tpu.dot_dimension_numbers<[1], [0], [0], [1], [0, 0, 1, 1], [], []>} : vector<12x36xf32>, vector<36x256xf32>, vector<12x256xf32> -> vector<12x256xf32>
    %186 = vector.broadcast %14 : vector<12x1xf32> to vector<12x256xf32>
    %187 = arith.addf %185, %186 : vector<12x256xf32>
    %188 = vector.extract_strided_slice %187 {offsets = [0, 0], sizes = [8, 256], strides = [1, 1]} : vector<12x256xf32> to vector<8x256xf32>
    %cst_62 = arith.constant dense<0.000000e+00> : vector<8x256xf32>
    %189 = tpu.matmul %15, %184, %cst_62 {dimension_numbers = #tpu.dot_dimension_numbers<[1], [0], [0], [1], [0, 0, 1, 1], [], []>} : vector<8x36xf32>, vector<36x256xf32>, vector<8x256xf32> -> vector<8x256xf32>
    %190 = arith.addf %188, %189 : vector<8x256xf32>
    %cst_63 = arith.constant 0.000000e+00 : f32
    %191 = vector.broadcast %cst_63 : f32 to vector<8x256xf32>
    %192 = arith.subf %191, %190 : vector<8x256xf32>
    %193 = math.exp %192 : vector<8x256xf32>
    %cst_64 = arith.constant 1.000000e+00 : f32
    %194 = vector.broadcast %cst_64 : f32 to vector<8x256xf32>
    %195 = arith.addf %194, %193 : vector<8x256xf32>
    %cst_65 = arith.constant 1.000000e+00 : f32
    %196 = vector.broadcast %cst_65 : f32 to vector<8x256xf32>
    %197 = arith.divf %196, %195 : vector<8x256xf32>
    %198 = vector.extract_strided_slice %197 {offsets = [0, 0], sizes = [4, 256], strides = [1, 1]} : vector<8x256xf32> to vector<4x256xf32>
    %199 = vector.extract_strided_slice %197 {offsets = [4, 0], sizes = [4, 256], strides = [1, 1]} : vector<8x256xf32> to vector<4x256xf32>
    %200 = arith.mulf %198, %125 : vector<4x256xf32>
    %c17_i32_66 = arith.constant 17 : i32
    %201 = tpu.dynamic_rotate %200 by %c17_i32_66 dim 1 : vector<4x256xf32>, i32 -> vector<4x256xf32>
    %202 = vector.broadcast %4 : vector<1x256xf32> to vector<4x256xf32>
    %203 = arith.mulf %201, %202 : vector<4x256xf32>
    %c16_i32_67 = arith.constant 16 : i32
    %204 = tpu.dynamic_rotate %200 by %c16_i32_67 dim 1 : vector<4x256xf32>, i32 -> vector<4x256xf32>
    %205 = vector.broadcast %5 : vector<1x256xf32> to vector<4x256xf32>
    %206 = arith.mulf %204, %205 : vector<4x256xf32>
    %c15_i32_68 = arith.constant 15 : i32
    %207 = tpu.dynamic_rotate %200 by %c15_i32_68 dim 1 : vector<4x256xf32>, i32 -> vector<4x256xf32>
    %208 = vector.broadcast %6 : vector<1x256xf32> to vector<4x256xf32>
    %209 = arith.mulf %207, %208 : vector<4x256xf32>
    %c1_i32_69 = arith.constant 1 : i32
    %210 = tpu.dynamic_rotate %200 by %c1_i32_69 dim 1 : vector<4x256xf32>, i32 -> vector<4x256xf32>
    %211 = vector.broadcast %7 : vector<1x256xf32> to vector<4x256xf32>
    %212 = arith.mulf %210, %211 : vector<4x256xf32>
    %213 = vector.broadcast %8 : vector<1x256xf32> to vector<4x256xf32>
    %214 = arith.mulf %200, %213 : vector<4x256xf32>
    %c255_i32_70 = arith.constant 255 : i32
    %215 = tpu.dynamic_rotate %200 by %c255_i32_70 dim 1 : vector<4x256xf32>, i32 -> vector<4x256xf32>
    %216 = vector.broadcast %9 : vector<1x256xf32> to vector<4x256xf32>
    %217 = arith.mulf %215, %216 : vector<4x256xf32>
    %c241_i32_71 = arith.constant 241 : i32
    %218 = tpu.dynamic_rotate %200 by %c241_i32_71 dim 1 : vector<4x256xf32>, i32 -> vector<4x256xf32>
    %219 = vector.broadcast %10 : vector<1x256xf32> to vector<4x256xf32>
    %220 = arith.mulf %218, %219 : vector<4x256xf32>
    %c240_i32_72 = arith.constant 240 : i32
    %221 = tpu.dynamic_rotate %200 by %c240_i32_72 dim 1 : vector<4x256xf32>, i32 -> vector<4x256xf32>
    %222 = vector.broadcast %11 : vector<1x256xf32> to vector<4x256xf32>
    %223 = arith.mulf %221, %222 : vector<4x256xf32>
    %c239_i32_73 = arith.constant 239 : i32
    %224 = tpu.dynamic_rotate %200 by %c239_i32_73 dim 1 : vector<4x256xf32>, i32 -> vector<4x256xf32>
    %225 = vector.broadcast %12 : vector<1x256xf32> to vector<4x256xf32>
    %226 = arith.mulf %224, %225 : vector<4x256xf32>
    %227 = tpu.concatenate %203, %206, %209, %212, %214, %217, %220, %223, %226 in 0 : vector<4x256xf32>, vector<4x256xf32>, vector<4x256xf32>, vector<4x256xf32>, vector<4x256xf32>, vector<4x256xf32>, vector<4x256xf32>, vector<4x256xf32>, vector<4x256xf32> -> vector<36x256xf32>
    %228 = vector.extract_strided_slice %187 {offsets = [8, 0], sizes = [4, 256], strides = [1, 1]} : vector<12x256xf32> to vector<4x256xf32>
    %cst_74 = arith.constant dense<0.000000e+00> : vector<4x256xf32>
    %229 = tpu.matmul %16, %227, %cst_74 {dimension_numbers = #tpu.dot_dimension_numbers<[1], [0], [0], [1], [0, 0, 1, 1], [], []>} : vector<4x36xf32>, vector<36x256xf32>, vector<4x256xf32> -> vector<4x256xf32>
    %230 = arith.addf %228, %229 : vector<4x256xf32>
    %231 = math.tanh %230 : vector<4x256xf32>
    %cst_75 = arith.constant 1.000000e+00 : f32
    %232 = vector.broadcast %cst_75 : f32 to vector<4x256xf32>
    %233 = arith.subf %232, %199 : vector<4x256xf32>
    %234 = arith.mulf %233, %125 : vector<4x256xf32>
    %235 = arith.mulf %199, %231 : vector<4x256xf32>
    %236 = arith.addf %234, %235 : vector<4x256xf32>
    %c0_76 = arith.constant 0 : index
    %c1_77 = arith.constant 1 : index
    %c0_78 = arith.constant 0 : index
    %c0_79 = arith.constant 0 : index
    %237 = vector.load %arg9[%c0_76, %c1_77, %c0_78, %c0_79] : memref<1x8x4x256xf32, #tpu.memory_space<vmem>>, vector<1x1x4x256xf32>
    %238 = vector.shape_cast %237 : vector<1x1x4x256xf32> to vector<4x256xf32>
    %239 = vector.shape_cast %236 : vector<4x256xf32> to vector<1x1x4x256xf32>
    tpu.vector_store %arg9[%c0_76, %c1_77, %c0_78, %c0_79], %239 {strides = array<i32>} : memref<1x8x4x256xf32, #tpu.memory_space<vmem>>, vector<1x1x4x256xf32>,
    %c0_80 = arith.constant 0 : index
    %c2 = arith.constant 2 : index
    %c0_81 = arith.constant 0 : index
    %c0_82 = arith.constant 0 : index
    %240 = vector.load %arg2[%c0_80, %c2, %c0_81, %c0_82] : memref<1x8x4x256xf32, #tpu.memory_space<vmem>>, vector<1x1x4x256xf32>
    %241 = vector.shape_cast %240 : vector<1x1x4x256xf32> to vector<4x256xf32>
    %c17_i32_83 = arith.constant 17 : i32
    %242 = tpu.dynamic_rotate %241 by %c17_i32_83 dim 1 : vector<4x256xf32>, i32 -> vector<4x256xf32>
    %243 = vector.broadcast %4 : vector<1x256xf32> to vector<4x256xf32>
    %244 = arith.mulf %242, %243 : vector<4x256xf32>
    %c16_i32_84 = arith.constant 16 : i32
    %245 = tpu.dynamic_rotate %241 by %c16_i32_84 dim 1 : vector<4x256xf32>, i32 -> vector<4x256xf32>
    %246 = vector.broadcast %5 : vector<1x256xf32> to vector<4x256xf32>
    %247 = arith.mulf %245, %246 : vector<4x256xf32>
    %c15_i32_85 = arith.constant 15 : i32
    %248 = tpu.dynamic_rotate %241 by %c15_i32_85 dim 1 : vector<4x256xf32>, i32 -> vector<4x256xf32>
    %249 = vector.broadcast %6 : vector<1x256xf32> to vector<4x256xf32>
    %250 = arith.mulf %248, %249 : vector<4x256xf32>
    %c1_i32_86 = arith.constant 1 : i32
    %251 = tpu.dynamic_rotate %241 by %c1_i32_86 dim 1 : vector<4x256xf32>, i32 -> vector<4x256xf32>
    %252 = vector.broadcast %7 : vector<1x256xf32> to vector<4x256xf32>
    %253 = arith.mulf %251, %252 : vector<4x256xf32>
    %254 = vector.broadcast %8 : vector<1x256xf32> to vector<4x256xf32>
    %255 = arith.mulf %241, %254 : vector<4x256xf32>
    %c255_i32_87 = arith.constant 255 : i32
    %256 = tpu.dynamic_rotate %241 by %c255_i32_87 dim 1 : vector<4x256xf32>, i32 -> vector<4x256xf32>
    %257 = vector.broadcast %9 : vector<1x256xf32> to vector<4x256xf32>
    %258 = arith.mulf %256, %257 : vector<4x256xf32>
    %c241_i32_88 = arith.constant 241 : i32
    %259 = tpu.dynamic_rotate %241 by %c241_i32_88 dim 1 : vector<4x256xf32>, i32 -> vector<4x256xf32>
    %260 = vector.broadcast %10 : vector<1x256xf32> to vector<4x256xf32>
    %261 = arith.mulf %259, %260 : vector<4x256xf32>
    %c240_i32_89 = arith.constant 240 : i32
    %262 = tpu.dynamic_rotate %241 by %c240_i32_89 dim 1 : vector<4x256xf32>, i32 -> vector<4x256xf32>
    %263 = vector.broadcast %11 : vector<1x256xf32> to vector<4x256xf32>
    %264 = arith.mulf %262, %263 : vector<4x256xf32>
    %c239_i32_90 = arith.constant 239 : i32
    %265 = tpu.dynamic_rotate %241 by %c239_i32_90 dim 1 : vector<4x256xf32>, i32 -> vector<4x256xf32>
    %266 = vector.broadcast %12 : vector<1x256xf32> to vector<4x256xf32>
    %267 = arith.mulf %265, %266 : vector<4x256xf32>
    %268 = tpu.concatenate %244, %247, %250, %253, %255, %258, %261, %264, %267 in 0 : vector<4x256xf32>, vector<4x256xf32>, vector<4x256xf32>, vector<4x256xf32>, vector<4x256xf32>, vector<4x256xf32>, vector<4x256xf32>, vector<4x256xf32>, vector<4x256xf32> -> vector<36x256xf32>
    %c17_i32_91 = arith.constant 17 : i32
    %269 = tpu.dynamic_rotate %236 by %c17_i32_91 dim 1 : vector<4x256xf32>, i32 -> vector<4x256xf32>
    %270 = vector.broadcast %4 : vector<1x256xf32> to vector<4x256xf32>
    %271 = arith.mulf %269, %270 : vector<4x256xf32>
    %c16_i32_92 = arith.constant 16 : i32
    %272 = tpu.dynamic_rotate %236 by %c16_i32_92 dim 1 : vector<4x256xf32>, i32 -> vector<4x256xf32>
    %273 = vector.broadcast %5 : vector<1x256xf32> to vector<4x256xf32>
    %274 = arith.mulf %272, %273 : vector<4x256xf32>
    %c15_i32_93 = arith.constant 15 : i32
    %275 = tpu.dynamic_rotate %236 by %c15_i32_93 dim 1 : vector<4x256xf32>, i32 -> vector<4x256xf32>
    %276 = vector.broadcast %6 : vector<1x256xf32> to vector<4x256xf32>
    %277 = arith.mulf %275, %276 : vector<4x256xf32>
    %c1_i32_94 = arith.constant 1 : i32
    %278 = tpu.dynamic_rotate %236 by %c1_i32_94 dim 1 : vector<4x256xf32>, i32 -> vector<4x256xf32>
    %279 = vector.broadcast %7 : vector<1x256xf32> to vector<4x256xf32>
    %280 = arith.mulf %278, %279 : vector<4x256xf32>
    %281 = vector.broadcast %8 : vector<1x256xf32> to vector<4x256xf32>
    %282 = arith.mulf %236, %281 : vector<4x256xf32>
    %c255_i32_95 = arith.constant 255 : i32
    %283 = tpu.dynamic_rotate %236 by %c255_i32_95 dim 1 : vector<4x256xf32>, i32 -> vector<4x256xf32>
    %284 = vector.broadcast %9 : vector<1x256xf32> to vector<4x256xf32>
    %285 = arith.mulf %283, %284 : vector<4x256xf32>
    %c241_i32_96 = arith.constant 241 : i32
    %286 = tpu.dynamic_rotate %236 by %c241_i32_96 dim 1 : vector<4x256xf32>, i32 -> vector<4x256xf32>
    %287 = vector.broadcast %10 : vector<1x256xf32> to vector<4x256xf32>
    %288 = arith.mulf %286, %287 : vector<4x256xf32>
    %c240_i32_97 = arith.constant 240 : i32
    %289 = tpu.dynamic_rotate %236 by %c240_i32_97 dim 1 : vector<4x256xf32>, i32 -> vector<4x256xf32>
    %290 = vector.broadcast %11 : vector<1x256xf32> to vector<4x256xf32>
    %291 = arith.mulf %289, %290 : vector<4x256xf32>
    %c239_i32_98 = arith.constant 239 : i32
    %292 = tpu.dynamic_rotate %236 by %c239_i32_98 dim 1 : vector<4x256xf32>, i32 -> vector<4x256xf32>
    %293 = vector.broadcast %12 : vector<1x256xf32> to vector<4x256xf32>
    %294 = arith.mulf %292, %293 : vector<4x256xf32>
    %295 = tpu.concatenate %271, %274, %277, %280, %282, %285, %288, %291, %294 in 0 : vector<4x256xf32>, vector<4x256xf32>, vector<4x256xf32>, vector<4x256xf32>, vector<4x256xf32>, vector<4x256xf32>, vector<4x256xf32>, vector<4x256xf32>, vector<4x256xf32> -> vector<36x256xf32>
    %cst_99 = arith.constant dense<0.000000e+00> : vector<12x256xf32>
    %296 = tpu.matmul %13, %268, %cst_99 {dimension_numbers = #tpu.dot_dimension_numbers<[1], [0], [0], [1], [0, 0, 1, 1], [], []>} : vector<12x36xf32>, vector<36x256xf32>, vector<12x256xf32> -> vector<12x256xf32>
    %297 = vector.broadcast %14 : vector<12x1xf32> to vector<12x256xf32>
    %298 = arith.addf %296, %297 : vector<12x256xf32>
    %299 = vector.extract_strided_slice %298 {offsets = [0, 0], sizes = [8, 256], strides = [1, 1]} : vector<12x256xf32> to vector<8x256xf32>
    %cst_100 = arith.constant dense<0.000000e+00> : vector<8x256xf32>
    %300 = tpu.matmul %15, %295, %cst_100 {dimension_numbers = #tpu.dot_dimension_numbers<[1], [0], [0], [1], [0, 0, 1, 1], [], []>} : vector<8x36xf32>, vector<36x256xf32>, vector<8x256xf32> -> vector<8x256xf32>
    %301 = arith.addf %299, %300 : vector<8x256xf32>
    %cst_101 = arith.constant 0.000000e+00 : f32
    %302 = vector.broadcast %cst_101 : f32 to vector<8x256xf32>
    %303 = arith.subf %302, %301 : vector<8x256xf32>
    %304 = math.exp %303 : vector<8x256xf32>
    %cst_102 = arith.constant 1.000000e+00 : f32
    %305 = vector.broadcast %cst_102 : f32 to vector<8x256xf32>
    %306 = arith.addf %305, %304 : vector<8x256xf32>
    %cst_103 = arith.constant 1.000000e+00 : f32
    %307 = vector.broadcast %cst_103 : f32 to vector<8x256xf32>
    %308 = arith.divf %307, %306 : vector<8x256xf32>
    %309 = vector.extract_strided_slice %308 {offsets = [0, 0], sizes = [4, 256], strides = [1, 1]} : vector<8x256xf32> to vector<4x256xf32>
    %310 = vector.extract_strided_slice %308 {offsets = [4, 0], sizes = [4, 256], strides = [1, 1]} : vector<8x256xf32> to vector<4x256xf32>
    %311 = arith.mulf %309, %236 : vector<4x256xf32>
    %c17_i32_104 = arith.constant 17 : i32
    %312 = tpu.dynamic_rotate %311 by %c17_i32_104 dim 1 : vector<4x256xf32>, i32 -> vector<4x256xf32>
    %313 = vector.broadcast %4 : vector<1x256xf32> to vector<4x256xf32>
    %314 = arith.mulf %312, %313 : vector<4x256xf32>
    %c16_i32_105 = arith.constant 16 : i32
    %315 = tpu.dynamic_rotate %311 by %c16_i32_105 dim 1 : vector<4x256xf32>, i32 -> vector<4x256xf32>
    %316 = vector.broadcast %5 : vector<1x256xf32> to vector<4x256xf32>
    %317 = arith.mulf %315, %316 : vector<4x256xf32>
    %c15_i32_106 = arith.constant 15 : i32
    %318 = tpu.dynamic_rotate %311 by %c15_i32_106 dim 1 : vector<4x256xf32>, i32 -> vector<4x256xf32>
    %319 = vector.broadcast %6 : vector<1x256xf32> to vector<4x256xf32>
    %320 = arith.mulf %318, %319 : vector<4x256xf32>
    %c1_i32_107 = arith.constant 1 : i32
    %321 = tpu.dynamic_rotate %311 by %c1_i32_107 dim 1 : vector<4x256xf32>, i32 -> vector<4x256xf32>
    %322 = vector.broadcast %7 : vector<1x256xf32> to vector<4x256xf32>
    %323 = arith.mulf %321, %322 : vector<4x256xf32>
    %324 = vector.broadcast %8 : vector<1x256xf32> to vector<4x256xf32>
    %325 = arith.mulf %311, %324 : vector<4x256xf32>
    %c255_i32_108 = arith.constant 255 : i32
    %326 = tpu.dynamic_rotate %311 by %c255_i32_108 dim 1 : vector<4x256xf32>, i32 -> vector<4x256xf32>
    %327 = vector.broadcast %9 : vector<1x256xf32> to vector<4x256xf32>
    %328 = arith.mulf %326, %327 : vector<4x256xf32>
    %c241_i32_109 = arith.constant 241 : i32
    %329 = tpu.dynamic_rotate %311 by %c241_i32_109 dim 1 : vector<4x256xf32>, i32 -> vector<4x256xf32>
    %330 = vector.broadcast %10 : vector<1x256xf32> to vector<4x256xf32>
    %331 = arith.mulf %329, %330 : vector<4x256xf32>
    %c240_i32_110 = arith.constant 240 : i32
    %332 = tpu.dynamic_rotate %311 by %c240_i32_110 dim 1 : vector<4x256xf32>, i32 -> vector<4x256xf32>
    %333 = vector.broadcast %11 : vector<1x256xf32> to vector<4x256xf32>
    %334 = arith.mulf %332, %333 : vector<4x256xf32>
    %c239_i32_111 = arith.constant 239 : i32
    %335 = tpu.dynamic_rotate %311 by %c239_i32_111 dim 1 : vector<4x256xf32>, i32 -> vector<4x256xf32>
    %336 = vector.broadcast %12 : vector<1x256xf32> to vector<4x256xf32>
    %337 = arith.mulf %335, %336 : vector<4x256xf32>
    %338 = tpu.concatenate %314, %317, %320, %323, %325, %328, %331, %334, %337 in 0 : vector<4x256xf32>, vector<4x256xf32>, vector<4x256xf32>, vector<4x256xf32>, vector<4x256xf32>, vector<4x256xf32>, vector<4x256xf32>, vector<4x256xf32>, vector<4x256xf32> -> vector<36x256xf32>
    %339 = vector.extract_strided_slice %298 {offsets = [8, 0], sizes = [4, 256], strides = [1, 1]} : vector<12x256xf32> to vector<4x256xf32>
    %cst_112 = arith.constant dense<0.000000e+00> : vector<4x256xf32>
    %340 = tpu.matmul %16, %338, %cst_112 {dimension_numbers = #tpu.dot_dimension_numbers<[1], [0], [0], [1], [0, 0, 1, 1], [], []>} : vector<4x36xf32>, vector<36x256xf32>, vector<4x256xf32> -> vector<4x256xf32>
    %341 = arith.addf %339, %340 : vector<4x256xf32>
    %342 = math.tanh %341 : vector<4x256xf32>
    %cst_113 = arith.constant 1.000000e+00 : f32
    %343 = vector.broadcast %cst_113 : f32 to vector<4x256xf32>
    %344 = arith.subf %343, %310 : vector<4x256xf32>
    %345 = arith.mulf %344, %236 : vector<4x256xf32>
    %346 = arith.mulf %310, %342 : vector<4x256xf32>
    %347 = arith.addf %345, %346 : vector<4x256xf32>
    %c0_114 = arith.constant 0 : index
    %c2_115 = arith.constant 2 : index
    %c0_116 = arith.constant 0 : index
    %c0_117 = arith.constant 0 : index
    %348 = vector.load %arg9[%c0_114, %c2_115, %c0_116, %c0_117] : memref<1x8x4x256xf32, #tpu.memory_space<vmem>>, vector<1x1x4x256xf32>
    %349 = vector.shape_cast %348 : vector<1x1x4x256xf32> to vector<4x256xf32>
    %350 = vector.shape_cast %347 : vector<4x256xf32> to vector<1x1x4x256xf32>
    tpu.vector_store %arg9[%c0_114, %c2_115, %c0_116, %c0_117], %350 {strides = array<i32>} : memref<1x8x4x256xf32, #tpu.memory_space<vmem>>, vector<1x1x4x256xf32>,
    %c0_118 = arith.constant 0 : index
    %c3 = arith.constant 3 : index
    %c0_119 = arith.constant 0 : index
    %c0_120 = arith.constant 0 : index
    %351 = vector.load %arg2[%c0_118, %c3, %c0_119, %c0_120] : memref<1x8x4x256xf32, #tpu.memory_space<vmem>>, vector<1x1x4x256xf32>
    %352 = vector.shape_cast %351 : vector<1x1x4x256xf32> to vector<4x256xf32>
    %c17_i32_121 = arith.constant 17 : i32
    %353 = tpu.dynamic_rotate %352 by %c17_i32_121 dim 1 : vector<4x256xf32>, i32 -> vector<4x256xf32>
    %354 = vector.broadcast %4 : vector<1x256xf32> to vector<4x256xf32>
    %355 = arith.mulf %353, %354 : vector<4x256xf32>
    %c16_i32_122 = arith.constant 16 : i32
    %356 = tpu.dynamic_rotate %352 by %c16_i32_122 dim 1 : vector<4x256xf32>, i32 -> vector<4x256xf32>
    %357 = vector.broadcast %5 : vector<1x256xf32> to vector<4x256xf32>
    %358 = arith.mulf %356, %357 : vector<4x256xf32>
    %c15_i32_123 = arith.constant 15 : i32
    %359 = tpu.dynamic_rotate %352 by %c15_i32_123 dim 1 : vector<4x256xf32>, i32 -> vector<4x256xf32>
    %360 = vector.broadcast %6 : vector<1x256xf32> to vector<4x256xf32>
    %361 = arith.mulf %359, %360 : vector<4x256xf32>
    %c1_i32_124 = arith.constant 1 : i32
    %362 = tpu.dynamic_rotate %352 by %c1_i32_124 dim 1 : vector<4x256xf32>, i32 -> vector<4x256xf32>
    %363 = vector.broadcast %7 : vector<1x256xf32> to vector<4x256xf32>
    %364 = arith.mulf %362, %363 : vector<4x256xf32>
    %365 = vector.broadcast %8 : vector<1x256xf32> to vector<4x256xf32>
    %366 = arith.mulf %352, %365 : vector<4x256xf32>
    %c255_i32_125 = arith.constant 255 : i32
    %367 = tpu.dynamic_rotate %352 by %c255_i32_125 dim 1 : vector<4x256xf32>, i32 -> vector<4x256xf32>
    %368 = vector.broadcast %9 : vector<1x256xf32> to vector<4x256xf32>
    %369 = arith.mulf %367, %368 : vector<4x256xf32>
    %c241_i32_126 = arith.constant 241 : i32
    %370 = tpu.dynamic_rotate %352 by %c241_i32_126 dim 1 : vector<4x256xf32>, i32 -> vector<4x256xf32>
    %371 = vector.broadcast %10 : vector<1x256xf32> to vector<4x256xf32>
    %372 = arith.mulf %370, %371 : vector<4x256xf32>
    %c240_i32_127 = arith.constant 240 : i32
    %373 = tpu.dynamic_rotate %352 by %c240_i32_127 dim 1 : vector<4x256xf32>, i32 -> vector<4x256xf32>
    %374 = vector.broadcast %11 : vector<1x256xf32> to vector<4x256xf32>
    %375 = arith.mulf %373, %374 : vector<4x256xf32>
    %c239_i32_128 = arith.constant 239 : i32
    %376 = tpu.dynamic_rotate %352 by %c239_i32_128 dim 1 : vector<4x256xf32>, i32 -> vector<4x256xf32>
    %377 = vector.broadcast %12 : vector<1x256xf32> to vector<4x256xf32>
    %378 = arith.mulf %376, %377 : vector<4x256xf32>
    %379 = tpu.concatenate %355, %358, %361, %364, %366, %369, %372, %375, %378 in 0 : vector<4x256xf32>, vector<4x256xf32>, vector<4x256xf32>, vector<4x256xf32>, vector<4x256xf32>, vector<4x256xf32>, vector<4x256xf32>, vector<4x256xf32>, vector<4x256xf32> -> vector<36x256xf32>
    %c17_i32_129 = arith.constant 17 : i32
    %380 = tpu.dynamic_rotate %347 by %c17_i32_129 dim 1 : vector<4x256xf32>, i32 -> vector<4x256xf32>
    %381 = vector.broadcast %4 : vector<1x256xf32> to vector<4x256xf32>
    %382 = arith.mulf %380, %381 : vector<4x256xf32>
    %c16_i32_130 = arith.constant 16 : i32
    %383 = tpu.dynamic_rotate %347 by %c16_i32_130 dim 1 : vector<4x256xf32>, i32 -> vector<4x256xf32>
    %384 = vector.broadcast %5 : vector<1x256xf32> to vector<4x256xf32>
    %385 = arith.mulf %383, %384 : vector<4x256xf32>
    %c15_i32_131 = arith.constant 15 : i32
    %386 = tpu.dynamic_rotate %347 by %c15_i32_131 dim 1 : vector<4x256xf32>, i32 -> vector<4x256xf32>
    %387 = vector.broadcast %6 : vector<1x256xf32> to vector<4x256xf32>
    %388 = arith.mulf %386, %387 : vector<4x256xf32>
    %c1_i32_132 = arith.constant 1 : i32
    %389 = tpu.dynamic_rotate %347 by %c1_i32_132 dim 1 : vector<4x256xf32>, i32 -> vector<4x256xf32>
    %390 = vector.broadcast %7 : vector<1x256xf32> to vector<4x256xf32>
    %391 = arith.mulf %389, %390 : vector<4x256xf32>
    %392 = vector.broadcast %8 : vector<1x256xf32> to vector<4x256xf32>
    %393 = arith.mulf %347, %392 : vector<4x256xf32>
    %c255_i32_133 = arith.constant 255 : i32
    %394 = tpu.dynamic_rotate %347 by %c255_i32_133 dim 1 : vector<4x256xf32>, i32 -> vector<4x256xf32>
    %395 = vector.broadcast %9 : vector<1x256xf32> to vector<4x256xf32>
    %396 = arith.mulf %394, %395 : vector<4x256xf32>
    %c241_i32_134 = arith.constant 241 : i32
    %397 = tpu.dynamic_rotate %347 by %c241_i32_134 dim 1 : vector<4x256xf32>, i32 -> vector<4x256xf32>
    %398 = vector.broadcast %10 : vector<1x256xf32> to vector<4x256xf32>
    %399 = arith.mulf %397, %398 : vector<4x256xf32>
    %c240_i32_135 = arith.constant 240 : i32
    %400 = tpu.dynamic_rotate %347 by %c240_i32_135 dim 1 : vector<4x256xf32>, i32 -> vector<4x256xf32>
    %401 = vector.broadcast %11 : vector<1x256xf32> to vector<4x256xf32>
    %402 = arith.mulf %400, %401 : vector<4x256xf32>
    %c239_i32_136 = arith.constant 239 : i32
    %403 = tpu.dynamic_rotate %347 by %c239_i32_136 dim 1 : vector<4x256xf32>, i32 -> vector<4x256xf32>
    %404 = vector.broadcast %12 : vector<1x256xf32> to vector<4x256xf32>
    %405 = arith.mulf %403, %404 : vector<4x256xf32>
    %406 = tpu.concatenate %382, %385, %388, %391, %393, %396, %399, %402, %405 in 0 : vector<4x256xf32>, vector<4x256xf32>, vector<4x256xf32>, vector<4x256xf32>, vector<4x256xf32>, vector<4x256xf32>, vector<4x256xf32>, vector<4x256xf32>, vector<4x256xf32> -> vector<36x256xf32>
    %cst_137 = arith.constant dense<0.000000e+00> : vector<12x256xf32>
    %407 = tpu.matmul %13, %379, %cst_137 {dimension_numbers = #tpu.dot_dimension_numbers<[1], [0], [0], [1], [0, 0, 1, 1], [], []>} : vector<12x36xf32>, vector<36x256xf32>, vector<12x256xf32> -> vector<12x256xf32>
    %408 = vector.broadcast %14 : vector<12x1xf32> to vector<12x256xf32>
    %409 = arith.addf %407, %408 : vector<12x256xf32>
    %410 = vector.extract_strided_slice %409 {offsets = [0, 0], sizes = [8, 256], strides = [1, 1]} : vector<12x256xf32> to vector<8x256xf32>
    %cst_138 = arith.constant dense<0.000000e+00> : vector<8x256xf32>
    %411 = tpu.matmul %15, %406, %cst_138 {dimension_numbers = #tpu.dot_dimension_numbers<[1], [0], [0], [1], [0, 0, 1, 1], [], []>} : vector<8x36xf32>, vector<36x256xf32>, vector<8x256xf32> -> vector<8x256xf32>
    %412 = arith.addf %410, %411 : vector<8x256xf32>
    %cst_139 = arith.constant 0.000000e+00 : f32
    %413 = vector.broadcast %cst_139 : f32 to vector<8x256xf32>
    %414 = arith.subf %413, %412 : vector<8x256xf32>
    %415 = math.exp %414 : vector<8x256xf32>
    %cst_140 = arith.constant 1.000000e+00 : f32
    %416 = vector.broadcast %cst_140 : f32 to vector<8x256xf32>
    %417 = arith.addf %416, %415 : vector<8x256xf32>
    %cst_141 = arith.constant 1.000000e+00 : f32
    %418 = vector.broadcast %cst_141 : f32 to vector<8x256xf32>
    %419 = arith.divf %418, %417 : vector<8x256xf32>
    %420 = vector.extract_strided_slice %419 {offsets = [0, 0], sizes = [4, 256], strides = [1, 1]} : vector<8x256xf32> to vector<4x256xf32>
    %421 = vector.extract_strided_slice %419 {offsets = [4, 0], sizes = [4, 256], strides = [1, 1]} : vector<8x256xf32> to vector<4x256xf32>
    %422 = arith.mulf %420, %347 : vector<4x256xf32>
    %c17_i32_142 = arith.constant 17 : i32
    %423 = tpu.dynamic_rotate %422 by %c17_i32_142 dim 1 : vector<4x256xf32>, i32 -> vector<4x256xf32>
    %424 = vector.broadcast %4 : vector<1x256xf32> to vector<4x256xf32>
    %425 = arith.mulf %423, %424 : vector<4x256xf32>
    %c16_i32_143 = arith.constant 16 : i32
    %426 = tpu.dynamic_rotate %422 by %c16_i32_143 dim 1 : vector<4x256xf32>, i32 -> vector<4x256xf32>
    %427 = vector.broadcast %5 : vector<1x256xf32> to vector<4x256xf32>
    %428 = arith.mulf %426, %427 : vector<4x256xf32>
    %c15_i32_144 = arith.constant 15 : i32
    %429 = tpu.dynamic_rotate %422 by %c15_i32_144 dim 1 : vector<4x256xf32>, i32 -> vector<4x256xf32>
    %430 = vector.broadcast %6 : vector<1x256xf32> to vector<4x256xf32>
    %431 = arith.mulf %429, %430 : vector<4x256xf32>
    %c1_i32_145 = arith.constant 1 : i32
    %432 = tpu.dynamic_rotate %422 by %c1_i32_145 dim 1 : vector<4x256xf32>, i32 -> vector<4x256xf32>
    %433 = vector.broadcast %7 : vector<1x256xf32> to vector<4x256xf32>
    %434 = arith.mulf %432, %433 : vector<4x256xf32>
    %435 = vector.broadcast %8 : vector<1x256xf32> to vector<4x256xf32>
    %436 = arith.mulf %422, %435 : vector<4x256xf32>
    %c255_i32_146 = arith.constant 255 : i32
    %437 = tpu.dynamic_rotate %422 by %c255_i32_146 dim 1 : vector<4x256xf32>, i32 -> vector<4x256xf32>
    %438 = vector.broadcast %9 : vector<1x256xf32> to vector<4x256xf32>
    %439 = arith.mulf %437, %438 : vector<4x256xf32>
    %c241_i32_147 = arith.constant 241 : i32
    %440 = tpu.dynamic_rotate %422 by %c241_i32_147 dim 1 : vector<4x256xf32>, i32 -> vector<4x256xf32>
    %441 = vector.broadcast %10 : vector<1x256xf32> to vector<4x256xf32>
    %442 = arith.mulf %440, %441 : vector<4x256xf32>
    %c240_i32_148 = arith.constant 240 : i32
    %443 = tpu.dynamic_rotate %422 by %c240_i32_148 dim 1 : vector<4x256xf32>, i32 -> vector<4x256xf32>
    %444 = vector.broadcast %11 : vector<1x256xf32> to vector<4x256xf32>
    %445 = arith.mulf %443, %444 : vector<4x256xf32>
    %c239_i32_149 = arith.constant 239 : i32
    %446 = tpu.dynamic_rotate %422 by %c239_i32_149 dim 1 : vector<4x256xf32>, i32 -> vector<4x256xf32>
    %447 = vector.broadcast %12 : vector<1x256xf32> to vector<4x256xf32>
    %448 = arith.mulf %446, %447 : vector<4x256xf32>
    %449 = tpu.concatenate %425, %428, %431, %434, %436, %439, %442, %445, %448 in 0 : vector<4x256xf32>, vector<4x256xf32>, vector<4x256xf32>, vector<4x256xf32>, vector<4x256xf32>, vector<4x256xf32>, vector<4x256xf32>, vector<4x256xf32>, vector<4x256xf32> -> vector<36x256xf32>
    %450 = vector.extract_strided_slice %409 {offsets = [8, 0], sizes = [4, 256], strides = [1, 1]} : vector<12x256xf32> to vector<4x256xf32>
    %cst_150 = arith.constant dense<0.000000e+00> : vector<4x256xf32>
    %451 = tpu.matmul %16, %449, %cst_150 {dimension_numbers = #tpu.dot_dimension_numbers<[1], [0], [0], [1], [0, 0, 1, 1], [], []>} : vector<4x36xf32>, vector<36x256xf32>, vector<4x256xf32> -> vector<4x256xf32>
    %452 = arith.addf %450, %451 : vector<4x256xf32>
    %453 = math.tanh %452 : vector<4x256xf32>
    %cst_151 = arith.constant 1.000000e+00 : f32
    %454 = vector.broadcast %cst_151 : f32 to vector<4x256xf32>
    %455 = arith.subf %454, %421 : vector<4x256xf32>
    %456 = arith.mulf %455, %347 : vector<4x256xf32>
    %457 = arith.mulf %421, %453 : vector<4x256xf32>
    %458 = arith.addf %456, %457 : vector<4x256xf32>
    %c0_152 = arith.constant 0 : index
    %c3_153 = arith.constant 3 : index
    %c0_154 = arith.constant 0 : index
    %c0_155 = arith.constant 0 : index
    %459 = vector.load %arg9[%c0_152, %c3_153, %c0_154, %c0_155] : memref<1x8x4x256xf32, #tpu.memory_space<vmem>>, vector<1x1x4x256xf32>
    %460 = vector.shape_cast %459 : vector<1x1x4x256xf32> to vector<4x256xf32>
    %461 = vector.shape_cast %458 : vector<4x256xf32> to vector<1x1x4x256xf32>
    tpu.vector_store %arg9[%c0_152, %c3_153, %c0_154, %c0_155], %461 {strides = array<i32>} : memref<1x8x4x256xf32, #tpu.memory_space<vmem>>, vector<1x1x4x256xf32>,
    %c0_156 = arith.constant 0 : index
    %c4 = arith.constant 4 : index
    %c0_157 = arith.constant 0 : index
    %c0_158 = arith.constant 0 : index
    %462 = vector.load %arg2[%c0_156, %c4, %c0_157, %c0_158] : memref<1x8x4x256xf32, #tpu.memory_space<vmem>>, vector<1x1x4x256xf32>
    %463 = vector.shape_cast %462 : vector<1x1x4x256xf32> to vector<4x256xf32>
    %c17_i32_159 = arith.constant 17 : i32
    %464 = tpu.dynamic_rotate %463 by %c17_i32_159 dim 1 : vector<4x256xf32>, i32 -> vector<4x256xf32>
    %465 = vector.broadcast %4 : vector<1x256xf32> to vector<4x256xf32>
    %466 = arith.mulf %464, %465 : vector<4x256xf32>
    %c16_i32_160 = arith.constant 16 : i32
    %467 = tpu.dynamic_rotate %463 by %c16_i32_160 dim 1 : vector<4x256xf32>, i32 -> vector<4x256xf32>
    %468 = vector.broadcast %5 : vector<1x256xf32> to vector<4x256xf32>
    %469 = arith.mulf %467, %468 : vector<4x256xf32>
    %c15_i32_161 = arith.constant 15 : i32
    %470 = tpu.dynamic_rotate %463 by %c15_i32_161 dim 1 : vector<4x256xf32>, i32 -> vector<4x256xf32>
    %471 = vector.broadcast %6 : vector<1x256xf32> to vector<4x256xf32>
    %472 = arith.mulf %470, %471 : vector<4x256xf32>
    %c1_i32_162 = arith.constant 1 : i32
    %473 = tpu.dynamic_rotate %463 by %c1_i32_162 dim 1 : vector<4x256xf32>, i32 -> vector<4x256xf32>
    %474 = vector.broadcast %7 : vector<1x256xf32> to vector<4x256xf32>
    %475 = arith.mulf %473, %474 : vector<4x256xf32>
    %476 = vector.broadcast %8 : vector<1x256xf32> to vector<4x256xf32>
    %477 = arith.mulf %463, %476 : vector<4x256xf32>
    %c255_i32_163 = arith.constant 255 : i32
    %478 = tpu.dynamic_rotate %463 by %c255_i32_163 dim 1 : vector<4x256xf32>, i32 -> vector<4x256xf32>
    %479 = vector.broadcast %9 : vector<1x256xf32> to vector<4x256xf32>
    %480 = arith.mulf %478, %479 : vector<4x256xf32>
    %c241_i32_164 = arith.constant 241 : i32
    %481 = tpu.dynamic_rotate %463 by %c241_i32_164 dim 1 : vector<4x256xf32>, i32 -> vector<4x256xf32>
    %482 = vector.broadcast %10 : vector<1x256xf32> to vector<4x256xf32>
    %483 = arith.mulf %481, %482 : vector<4x256xf32>
    %c240_i32_165 = arith.constant 240 : i32
    %484 = tpu.dynamic_rotate %463 by %c240_i32_165 dim 1 : vector<4x256xf32>, i32 -> vector<4x256xf32>
    %485 = vector.broadcast %11 : vector<1x256xf32> to vector<4x256xf32>
    %486 = arith.mulf %484, %485 : vector<4x256xf32>
    %c239_i32_166 = arith.constant 239 : i32
    %487 = tpu.dynamic_rotate %463 by %c239_i32_166 dim 1 : vector<4x256xf32>, i32 -> vector<4x256xf32>
    %488 = vector.broadcast %12 : vector<1x256xf32> to vector<4x256xf32>
    %489 = arith.mulf %487, %488 : vector<4x256xf32>
    %490 = tpu.concatenate %466, %469, %472, %475, %477, %480, %483, %486, %489 in 0 : vector<4x256xf32>, vector<4x256xf32>, vector<4x256xf32>, vector<4x256xf32>, vector<4x256xf32>, vector<4x256xf32>, vector<4x256xf32>, vector<4x256xf32>, vector<4x256xf32> -> vector<36x256xf32>
    %c17_i32_167 = arith.constant 17 : i32
    %491 = tpu.dynamic_rotate %458 by %c17_i32_167 dim 1 : vector<4x256xf32>, i32 -> vector<4x256xf32>
    %492 = vector.broadcast %4 : vector<1x256xf32> to vector<4x256xf32>
    %493 = arith.mulf %491, %492 : vector<4x256xf32>
    %c16_i32_168 = arith.constant 16 : i32
    %494 = tpu.dynamic_rotate %458 by %c16_i32_168 dim 1 : vector<4x256xf32>, i32 -> vector<4x256xf32>
    %495 = vector.broadcast %5 : vector<1x256xf32> to vector<4x256xf32>
    %496 = arith.mulf %494, %495 : vector<4x256xf32>
    %c15_i32_169 = arith.constant 15 : i32
    %497 = tpu.dynamic_rotate %458 by %c15_i32_169 dim 1 : vector<4x256xf32>, i32 -> vector<4x256xf32>
    %498 = vector.broadcast %6 : vector<1x256xf32> to vector<4x256xf32>
    %499 = arith.mulf %497, %498 : vector<4x256xf32>
    %c1_i32_170 = arith.constant 1 : i32
    %500 = tpu.dynamic_rotate %458 by %c1_i32_170 dim 1 : vector<4x256xf32>, i32 -> vector<4x256xf32>
    %501 = vector.broadcast %7 : vector<1x256xf32> to vector<4x256xf32>
    %502 = arith.mulf %500, %501 : vector<4x256xf32>
    %503 = vector.broadcast %8 : vector<1x256xf32> to vector<4x256xf32>
    %504 = arith.mulf %458, %503 : vector<4x256xf32>
    %c255_i32_171 = arith.constant 255 : i32
    %505 = tpu.dynamic_rotate %458 by %c255_i32_171 dim 1 : vector<4x256xf32>, i32 -> vector<4x256xf32>
    %506 = vector.broadcast %9 : vector<1x256xf32> to vector<4x256xf32>
    %507 = arith.mulf %505, %506 : vector<4x256xf32>
    %c241_i32_172 = arith.constant 241 : i32
    %508 = tpu.dynamic_rotate %458 by %c241_i32_172 dim 1 : vector<4x256xf32>, i32 -> vector<4x256xf32>
    %509 = vector.broadcast %10 : vector<1x256xf32> to vector<4x256xf32>
    %510 = arith.mulf %508, %509 : vector<4x256xf32>
    %c240_i32_173 = arith.constant 240 : i32
    %511 = tpu.dynamic_rotate %458 by %c240_i32_173 dim 1 : vector<4x256xf32>, i32 -> vector<4x256xf32>
    %512 = vector.broadcast %11 : vector<1x256xf32> to vector<4x256xf32>
    %513 = arith.mulf %511, %512 : vector<4x256xf32>
    %c239_i32_174 = arith.constant 239 : i32
    %514 = tpu.dynamic_rotate %458 by %c239_i32_174 dim 1 : vector<4x256xf32>, i32 -> vector<4x256xf32>
    %515 = vector.broadcast %12 : vector<1x256xf32> to vector<4x256xf32>
    %516 = arith.mulf %514, %515 : vector<4x256xf32>
    %517 = tpu.concatenate %493, %496, %499, %502, %504, %507, %510, %513, %516 in 0 : vector<4x256xf32>, vector<4x256xf32>, vector<4x256xf32>, vector<4x256xf32>, vector<4x256xf32>, vector<4x256xf32>, vector<4x256xf32>, vector<4x256xf32>, vector<4x256xf32> -> vector<36x256xf32>
    %cst_175 = arith.constant dense<0.000000e+00> : vector<12x256xf32>
    %518 = tpu.matmul %13, %490, %cst_175 {dimension_numbers = #tpu.dot_dimension_numbers<[1], [0], [0], [1], [0, 0, 1, 1], [], []>} : vector<12x36xf32>, vector<36x256xf32>, vector<12x256xf32> -> vector<12x256xf32>
    %519 = vector.broadcast %14 : vector<12x1xf32> to vector<12x256xf32>
    %520 = arith.addf %518, %519 : vector<12x256xf32>
    %521 = vector.extract_strided_slice %520 {offsets = [0, 0], sizes = [8, 256], strides = [1, 1]} : vector<12x256xf32> to vector<8x256xf32>
    %cst_176 = arith.constant dense<0.000000e+00> : vector<8x256xf32>
    %522 = tpu.matmul %15, %517, %cst_176 {dimension_numbers = #tpu.dot_dimension_numbers<[1], [0], [0], [1], [0, 0, 1, 1], [], []>} : vector<8x36xf32>, vector<36x256xf32>, vector<8x256xf32> -> vector<8x256xf32>
    %523 = arith.addf %521, %522 : vector<8x256xf32>
    %cst_177 = arith.constant 0.000000e+00 : f32
    %524 = vector.broadcast %cst_177 : f32 to vector<8x256xf32>
    %525 = arith.subf %524, %523 : vector<8x256xf32>
    %526 = math.exp %525 : vector<8x256xf32>
    %cst_178 = arith.constant 1.000000e+00 : f32
    %527 = vector.broadcast %cst_178 : f32 to vector<8x256xf32>
    %528 = arith.addf %527, %526 : vector<8x256xf32>
    %cst_179 = arith.constant 1.000000e+00 : f32
    %529 = vector.broadcast %cst_179 : f32 to vector<8x256xf32>
    %530 = arith.divf %529, %528 : vector<8x256xf32>
    %531 = vector.extract_strided_slice %530 {offsets = [0, 0], sizes = [4, 256], strides = [1, 1]} : vector<8x256xf32> to vector<4x256xf32>
    %532 = vector.extract_strided_slice %530 {offsets = [4, 0], sizes = [4, 256], strides = [1, 1]} : vector<8x256xf32> to vector<4x256xf32>
    %533 = arith.mulf %531, %458 : vector<4x256xf32>
    %c17_i32_180 = arith.constant 17 : i32
    %534 = tpu.dynamic_rotate %533 by %c17_i32_180 dim 1 : vector<4x256xf32>, i32 -> vector<4x256xf32>
    %535 = vector.broadcast %4 : vector<1x256xf32> to vector<4x256xf32>
    %536 = arith.mulf %534, %535 : vector<4x256xf32>
    %c16_i32_181 = arith.constant 16 : i32
    %537 = tpu.dynamic_rotate %533 by %c16_i32_181 dim 1 : vector<4x256xf32>, i32 -> vector<4x256xf32>
    %538 = vector.broadcast %5 : vector<1x256xf32> to vector<4x256xf32>
    %539 = arith.mulf %537, %538 : vector<4x256xf32>
    %c15_i32_182 = arith.constant 15 : i32
    %540 = tpu.dynamic_rotate %533 by %c15_i32_182 dim 1 : vector<4x256xf32>, i32 -> vector<4x256xf32>
    %541 = vector.broadcast %6 : vector<1x256xf32> to vector<4x256xf32>
    %542 = arith.mulf %540, %541 : vector<4x256xf32>
    %c1_i32_183 = arith.constant 1 : i32
    %543 = tpu.dynamic_rotate %533 by %c1_i32_183 dim 1 : vector<4x256xf32>, i32 -> vector<4x256xf32>
    %544 = vector.broadcast %7 : vector<1x256xf32> to vector<4x256xf32>
    %545 = arith.mulf %543, %544 : vector<4x256xf32>
    %546 = vector.broadcast %8 : vector<1x256xf32> to vector<4x256xf32>
    %547 = arith.mulf %533, %546 : vector<4x256xf32>
    %c255_i32_184 = arith.constant 255 : i32
    %548 = tpu.dynamic_rotate %533 by %c255_i32_184 dim 1 : vector<4x256xf32>, i32 -> vector<4x256xf32>
    %549 = vector.broadcast %9 : vector<1x256xf32> to vector<4x256xf32>
    %550 = arith.mulf %548, %549 : vector<4x256xf32>
    %c241_i32_185 = arith.constant 241 : i32
    %551 = tpu.dynamic_rotate %533 by %c241_i32_185 dim 1 : vector<4x256xf32>, i32 -> vector<4x256xf32>
    %552 = vector.broadcast %10 : vector<1x256xf32> to vector<4x256xf32>
    %553 = arith.mulf %551, %552 : vector<4x256xf32>
    %c240_i32_186 = arith.constant 240 : i32
    %554 = tpu.dynamic_rotate %533 by %c240_i32_186 dim 1 : vector<4x256xf32>, i32 -> vector<4x256xf32>
    %555 = vector.broadcast %11 : vector<1x256xf32> to vector<4x256xf32>
    %556 = arith.mulf %554, %555 : vector<4x256xf32>
    %c239_i32_187 = arith.constant 239 : i32
    %557 = tpu.dynamic_rotate %533 by %c239_i32_187 dim 1 : vector<4x256xf32>, i32 -> vector<4x256xf32>
    %558 = vector.broadcast %12 : vector<1x256xf32> to vector<4x256xf32>
    %559 = arith.mulf %557, %558 : vector<4x256xf32>
    %560 = tpu.concatenate %536, %539, %542, %545, %547, %550, %553, %556, %559 in 0 : vector<4x256xf32>, vector<4x256xf32>, vector<4x256xf32>, vector<4x256xf32>, vector<4x256xf32>, vector<4x256xf32>, vector<4x256xf32>, vector<4x256xf32>, vector<4x256xf32> -> vector<36x256xf32>
    %561 = vector.extract_strided_slice %520 {offsets = [8, 0], sizes = [4, 256], strides = [1, 1]} : vector<12x256xf32> to vector<4x256xf32>
    %cst_188 = arith.constant dense<0.000000e+00> : vector<4x256xf32>
    %562 = tpu.matmul %16, %560, %cst_188 {dimension_numbers = #tpu.dot_dimension_numbers<[1], [0], [0], [1], [0, 0, 1, 1], [], []>} : vector<4x36xf32>, vector<36x256xf32>, vector<4x256xf32> -> vector<4x256xf32>
    %563 = arith.addf %561, %562 : vector<4x256xf32>
    %564 = math.tanh %563 : vector<4x256xf32>
    %cst_189 = arith.constant 1.000000e+00 : f32
    %565 = vector.broadcast %cst_189 : f32 to vector<4x256xf32>
    %566 = arith.subf %565, %532 : vector<4x256xf32>
    %567 = arith.mulf %566, %458 : vector<4x256xf32>
    %568 = arith.mulf %532, %564 : vector<4x256xf32>
    %569 = arith.addf %567, %568 : vector<4x256xf32>
    %c0_190 = arith.constant 0 : index
    %c4_191 = arith.constant 4 : index
    %c0_192 = arith.constant 0 : index
    %c0_193 = arith.constant 0 : index
    %570 = vector.load %arg9[%c0_190, %c4_191, %c0_192, %c0_193] : memref<1x8x4x256xf32, #tpu.memory_space<vmem>>, vector<1x1x4x256xf32>
    %571 = vector.shape_cast %570 : vector<1x1x4x256xf32> to vector<4x256xf32>
    %572 = vector.shape_cast %569 : vector<4x256xf32> to vector<1x1x4x256xf32>
    tpu.vector_store %arg9[%c0_190, %c4_191, %c0_192, %c0_193], %572 {strides = array<i32>} : memref<1x8x4x256xf32, #tpu.memory_space<vmem>>, vector<1x1x4x256xf32>,
    %c0_194 = arith.constant 0 : index
    %c5 = arith.constant 5 : index
    %c0_195 = arith.constant 0 : index
    %c0_196 = arith.constant 0 : index
    %573 = vector.load %arg2[%c0_194, %c5, %c0_195, %c0_196] : memref<1x8x4x256xf32, #tpu.memory_space<vmem>>, vector<1x1x4x256xf32>
    %574 = vector.shape_cast %573 : vector<1x1x4x256xf32> to vector<4x256xf32>
    %c17_i32_197 = arith.constant 17 : i32
    %575 = tpu.dynamic_rotate %574 by %c17_i32_197 dim 1 : vector<4x256xf32>, i32 -> vector<4x256xf32>
    %576 = vector.broadcast %4 : vector<1x256xf32> to vector<4x256xf32>
    %577 = arith.mulf %575, %576 : vector<4x256xf32>
    %c16_i32_198 = arith.constant 16 : i32
    %578 = tpu.dynamic_rotate %574 by %c16_i32_198 dim 1 : vector<4x256xf32>, i32 -> vector<4x256xf32>
    %579 = vector.broadcast %5 : vector<1x256xf32> to vector<4x256xf32>
    %580 = arith.mulf %578, %579 : vector<4x256xf32>
    %c15_i32_199 = arith.constant 15 : i32
    %581 = tpu.dynamic_rotate %574 by %c15_i32_199 dim 1 : vector<4x256xf32>, i32 -> vector<4x256xf32>
    %582 = vector.broadcast %6 : vector<1x256xf32> to vector<4x256xf32>
    %583 = arith.mulf %581, %582 : vector<4x256xf32>
    %c1_i32_200 = arith.constant 1 : i32
    %584 = tpu.dynamic_rotate %574 by %c1_i32_200 dim 1 : vector<4x256xf32>, i32 -> vector<4x256xf32>
    %585 = vector.broadcast %7 : vector<1x256xf32> to vector<4x256xf32>
    %586 = arith.mulf %584, %585 : vector<4x256xf32>
    %587 = vector.broadcast %8 : vector<1x256xf32> to vector<4x256xf32>
    %588 = arith.mulf %574, %587 : vector<4x256xf32>
    %c255_i32_201 = arith.constant 255 : i32
    %589 = tpu.dynamic_rotate %574 by %c255_i32_201 dim 1 : vector<4x256xf32>, i32 -> vector<4x256xf32>
    %590 = vector.broadcast %9 : vector<1x256xf32> to vector<4x256xf32>
    %591 = arith.mulf %589, %590 : vector<4x256xf32>
    %c241_i32_202 = arith.constant 241 : i32
    %592 = tpu.dynamic_rotate %574 by %c241_i32_202 dim 1 : vector<4x256xf32>, i32 -> vector<4x256xf32>
    %593 = vector.broadcast %10 : vector<1x256xf32> to vector<4x256xf32>
    %594 = arith.mulf %592, %593 : vector<4x256xf32>
    %c240_i32_203 = arith.constant 240 : i32
    %595 = tpu.dynamic_rotate %574 by %c240_i32_203 dim 1 : vector<4x256xf32>, i32 -> vector<4x256xf32>
    %596 = vector.broadcast %11 : vector<1x256xf32> to vector<4x256xf32>
    %597 = arith.mulf %595, %596 : vector<4x256xf32>
    %c239_i32_204 = arith.constant 239 : i32
    %598 = tpu.dynamic_rotate %574 by %c239_i32_204 dim 1 : vector<4x256xf32>, i32 -> vector<4x256xf32>
    %599 = vector.broadcast %12 : vector<1x256xf32> to vector<4x256xf32>
    %600 = arith.mulf %598, %599 : vector<4x256xf32>
    %601 = tpu.concatenate %577, %580, %583, %586, %588, %591, %594, %597, %600 in 0 : vector<4x256xf32>, vector<4x256xf32>, vector<4x256xf32>, vector<4x256xf32>, vector<4x256xf32>, vector<4x256xf32>, vector<4x256xf32>, vector<4x256xf32>, vector<4x256xf32> -> vector<36x256xf32>
    %c17_i32_205 = arith.constant 17 : i32
    %602 = tpu.dynamic_rotate %569 by %c17_i32_205 dim 1 : vector<4x256xf32>, i32 -> vector<4x256xf32>
    %603 = vector.broadcast %4 : vector<1x256xf32> to vector<4x256xf32>
    %604 = arith.mulf %602, %603 : vector<4x256xf32>
    %c16_i32_206 = arith.constant 16 : i32
    %605 = tpu.dynamic_rotate %569 by %c16_i32_206 dim 1 : vector<4x256xf32>, i32 -> vector<4x256xf32>
    %606 = vector.broadcast %5 : vector<1x256xf32> to vector<4x256xf32>
    %607 = arith.mulf %605, %606 : vector<4x256xf32>
    %c15_i32_207 = arith.constant 15 : i32
    %608 = tpu.dynamic_rotate %569 by %c15_i32_207 dim 1 : vector<4x256xf32>, i32 -> vector<4x256xf32>
    %609 = vector.broadcast %6 : vector<1x256xf32> to vector<4x256xf32>
    %610 = arith.mulf %608, %609 : vector<4x256xf32>
    %c1_i32_208 = arith.constant 1 : i32
    %611 = tpu.dynamic_rotate %569 by %c1_i32_208 dim 1 : vector<4x256xf32>, i32 -> vector<4x256xf32>
    %612 = vector.broadcast %7 : vector<1x256xf32> to vector<4x256xf32>
    %613 = arith.mulf %611, %612 : vector<4x256xf32>
    %614 = vector.broadcast %8 : vector<1x256xf32> to vector<4x256xf32>
    %615 = arith.mulf %569, %614 : vector<4x256xf32>
    %c255_i32_209 = arith.constant 255 : i32
    %616 = tpu.dynamic_rotate %569 by %c255_i32_209 dim 1 : vector<4x256xf32>, i32 -> vector<4x256xf32>
    %617 = vector.broadcast %9 : vector<1x256xf32> to vector<4x256xf32>
    %618 = arith.mulf %616, %617 : vector<4x256xf32>
    %c241_i32_210 = arith.constant 241 : i32
    %619 = tpu.dynamic_rotate %569 by %c241_i32_210 dim 1 : vector<4x256xf32>, i32 -> vector<4x256xf32>
    %620 = vector.broadcast %10 : vector<1x256xf32> to vector<4x256xf32>
    %621 = arith.mulf %619, %620 : vector<4x256xf32>
    %c240_i32_211 = arith.constant 240 : i32
    %622 = tpu.dynamic_rotate %569 by %c240_i32_211 dim 1 : vector<4x256xf32>, i32 -> vector<4x256xf32>
    %623 = vector.broadcast %11 : vector<1x256xf32> to vector<4x256xf32>
    %624 = arith.mulf %622, %623 : vector<4x256xf32>
    %c239_i32_212 = arith.constant 239 : i32
    %625 = tpu.dynamic_rotate %569 by %c239_i32_212 dim 1 : vector<4x256xf32>, i32 -> vector<4x256xf32>
    %626 = vector.broadcast %12 : vector<1x256xf32> to vector<4x256xf32>
    %627 = arith.mulf %625, %626 : vector<4x256xf32>
    %628 = tpu.concatenate %604, %607, %610, %613, %615, %618, %621, %624, %627 in 0 : vector<4x256xf32>, vector<4x256xf32>, vector<4x256xf32>, vector<4x256xf32>, vector<4x256xf32>, vector<4x256xf32>, vector<4x256xf32>, vector<4x256xf32>, vector<4x256xf32> -> vector<36x256xf32>
    %cst_213 = arith.constant dense<0.000000e+00> : vector<12x256xf32>
    %629 = tpu.matmul %13, %601, %cst_213 {dimension_numbers = #tpu.dot_dimension_numbers<[1], [0], [0], [1], [0, 0, 1, 1], [], []>} : vector<12x36xf32>, vector<36x256xf32>, vector<12x256xf32> -> vector<12x256xf32>
    %630 = vector.broadcast %14 : vector<12x1xf32> to vector<12x256xf32>
    %631 = arith.addf %629, %630 : vector<12x256xf32>
    %632 = vector.extract_strided_slice %631 {offsets = [0, 0], sizes = [8, 256], strides = [1, 1]} : vector<12x256xf32> to vector<8x256xf32>
    %cst_214 = arith.constant dense<0.000000e+00> : vector<8x256xf32>
    %633 = tpu.matmul %15, %628, %cst_214 {dimension_numbers = #tpu.dot_dimension_numbers<[1], [0], [0], [1], [0, 0, 1, 1], [], []>} : vector<8x36xf32>, vector<36x256xf32>, vector<8x256xf32> -> vector<8x256xf32>
    %634 = arith.addf %632, %633 : vector<8x256xf32>
    %cst_215 = arith.constant 0.000000e+00 : f32
    %635 = vector.broadcast %cst_215 : f32 to vector<8x256xf32>
    %636 = arith.subf %635, %634 : vector<8x256xf32>
    %637 = math.exp %636 : vector<8x256xf32>
    %cst_216 = arith.constant 1.000000e+00 : f32
    %638 = vector.broadcast %cst_216 : f32 to vector<8x256xf32>
    %639 = arith.addf %638, %637 : vector<8x256xf32>
    %cst_217 = arith.constant 1.000000e+00 : f32
    %640 = vector.broadcast %cst_217 : f32 to vector<8x256xf32>
    %641 = arith.divf %640, %639 : vector<8x256xf32>
    %642 = vector.extract_strided_slice %641 {offsets = [0, 0], sizes = [4, 256], strides = [1, 1]} : vector<8x256xf32> to vector<4x256xf32>
    %643 = vector.extract_strided_slice %641 {offsets = [4, 0], sizes = [4, 256], strides = [1, 1]} : vector<8x256xf32> to vector<4x256xf32>
    %644 = arith.mulf %642, %569 : vector<4x256xf32>
    %c17_i32_218 = arith.constant 17 : i32
    %645 = tpu.dynamic_rotate %644 by %c17_i32_218 dim 1 : vector<4x256xf32>, i32 -> vector<4x256xf32>
    %646 = vector.broadcast %4 : vector<1x256xf32> to vector<4x256xf32>
    %647 = arith.mulf %645, %646 : vector<4x256xf32>
    %c16_i32_219 = arith.constant 16 : i32
    %648 = tpu.dynamic_rotate %644 by %c16_i32_219 dim 1 : vector<4x256xf32>, i32 -> vector<4x256xf32>
    %649 = vector.broadcast %5 : vector<1x256xf32> to vector<4x256xf32>
    %650 = arith.mulf %648, %649 : vector<4x256xf32>
    %c15_i32_220 = arith.constant 15 : i32
    %651 = tpu.dynamic_rotate %644 by %c15_i32_220 dim 1 : vector<4x256xf32>, i32 -> vector<4x256xf32>
    %652 = vector.broadcast %6 : vector<1x256xf32> to vector<4x256xf32>
    %653 = arith.mulf %651, %652 : vector<4x256xf32>
    %c1_i32_221 = arith.constant 1 : i32
    %654 = tpu.dynamic_rotate %644 by %c1_i32_221 dim 1 : vector<4x256xf32>, i32 -> vector<4x256xf32>
    %655 = vector.broadcast %7 : vector<1x256xf32> to vector<4x256xf32>
    %656 = arith.mulf %654, %655 : vector<4x256xf32>
    %657 = vector.broadcast %8 : vector<1x256xf32> to vector<4x256xf32>
    %658 = arith.mulf %644, %657 : vector<4x256xf32>
    %c255_i32_222 = arith.constant 255 : i32
    %659 = tpu.dynamic_rotate %644 by %c255_i32_222 dim 1 : vector<4x256xf32>, i32 -> vector<4x256xf32>
    %660 = vector.broadcast %9 : vector<1x256xf32> to vector<4x256xf32>
    %661 = arith.mulf %659, %660 : vector<4x256xf32>
    %c241_i32_223 = arith.constant 241 : i32
    %662 = tpu.dynamic_rotate %644 by %c241_i32_223 dim 1 : vector<4x256xf32>, i32 -> vector<4x256xf32>
    %663 = vector.broadcast %10 : vector<1x256xf32> to vector<4x256xf32>
    %664 = arith.mulf %662, %663 : vector<4x256xf32>
    %c240_i32_224 = arith.constant 240 : i32
    %665 = tpu.dynamic_rotate %644 by %c240_i32_224 dim 1 : vector<4x256xf32>, i32 -> vector<4x256xf32>
    %666 = vector.broadcast %11 : vector<1x256xf32> to vector<4x256xf32>
    %667 = arith.mulf %665, %666 : vector<4x256xf32>
    %c239_i32_225 = arith.constant 239 : i32
    %668 = tpu.dynamic_rotate %644 by %c239_i32_225 dim 1 : vector<4x256xf32>, i32 -> vector<4x256xf32>
    %669 = vector.broadcast %12 : vector<1x256xf32> to vector<4x256xf32>
    %670 = arith.mulf %668, %669 : vector<4x256xf32>
    %671 = tpu.concatenate %647, %650, %653, %656, %658, %661, %664, %667, %670 in 0 : vector<4x256xf32>, vector<4x256xf32>, vector<4x256xf32>, vector<4x256xf32>, vector<4x256xf32>, vector<4x256xf32>, vector<4x256xf32>, vector<4x256xf32>, vector<4x256xf32> -> vector<36x256xf32>
    %672 = vector.extract_strided_slice %631 {offsets = [8, 0], sizes = [4, 256], strides = [1, 1]} : vector<12x256xf32> to vector<4x256xf32>
    %cst_226 = arith.constant dense<0.000000e+00> : vector<4x256xf32>
    %673 = tpu.matmul %16, %671, %cst_226 {dimension_numbers = #tpu.dot_dimension_numbers<[1], [0], [0], [1], [0, 0, 1, 1], [], []>} : vector<4x36xf32>, vector<36x256xf32>, vector<4x256xf32> -> vector<4x256xf32>
    %674 = arith.addf %672, %673 : vector<4x256xf32>
    %675 = math.tanh %674 : vector<4x256xf32>
    %cst_227 = arith.constant 1.000000e+00 : f32
    %676 = vector.broadcast %cst_227 : f32 to vector<4x256xf32>
    %677 = arith.subf %676, %643 : vector<4x256xf32>
    %678 = arith.mulf %677, %569 : vector<4x256xf32>
    %679 = arith.mulf %643, %675 : vector<4x256xf32>
    %680 = arith.addf %678, %679 : vector<4x256xf32>
    %c0_228 = arith.constant 0 : index
    %c5_229 = arith.constant 5 : index
    %c0_230 = arith.constant 0 : index
    %c0_231 = arith.constant 0 : index
    %681 = vector.load %arg9[%c0_228, %c5_229, %c0_230, %c0_231] : memref<1x8x4x256xf32, #tpu.memory_space<vmem>>, vector<1x1x4x256xf32>
    %682 = vector.shape_cast %681 : vector<1x1x4x256xf32> to vector<4x256xf32>
    %683 = vector.shape_cast %680 : vector<4x256xf32> to vector<1x1x4x256xf32>
    tpu.vector_store %arg9[%c0_228, %c5_229, %c0_230, %c0_231], %683 {strides = array<i32>} : memref<1x8x4x256xf32, #tpu.memory_space<vmem>>, vector<1x1x4x256xf32>,
    %c0_232 = arith.constant 0 : index
    %c6 = arith.constant 6 : index
    %c0_233 = arith.constant 0 : index
    %c0_234 = arith.constant 0 : index
    %684 = vector.load %arg2[%c0_232, %c6, %c0_233, %c0_234] : memref<1x8x4x256xf32, #tpu.memory_space<vmem>>, vector<1x1x4x256xf32>
    %685 = vector.shape_cast %684 : vector<1x1x4x256xf32> to vector<4x256xf32>
    %c17_i32_235 = arith.constant 17 : i32
    %686 = tpu.dynamic_rotate %685 by %c17_i32_235 dim 1 : vector<4x256xf32>, i32 -> vector<4x256xf32>
    %687 = vector.broadcast %4 : vector<1x256xf32> to vector<4x256xf32>
    %688 = arith.mulf %686, %687 : vector<4x256xf32>
    %c16_i32_236 = arith.constant 16 : i32
    %689 = tpu.dynamic_rotate %685 by %c16_i32_236 dim 1 : vector<4x256xf32>, i32 -> vector<4x256xf32>
    %690 = vector.broadcast %5 : vector<1x256xf32> to vector<4x256xf32>
    %691 = arith.mulf %689, %690 : vector<4x256xf32>
    %c15_i32_237 = arith.constant 15 : i32
    %692 = tpu.dynamic_rotate %685 by %c15_i32_237 dim 1 : vector<4x256xf32>, i32 -> vector<4x256xf32>
    %693 = vector.broadcast %6 : vector<1x256xf32> to vector<4x256xf32>
    %694 = arith.mulf %692, %693 : vector<4x256xf32>
    %c1_i32_238 = arith.constant 1 : i32
    %695 = tpu.dynamic_rotate %685 by %c1_i32_238 dim 1 : vector<4x256xf32>, i32 -> vector<4x256xf32>
    %696 = vector.broadcast %7 : vector<1x256xf32> to vector<4x256xf32>
    %697 = arith.mulf %695, %696 : vector<4x256xf32>
    %698 = vector.broadcast %8 : vector<1x256xf32> to vector<4x256xf32>
    %699 = arith.mulf %685, %698 : vector<4x256xf32>
    %c255_i32_239 = arith.constant 255 : i32
    %700 = tpu.dynamic_rotate %685 by %c255_i32_239 dim 1 : vector<4x256xf32>, i32 -> vector<4x256xf32>
    %701 = vector.broadcast %9 : vector<1x256xf32> to vector<4x256xf32>
    %702 = arith.mulf %700, %701 : vector<4x256xf32>
    %c241_i32_240 = arith.constant 241 : i32
    %703 = tpu.dynamic_rotate %685 by %c241_i32_240 dim 1 : vector<4x256xf32>, i32 -> vector<4x256xf32>
    %704 = vector.broadcast %10 : vector<1x256xf32> to vector<4x256xf32>
    %705 = arith.mulf %703, %704 : vector<4x256xf32>
    %c240_i32_241 = arith.constant 240 : i32
    %706 = tpu.dynamic_rotate %685 by %c240_i32_241 dim 1 : vector<4x256xf32>, i32 -> vector<4x256xf32>
    %707 = vector.broadcast %11 : vector<1x256xf32> to vector<4x256xf32>
    %708 = arith.mulf %706, %707 : vector<4x256xf32>
    %c239_i32_242 = arith.constant 239 : i32
    %709 = tpu.dynamic_rotate %685 by %c239_i32_242 dim 1 : vector<4x256xf32>, i32 -> vector<4x256xf32>
    %710 = vector.broadcast %12 : vector<1x256xf32> to vector<4x256xf32>
    %711 = arith.mulf %709, %710 : vector<4x256xf32>
    %712 = tpu.concatenate %688, %691, %694, %697, %699, %702, %705, %708, %711 in 0 : vector<4x256xf32>, vector<4x256xf32>, vector<4x256xf32>, vector<4x256xf32>, vector<4x256xf32>, vector<4x256xf32>, vector<4x256xf32>, vector<4x256xf32>, vector<4x256xf32> -> vector<36x256xf32>
    %c17_i32_243 = arith.constant 17 : i32
    %713 = tpu.dynamic_rotate %680 by %c17_i32_243 dim 1 : vector<4x256xf32>, i32 -> vector<4x256xf32>
    %714 = vector.broadcast %4 : vector<1x256xf32> to vector<4x256xf32>
    %715 = arith.mulf %713, %714 : vector<4x256xf32>
    %c16_i32_244 = arith.constant 16 : i32
    %716 = tpu.dynamic_rotate %680 by %c16_i32_244 dim 1 : vector<4x256xf32>, i32 -> vector<4x256xf32>
    %717 = vector.broadcast %5 : vector<1x256xf32> to vector<4x256xf32>
    %718 = arith.mulf %716, %717 : vector<4x256xf32>
    %c15_i32_245 = arith.constant 15 : i32
    %719 = tpu.dynamic_rotate %680 by %c15_i32_245 dim 1 : vector<4x256xf32>, i32 -> vector<4x256xf32>
    %720 = vector.broadcast %6 : vector<1x256xf32> to vector<4x256xf32>
    %721 = arith.mulf %719, %720 : vector<4x256xf32>
    %c1_i32_246 = arith.constant 1 : i32
    %722 = tpu.dynamic_rotate %680 by %c1_i32_246 dim 1 : vector<4x256xf32>, i32 -> vector<4x256xf32>
    %723 = vector.broadcast %7 : vector<1x256xf32> to vector<4x256xf32>
    %724 = arith.mulf %722, %723 : vector<4x256xf32>
    %725 = vector.broadcast %8 : vector<1x256xf32> to vector<4x256xf32>
    %726 = arith.mulf %680, %725 : vector<4x256xf32>
    %c255_i32_247 = arith.constant 255 : i32
    %727 = tpu.dynamic_rotate %680 by %c255_i32_247 dim 1 : vector<4x256xf32>, i32 -> vector<4x256xf32>
    %728 = vector.broadcast %9 : vector<1x256xf32> to vector<4x256xf32>
    %729 = arith.mulf %727, %728 : vector<4x256xf32>
    %c241_i32_248 = arith.constant 241 : i32
    %730 = tpu.dynamic_rotate %680 by %c241_i32_248 dim 1 : vector<4x256xf32>, i32 -> vector<4x256xf32>
    %731 = vector.broadcast %10 : vector<1x256xf32> to vector<4x256xf32>
    %732 = arith.mulf %730, %731 : vector<4x256xf32>
    %c240_i32_249 = arith.constant 240 : i32
    %733 = tpu.dynamic_rotate %680 by %c240_i32_249 dim 1 : vector<4x256xf32>, i32 -> vector<4x256xf32>
    %734 = vector.broadcast %11 : vector<1x256xf32> to vector<4x256xf32>
    %735 = arith.mulf %733, %734 : vector<4x256xf32>
    %c239_i32_250 = arith.constant 239 : i32
    %736 = tpu.dynamic_rotate %680 by %c239_i32_250 dim 1 : vector<4x256xf32>, i32 -> vector<4x256xf32>
    %737 = vector.broadcast %12 : vector<1x256xf32> to vector<4x256xf32>
    %738 = arith.mulf %736, %737 : vector<4x256xf32>
    %739 = tpu.concatenate %715, %718, %721, %724, %726, %729, %732, %735, %738 in 0 : vector<4x256xf32>, vector<4x256xf32>, vector<4x256xf32>, vector<4x256xf32>, vector<4x256xf32>, vector<4x256xf32>, vector<4x256xf32>, vector<4x256xf32>, vector<4x256xf32> -> vector<36x256xf32>
    %cst_251 = arith.constant dense<0.000000e+00> : vector<12x256xf32>
    %740 = tpu.matmul %13, %712, %cst_251 {dimension_numbers = #tpu.dot_dimension_numbers<[1], [0], [0], [1], [0, 0, 1, 1], [], []>} : vector<12x36xf32>, vector<36x256xf32>, vector<12x256xf32> -> vector<12x256xf32>
    %741 = vector.broadcast %14 : vector<12x1xf32> to vector<12x256xf32>
    %742 = arith.addf %740, %741 : vector<12x256xf32>
    %743 = vector.extract_strided_slice %742 {offsets = [0, 0], sizes = [8, 256], strides = [1, 1]} : vector<12x256xf32> to vector<8x256xf32>
    %cst_252 = arith.constant dense<0.000000e+00> : vector<8x256xf32>
    %744 = tpu.matmul %15, %739, %cst_252 {dimension_numbers = #tpu.dot_dimension_numbers<[1], [0], [0], [1], [0, 0, 1, 1], [], []>} : vector<8x36xf32>, vector<36x256xf32>, vector<8x256xf32> -> vector<8x256xf32>
    %745 = arith.addf %743, %744 : vector<8x256xf32>
    %cst_253 = arith.constant 0.000000e+00 : f32
    %746 = vector.broadcast %cst_253 : f32 to vector<8x256xf32>
    %747 = arith.subf %746, %745 : vector<8x256xf32>
    %748 = math.exp %747 : vector<8x256xf32>
    %cst_254 = arith.constant 1.000000e+00 : f32
    %749 = vector.broadcast %cst_254 : f32 to vector<8x256xf32>
    %750 = arith.addf %749, %748 : vector<8x256xf32>
    %cst_255 = arith.constant 1.000000e+00 : f32
    %751 = vector.broadcast %cst_255 : f32 to vector<8x256xf32>
    %752 = arith.divf %751, %750 : vector<8x256xf32>
    %753 = vector.extract_strided_slice %752 {offsets = [0, 0], sizes = [4, 256], strides = [1, 1]} : vector<8x256xf32> to vector<4x256xf32>
    %754 = vector.extract_strided_slice %752 {offsets = [4, 0], sizes = [4, 256], strides = [1, 1]} : vector<8x256xf32> to vector<4x256xf32>
    %755 = arith.mulf %753, %680 : vector<4x256xf32>
    %c17_i32_256 = arith.constant 17 : i32
    %756 = tpu.dynamic_rotate %755 by %c17_i32_256 dim 1 : vector<4x256xf32>, i32 -> vector<4x256xf32>
    %757 = vector.broadcast %4 : vector<1x256xf32> to vector<4x256xf32>
    %758 = arith.mulf %756, %757 : vector<4x256xf32>
    %c16_i32_257 = arith.constant 16 : i32
    %759 = tpu.dynamic_rotate %755 by %c16_i32_257 dim 1 : vector<4x256xf32>, i32 -> vector<4x256xf32>
    %760 = vector.broadcast %5 : vector<1x256xf32> to vector<4x256xf32>
    %761 = arith.mulf %759, %760 : vector<4x256xf32>
    %c15_i32_258 = arith.constant 15 : i32
    %762 = tpu.dynamic_rotate %755 by %c15_i32_258 dim 1 : vector<4x256xf32>, i32 -> vector<4x256xf32>
    %763 = vector.broadcast %6 : vector<1x256xf32> to vector<4x256xf32>
    %764 = arith.mulf %762, %763 : vector<4x256xf32>
    %c1_i32_259 = arith.constant 1 : i32
    %765 = tpu.dynamic_rotate %755 by %c1_i32_259 dim 1 : vector<4x256xf32>, i32 -> vector<4x256xf32>
    %766 = vector.broadcast %7 : vector<1x256xf32> to vector<4x256xf32>
    %767 = arith.mulf %765, %766 : vector<4x256xf32>
    %768 = vector.broadcast %8 : vector<1x256xf32> to vector<4x256xf32>
    %769 = arith.mulf %755, %768 : vector<4x256xf32>
    %c255_i32_260 = arith.constant 255 : i32
    %770 = tpu.dynamic_rotate %755 by %c255_i32_260 dim 1 : vector<4x256xf32>, i32 -> vector<4x256xf32>
    %771 = vector.broadcast %9 : vector<1x256xf32> to vector<4x256xf32>
    %772 = arith.mulf %770, %771 : vector<4x256xf32>
    %c241_i32_261 = arith.constant 241 : i32
    %773 = tpu.dynamic_rotate %755 by %c241_i32_261 dim 1 : vector<4x256xf32>, i32 -> vector<4x256xf32>
    %774 = vector.broadcast %10 : vector<1x256xf32> to vector<4x256xf32>
    %775 = arith.mulf %773, %774 : vector<4x256xf32>
    %c240_i32_262 = arith.constant 240 : i32
    %776 = tpu.dynamic_rotate %755 by %c240_i32_262 dim 1 : vector<4x256xf32>, i32 -> vector<4x256xf32>
    %777 = vector.broadcast %11 : vector<1x256xf32> to vector<4x256xf32>
    %778 = arith.mulf %776, %777 : vector<4x256xf32>
    %c239_i32_263 = arith.constant 239 : i32
    %779 = tpu.dynamic_rotate %755 by %c239_i32_263 dim 1 : vector<4x256xf32>, i32 -> vector<4x256xf32>
    %780 = vector.broadcast %12 : vector<1x256xf32> to vector<4x256xf32>
    %781 = arith.mulf %779, %780 : vector<4x256xf32>
    %782 = tpu.concatenate %758, %761, %764, %767, %769, %772, %775, %778, %781 in 0 : vector<4x256xf32>, vector<4x256xf32>, vector<4x256xf32>, vector<4x256xf32>, vector<4x256xf32>, vector<4x256xf32>, vector<4x256xf32>, vector<4x256xf32>, vector<4x256xf32> -> vector<36x256xf32>
    %783 = vector.extract_strided_slice %742 {offsets = [8, 0], sizes = [4, 256], strides = [1, 1]} : vector<12x256xf32> to vector<4x256xf32>
    %cst_264 = arith.constant dense<0.000000e+00> : vector<4x256xf32>
    %784 = tpu.matmul %16, %782, %cst_264 {dimension_numbers = #tpu.dot_dimension_numbers<[1], [0], [0], [1], [0, 0, 1, 1], [], []>} : vector<4x36xf32>, vector<36x256xf32>, vector<4x256xf32> -> vector<4x256xf32>
    %785 = arith.addf %783, %784 : vector<4x256xf32>
    %786 = math.tanh %785 : vector<4x256xf32>
    %cst_265 = arith.constant 1.000000e+00 : f32
    %787 = vector.broadcast %cst_265 : f32 to vector<4x256xf32>
    %788 = arith.subf %787, %754 : vector<4x256xf32>
    %789 = arith.mulf %788, %680 : vector<4x256xf32>
    %790 = arith.mulf %754, %786 : vector<4x256xf32>
    %791 = arith.addf %789, %790 : vector<4x256xf32>
    %c0_266 = arith.constant 0 : index
    %c6_267 = arith.constant 6 : index
    %c0_268 = arith.constant 0 : index
    %c0_269 = arith.constant 0 : index
    %792 = vector.load %arg9[%c0_266, %c6_267, %c0_268, %c0_269] : memref<1x8x4x256xf32, #tpu.memory_space<vmem>>, vector<1x1x4x256xf32>
    %793 = vector.shape_cast %792 : vector<1x1x4x256xf32> to vector<4x256xf32>
    %794 = vector.shape_cast %791 : vector<4x256xf32> to vector<1x1x4x256xf32>
    tpu.vector_store %arg9[%c0_266, %c6_267, %c0_268, %c0_269], %794 {strides = array<i32>} : memref<1x8x4x256xf32, #tpu.memory_space<vmem>>, vector<1x1x4x256xf32>,
    %c0_270 = arith.constant 0 : index
    %c7 = arith.constant 7 : index
    %c0_271 = arith.constant 0 : index
    %c0_272 = arith.constant 0 : index
    %795 = vector.load %arg2[%c0_270, %c7, %c0_271, %c0_272] : memref<1x8x4x256xf32, #tpu.memory_space<vmem>>, vector<1x1x4x256xf32>
    %796 = vector.shape_cast %795 : vector<1x1x4x256xf32> to vector<4x256xf32>
    %c17_i32_273 = arith.constant 17 : i32
    %797 = tpu.dynamic_rotate %796 by %c17_i32_273 dim 1 : vector<4x256xf32>, i32 -> vector<4x256xf32>
    %798 = vector.broadcast %4 : vector<1x256xf32> to vector<4x256xf32>
    %799 = arith.mulf %797, %798 : vector<4x256xf32>
    %c16_i32_274 = arith.constant 16 : i32
    %800 = tpu.dynamic_rotate %796 by %c16_i32_274 dim 1 : vector<4x256xf32>, i32 -> vector<4x256xf32>
    %801 = vector.broadcast %5 : vector<1x256xf32> to vector<4x256xf32>
    %802 = arith.mulf %800, %801 : vector<4x256xf32>
    %c15_i32_275 = arith.constant 15 : i32
    %803 = tpu.dynamic_rotate %796 by %c15_i32_275 dim 1 : vector<4x256xf32>, i32 -> vector<4x256xf32>
    %804 = vector.broadcast %6 : vector<1x256xf32> to vector<4x256xf32>
    %805 = arith.mulf %803, %804 : vector<4x256xf32>
    %c1_i32_276 = arith.constant 1 : i32
    %806 = tpu.dynamic_rotate %796 by %c1_i32_276 dim 1 : vector<4x256xf32>, i32 -> vector<4x256xf32>
    %807 = vector.broadcast %7 : vector<1x256xf32> to vector<4x256xf32>
    %808 = arith.mulf %806, %807 : vector<4x256xf32>
    %809 = vector.broadcast %8 : vector<1x256xf32> to vector<4x256xf32>
    %810 = arith.mulf %796, %809 : vector<4x256xf32>
    %c255_i32_277 = arith.constant 255 : i32
    %811 = tpu.dynamic_rotate %796 by %c255_i32_277 dim 1 : vector<4x256xf32>, i32 -> vector<4x256xf32>
    %812 = vector.broadcast %9 : vector<1x256xf32> to vector<4x256xf32>
    %813 = arith.mulf %811, %812 : vector<4x256xf32>
    %c241_i32_278 = arith.constant 241 : i32
    %814 = tpu.dynamic_rotate %796 by %c241_i32_278 dim 1 : vector<4x256xf32>, i32 -> vector<4x256xf32>
    %815 = vector.broadcast %10 : vector<1x256xf32> to vector<4x256xf32>
    %816 = arith.mulf %814, %815 : vector<4x256xf32>
    %c240_i32_279 = arith.constant 240 : i32
    %817 = tpu.dynamic_rotate %796 by %c240_i32_279 dim 1 : vector<4x256xf32>, i32 -> vector<4x256xf32>
    %818 = vector.broadcast %11 : vector<1x256xf32> to vector<4x256xf32>
    %819 = arith.mulf %817, %818 : vector<4x256xf32>
    %c239_i32_280 = arith.constant 239 : i32
    %820 = tpu.dynamic_rotate %796 by %c239_i32_280 dim 1 : vector<4x256xf32>, i32 -> vector<4x256xf32>
    %821 = vector.broadcast %12 : vector<1x256xf32> to vector<4x256xf32>
    %822 = arith.mulf %820, %821 : vector<4x256xf32>
    %823 = tpu.concatenate %799, %802, %805, %808, %810, %813, %816, %819, %822 in 0 : vector<4x256xf32>, vector<4x256xf32>, vector<4x256xf32>, vector<4x256xf32>, vector<4x256xf32>, vector<4x256xf32>, vector<4x256xf32>, vector<4x256xf32>, vector<4x256xf32> -> vector<36x256xf32>
    %c17_i32_281 = arith.constant 17 : i32
    %824 = tpu.dynamic_rotate %791 by %c17_i32_281 dim 1 : vector<4x256xf32>, i32 -> vector<4x256xf32>
    %825 = vector.broadcast %4 : vector<1x256xf32> to vector<4x256xf32>
    %826 = arith.mulf %824, %825 : vector<4x256xf32>
    %c16_i32_282 = arith.constant 16 : i32
    %827 = tpu.dynamic_rotate %791 by %c16_i32_282 dim 1 : vector<4x256xf32>, i32 -> vector<4x256xf32>
    %828 = vector.broadcast %5 : vector<1x256xf32> to vector<4x256xf32>
    %829 = arith.mulf %827, %828 : vector<4x256xf32>
    %c15_i32_283 = arith.constant 15 : i32
    %830 = tpu.dynamic_rotate %791 by %c15_i32_283 dim 1 : vector<4x256xf32>, i32 -> vector<4x256xf32>
    %831 = vector.broadcast %6 : vector<1x256xf32> to vector<4x256xf32>
    %832 = arith.mulf %830, %831 : vector<4x256xf32>
    %c1_i32_284 = arith.constant 1 : i32
    %833 = tpu.dynamic_rotate %791 by %c1_i32_284 dim 1 : vector<4x256xf32>, i32 -> vector<4x256xf32>
    %834 = vector.broadcast %7 : vector<1x256xf32> to vector<4x256xf32>
    %835 = arith.mulf %833, %834 : vector<4x256xf32>
    %836 = vector.broadcast %8 : vector<1x256xf32> to vector<4x256xf32>
    %837 = arith.mulf %791, %836 : vector<4x256xf32>
    %c255_i32_285 = arith.constant 255 : i32
    %838 = tpu.dynamic_rotate %791 by %c255_i32_285 dim 1 : vector<4x256xf32>, i32 -> vector<4x256xf32>
    %839 = vector.broadcast %9 : vector<1x256xf32> to vector<4x256xf32>
    %840 = arith.mulf %838, %839 : vector<4x256xf32>
    %c241_i32_286 = arith.constant 241 : i32
    %841 = tpu.dynamic_rotate %791 by %c241_i32_286 dim 1 : vector<4x256xf32>, i32 -> vector<4x256xf32>
    %842 = vector.broadcast %10 : vector<1x256xf32> to vector<4x256xf32>
    %843 = arith.mulf %841, %842 : vector<4x256xf32>
    %c240_i32_287 = arith.constant 240 : i32
    %844 = tpu.dynamic_rotate %791 by %c240_i32_287 dim 1 : vector<4x256xf32>, i32 -> vector<4x256xf32>
    %845 = vector.broadcast %11 : vector<1x256xf32> to vector<4x256xf32>
    %846 = arith.mulf %844, %845 : vector<4x256xf32>
    %c239_i32_288 = arith.constant 239 : i32
    %847 = tpu.dynamic_rotate %791 by %c239_i32_288 dim 1 : vector<4x256xf32>, i32 -> vector<4x256xf32>
    %848 = vector.broadcast %12 : vector<1x256xf32> to vector<4x256xf32>
    %849 = arith.mulf %847, %848 : vector<4x256xf32>
    %850 = tpu.concatenate %826, %829, %832, %835, %837, %840, %843, %846, %849 in 0 : vector<4x256xf32>, vector<4x256xf32>, vector<4x256xf32>, vector<4x256xf32>, vector<4x256xf32>, vector<4x256xf32>, vector<4x256xf32>, vector<4x256xf32>, vector<4x256xf32> -> vector<36x256xf32>
    %cst_289 = arith.constant dense<0.000000e+00> : vector<12x256xf32>
    %851 = tpu.matmul %13, %823, %cst_289 {dimension_numbers = #tpu.dot_dimension_numbers<[1], [0], [0], [1], [0, 0, 1, 1], [], []>} : vector<12x36xf32>, vector<36x256xf32>, vector<12x256xf32> -> vector<12x256xf32>
    %852 = vector.broadcast %14 : vector<12x1xf32> to vector<12x256xf32>
    %853 = arith.addf %851, %852 : vector<12x256xf32>
    %854 = vector.extract_strided_slice %853 {offsets = [0, 0], sizes = [8, 256], strides = [1, 1]} : vector<12x256xf32> to vector<8x256xf32>
    %cst_290 = arith.constant dense<0.000000e+00> : vector<8x256xf32>
    %855 = tpu.matmul %15, %850, %cst_290 {dimension_numbers = #tpu.dot_dimension_numbers<[1], [0], [0], [1], [0, 0, 1, 1], [], []>} : vector<8x36xf32>, vector<36x256xf32>, vector<8x256xf32> -> vector<8x256xf32>
    %856 = arith.addf %854, %855 : vector<8x256xf32>
    %cst_291 = arith.constant 0.000000e+00 : f32
    %857 = vector.broadcast %cst_291 : f32 to vector<8x256xf32>
    %858 = arith.subf %857, %856 : vector<8x256xf32>
    %859 = math.exp %858 : vector<8x256xf32>
    %cst_292 = arith.constant 1.000000e+00 : f32
    %860 = vector.broadcast %cst_292 : f32 to vector<8x256xf32>
    %861 = arith.addf %860, %859 : vector<8x256xf32>
    %cst_293 = arith.constant 1.000000e+00 : f32
    %862 = vector.broadcast %cst_293 : f32 to vector<8x256xf32>
    %863 = arith.divf %862, %861 : vector<8x256xf32>
    %864 = vector.extract_strided_slice %863 {offsets = [0, 0], sizes = [4, 256], strides = [1, 1]} : vector<8x256xf32> to vector<4x256xf32>
    %865 = vector.extract_strided_slice %863 {offsets = [4, 0], sizes = [4, 256], strides = [1, 1]} : vector<8x256xf32> to vector<4x256xf32>
    %866 = arith.mulf %864, %791 : vector<4x256xf32>
    %c17_i32_294 = arith.constant 17 : i32
    %867 = tpu.dynamic_rotate %866 by %c17_i32_294 dim 1 : vector<4x256xf32>, i32 -> vector<4x256xf32>
    %868 = vector.broadcast %4 : vector<1x256xf32> to vector<4x256xf32>
    %869 = arith.mulf %867, %868 : vector<4x256xf32>
    %c16_i32_295 = arith.constant 16 : i32
    %870 = tpu.dynamic_rotate %866 by %c16_i32_295 dim 1 : vector<4x256xf32>, i32 -> vector<4x256xf32>
    %871 = vector.broadcast %5 : vector<1x256xf32> to vector<4x256xf32>
    %872 = arith.mulf %870, %871 : vector<4x256xf32>
    %c15_i32_296 = arith.constant 15 : i32
    %873 = tpu.dynamic_rotate %866 by %c15_i32_296 dim 1 : vector<4x256xf32>, i32 -> vector<4x256xf32>
    %874 = vector.broadcast %6 : vector<1x256xf32> to vector<4x256xf32>
    %875 = arith.mulf %873, %874 : vector<4x256xf32>
    %c1_i32_297 = arith.constant 1 : i32
    %876 = tpu.dynamic_rotate %866 by %c1_i32_297 dim 1 : vector<4x256xf32>, i32 -> vector<4x256xf32>
    %877 = vector.broadcast %7 : vector<1x256xf32> to vector<4x256xf32>
    %878 = arith.mulf %876, %877 : vector<4x256xf32>
    %879 = vector.broadcast %8 : vector<1x256xf32> to vector<4x256xf32>
    %880 = arith.mulf %866, %879 : vector<4x256xf32>
    %c255_i32_298 = arith.constant 255 : i32
    %881 = tpu.dynamic_rotate %866 by %c255_i32_298 dim 1 : vector<4x256xf32>, i32 -> vector<4x256xf32>
    %882 = vector.broadcast %9 : vector<1x256xf32> to vector<4x256xf32>
    %883 = arith.mulf %881, %882 : vector<4x256xf32>
    %c241_i32_299 = arith.constant 241 : i32
    %884 = tpu.dynamic_rotate %866 by %c241_i32_299 dim 1 : vector<4x256xf32>, i32 -> vector<4x256xf32>
    %885 = vector.broadcast %10 : vector<1x256xf32> to vector<4x256xf32>
    %886 = arith.mulf %884, %885 : vector<4x256xf32>
    %c240_i32_300 = arith.constant 240 : i32
    %887 = tpu.dynamic_rotate %866 by %c240_i32_300 dim 1 : vector<4x256xf32>, i32 -> vector<4x256xf32>
    %888 = vector.broadcast %11 : vector<1x256xf32> to vector<4x256xf32>
    %889 = arith.mulf %887, %888 : vector<4x256xf32>
    %c239_i32_301 = arith.constant 239 : i32
    %890 = tpu.dynamic_rotate %866 by %c239_i32_301 dim 1 : vector<4x256xf32>, i32 -> vector<4x256xf32>
    %891 = vector.broadcast %12 : vector<1x256xf32> to vector<4x256xf32>
    %892 = arith.mulf %890, %891 : vector<4x256xf32>
    %893 = tpu.concatenate %869, %872, %875, %878, %880, %883, %886, %889, %892 in 0 : vector<4x256xf32>, vector<4x256xf32>, vector<4x256xf32>, vector<4x256xf32>, vector<4x256xf32>, vector<4x256xf32>, vector<4x256xf32>, vector<4x256xf32>, vector<4x256xf32> -> vector<36x256xf32>
    %894 = vector.extract_strided_slice %853 {offsets = [8, 0], sizes = [4, 256], strides = [1, 1]} : vector<12x256xf32> to vector<4x256xf32>
    %cst_302 = arith.constant dense<0.000000e+00> : vector<4x256xf32>
    %895 = tpu.matmul %16, %893, %cst_302 {dimension_numbers = #tpu.dot_dimension_numbers<[1], [0], [0], [1], [0, 0, 1, 1], [], []>} : vector<4x36xf32>, vector<36x256xf32>, vector<4x256xf32> -> vector<4x256xf32>
    %896 = arith.addf %894, %895 : vector<4x256xf32>
    %897 = math.tanh %896 : vector<4x256xf32>
    %cst_303 = arith.constant 1.000000e+00 : f32
    %898 = vector.broadcast %cst_303 : f32 to vector<4x256xf32>
    %899 = arith.subf %898, %865 : vector<4x256xf32>
    %900 = arith.mulf %899, %791 : vector<4x256xf32>
    %901 = arith.mulf %865, %897 : vector<4x256xf32>
    %902 = arith.addf %900, %901 : vector<4x256xf32>
    %c0_304 = arith.constant 0 : index
    %c7_305 = arith.constant 7 : index
    %c0_306 = arith.constant 0 : index
    %c0_307 = arith.constant 0 : index
    %903 = vector.load %arg9[%c0_304, %c7_305, %c0_306, %c0_307] : memref<1x8x4x256xf32, #tpu.memory_space<vmem>>, vector<1x1x4x256xf32>
    %904 = vector.shape_cast %903 : vector<1x1x4x256xf32> to vector<4x256xf32>
    %905 = vector.shape_cast %902 : vector<4x256xf32> to vector<1x1x4x256xf32>
    tpu.vector_store %arg9[%c0_304, %c7_305, %c0_306, %c0_307], %905 {strides = array<i32>} : memref<1x8x4x256xf32, #tpu.memory_space<vmem>>, vector<1x1x4x256xf32>,
    %c0_308 = arith.constant 0 : index
    %c0_309 = arith.constant 0 : index
    %906 = vector.load %arg10[%c0_308, %c0_309] : memref<4x256xf32, #tpu.memory_space<vmem>>, vector<4x256xf32>
    tpu.vector_store %arg10[%c0_308, %c0_309], %902 {strides = array<i32>} : memref<4x256xf32, #tpu.memory_space<vmem>>, vector<4x256xf32>,
    return
  }
  func.func @transform_0(%arg0: i32, %arg1: i32) -> (i32, i32, i32, i32) {
    %c0_i32 = arith.constant 0 : i32
    %c0_i32_0 = arith.constant 0 : i32
    %c0_i32_1 = arith.constant 0 : i32
    return %arg0, %arg1, %c0_i32, %c0_i32_0 : i32, i32, i32, i32
  }
  func.func @transform_1(%arg0: i32, %arg1: i32) -> (i32, i32, i32) {
    %c0_i32 = arith.constant 0 : i32
    %c0_i32_0 = arith.constant 0 : i32
    %c0_i32_1 = arith.constant 0 : i32
    return %arg0, %c0_i32, %c0_i32_0 : i32, i32, i32
  }
  func.func @transform_2(%arg0: i32, %arg1: i32) -> (i32, i32) {
    %c0_i32 = arith.constant 0 : i32
    %c0_i32_0 = arith.constant 0 : i32
    %c0_i32_1 = arith.constant 0 : i32
    return %c0_i32, %c0_i32_0 : i32, i32
  }
  func.func @transform_3(%arg0: i32, %arg1: i32) -> (i32, i32) {
    %c0_i32 = arith.constant 0 : i32
    %c0_i32_0 = arith.constant 0 : i32
    %c0_i32_1 = arith.constant 0 : i32
    return %c0_i32, %c0_i32_0 : i32, i32
  }
  func.func @transform_4(%arg0: i32, %arg1: i32) -> (i32, i32) {
    %c0_i32 = arith.constant 0 : i32
    %c0_i32_0 = arith.constant 0 : i32
    %c0_i32_1 = arith.constant 0 : i32
    return %c0_i32, %c0_i32_0 : i32, i32
  }
  func.func @transform_5(%arg0: i32, %arg1: i32) -> (i32, i32) {
    %c0_i32 = arith.constant 0 : i32
    %c0_i32_0 = arith.constant 0 : i32
    %c0_i32_1 = arith.constant 0 : i32
    return %c0_i32, %c0_i32_0 : i32, i32
  }
  func.func @transform_6(%arg0: i32, %arg1: i32) -> (i32, i32) {
    %c0_i32 = arith.constant 0 : i32
    %c0_i32_0 = arith.constant 0 : i32
    %c0_i32_1 = arith.constant 0 : i32
    return %c0_i32, %c0_i32_0 : i32, i32
  }
  func.func @transform_7(%arg0: i32, %arg1: i32) -> (i32, i32, i32, i32) {
    %c0_i32 = arith.constant 0 : i32
    %c0_i32_0 = arith.constant 0 : i32
    %c0_i32_1 = arith.constant 0 : i32
    return %arg0, %arg1, %c0_i32, %c0_i32_0 : i32, i32, i32, i32
  }
}

</mosaic_0001>

<llo_original>
// kernel: tpu_custom_call.1
$region0: #{tpu_custom_call.1}
  #allocation0 [shape = 'u32[]', space=smem, size = 0x4, offset = 0x4, fixed_abs, tag = 'smem constant byte address 0x4 - core index']
  #allocation1 [shape = 'u32[144,128]{1,0:T(1,128)}', space=vmem, size = 0x12000, scoped, tag = 'internal scratch']
  #allocation2 [shape = 'f32[4,256]{1,0:T(4,128)}', space=vmem, size = 0x1000, scoped, tag = 'scratch operand']
  %s0 = inlined_call_operand.hbm [shape: f32[2,8,4,256], index: 0, kind: input, shape index: {}]
  %s1 = inlined_call_operand.hbm [shape: f32[2,4,256], index: 1, kind: input, shape index: {}]
  %s2 = inlined_call_operand.hbm [shape: f32[12,36], index: 2, kind: input, shape index: {}]
  %s3 = inlined_call_operand.vmem [shape: f32[12,1], index: 3, kind: input, shape index: {}]
  %s4 = inlined_call_operand.hbm [shape: f32[8,36], index: 4, kind: input, shape index: {}]
  %s5 = inlined_call_operand.vmem [shape: f32[4,36], index: 5, kind: input, shape index: {}]
  %s6 = inlined_call_operand.vmem [shape: f32[9,256], index: 6, kind: input, shape index: {}]
  %s7 = inlined_call_operand.hbm [shape: f32[2,8,4,256], index: 7, kind: output, shape index: {}]
  %s8 = sld [smem:[#allocation0]]
  $region81: #{tpu_custom_call.1} parent=0
    _
  %s10 = ssub.s32 1, %s8
  %s11 = scalar_select 0, %s10, %s8
  $region1: #{tpu_custom_call.1} parent=0
    #allocation3 [shape = 'u8[65536]{0}', space=vmem, size = 0x10000, scoped, tag = 'input window, operand 0']
    #allocation4 [shape = 's32[2]{0}', space=sflag, size = 0x8, scoped, tag = 'scoped memory for tpu_custom_call.1']
    #allocation5 [shape = 's32[2]{0}', space=sflag, size = 0x8, scoped, tag = 'scoped memory for tpu_custom_call.1']
    #allocation6 [shape = 'u8[8192]{0}', space=vmem, size = 0x2000, scoped, tag = 'input window, operand 1']
    #allocation7 [shape = 's32[2]{0}', space=sflag, size = 0x8, scoped, tag = 'scoped memory for tpu_custom_call.1']
    #allocation8 [shape = 'u8[8192]{0}', space=vmem, size = 0x2000, scoped, tag = 'input window, operand 2, single buffered']
    #allocation9 [shape = 'u8[4096]{0}', space=vmem, size = 0x1000, scoped, tag = 'input window, operand 4, single buffered']
    #allocation10 [shape = 's32[1]{0}', space=sflag, size = 0x4, scoped, tag = 'scoped memory for tpu_custom_call.1']
    #allocation11 [shape = 'u8[65536]{0}', space=vmem, size = 0x10000, scoped, tag = 'output window, operand 0']
    %12 = vsyncpa [#allocation4], 0
    %s13 = scalar_lea.sflag [#allocation4], 1
    %14 = vsyncpa %s13, 0
    %15 = vsyncpa [#allocation7], 0
    %s16 = scalar_lea.sflag [#allocation7], 1
    %17 = vsyncpa %s16, 0
    %18 = vsyncpa [#allocation10], 0
    %19 = vsyncpa [#allocation5], 0
    %s20 = scalar_lea.sflag [#allocation5], 1
    %21 = vsyncpa %s20, 0
    loop: start=0, step=1, limit=4
    $region2: #{tpu_custom_call.1} parent=1 // loop_pre_header
      _
    $region3: #{tpu_custom_call.1} parent=1 // loop_header
      %s23 = sphi 0, %s27
      %p24 = scmp.ge.s32.totalorder %s23, 4
      %s30 = sphi 0, %s42
      %s31 = sphi 0, %s38
      %s32 = sphi 0, %s30
      %s33 = sphi 0, %s31
      %s34 = sphi 0, %s32
      %s35 = sphi 0, %s33
      %s47 = sphi 0, %s49
      %s50 = sphi 0, %s47
      %s51 = sphi 0, %s50
      %s67 = sphi 0, %s51
      %s73 = sphi 0, %s75
      %s76 = sphi 0, %s73
      %s77 = sphi 0, %s76
      %s93 = sphi 0, %s77
      %s97 = sphi 0, %s97
      %s99 = sphi 0, %s97
      %s100 = sphi 0, %s99
      %s114 = sphi 0, %s100
      %s118 = sphi 0, %s118
      %s120 = sphi 0, %s118
      %s121 = sphi 0, %s120
      %s135 = sphi 0, %s121
      %s139 = sphi 0, %s139
      %s141 = sphi 0, %s139
      %s142 = sphi 0, %s141
      %s156 = sphi 0, %s142
      %s160 = sphi 0, %s160
      %s162 = sphi 0, %s160
      %s163 = sphi 0, %s162
      %s177 = sphi 0, %s163
      %s181 = sphi 0, %s181
      %s183 = sphi 0, %s181
      %s184 = sphi 0, %s183
      %s198 = sphi 0, %s184
      %s206 = sphi 0, %s208
      %s209 = sphi 0, %s206
      %s210 = sphi 0, %s209
      %s226 = sphi 0, %s210
    $region4: #{tpu_custom_call.1} parent=1 // loop_header_branch
      %26 = sbr.rel (%p24) target = $region8
    $region5: #{tpu_custom_call.1} parent=1 // loop_body
      %s28 = ssub.s32 %s23, 1
      %s29 = ssub.s32 %s23, 2
      %s36 = sadd.s32 1, %s31
      %p37 = scmp.ge.s32.totalorder %s36, 1
      %s38 = scalar_select %p37, 0, %s36
      %s39 = sadd.s32 1, %s30
      %s40 = scalar_select %p37, %s39, %s30
      %p41 = scmp.ge.s32.totalorder %s40, 2
      %s42 = scalar_select %p41, 0, %s40
      %s43 = ssub.s32 %s30, %s42
      %s44 = ssub.s32 %s31, %s38
      %s45 = sor.u32 %s43, %s44
      %p46 = scmp.eq.s32.totalorder %s45, 0
      %s48 = sadd.s32 %s47, 1
      %s49 = scalar_select %p46, %s47, %s48
      %p52 = pneg %p46
      %p53 = scmp.eq.s32.totalorder %s23, 1
      %p54 = por %p52, %p53
      %p55 = scmp.ne.s32.totalorder %s47, %s50
      %p56 = scmp.eq.s32.totalorder %s23, 0
      %p57 = por %p55, %p56
      %p58 = scmp.ne.s32.totalorder %s47, %s50
      %p59 = scmp.eq.s32.totalorder %s28, 1
      %p60 = por %p58, %p59
      %p61 = scmp.ne.s32.totalorder %s50, %s51
      %p62 = scmp.eq.s32.totalorder %s28, 0
      %p63 = por %p61, %p62
      %p64 = scmp.ne.s32.totalorder %s50, %s51
      %p65 = scmp.eq.s32.totalorder %s29, 1
      %p66 = por %p64, %p65
      %p68 = scmp.ne.s32.totalorder %s51, %s67
      %p69 = scmp.eq.s32.totalorder %s29, 0
      %p70 = por %p68, %p69
      %s71 = ssub.s32 %s30, %s42
      %p72 = scmp.eq.s32.totalorder %s71, 0
      %s74 = sadd.s32 %s73, 1
      %s75 = scalar_select %p72, %s73, %s74
      %p78 = pneg %p72
      %p79 = scmp.eq.s32.totalorder %s23, 1
      %p80 = por %p78, %p79
      %p81 = scmp.ne.s32.totalorder %s73, %s76
      %p82 = scmp.eq.s32.totalorder %s23, 0
      %p83 = por %p81, %p82
      %p84 = scmp.ne.s32.totalorder %s73, %s76
      %p85 = scmp.eq.s32.totalorder %s28, 1
      %p86 = por %p84, %p85
      %p87 = scmp.ne.s32.totalorder %s76, %s77
      %p88 = scmp.eq.s32.totalorder %s28, 0
      %p89 = por %p87, %p88
      %p90 = scmp.ne.s32.totalorder %s76, %s77
      %p91 = scmp.eq.s32.totalorder %s29, 1
      %p92 = por %p90, %p91
      %p94 = scmp.ne.s32.totalorder %s77, %s93
      %p95 = scmp.eq.s32.totalorder %s29, 0
      %p96 = por %p94, %p95
      %s98 = sadd.s32 %s97, 1
      %p101 = scmp.eq.s32.totalorder %s23, 1
      %p102 = scmp.ne.s32.totalorder %s97, %s99
      %p103 = scmp.eq.s32.totalorder %s23, 0
      %p104 = por %p102, %p103
      %p105 = scmp.ne.s32.totalorder %s97, %s99
      %p106 = scmp.eq.s32.totalorder %s28, 1
      %p107 = por %p105, %p106
      %p108 = scmp.ne.s32.totalorder %s99, %s100
      %p109 = scmp.eq.s32.totalorder %s28, 0
      %p110 = por %p108, %p109
      %p111 = scmp.ne.s32.totalorder %s99, %s100
      %p112 = scmp.eq.s32.totalorder %s29, 1
      %p113 = por %p111, %p112
      %p115 = scmp.ne.s32.totalorder %s100, %s114
      %p116 = scmp.eq.s32.totalorder %s29, 0
      %p117 = por %p115, %p116
      %s119 = sadd.s32 %s118, 1
      %p122 = scmp.eq.s32.totalorder %s23, 1
      %p123 = scmp.ne.s32.totalorder %s118, %s120
      %p124 = scmp.eq.s32.totalorder %s23, 0
      %p125 = por %p123, %p124
      %p126 = scmp.ne.s32.totalorder %s118, %s120
      %p127 = scmp.eq.s32.totalorder %s28, 1
      %p128 = por %p126, %p127
      %p129 = scmp.ne.s32.totalorder %s120, %s121
      %p130 = scmp.eq.s32.totalorder %s28, 0
      %p131 = por %p129, %p130
      %p132 = scmp.ne.s32.totalorder %s120, %s121
      %p133 = scmp.eq.s32.totalorder %s29, 1
      %p134 = por %p132, %p133
      %p136 = scmp.ne.s32.totalorder %s121, %s135
      %p137 = scmp.eq.s32.totalorder %s29, 0
      %p138 = por %p136, %p137
      %s140 = sadd.s32 %s139, 1
      %p143 = scmp.eq.s32.totalorder %s23, 1
      %p144 = scmp.ne.s32.totalorder %s139, %s141
      %p145 = scmp.eq.s32.totalorder %s23, 0
      %p146 = por %p144, %p145
      %p147 = scmp.ne.s32.totalorder %s139, %s141
      %p148 = scmp.eq.s32.totalorder %s28, 1
      %p149 = por %p147, %p148
      %p150 = scmp.ne.s32.totalorder %s141, %s142
      %p151 = scmp.eq.s32.totalorder %s28, 0
      %p152 = por %p150, %p151
      %p153 = scmp.ne.s32.totalorder %s141, %s142
      %p154 = scmp.eq.s32.totalorder %s29, 1
      %p155 = por %p153, %p154
      %p157 = scmp.ne.s32.totalorder %s142, %s156
      %p158 = scmp.eq.s32.totalorder %s29, 0
      %p159 = por %p157, %p158
      %s161 = sadd.s32 %s160, 1
      %p164 = scmp.eq.s32.totalorder %s23, 1
      %p165 = scmp.ne.s32.totalorder %s160, %s162
      %p166 = scmp.eq.s32.totalorder %s23, 0
      %p167 = por %p165, %p166
      %p168 = scmp.ne.s32.totalorder %s160, %s162
      %p169 = scmp.eq.s32.totalorder %s28, 1
      %p170 = por %p168, %p169
      %p171 = scmp.ne.s32.totalorder %s162, %s163
      %p172 = scmp.eq.s32.totalorder %s28, 0
      %p173 = por %p171, %p172
      %p174 = scmp.ne.s32.totalorder %s162, %s163
      %p175 = scmp.eq.s32.totalorder %s29, 1
      %p176 = por %p174, %p175
      %p178 = scmp.ne.s32.totalorder %s163, %s177
      %p179 = scmp.eq.s32.totalorder %s29, 0
      %p180 = por %p178, %p179
      %s182 = sadd.s32 %s181, 1
      %p185 = scmp.eq.s32.totalorder %s23, 1
      %p186 = scmp.ne.s32.totalorder %s181, %s183
      %p187 = scmp.eq.s32.totalorder %s23, 0
      %p188 = por %p186, %p187
      %p189 = scmp.ne.s32.totalorder %s181, %s183
      %p190 = scmp.eq.s32.totalorder %s28, 1
      %p191 = por %p189, %p190
      %p192 = scmp.ne.s32.totalorder %s183, %s184
      %p193 = scmp.eq.s32.totalorder %s28, 0
      %p194 = por %p192, %p193
      %p195 = scmp.ne.s32.totalorder %s183, %s184
      %p196 = scmp.eq.s32.totalorder %s29, 1
      %p197 = por %p195, %p196
      %p199 = scmp.ne.s32.totalorder %s184, %s198
      %p200 = scmp.eq.s32.totalorder %s29, 0
      %p201 = por %p199, %p200
      %s202 = ssub.s32 %s30, %s42
      %s203 = ssub.s32 %s31, %s38
      %s204 = sor.u32 %s202, %s203
      %p205 = scmp.eq.s32.totalorder %s204, 0
      %s207 = sadd.s32 %s206, 1
      %s208 = scalar_select %p205, %s206, %s207
      %p211 = pneg %p205
      %p212 = scmp.eq.s32.totalorder %s23, 1
      %p213 = por %p211, %p212
      %p214 = scmp.ne.s32.totalorder %s206, %s209
      %p215 = scmp.eq.s32.totalorder %s23, 0
      %p216 = por %p214, %p215
      %p217 = scmp.ne.s32.totalorder %s206, %s209
      %p218 = scmp.eq.s32.totalorder %s28, 1
      %p219 = por %p217, %p218
      %p220 = scmp.ne.s32.totalorder %s209, %s210
      %p221 = scmp.eq.s32.totalorder %s28, 0
      %p222 = por %p220, %p221
      %p223 = scmp.ne.s32.totalorder %s209, %s210
      %p224 = scmp.eq.s32.totalorder %s29, 1
      %p225 = por %p223, %p224
      %p227 = scmp.ne.s32.totalorder %s210, %s226
      %p228 = scmp.eq.s32.totalorder %s29, 0
      %p229 = por %p227, %p228
      %p230 = scmp.le.s32.totalorder 1, %s23
      %p231 = scmp.lt.s32.totalorder %s23, 3
      %p232 = pnand %p230, %p231
      %p233 = pneg %p232
      // Predicated region
      $region9: #{tpu_custom_call.1} parent=5 // pred_check
        _
      $region10: #{tpu_custom_call.1} parent=5 // pred_check_branch
        %235 = sbr.rel (%p232) target = $region12
      $region11: #{tpu_custom_call.1} parent=5 // pred_region
        %s236 = ssub.s32 %s23, 1
        // Predicated region
        $region13: #{tpu_custom_call.1} parent=11 // pred_check
          %p237 = pneg %p110
        $region14: #{tpu_custom_call.1} parent=11 // pred_check_branch
          %239 = sbr.rel (%p237) target = $region16
        $region15: #{tpu_custom_call.1} parent=11 // pred_region
          %s241 = ssub.s32 256, 256
          %242 = vsyncadd [#allocation7], %s241
          %s243 = sshll.u32 [#allocation8], 4
          %s244 = int_to_ptr.vmem [resolvable:$true] %s243
          %249 = dma.hbm_to_vmem [thread:$0]  %s2, 256, %s244, [#allocation7], 128, 128, 8
        $region16: #{tpu_custom_call.1} parent=11 // pred_fallthru
          _
        // Predicated region
        $region17: #{tpu_custom_call.1} parent=11 // pred_check
          %p250 = pneg %p131
        $region18: #{tpu_custom_call.1} parent=11 // pred_check_branch
          %252 = sbr.rel (%p250) target = $region20
        $region19: #{tpu_custom_call.1} parent=11 // pred_region
          _
        $region20: #{tpu_custom_call.1} parent=11 // pred_fallthru
          _
        // Predicated region
        $region21: #{tpu_custom_call.1} parent=11 // pred_check
          %p253 = pneg %p152
        $region22: #{tpu_custom_call.1} parent=11 // pred_check_branch
          %255 = sbr.rel (%p253) target = $region24
        $region23: #{tpu_custom_call.1} parent=11 // pred_region
          %s257 = ssub.s32 128, 128
          %258 = vsyncadd [#allocation10], %s257
          %s260 = sshll.u32 [#allocation9], 4
          %s261 = int_to_ptr.vmem [resolvable:$true] %s260
          %263 = dma.hbm_to_vmem [thread:$0]  %s4, 128, %s261, [#allocation10]
        $region24: #{tpu_custom_call.1} parent=11 // pred_fallthru
          _
        // Predicated region
        $region25: #{tpu_custom_call.1} parent=11 // pred_check
          %p264 = pneg %p173
        $region26: #{tpu_custom_call.1} parent=11 // pred_check_branch
          %266 = sbr.rel (%p264) target = $region28
        $region27: #{tpu_custom_call.1} parent=11 // pred_region
          _
        $region28: #{tpu_custom_call.1} parent=11 // pred_fallthru
          _
        // Predicated region
        $region29: #{tpu_custom_call.1} parent=11 // pred_check
          %p267 = pneg %p194
        $region30: #{tpu_custom_call.1} parent=11 // pred_check_branch
          %269 = sbr.rel (%p267) target = $region32
        $region31: #{tpu_custom_call.1} parent=11 // pred_region
          _
        $region32: #{tpu_custom_call.1} parent=11 // pred_fallthru
          _
      $region12: #{tpu_custom_call.1} parent=5 // pred_fallthru
        _
      %p270 = scmp.lt.s32.totalorder %s23, 2
      // Predicated region
      $region33: #{tpu_custom_call.1} parent=5 // pred_check
        %p271 = pneg %p270
      $region34: #{tpu_custom_call.1} parent=5 // pred_check_branch
        %273 = sbr.rel (%p271) target = $region36
      $region35: #{tpu_custom_call.1} parent=5 // pred_region
        // Predicated region
        $region37: #{tpu_custom_call.1} parent=35 // pred_check
          %p274 = pneg %p57
        $region38: #{tpu_custom_call.1} parent=35 // pred_check_branch
          %276 = sbr.rel (%p274) target = $region40
        $region39: #{tpu_custom_call.1} parent=35 // pred_region
          %s277 = sand.u32 %s47, 1
          %s278 = scalar_lea.sflag [#allocation4], %s277
          %s279 = sand.u32 %s47, 1
          %s280 = smul.addr %s279, 64
          %s281 = scalar_lea.vmem [#allocation3], %s280
          %s282 = smul.u32 8, %s31
          %s284 = ssub.s32 1024, 1024
          %285 = vsyncadd %s278, %s284
          %s286 = smul.addr %s282, 2
          %s287 = smul.addr %s30, 16
          %s288 = sadd.s32 %s286, %s287
          %s289 = smul.addr %s288, 64
          %s290 = scalar_lea.hbm %s0, %s289
          %s291 = sshll.u32 %s281, 4
          %s292 = int_to_ptr.vmem [resolvable:$true] %s291
          %297 = dma.hbm_to_vmem [thread:$0]  %s290, 1024, %s292, %s278, 128, 128, 8
        $region40: #{tpu_custom_call.1} parent=35 // pred_fallthru
          _
        // Predicated region
        $region41: #{tpu_custom_call.1} parent=35 // pred_check
          %p298 = pneg %p83
        $region42: #{tpu_custom_call.1} parent=35 // pred_check_branch
          %300 = sbr.rel (%p298) target = $region44
        $region43: #{tpu_custom_call.1} parent=35 // pred_region
          %s301 = sand.u32 %s23, 1
          %s302 = scalar_lea.sflag [#allocation7], %s301
          %s303 = sand.u32 %s73, 1
          %s304 = smul.addr %s303, 8
          %s305 = scalar_lea.vmem [#allocation6], %s304
          %s307 = ssub.s32 128, 128
          %308 = vsyncadd %s302, %s307
          %s309 = smul.addr %s30, 2
          %s310 = smul.addr %s309, 64
          %s311 = scalar_lea.hbm %s1, %s310
          %s313 = sshll.u32 %s305, 4
          %s314 = int_to_ptr.vmem [resolvable:$true] %s313
          %316 = dma.hbm_to_vmem [thread:$0]  %s311, 128, %s314, %s302
        $region44: #{tpu_custom_call.1} parent=35 // pred_fallthru
          _
      $region36: #{tpu_custom_call.1} parent=5 // pred_fallthru
        _
      %p317 = scmp.le.s32.totalorder 1, %s23
      %p318 = scmp.lt.s32.totalorder %s23, 3
      %p319 = pnand %p317, %p318
      %p320 = pneg %p319
      // Predicated region
      $region45: #{tpu_custom_call.1} parent=5 // pred_check
        _
      $region46: #{tpu_custom_call.1} parent=5 // pred_check_branch
        %322 = sbr.rel (%p319) target = $region48
      $region47: #{tpu_custom_call.1} parent=5 // pred_region
        %s323 = ssub.s32 %s23, 1
        %s324 = sand.u32 %s50, 1
        %s325 = scalar_lea.sflag [#allocation4], %s324
        %s326 = sand.u32 %s50, 1
        %s327 = smul.addr %s326, 64
        %s328 = scalar_lea.vmem [#allocation3], %s327
        // Predicated region
        $region49: #{tpu_custom_call.1} parent=47 // pred_check
          %p329 = pneg %p63
        $region50: #{tpu_custom_call.1} parent=47 // pred_check_branch
          %331 = sbr.rel (%p329) target = $region52
        $region51: #{tpu_custom_call.1} parent=47 // pred_region
          %332 = dma.done %s325, 1024
        $region52: #{tpu_custom_call.1} parent=47 // pred_fallthru
          _
        %s333 = sand.u32 %s28, 1
        %s334 = scalar_lea.sflag [#allocation7], %s333
        %s335 = sand.u32 %s76, 1
        %s336 = smul.addr %s335, 8
        %s337 = scalar_lea.vmem [#allocation6], %s336
        // Predicated region
        $region53: #{tpu_custom_call.1} parent=47 // pred_check
          %p338 = pneg %p89
        $region54: #{tpu_custom_call.1} parent=47 // pred_check_branch
          %340 = sbr.rel (%p338) target = $region56
        $region55: #{tpu_custom_call.1} parent=47 // pred_region
          %341 = dma.done %s334, 128
        $region56: #{tpu_custom_call.1} parent=47 // pred_fallthru
          _
        // Predicated region
        $region57: #{tpu_custom_call.1} parent=47 // pred_check
          %p342 = pneg %p110
        $region58: #{tpu_custom_call.1} parent=47 // pred_check_branch
          %344 = sbr.rel (%p342) target = $region60
        $region59: #{tpu_custom_call.1} parent=47 // pred_region
          %345 = dma.done [#allocation7], 256
        $region60: #{tpu_custom_call.1} parent=47 // pred_fallthru
          _
        // Predicated region
        $region61: #{tpu_custom_call.1} parent=47 // pred_check
          %p346 = pneg %p152
        $region62: #{tpu_custom_call.1} parent=47 // pred_check_branch
          %348 = sbr.rel (%p346) target = $region64
        $region63: #{tpu_custom_call.1} parent=47 // pred_region
          %349 = dma.done [#allocation10], 128
        $region64: #{tpu_custom_call.1} parent=47 // pred_fallthru
          _
        %s350 = sand.u32 %s50, 1
        %s351 = scalar_lea.sflag [#allocation4], %s350
        %s352 = sand.u32 %s50, 1
        %s353 = smul.addr %s352, 64
        %s354 = scalar_lea.vmem [#allocation3], %s353
        %p355 = pneg %p63
        %p356 = pneg %p60
        %s357 = sand.u32 %s28, 1
        %s358 = scalar_lea.sflag [#allocation7], %s357
        %s359 = sand.u32 %s76, 1
        %s360 = smul.addr %s359, 8
        %s361 = scalar_lea.vmem [#allocation6], %s360
        %p362 = pneg %p89
        %p363 = pneg %p86
        %p364 = pneg %p110
        %p365 = pneg %p107
        %p366 = pneg %p131
        %p367 = pneg %p128
        %p368 = pneg %p152
        %p369 = pneg %p149
        %p370 = pneg %p173
        %p371 = pneg %p170
        %p372 = pneg %p194
        %p373 = pneg %p191
        %p374 = pneg %p222
        %p375 = pneg %p219
        %s376 = sand.u32 %s209, 1
        %s377 = scalar_lea.sflag [#allocation5], %s376
        %s378 = sand.u32 %s209, 1
        %s379 = smul.addr %s378, 64
        %s380 = scalar_lea.vmem [#allocation11], %s379
        %s381 = smul.u32 8, %s33
        %s382 = smul.u32 8, %s33
        %p383 = scmp.eq.s32.totalorder %s33, 0
        // Predicated region
        $region65: #{tpu_custom_call.1} parent=47 // pred_check
          %p384 = pneg %p383
        $region66: #{tpu_custom_call.1} parent=47 // pred_check_branch
          %386 = sbr.rel (%p384) target = $region68
        $region67: #{tpu_custom_call.1} parent=47 // pred_region
          %v387 = vld [vmem:[%s337] sm:$0xff]
          %388 = vst [vmem:[#allocation2] sm:$0xff] %v387
        $region68: #{tpu_custom_call.1} parent=47 // pred_fallthru
          _
        %v389 = vld [vmem:[%s6] sm:$0xff]
        %v390 = vld [vmem:[%s6 + $0x8] sm:$0xff]
        %v391 = vld [vmem:[%s6 + $0x10] sm:$0x1]
        %v392 = vld [vmem:[%s6 + $0x18] sm:$0x1]
        %v393 = vld [vmem:[#allocation8] sm:$0xff]
        %v394 = vld [vmem:[#allocation8 + $0x8] sm:$0xf]
        %v395 = vld [vmem:[%s3] sm:$0xff]
        %v396 = vld [vmem:[%s3 + $0x8] sm:$0xf]
        %v397 = vld [vmem:[#allocation9] sm:$0xff]
        %v398 = vld [vmem:[%s5] sm:$0xf]
        %v399 = vld [vmem:[#allocation2] sm:$0xff]
        %v400 = vld [vmem:[%s328] sm:$0xff]
        %v402 = vcombine.high %v400, %v400
        %404 = vrot.lane.b32.xlu0 %v400, 17
        %v405 = vpop.permute.xlu0 %404
        %406 = vrot.lane.b32.xlu0 %v402, 17
        %v407 = vpop.permute.xlu0 %406
        %v408 = vlaneseq
        %v409 = vand.u32 %v408, 127
        %vm410 = vcmp.lt.s32.totalorder %v409, 17
        %v411 = vsel %vm410, %v405, %v407
        %v412 = vsel %vm410, %v407, %v405
        %v413 = vlaneseq
        %v414 = vshrl.u32 %v413, 7
        %v415 = vsub.s32 0, %v414
        %v416 = vrot.slane %v389, %v415
        %v417 = vlaneseq
        %v418 = vshrl.u32 %v417, 7
        %v419 = vsub.s32 0, %v418
        %v420 = vrot.slane %v390, %v419
        %v421 = vmul.f32 %v412, %v416
        %v422 = vmul.f32 %v411, %v420
        %423 = vrot.lane.b32.xlu0 %v400, 16
        %v424 = vpop.permute.xlu0 %423
        %425 = vrot.lane.b32.xlu0 %v402, 16
        %v426 = vpop.permute.xlu0 %425
        %vm427 = vcmp.lt.s32.totalorder %v409, 16
        %v428 = vsel %vm427, %v424, %v426
        %v429 = vsel %vm427, %v426, %v424
        %v430 = vlaneseq
        %v431 = vshrl.u32 %v430, 7
        %v432 = vsub.s32 1, %v431
        %v433 = vrot.slane %v389, %v432
        %v434 = vlaneseq
        %v435 = vshrl.u32 %v434, 7
        %v436 = vsub.s32 1, %v435
        %v437 = vrot.slane %v390, %v436
        %v438 = vmul.f32 %v429, %v433
        %v439 = vmul.f32 %v428, %v437
        %440 = vrot.lane.b32.xlu0 %v400, 15
        %v441 = vpop.permute.xlu0 %440
        %442 = vrot.lane.b32.xlu0 %v402, 15
        %v443 = vpop.permute.xlu0 %442
        %vm444 = vcmp.lt.s32.totalorder %v409, 15
        %v445 = vsel %vm444, %v441, %v443
        %v446 = vsel %vm444, %v443, %v441
        %v447 = vlaneseq
        %v448 = vshrl.u32 %v447, 7
        %v449 = vsub.s32 2, %v448
        %v450 = vrot.slane %v389, %v449
        %v451 = vlaneseq
        %v452 = vshrl.u32 %v451, 7
        %v453 = vsub.s32 2, %v452
        %v454 = vrot.slane %v390, %v453
        %v455 = vmul.f32 %v446, %v450
        %v456 = vmul.f32 %v445, %v454
        %457 = vrot.lane.b32.xlu0 %v400, 1
        %v458 = vpop.permute.xlu0 %457
        %459 = vrot.lane.b32.xlu0 %v402, 1
        %v460 = vpop.permute.xlu0 %459
        %vm461 = vcmp.lt.s32.totalorder %v409, 1
        %v462 = vsel %vm461, %v458, %v460
        %v463 = vsel %vm461, %v460, %v458
        %v464 = vlaneseq
        %v465 = vshrl.u32 %v464, 7
        %v466 = vsub.s32 3, %v465
        %v467 = vrot.slane %v389, %v466
        %v468 = vlaneseq
        %v469 = vshrl.u32 %v468, 7
        %v470 = vsub.s32 3, %v469
        %v471 = vrot.slane %v390, %v470
        %v472 = vmul.f32 %v463, %v467
        %v473 = vmul.f32 %v462, %v471
        %v474 = vlaneseq
        %v475 = vshrl.u32 %v474, 7
        %v476 = vsub.s32 4, %v475
        %v477 = vrot.slane %v389, %v476
        %v478 = vlaneseq
        %v479 = vshrl.u32 %v478, 7
        %v480 = vsub.s32 4, %v479
        %v481 = vrot.slane %v390, %v480
        %v484 = vcombine.low %v477, %v481
        %v486 = vmul.f32 %v400, %v484
        %487 = vrot.lane.b32.xlu0 %v400, 127
        %v488 = vpop.permute.xlu0 %487
        %489 = vrot.lane.b32.xlu0 %v402, 127
        %v490 = vpop.permute.xlu0 %489
        %vm491 = vcmp.lt.s32.totalorder %v409, 127
        %v492 = vsel %vm491, %v488, %v490
        %v493 = vsel %vm491, %v490, %v488
        %v494 = vlaneseq
        %v495 = vshrl.u32 %v494, 7
        %v496 = vsub.s32 5, %v495
        %v497 = vrot.slane %v389, %v496
        %v498 = vlaneseq
        %v499 = vshrl.u32 %v498, 7
        %v500 = vsub.s32 5, %v499
        %v501 = vrot.slane %v390, %v500
        %v502 = vmul.f32 %v492, %v497
        %v503 = vmul.f32 %v493, %v501
        %504 = vrot.lane.b32.xlu0 %v400, 113
        %v505 = vpop.permute.xlu0 %504
        %506 = vrot.lane.b32.xlu0 %v402, 113
        %v507 = vpop.permute.xlu0 %506
        %vm508 = vcmp.lt.s32.totalorder %v409, 113
        %v509 = vsel %vm508, %v505, %v507
        %v510 = vsel %vm508, %v507, %v505
        %v511 = vlaneseq
        %v512 = vshrl.u32 %v511, 7
        %v513 = vsub.s32 6, %v512
        %v514 = vrot.slane %v389, %v513
        %v515 = vlaneseq
        %v516 = vshrl.u32 %v515, 7
        %v517 = vsub.s32 6, %v516
        %v518 = vrot.slane %v390, %v517
        %v519 = vmul.f32 %v509, %v514
        %v520 = vmul.f32 %v510, %v518
        %521 = vrot.lane.b32.xlu0 %v400, 112
        %v522 = vpop.permute.xlu0 %521
        %523 = vrot.lane.b32.xlu0 %v402, 112
        %v524 = vpop.permute.xlu0 %523
        %vm525 = vcmp.lt.s32.totalorder %v409, 112
        %v526 = vsel %vm525, %v522, %v524
        %v527 = vsel %vm525, %v524, %v522
        %v528 = vlaneseq
        %v529 = vshrl.u32 %v528, 7
        %v530 = vsub.s32 7, %v529
        %v531 = vrot.slane %v389, %v530
        %v532 = vlaneseq
        %v533 = vshrl.u32 %v532, 7
        %v534 = vsub.s32 7, %v533
        %v535 = vrot.slane %v390, %v534
        %v536 = vmul.f32 %v526, %v531
        %v537 = vmul.f32 %v527, %v535
        %538 = vrot.lane.b32.xlu0 %v400, 111
        %v539 = vpop.permute.xlu0 %538
        %540 = vrot.lane.b32.xlu0 %v402, 111
        %v541 = vpop.permute.xlu0 %540
        %vm542 = vcmp.lt.s32.totalorder %v409, 111
        %v543 = vsel %vm542, %v539, %v541
        %v544 = vsel %vm542, %v541, %v539
        %v545 = vlaneseq
        %v546 = vshrl.u32 %v545, 7
        %v547 = vsub.s32 0, %v546
        %v548 = vrot.slane %v391, %v547
        %v549 = vlaneseq
        %v550 = vshrl.u32 %v549, 7
        %v551 = vsub.s32 0, %v550
        %v552 = vrot.slane %v392, %v551
        %v553 = vmul.f32 %v543, %v548
        %v554 = vmul.f32 %v544, %v552
        %v557 = vrot.slane %v438, 4
        %v558 = vrot.slane %v439, 4
        %v563 = vrot.slane %v472, 4
        %v564 = vrot.slane %v473, 4
        %v568 = vcombine.high %v486, %v486
        %v572 = vrot.slane %v502, 4
        %v573 = vrot.slane %v503, 4
        %v578 = vrot.slane %v536, 4
        %v579 = vrot.slane %v537, 4
        %vm582 = vcmask 1043456
        %v583 = vsel %vm582, %v421, %v557
        %v584 = vsel %vm582, %v422, %v558
        %v585 = vsel %vm582, %v455, %v563
        %v586 = vsel %vm582, %v456, %v564
        %v587 = vsel %vm582, %v486, %v572
        %v588 = vsel %vm582, %v568, %v573
        %v589 = vsel %vm582, %v519, %v578
        %v590 = vsel %vm582, %v520, %v579
        %v592 = vcombine.high %v399, %v399
        %594 = vrot.lane.b32.xlu0 %v399, 17
        %v595 = vpop.permute.xlu0 %594
        %596 = vrot.lane.b32.xlu0 %v592, 17
        %v597 = vpop.permute.xlu0 %596
        %v598 = vsel %vm410, %v595, %v597
        %v599 = vsel %vm410, %v597, %v595
        %v600 = vmul.f32 %v599, %v416
        %v601 = vmul.f32 %v598, %v420
        %602 = vrot.lane.b32.xlu0 %v399, 16
        %v603 = vpop.permute.xlu0 %602
        %604 = vrot.lane.b32.xlu0 %v592, 16
        %v605 = vpop.permute.xlu0 %604
        %v606 = vsel %vm427, %v603, %v605
        %v607 = vsel %vm427, %v605, %v603
        %v608 = vmul.f32 %v607, %v433
        %v609 = vmul.f32 %v606, %v437
        %610 = vrot.lane.b32.xlu0 %v399, 15
        %v611 = vpop.permute.xlu0 %610
        %612 = vrot.lane.b32.xlu0 %v592, 15
        %v613 = vpop.permute.xlu0 %612
        %v614 = vsel %vm444, %v611, %v613
        %v615 = vsel %vm444, %v613, %v611
        %v616 = vmul.f32 %v615, %v450
        %v617 = vmul.f32 %v614, %v454
        %618 = vrot.lane.b32.xlu0 %v399, 1
        %v619 = vpop.permute.xlu0 %618
        %620 = vrot.lane.b32.xlu0 %v592, 1
        %v621 = vpop.permute.xlu0 %620
        %v622 = vsel %vm461, %v619, %v621
        %v623 = vsel %vm461, %v621, %v619
        %v624 = vmul.f32 %v623, %v467
        %v625 = vmul.f32 %v622, %v471
        %v626 = vmul.f32 %v399, %v484
        %627 = vrot.lane.b32.xlu0 %v399, 127
        %v628 = vpop.permute.xlu0 %627
        %629 = vrot.lane.b32.xlu0 %v592, 127
        %v630 = vpop.permute.xlu0 %629
        %v631 = vsel %vm491, %v628, %v630
        %v632 = vsel %vm491, %v630, %v628
        %v633 = vmul.f32 %v631, %v497
        %v634 = vmul.f32 %v632, %v501
        %635 = vrot.lane.b32.xlu0 %v399, 113
        %v636 = vpop.permute.xlu0 %635
        %637 = vrot.lane.b32.xlu0 %v592, 113
        %v638 = vpop.permute.xlu0 %637
        %v639 = vsel %vm508, %v636, %v638
        %v640 = vsel %vm508, %v638, %v636
        %v641 = vmul.f32 %v639, %v514
        %v642 = vmul.f32 %v640, %v518
        %643 = vrot.lane.b32.xlu0 %v399, 112
        %v644 = vpop.permute.xlu0 %643
        %645 = vrot.lane.b32.xlu0 %v592, 112
        %v646 = vpop.permute.xlu0 %645
        %v647 = vsel %vm525, %v644, %v646
        %v648 = vsel %vm525, %v646, %v644
        %v649 = vmul.f32 %v647, %v531
        %v650 = vmul.f32 %v648, %v535
        %651 = vrot.lane.b32.xlu0 %v399, 111
        %v652 = vpop.permute.xlu0 %651
        %653 = vrot.lane.b32.xlu0 %v592, 111
        %v654 = vpop.permute.xlu0 %653
        %v655 = vsel %vm542, %v652, %v654
        %v656 = vsel %vm542, %v654, %v652
        %v657 = vmul.f32 %v655, %v548
        %v658 = vmul.f32 %v656, %v552
        %v661 = vrot.slane %v608, 4
        %v662 = vrot.slane %v609, 4
        %v667 = vrot.slane %v624, 4
        %v668 = vrot.slane %v625, 4
        %v672 = vcombine.high %v626, %v626
        %v676 = vrot.slane %v633, 4
        %v677 = vrot.slane %v634, 4
        %v682 = vrot.slane %v649, 4
        %v683 = vrot.slane %v650, 4
        %v686 = vsel %vm582, %v600, %v661
        %v687 = vsel %vm582, %v601, %v662
        %v688 = vsel %vm582, %v616, %v667
        %v689 = vsel %vm582, %v617, %v668
        %v690 = vsel %vm582, %v626, %v676
        %v691 = vsel %vm582, %v672, %v677
        %v692 = vsel %vm582, %v641, %v682
        %v693 = vsel %vm582, %v642, %v683
        %695 = vset.pattern.permute.xlu0 0
        %696 = vperm.xlu0 %695, %v395
        %v697 = vpop.permute.xlu0 %696
        %700 = vset.pattern.permute.xlu0 0
        %701 = vperm.xlu0 %700, %v396
        %v702 = vpop.permute.xlu0 %701
        %vm704 = vcmask 293888
        %v706 = vsel %vm704, %v393, 0
        %v709 = vsel %vm704, %v394, 0
        %v712 = vsel %vm582, %v553, 0
        %v715 = vsel %vm582, %v554, 0
        %717 = vmatprep.subr.mxu0 %v584
        %718 = vmatpush1.msra.mxu0 %v583
        %719 = vmatprep.subr.mxu0 %v586
        %720 = vmatpush1.msra.mxu0 %v585
        %721 = vmatprep.subr.mxu0 %v588
        %722 = vmatpush1.msra.mxu0 %v587
        %723 = vmatprep.subr.mxu0 %v590
        %724 = vmatpush1.msra.mxu0 %v589
        %725 = vmatprep.subr.mxu0 %v715
        %726 = vmatpush1.msra.mxu0 %v712
        %727 = vmatprep.subr.mxu0 0.0
        %728 = vmatpush1.msra.mxu0 0.0
        %729 = vmatprep.subr.mxu0 0.0
        %730 = vmatpush1.msra.mxu0 0.0
        %731 = vmatprep.subr.mxu0 0.0
        %732 = vmatpush1.msra.mxu0 0.0
        %733 = vmatprep.subr.mxu0 0.0
        %734 = vmatpush1.msra.mxu0 0.0
        %735 = vmatprep.subr.mxu0 0.0
        %736 = vmatpush1.msra.mxu0 0.0
        %737 = vmatprep.subr.mxu0 0.0
        %738 = vmatpush1.msra.mxu0 0.0
        %739 = vmatprep.subr.mxu0 0.0
        %740 = vmatpush1.msra.mxu0 0.0
        %741 = vmatprep.subr.mxu0 0.0
        %742 = vmatpush1.msra.mxu0 0.0
        %743 = vmatprep.subr.mxu0 0.0
        %744 = vmatpush1.msra.mxu0 0.0
        %745 = vmatprep.subr.mxu0 0.0
        %746 = vmatpush1.msra.mxu0 0.0
        %747 = vmatprep.subr.mxu0 0.0
        %748 = vmatpush1.msra.mxu0 0.0
        %749 = vmatprep.subr.mxu0 0.0
        %750 = vmatpush1.msra.mxu0 0.0
        %751 = vmatprep.subr.mxu0 0.0
        %752 = vmatpush1.msra.mxu0 0.0
        %753 = vmatprep.subr.mxu0 0.0
        %754 = vmatpush1.msra.mxu0 0.0
        %755 = vmatprep.subr.mxu0 0.0
        %756 = vmatpush1.msra.mxu0 0.0
        %757 = vmatprep.subr.mxu0 0.0
        %758 = vmatpush1.msra.mxu0 0.0
        %759 = vmatprep.subr.mxu0 0.0
        %760 = vmatpush1.msra.mxu0 0.0
        %761 = vmatprep.subr.mxu0 0.0
        %762 = vmatpush1.msra.mxu0 0.0
        %763 = vmatprep.subr.mxu0 0.0
        %764 = vmatpush1.msra.mxu0 0.0
        %765 = vmatprep.subr.mxu0 0.0
        %766 = vmatpush1.msra.mxu0 0.0
        %767 = vmatprep.subr.mxu0 0.0
        %768 = vmatpush1.msra.mxu0 0.0
        %769 = vmatprep.subr.mxu0 0.0
        %770 = vmatpush1.msra.mxu0 0.0
        %771 = vmatprep.subr.mxu0 0.0
        %772 = vmatpush1.msra.mxu0 0.0
        %773 = vmatprep.subr.mxu0 0.0
        %774 = vmatpush1.msra.mxu0 0.0
        %775 = vmatprep.subr.mxu0 0.0
        %776 = vmatpush1.msra.mxu0 0.0
        %777 = vmatprep.subr.mxu0 0.0
        %778 = vmatpush1.msra.mxu0 0.0
        %779 = vmatprep.subr.mxu0 0.0
        %780 = vmatpush1.msra.mxu0 0.0
        %781 = vmatprep.mubr.f32.mxu0 0.0
        %782 = vmatmul.mubr.f32.gmra.mrb[0].mxu0 %v706
        %v783 = vpop.f32.mrb[0].mxu0
        %v784 = vadd.f32 %v697, %v783
        %v785 = vpop.f32.mrb[0].mxu0
        %v786 = vadd.f32 %v697, %v785
        %787 = vmatprep.mubr.f32.mxu0 0.0
        %788 = vmatmul.mubr.f32.gmra.mrb[0].mxu0 %v709
        %v789 = vpop.f32.mrb[0].mxu0
        %v790 = vadd.f32 %v702, %v789
        %v791 = vpop.f32.mrb[0].mxu0
        %v792 = vadd.f32 %v702, %v791
        %793 = vdwg.mxu0
        %v795 = vsel %vm704, %v397, 0
        %v798 = vsel %vm582, %v657, 0
        %v801 = vsel %vm582, %v658, 0
        %803 = vmatprep.subr.mxu0 %v687
        %804 = vmatpush1.msra.mxu0 %v686
        %805 = vmatprep.subr.mxu0 %v689
        %806 = vmatpush1.msra.mxu0 %v688
        %807 = vmatprep.subr.mxu0 %v691
        %808 = vmatpush1.msra.mxu0 %v690
        %809 = vmatprep.subr.mxu0 %v693
        %810 = vmatpush1.msra.mxu0 %v692
        %811 = vmatprep.subr.mxu0 %v801
        %812 = vmatpush1.msra.mxu0 %v798
        %813 = vmatprep.subr.mxu0 0.0
        %814 = vmatpush1.msra.mxu0 0.0
        %815 = vmatprep.subr.mxu0 0.0
        %816 = vmatpush1.msra.mxu0 0.0
        %817 = vmatprep.subr.mxu0 0.0
        %818 = vmatpush1.msra.mxu0 0.0
        %819 = vmatprep.subr.mxu0 0.0
        %820 = vmatpush1.msra.mxu0 0.0
        %821 = vmatprep.subr.mxu0 0.0
        %822 = vmatpush1.msra.mxu0 0.0
        %823 = vmatprep.subr.mxu0 0.0
        %824 = vmatpush1.msra.mxu0 0.0
        %825 = vmatprep.subr.mxu0 0.0
        %826 = vmatpush1.msra.mxu0 0.0
        %827 = vmatprep.subr.mxu0 0.0
        %828 = vmatpush1.msra.mxu0 0.0
        %829 = vmatprep.subr.mxu0 0.0
        %830 = vmatpush1.msra.mxu0 0.0
        %831 = vmatprep.subr.mxu0 0.0
        %832 = vmatpush1.msra.mxu0 0.0
        %833 = vmatprep.subr.mxu0 0.0
        %834 = vmatpush1.msra.mxu0 0.0
        %835 = vmatprep.subr.mxu0 0.0
        %836 = vmatpush1.msra.mxu0 0.0
        %837 = vmatprep.subr.mxu0 0.0
        %838 = vmatpush1.msra.mxu0 0.0
        %839 = vmatprep.subr.mxu0 0.0
        %840 = vmatpush1.msra.mxu0 0.0
        %841 = vmatprep.subr.mxu0 0.0
        %842 = vmatpush1.msra.mxu0 0.0
        %843 = vmatprep.subr.mxu0 0.0
        %844 = vmatpush1.msra.mxu0 0.0
        %845 = vmatprep.subr.mxu0 0.0
        %846 = vmatpush1.msra.mxu0 0.0
        %847 = vmatprep.subr.mxu0 0.0
        %848 = vmatpush1.msra.mxu0 0.0
        %849 = vmatprep.subr.mxu0 0.0
        %850 = vmatpush1.msra.mxu0 0.0
        %851 = vmatprep.subr.mxu0 0.0
        %852 = vmatpush1.msra.mxu0 0.0
        %853 = vmatprep.subr.mxu0 0.0
        %854 = vmatpush1.msra.mxu0 0.0
        %855 = vmatprep.subr.mxu0 0.0
        %856 = vmatpush1.msra.mxu0 0.0
        %857 = vmatprep.subr.mxu0 0.0
        %858 = vmatpush1.msra.mxu0 0.0
        %859 = vmatprep.subr.mxu0 0.0
        %860 = vmatpush1.msra.mxu0 0.0
        %861 = vmatprep.subr.mxu0 0.0
        %862 = vmatpush1.msra.mxu0 0.0
        %863 = vmatprep.subr.mxu0 0.0
        %864 = vmatpush1.msra.mxu0 0.0
        %865 = vmatprep.subr.mxu0 0.0
        %866 = vmatpush1.msra.mxu0 0.0
        %867 = vmatprep.mubr.f32.mxu0 0.0
        %868 = vmatmul.mubr.f32.gmra.mrb[0].mxu0 %v795
        %v869 = vpop.f32.mrb[0].mxu0
        %v870 = vadd.f32 0.0, %v869
        %v871 = vpop.f32.mrb[0].mxu0
        %v872 = vadd.f32 0.0, %v871
        %873 = vdwg.mxu0
        %v874 = vadd.f32 %v784, %v870
        %v875 = vadd.f32 %v786, %v872
        %v876 = vsub.f32 0.0, %v874
        %v877 = vsub.f32 0.0, %v875
        %v878 = vmul.f32 %v876, 1.442695
        %v879 = vpow.pop %v878
        %v880 = vmul.f32 %v877, 1.442695
        %v881 = vpow.pop %v880
        %v882 = vadd.f32 %v879, 1.0
        %v883 = vadd.f32 %v881, 1.0
        %v884 = vrcp.pop %v882
        %v885 = vmul.f32 1.0, %v884
        %v886 = vrcp.pop %v883
        %v887 = vmul.f32 1.0, %v886
        %v888 = vmul.f32 %v885, %v399
        %v889 = vmul.f32 %v887, %v592
        %890 = vrot.lane.b32.xlu0 %v888, 17
        %v891 = vpop.permute.xlu0 %890
        %892 = vrot.lane.b32.xlu0 %v889, 17
        %v893 = vpop.permute.xlu0 %892
        %v894 = vsel %vm410, %v891, %v893
        %v895 = vsel %vm410, %v893, %v891
        %v896 = vmul.f32 %v895, %v416
        %v897 = vmul.f32 %v894, %v420
        %898 = vrot.lane.b32.xlu0 %v888, 16
        %v899 = vpop.permute.xlu0 %898
        %900 = vrot.lane.b32.xlu0 %v889, 16
        %v901 = vpop.permute.xlu0 %900
        %v902 = vsel %vm427, %v899, %v901
        %v903 = vsel %vm427, %v901, %v899
        %v904 = vmul.f32 %v903, %v433
        %v905 = vmul.f32 %v902, %v437
        %906 = vrot.lane.b32.xlu0 %v888, 15
        %v907 = vpop.permute.xlu0 %906
        %908 = vrot.lane.b32.xlu0 %v889, 15
        %v909 = vpop.permute.xlu0 %908
        %v910 = vsel %vm444, %v907, %v909
        %v911 = vsel %vm444, %v909, %v907
        %v912 = vmul.f32 %v911, %v450
        %v913 = vmul.f32 %v910, %v454
        %914 = vrot.lane.b32.xlu0 %v888, 1
        %v915 = vpop.permute.xlu0 %914
        %916 = vrot.lane.b32.xlu0 %v889, 1
        %v917 = vpop.permute.xlu0 %916
        %v918 = vsel %vm461, %v915, %v917
        %v919 = vsel %vm461, %v917, %v915
        %v920 = vmul.f32 %v919, %v467
        %v921 = vmul.f32 %v918, %v471
        %v922 = vmul.f32 %v888, %v477
        %v923 = vmul.f32 %v889, %v481
        %924 = vrot.lane.b32.xlu0 %v888, 127
        %v925 = vpop.permute.xlu0 %924
        %926 = vrot.lane.b32.xlu0 %v889, 127
        %v927 = vpop.permute.xlu0 %926
        %v928 = vsel %vm491, %v925, %v927
        %v929 = vsel %vm491, %v927, %v925
        %v930 = vmul.f32 %v928, %v497
        %v931 = vmul.f32 %v929, %v501
        %932 = vrot.lane.b32.xlu0 %v888, 113
        %v933 = vpop.permute.xlu0 %932
        %934 = vrot.lane.b32.xlu0 %v889, 113
        %v935 = vpop.permute.xlu0 %934
        %v936 = vsel %vm508, %v933, %v935
        %v937 = vsel %vm508, %v935, %v933
        %v938 = vmul.f32 %v936, %v514
        %v939 = vmul.f32 %v937, %v518
        %940 = vrot.lane.b32.xlu0 %v888, 112
        %v941 = vpop.permute.xlu0 %940
        %942 = vrot.lane.b32.xlu0 %v889, 112
        %v943 = vpop.permute.xlu0 %942
        %v944 = vsel %vm525, %v941, %v943
        %v945 = vsel %vm525, %v943, %v941
        %v946 = vmul.f32 %v944, %v531
        %v947 = vmul.f32 %v945, %v535
        %948 = vrot.lane.b32.xlu0 %v888, 111
        %v949 = vpop.permute.xlu0 %948
        %950 = vrot.lane.b32.xlu0 %v889, 111
        %v951 = vpop.permute.xlu0 %950
        %v952 = vsel %vm542, %v949, %v951
        %v953 = vsel %vm542, %v951, %v949
        %v954 = vmul.f32 %v952, %v548
        %v955 = vmul.f32 %v953, %v552
        %v958 = vrot.slane %v904, 4
        %v959 = vrot.slane %v905, 4
        %v964 = vrot.slane %v920, 4
        %v965 = vrot.slane %v921, 4
        %v970 = vrot.slane %v930, 4
        %v971 = vrot.slane %v931, 4
        %v976 = vrot.slane %v946, 4
        %v977 = vrot.slane %v947, 4
        %v980 = vsel %vm582, %v896, %v958
        %v981 = vsel %vm582, %v897, %v959
        %v982 = vsel %vm582, %v912, %v964
        %v983 = vsel %vm582, %v913, %v965
        %v984 = vsel %vm582, %v922, %v970
        %v985 = vsel %vm582, %v923, %v971
        %v986 = vsel %vm582, %v938, %v976
        %v987 = vsel %vm582, %v939, %v977
        %v989 = vsel %vm704, %v398, 0
        %v992 = vsel %vm582, %v954, 0
        %v995 = vsel %vm582, %v955, 0
        %997 = vmatprep.subr.mxu0 %v981
        %998 = vmatpush1.msra.mxu0 %v980
        %999 = vmatprep.subr.mxu0 %v983
        %1000 = vmatpush1.msra.mxu0 %v982
        %1001 = vmatprep.subr.mxu0 %v985
        %1002 = vmatpush1.msra.mxu0 %v984
        %1003 = vmatprep.subr.mxu0 %v987
        %1004 = vmatpush1.msra.mxu0 %v986
        %1005 = vmatprep.subr.mxu0 %v995
        %1006 = vmatpush1.msra.mxu0 %v992
        %1007 = vmatprep.subr.mxu0 0.0
        %1008 = vmatpush1.msra.mxu0 0.0
        %1009 = vmatprep.subr.mxu0 0.0
        %1010 = vmatpush1.msra.mxu0 0.0
        %1011 = vmatprep.subr.mxu0 0.0
        %1012 = vmatpush1.msra.mxu0 0.0
        %1013 = vmatprep.subr.mxu0 0.0
        %1014 = vmatpush1.msra.mxu0 0.0
        %1015 = vmatprep.subr.mxu0 0.0
        %1016 = vmatpush1.msra.mxu0 0.0
        %1017 = vmatprep.subr.mxu0 0.0
        %1018 = vmatpush1.msra.mxu0 0.0
        %1019 = vmatprep.subr.mxu0 0.0
        %1020 = vmatpush1.msra.mxu0 0.0
        %1021 = vmatprep.subr.mxu0 0.0
        %1022 = vmatpush1.msra.mxu0 0.0
        %1023 = vmatprep.subr.mxu0 0.0
        %1024 = vmatpush1.msra.mxu0 0.0
        %1025 = vmatprep.subr.mxu0 0.0
        %1026 = vmatpush1.msra.mxu0 0.0
        %1027 = vmatprep.subr.mxu0 0.0
        %1028 = vmatpush1.msra.mxu0 0.0
        %1029 = vmatprep.subr.mxu0 0.0
        %1030 = vmatpush1.msra.mxu0 0.0
        %1031 = vmatprep.subr.mxu0 0.0
        %1032 = vmatpush1.msra.mxu0 0.0
        %1033 = vmatprep.subr.mxu0 0.0
        %1034 = vmatpush1.msra.mxu0 0.0
        %1035 = vmatprep.subr.mxu0 0.0
        %1036 = vmatpush1.msra.mxu0 0.0
        %1037 = vmatprep.subr.mxu0 0.0
        %1038 = vmatpush1.msra.mxu0 0.0
        %1039 = vmatprep.subr.mxu0 0.0
        %1040 = vmatpush1.msra.mxu0 0.0
        %1041 = vmatprep.subr.mxu0 0.0
        %1042 = vmatpush1.msra.mxu0 0.0
        %1043 = vmatprep.subr.mxu0 0.0
        %1044 = vmatpush1.msra.mxu0 0.0
        %1045 = vmatprep.subr.mxu0 0.0
        %1046 = vmatpush1.msra.mxu0 0.0
        %1047 = vmatprep.subr.mxu0 0.0
        %1048 = vmatpush1.msra.mxu0 0.0
        %1049 = vmatprep.subr.mxu0 0.0
        %1050 = vmatpush1.msra.mxu0 0.0
        %1051 = vmatprep.subr.mxu0 0.0
        %1052 = vmatpush1.msra.mxu0 0.0
        %1053 = vmatprep.subr.mxu0 0.0
        %1054 = vmatpush1.msra.mxu0 0.0
        %1055 = vmatprep.subr.mxu0 0.0
        %1056 = vmatpush1.msra.mxu0 0.0
        %1057 = vmatprep.subr.mxu0 0.0
        %1058 = vmatpush1.msra.mxu0 0.0
        %1059 = vmatprep.subr.mxu0 0.0
        %1060 = vmatpush1.msra.mxu0 0.0
        %1061 = vmatprep.mubr.f32.mxu0 0.0
        %1062 = vmatmul.mubr.f32.gmra.mrb[0].mxu0 %v989
        %v1063 = vpop.f32.mrb[0].mxu0
        %v1064 = vadd.f32 0.0, %v1063
        %v1065 = vpop.f32.mrb[0].mxu0
        %v1066 = vadd.f32 0.0, %v1065
        %1067 = vdwg.mxu0
        %v1068 = vadd.f32 %v790, %v1064
        %v1069 = vadd.f32 %v792, %v1066
        %v1070 = vtanh.pop %v1068
        %v1071 = vtanh.pop %v1069
        %v1072 = vsub.f32 1.0, %v885
        %v1073 = vsub.f32 1.0, %v887
        %v1074 = vcombine.low %v399, %v399
        %v1076 = vmul.f32 %v1072, %v1074
        %v1077 = vmul.f32 %v1073, %v399
        %v1080 = vrot.slane %v1070, 4
        %v1081 = vrot.slane %v1071, 4
        %v1084 = vmul.f32 %v885, %v1080
        %v1085 = vmul.f32 %v887, %v1081
        %v1086 = vadd.f32 %v1076, %v1084
        %v1087 = vadd.f32 %v1077, %v1085
        %v1090 = vcombine.high %v1086, %v1087
        %1092 = vst [vmem:[%s380] sm:$0xff] %v1090
        %s1093 = scalar_lea.vmem %s328, 8 [#allocation3]
        %v1094 = vld [vmem:[%s1093] sm:$0xff]
        %v1096 = vcombine.high %v1094, %v1094
        %1098 = vrot.lane.b32.xlu0 %v1094, 17
        %v1099 = vpop.permute.xlu0 %1098
        %1100 = vrot.lane.b32.xlu0 %v1096, 17
        %v1101 = vpop.permute.xlu0 %1100
        %v1102 = vsel %vm410, %v1099, %v1101
        %v1103 = vsel %vm410, %v1101, %v1099
        %v1104 = vmul.f32 %v1103, %v416
        %v1105 = vmul.f32 %v1102, %v420
        %1106 = vrot.lane.b32.xlu0 %v1094, 16
        %v1107 = vpop.permute.xlu0 %1106
        %1108 = vrot.lane.b32.xlu0 %v1096, 16
        %v1109 = vpop.permute.xlu0 %1108
        %v1110 = vsel %vm427, %v1107, %v1109
        %v1111 = vsel %vm427, %v1109, %v1107
        %v1112 = vmul.f32 %v1111, %v433
        %v1113 = vmul.f32 %v1110, %v437
        %1114 = vrot.lane.b32.xlu0 %v1094, 15
        %v1115 = vpop.permute.xlu0 %1114
        %1116 = vrot.lane.b32.xlu0 %v1096, 15
        %v1117 = vpop.permute.xlu0 %1116
        %v1118 = vsel %vm444, %v1115, %v1117
        %v1119 = vsel %vm444, %v1117, %v1115
        %v1120 = vmul.f32 %v1119, %v450
        %v1121 = vmul.f32 %v1118, %v454
        %1122 = vrot.lane.b32.xlu0 %v1094, 1
        %v1123 = vpop.permute.xlu0 %1122
        %1124 = vrot.lane.b32.xlu0 %v1096, 1
        %v1125 = vpop.permute.xlu0 %1124
        %v1126 = vsel %vm461, %v1123, %v1125
        %v1127 = vsel %vm461, %v1125, %v1123
        %v1128 = vmul.f32 %v1127, %v467
        %v1129 = vmul.f32 %v1126, %v471
        %v1130 = vmul.f32 %v1094, %v484
        %1131 = vrot.lane.b32.xlu0 %v1094, 127
        %v1132 = vpop.permute.xlu0 %1131
        %1133 = vrot.lane.b32.xlu0 %v1096, 127
        %v1134 = vpop.permute.xlu0 %1133
        %v1135 = vsel %vm491, %v1132, %v1134
        %v1136 = vsel %vm491, %v1134, %v1132
        %v1137 = vmul.f32 %v1135, %v497
        %v1138 = vmul.f32 %v1136, %v501
        %1139 = vrot.lane.b32.xlu0 %v1094, 113
        %v1140 = vpop.permute.xlu0 %1139
        %1141 = vrot.lane.b32.xlu0 %v1096, 113
        %v1142 = vpop.permute.xlu0 %1141
        %v1143 = vsel %vm508, %v1140, %v1142
        %v1144 = vsel %vm508, %v1142, %v1140
        %v1145 = vmul.f32 %v1143, %v514
        %v1146 = vmul.f32 %v1144, %v518
        %1147 = vrot.lane.b32.xlu0 %v1094, 112
        %v1148 = vpop.permute.xlu0 %1147
        %1149 = vrot.lane.b32.xlu0 %v1096, 112
        %v1150 = vpop.permute.xlu0 %1149
        %v1151 = vsel %vm525, %v1148, %v1150
        %v1152 = vsel %vm525, %v1150, %v1148
        %v1153 = vmul.f32 %v1151, %v531
        %v1154 = vmul.f32 %v1152, %v535
        %1155 = vrot.lane.b32.xlu0 %v1094, 111
        %v1156 = vpop.permute.xlu0 %1155
        %1157 = vrot.lane.b32.xlu0 %v1096, 111
        %v1158 = vpop.permute.xlu0 %1157
        %v1159 = vsel %vm542, %v1156, %v1158
        %v1160 = vsel %vm542, %v1158, %v1156
        %v1161 = vmul.f32 %v1159, %v548
        %v1162 = vmul.f32 %v1160, %v552
        %v1165 = vrot.slane %v1112, 4
        %v1166 = vrot.slane %v1113, 4
        %v1171 = vrot.slane %v1128, 4
        %v1172 = vrot.slane %v1129, 4
        %v1176 = vcombine.high %v1130, %v1130
        %v1180 = vrot.slane %v1137, 4
        %v1181 = vrot.slane %v1138, 4
        %v1186 = vrot.slane %v1153, 4
        %v1187 = vrot.slane %v1154, 4
        %v1190 = vsel %vm582, %v1104, %v1165
        %v1191 = vsel %vm582, %v1105, %v1166
        %v1192 = vsel %vm582, %v1120, %v1171
        %v1193 = vsel %vm582, %v1121, %v1172
        %v1194 = vsel %vm582, %v1130, %v1180
        %v1195 = vsel %vm582, %v1176, %v1181
        %v1196 = vsel %vm582, %v1145, %v1186
        %v1197 = vsel %vm582, %v1146, %v1187
        %v1198 = vrot.slane %v1086, 4
        %v1199 = vrot.slane %v1087, 4
        %1202 = vrot.lane.b32.xlu0 %v1198, 17
        %v1203 = vpop.permute.xlu0 %1202
        %1204 = vrot.lane.b32.xlu0 %v1199, 17
        %v1205 = vpop.permute.xlu0 %1204
        %v1206 = vsel %vm410, %v1203, %v1205
        %v1207 = vsel %vm410, %v1205, %v1203
        %v1208 = vmul.f32 %v1207, %v416
        %v1209 = vmul.f32 %v1206, %v420
        %1210 = vrot.lane.b32.xlu0 %v1198, 16
        %v1211 = vpop.permute.xlu0 %1210
        %1212 = vrot.lane.b32.xlu0 %v1199, 16
        %v1213 = vpop.permute.xlu0 %1212
        %v1214 = vsel %vm427, %v1211, %v1213
        %v1215 = vsel %vm427, %v1213, %v1211
        %v1216 = vmul.f32 %v1215, %v433
        %v1217 = vmul.f32 %v1214, %v437
        %1218 = vrot.lane.b32.xlu0 %v1198, 15
        %v1219 = vpop.permute.xlu0 %1218
        %1220 = vrot.lane.b32.xlu0 %v1199, 15
        %v1221 = vpop.permute.xlu0 %1220
        %v1222 = vsel %vm444, %v1219, %v1221
        %v1223 = vsel %vm444, %v1221, %v1219
        %v1224 = vmul.f32 %v1223, %v450
        %v1225 = vmul.f32 %v1222, %v454
        %1226 = vrot.lane.b32.xlu0 %v1198, 1
        %v1227 = vpop.permute.xlu0 %1226
        %1228 = vrot.lane.b32.xlu0 %v1199, 1
        %v1229 = vpop.permute.xlu0 %1228
        %v1230 = vsel %vm461, %v1227, %v1229
        %v1231 = vsel %vm461, %v1229, %v1227
        %v1232 = vmul.f32 %v1231, %v467
        %v1233 = vmul.f32 %v1230, %v471
        %v1234 = vmul.f32 %v1086, %v477
        %v1235 = vmul.f32 %v1087, %v481
        %1236 = vrot.lane.b32.xlu0 %v1198, 127
        %v1237 = vpop.permute.xlu0 %1236
        %1238 = vrot.lane.b32.xlu0 %v1199, 127
        %v1239 = vpop.permute.xlu0 %1238
        %v1240 = vsel %vm491, %v1237, %v1239
        %v1241 = vsel %vm491, %v1239, %v1237
        %v1242 = vmul.f32 %v1240, %v497
        %v1243 = vmul.f32 %v1241, %v501
        %1244 = vrot.lane.b32.xlu0 %v1198, 113
        %v1245 = vpop.permute.xlu0 %1244
        %1246 = vrot.lane.b32.xlu0 %v1199, 113
        %v1247 = vpop.permute.xlu0 %1246
        %v1248 = vsel %vm508, %v1245, %v1247
        %v1249 = vsel %vm508, %v1247, %v1245
        %v1250 = vmul.f32 %v1248, %v514
        %v1251 = vmul.f32 %v1249, %v518
        %1252 = vrot.lane.b32.xlu0 %v1198, 112
        %v1253 = vpop.permute.xlu0 %1252
        %1254 = vrot.lane.b32.xlu0 %v1199, 112
        %v1255 = vpop.permute.xlu0 %1254
        %v1256 = vsel %vm525, %v1253, %v1255
        %v1257 = vsel %vm525, %v1255, %v1253
        %v1258 = vmul.f32 %v1256, %v531
        %v1259 = vmul.f32 %v1257, %v535
        %1260 = vrot.lane.b32.xlu0 %v1198, 111
        %v1261 = vpop.permute.xlu0 %1260
        %1262 = vrot.lane.b32.xlu0 %v1199, 111
        %v1263 = vpop.permute.xlu0 %1262
        %v1264 = vsel %vm542, %v1261, %v1263
        %v1265 = vsel %vm542, %v1263, %v1261
        %v1266 = vmul.f32 %v1264, %v548
        %v1267 = vmul.f32 %v1265, %v552
        %v1270 = vrot.slane %v1216, 4
        %v1271 = vrot.slane %v1217, 4
        %v1276 = vrot.slane %v1232, 4
        %v1277 = vrot.slane %v1233, 4
        %v1282 = vrot.slane %v1234, 4
        %v1283 = vrot.slane %v1235, 4
        %v1288 = vrot.slane %v1242, 4
        %v1289 = vrot.slane %v1243, 4
        %v1294 = vrot.slane %v1258, 4
        %v1295 = vrot.slane %v1259, 4
        %v1298 = vsel %vm582, %v1208, %v1270
        %v1299 = vsel %vm582, %v1209, %v1271
        %v1300 = vsel %vm582, %v1224, %v1276
        %v1301 = vsel %vm582, %v1225, %v1277
        %v1302 = vsel %vm582, %v1282, %v1288
        %v1303 = vsel %vm582, %v1283, %v1289
        %v1304 = vsel %vm582, %v1250, %v1294
        %v1305 = vsel %vm582, %v1251, %v1295
        %v1307 = vsel %vm582, %v1161, 0
        %v1310 = vsel %vm582, %v1162, 0
        %1312 = vmatprep.subr.mxu0 %v1191
        %1313 = vmatpush1.msra.mxu0 %v1190
        %1314 = vmatprep.subr.mxu0 %v1193
        %1315 = vmatpush1.msra.mxu0 %v1192
        %1316 = vmatprep.subr.mxu0 %v1195
        %1317 = vmatpush1.msra.mxu0 %v1194
        %1318 = vmatprep.subr.mxu0 %v1197
        %1319 = vmatpush1.msra.mxu0 %v1196
        %1320 = vmatprep.subr.mxu0 %v1310
        %1321 = vmatpush1.msra.mxu0 %v1307
        %1322 = vmatprep.subr.mxu0 0.0
        %1323 = vmatpush1.msra.mxu0 0.0
        %1324 = vmatprep.subr.mxu0 0.0
        %1325 = vmatpush1.msra.mxu0 0.0
        %1326 = vmatprep.subr.mxu0 0.0
        %1327 = vmatpush1.msra.mxu0 0.0
        %1328 = vmatprep.subr.mxu0 0.0
        %1329 = vmatpush1.msra.mxu0 0.0
        %1330 = vmatprep.subr.mxu0 0.0
        %1331 = vmatpush1.msra.mxu0 0.0
        %1332 = vmatprep.subr.mxu0 0.0
        %1333 = vmatpush1.msra.mxu0 0.0
        %1334 = vmatprep.subr.mxu0 0.0
        %1335 = vmatpush1.msra.mxu0 0.0
        %1336 = vmatprep.subr.mxu0 0.0
        %1337 = vmatpush1.msra.mxu0 0.0
        %1338 = vmatprep.subr.mxu0 0.0
        %1339 = vmatpush1.msra.mxu0 0.0
        %1340 = vmatprep.subr.mxu0 0.0
        %1341 = vmatpush1.msra.mxu0 0.0
        %1342 = vmatprep.subr.mxu0 0.0
        %1343 = vmatpush1.msra.mxu0 0.0
        %1344 = vmatprep.subr.mxu0 0.0
        %1345 = vmatpush1.msra.mxu0 0.0
        %1346 = vmatprep.subr.mxu0 0.0
        %1347 = vmatpush1.msra.mxu0 0.0
        %1348 = vmatprep.subr.mxu0 0.0
        %1349 = vmatpush1.msra.mxu0 0.0
        %1350 = vmatprep.subr.mxu0 0.0
        %1351 = vmatpush1.msra.mxu0 0.0
        %1352 = vmatprep.subr.mxu0 0.0
        %1353 = vmatpush1.msra.mxu0 0.0
        %1354 = vmatprep.subr.mxu0 0.0
        %1355 = vmatpush1.msra.mxu0 0.0
        %1356 = vmatprep.subr.mxu0 0.0
        %1357 = vmatpush1.msra.mxu0 0.0
        %1358 = vmatprep.subr.mxu0 0.0
        %1359 = vmatpush1.msra.mxu0 0.0
        %1360 = vmatprep.subr.mxu0 0.0
        %1361 = vmatpush1.msra.mxu0 0.0
        %1362 = vmatprep.subr.mxu0 0.0
        %1363 = vmatpush1.msra.mxu0 0.0
        %1364 = vmatprep.subr.mxu0 0.0
        %1365 = vmatpush1.msra.mxu0 0.0
        %1366 = vmatprep.subr.mxu0 0.0
        %1367 = vmatpush1.msra.mxu0 0.0
        %1368 = vmatprep.subr.mxu0 0.0
        %1369 = vmatpush1.msra.mxu0 0.0
        %1370 = vmatprep.subr.mxu0 0.0
        %1371 = vmatpush1.msra.mxu0 0.0
        %1372 = vmatprep.subr.mxu0 0.0
        %1373 = vmatpush1.msra.mxu0 0.0
        %1374 = vmatprep.subr.mxu0 0.0
        %1375 = vmatpush1.msra.mxu0 0.0
        %1376 = vmatprep.mubr.f32.mxu0 0.0
        %1377 = vmatmul.mubr.f32.gmra.mrb[0].mxu0 %v706
        %v1378 = vpop.f32.mrb[0].mxu0
        %v1379 = vadd.f32 %v697, %v1378
        %v1380 = vpop.f32.mrb[0].mxu0
        %v1381 = vadd.f32 %v697, %v1380
        %1382 = vmatprep.mubr.f32.mxu0 0.0
        %1383 = vmatmul.mubr.f32.gmra.mrb[0].mxu0 %v709
        %v1384 = vpop.f32.mrb[0].mxu0
        %v1385 = vadd.f32 %v702, %v1384
        %v1386 = vpop.f32.mrb[0].mxu0
        %v1387 = vadd.f32 %v702, %v1386
        %1388 = vdwg.mxu0
        %v1390 = vsel %vm582, %v1266, 0
        %v1393 = vsel %vm582, %v1267, 0
        %1395 = vmatprep.subr.mxu0 %v1299
        %1396 = vmatpush1.msra.mxu0 %v1298
        %1397 = vmatprep.subr.mxu0 %v1301
        %1398 = vmatpush1.msra.mxu0 %v1300
        %1399 = vmatprep.subr.mxu0 %v1303
        %1400 = vmatpush1.msra.mxu0 %v1302
        %1401 = vmatprep.subr.mxu0 %v1305
        %1402 = vmatpush1.msra.mxu0 %v1304
        %1403 = vmatprep.subr.mxu0 %v1393
        %1404 = vmatpush1.msra.mxu0 %v1390
        %1405 = vmatprep.subr.mxu0 0.0
        %1406 = vmatpush1.msra.mxu0 0.0
        %1407 = vmatprep.subr.mxu0 0.0
        %1408 = vmatpush1.msra.mxu0 0.0
        %1409 = vmatprep.subr.mxu0 0.0
        %1410 = vmatpush1.msra.mxu0 0.0
        %1411 = vmatprep.subr.mxu0 0.0
        %1412 = vmatpush1.msra.mxu0 0.0
        %1413 = vmatprep.subr.mxu0 0.0
        %1414 = vmatpush1.msra.mxu0 0.0
        %1415 = vmatprep.subr.mxu0 0.0
        %1416 = vmatpush1.msra.mxu0 0.0
        %1417 = vmatprep.subr.mxu0 0.0
        %1418 = vmatpush1.msra.mxu0 0.0
        %1419 = vmatprep.subr.mxu0 0.0
        %1420 = vmatpush1.msra.mxu0 0.0
        %1421 = vmatprep.subr.mxu0 0.0
        %1422 = vmatpush1.msra.mxu0 0.0
        %1423 = vmatprep.subr.mxu0 0.0
        %1424 = vmatpush1.msra.mxu0 0.0
        %1425 = vmatprep.subr.mxu0 0.0
        %1426 = vmatpush1.msra.mxu0 0.0
        %1427 = vmatprep.subr.mxu0 0.0
        %1428 = vmatpush1.msra.mxu0 0.0
        %1429 = vmatprep.subr.mxu0 0.0
        %1430 = vmatpush1.msra.mxu0 0.0
        %1431 = vmatprep.subr.mxu0 0.0
        %1432 = vmatpush1.msra.mxu0 0.0
        %1433 = vmatprep.subr.mxu0 0.0
        %1434 = vmatpush1.msra.mxu0 0.0
        %1435 = vmatprep.subr.mxu0 0.0
        %1436 = vmatpush1.msra.mxu0 0.0
        %1437 = vmatprep.subr.mxu0 0.0
        %1438 = vmatpush1.msra.mxu0 0.0
        %1439 = vmatprep.subr.mxu0 0.0
        %1440 = vmatpush1.msra.mxu0 0.0
        %1441 = vmatprep.subr.mxu0 0.0
        %1442 = vmatpush1.msra.mxu0 0.0
        %1443 = vmatprep.subr.mxu0 0.0
        %1444 = vmatpush1.msra.mxu0 0.0
        %1445 = vmatprep.subr.mxu0 0.0
        %1446 = vmatpush1.msra.mxu0 0.0
        %1447 = vmatprep.subr.mxu0 0.0
        %1448 = vmatpush1.msra.mxu0 0.0
        %1449 = vmatprep.subr.mxu0 0.0
        %1450 = vmatpush1.msra.mxu0 0.0
        %1451 = vmatprep.subr.mxu0 0.0
        %1452 = vmatpush1.msra.mxu0 0.0
        %1453 = vmatprep.subr.mxu0 0.0
        %1454 = vmatpush1.msra.mxu0 0.0
        %1455 = vmatprep.subr.mxu0 0.0
        %1456 = vmatpush1.msra.mxu0 0.0
        %1457 = vmatprep.subr.mxu0 0.0
        %1458 = vmatpush1.msra.mxu0 0.0
        %1459 = vmatprep.mubr.f32.mxu0 0.0
        %1460 = vmatmul.mubr.f32.gmra.mrb[0].mxu0 %v795
        %v1461 = vpop.f32.mrb[0].mxu0
        %v1462 = vadd.f32 0.0, %v1461
        %v1463 = vpop.f32.mrb[0].mxu0
        %v1464 = vadd.f32 0.0, %v1463
        %1465 = vdwg.mxu0
        %v1466 = vadd.f32 %v1379, %v1462
        %v1467 = vadd.f32 %v1381, %v1464
        %v1468 = vsub.f32 0.0, %v1466
        %v1469 = vsub.f32 0.0, %v1467
        %v1470 = vmul.f32 %v1468, 1.442695
        %v1471 = vpow.pop %v1470
        %v1472 = vmul.f32 %v1469, 1.442695
        %v1473 = vpow.pop %v1472
        %v1474 = vadd.f32 %v1471, 1.0
        %v1475 = vadd.f32 %v1473, 1.0
        %v1476 = vrcp.pop %v1474
        %v1477 = vmul.f32 1.0, %v1476
        %v1478 = vrcp.pop %v1475
        %v1479 = vmul.f32 1.0, %v1478
        %v1480 = vmul.f32 %v1477, %v1198
        %v1481 = vmul.f32 %v1479, %v1199
        %1482 = vrot.lane.b32.xlu0 %v1480, 17
        %v1483 = vpop.permute.xlu0 %1482
        %1484 = vrot.lane.b32.xlu0 %v1481, 17
        %v1485 = vpop.permute.xlu0 %1484
        %v1486 = vsel %vm410, %v1483, %v1485
        %v1487 = vsel %vm410, %v1485, %v1483
        %v1488 = vmul.f32 %v1487, %v416
        %v1489 = vmul.f32 %v1486, %v420
        %1490 = vrot.lane.b32.xlu0 %v1480, 16
        %v1491 = vpop.permute.xlu0 %1490
        %1492 = vrot.lane.b32.xlu0 %v1481, 16
        %v1493 = vpop.permute.xlu0 %1492
        %v1494 = vsel %vm427, %v1491, %v1493
        %v1495 = vsel %vm427, %v1493, %v1491
        %v1496 = vmul.f32 %v1495, %v433
        %v1497 = vmul.f32 %v1494, %v437
        %1498 = vrot.lane.b32.xlu0 %v1480, 15
        %v1499 = vpop.permute.xlu0 %1498
        %1500 = vrot.lane.b32.xlu0 %v1481, 15
        %v1501 = vpop.permute.xlu0 %1500
        %v1502 = vsel %vm444, %v1499, %v1501
        %v1503 = vsel %vm444, %v1501, %v1499
        %v1504 = vmul.f32 %v1503, %v450
        %v1505 = vmul.f32 %v1502, %v454
        %1506 = vrot.lane.b32.xlu0 %v1480, 1
        %v1507 = vpop.permute.xlu0 %1506
        %1508 = vrot.lane.b32.xlu0 %v1481, 1
        %v1509 = vpop.permute.xlu0 %1508
        %v1510 = vsel %vm461, %v1507, %v1509
        %v1511 = vsel %vm461, %v1509, %v1507
        %v1512 = vmul.f32 %v1511, %v467
        %v1513 = vmul.f32 %v1510, %v471
        %v1514 = vmul.f32 %v1480, %v477
        %v1515 = vmul.f32 %v1481, %v481
        %1516 = vrot.lane.b32.xlu0 %v1480, 127
        %v1517 = vpop.permute.xlu0 %1516
        %1518 = vrot.lane.b32.xlu0 %v1481, 127
        %v1519 = vpop.permute.xlu0 %1518
        %v1520 = vsel %vm491, %v1517, %v1519
        %v1521 = vsel %vm491, %v1519, %v1517
        %v1522 = vmul.f32 %v1520, %v497
        %v1523 = vmul.f32 %v1521, %v501
        %1524 = vrot.lane.b32.xlu0 %v1480, 113
        %v1525 = vpop.permute.xlu0 %1524
        %1526 = vrot.lane.b32.xlu0 %v1481, 113
        %v1527 = vpop.permute.xlu0 %1526
        %v1528 = vsel %vm508, %v1525, %v1527
        %v1529 = vsel %vm508, %v1527, %v1525
        %v1530 = vmul.f32 %v1528, %v514
        %v1531 = vmul.f32 %v1529, %v518
        %1532 = vrot.lane.b32.xlu0 %v1480, 112
        %v1533 = vpop.permute.xlu0 %1532
        %1534 = vrot.lane.b32.xlu0 %v1481, 112
        %v1535 = vpop.permute.xlu0 %1534
        %v1536 = vsel %vm525, %v1533, %v1535
        %v1537 = vsel %vm525, %v1535, %v1533
        %v1538 = vmul.f32 %v1536, %v531
        %v1539 = vmul.f32 %v1537, %v535
        %1540 = vrot.lane.b32.xlu0 %v1480, 111
        %v1541 = vpop.permute.xlu0 %1540
        %1542 = vrot.lane.b32.xlu0 %v1481, 111
        %v1543 = vpop.permute.xlu0 %1542
        %v1544 = vsel %vm542, %v1541, %v1543
        %v1545 = vsel %vm542, %v1543, %v1541
        %v1546 = vmul.f32 %v1544, %v548
        %v1547 = vmul.f32 %v1545, %v552
        %v1550 = vrot.slane %v1496, 4
        %v1551 = vrot.slane %v1497, 4
        %v1556 = vrot.slane %v1512, 4
        %v1557 = vrot.slane %v1513, 4
        %v1562 = vrot.slane %v1522, 4
        %v1563 = vrot.slane %v1523, 4
        %v1568 = vrot.slane %v1538, 4
        %v1569 = vrot.slane %v1539, 4
        %v1572 = vsel %vm582, %v1488, %v1550
        %v1573 = vsel %vm582, %v1489, %v1551
        %v1574 = vsel %vm582, %v1504, %v1556
        %v1575 = vsel %vm582, %v1505, %v1557
        %v1576 = vsel %vm582, %v1514, %v1562
        %v1577 = vsel %vm582, %v1515, %v1563
        %v1578 = vsel %vm582, %v1530, %v1568
        %v1579 = vsel %vm582, %v1531, %v1569
        %v1581 = vsel %vm582, %v1546, 0
        %v1584 = vsel %vm582, %v1547, 0
        %1586 = vmatprep.subr.mxu0 %v1573
        %1587 = vmatpush1.msra.mxu0 %v1572
        %1588 = vmatprep.subr.mxu0 %v1575
        %1589 = vmatpush1.msra.mxu0 %v1574
        %1590 = vmatprep.subr.mxu0 %v1577
        %1591 = vmatpush1.msra.mxu0 %v1576
        %1592 = vmatprep.subr.mxu0 %v1579
        %1593 = vmatpush1.msra.mxu0 %v1578
        %1594 = vmatprep.subr.mxu0 %v1584
        %1595 = vmatpush1.msra.mxu0 %v1581
        %1596 = vmatprep.subr.mxu0 0.0
        %1597 = vmatpush1.msra.mxu0 0.0
        %1598 = vmatprep.subr.mxu0 0.0
        %1599 = vmatpush1.msra.mxu0 0.0
        %1600 = vmatprep.subr.mxu0 0.0
        %1601 = vmatpush1.msra.mxu0 0.0
        %1602 = vmatprep.subr.mxu0 0.0
        %1603 = vmatpush1.msra.mxu0 0.0
        %1604 = vmatprep.subr.mxu0 0.0
        %1605 = vmatpush1.msra.mxu0 0.0
        %1606 = vmatprep.subr.mxu0 0.0
        %1607 = vmatpush1.msra.mxu0 0.0
        %1608 = vmatprep.subr.mxu0 0.0
        %1609 = vmatpush1.msra.mxu0 0.0
        %1610 = vmatprep.subr.mxu0 0.0
        %1611 = vmatpush1.msra.mxu0 0.0
        %1612 = vmatprep.subr.mxu0 0.0
        %1613 = vmatpush1.msra.mxu0 0.0
        %1614 = vmatprep.subr.mxu0 0.0
        %1615 = vmatpush1.msra.mxu0 0.0
        %1616 = vmatprep.subr.mxu0 0.0
        %1617 = vmatpush1.msra.mxu0 0.0
        %1618 = vmatprep.subr.mxu0 0.0
        %1619 = vmatpush1.msra.mxu0 0.0
        %1620 = vmatprep.subr.mxu0 0.0
        %1621 = vmatpush1.msra.mxu0 0.0
        %1622 = vmatprep.subr.mxu0 0.0
        %1623 = vmatpush1.msra.mxu0 0.0
        %1624 = vmatprep.subr.mxu0 0.0
        %1625 = vmatpush1.msra.mxu0 0.0
        %1626 = vmatprep.subr.mxu0 0.0
        %1627 = vmatpush1.msra.mxu0 0.0
        %1628 = vmatprep.subr.mxu0 0.0
        %1629 = vmatpush1.msra.mxu0 0.0
        %1630 = vmatprep.subr.mxu0 0.0
        %1631 = vmatpush1.msra.mxu0 0.0
        %1632 = vmatprep.subr.mxu0 0.0
        %1633 = vmatpush1.msra.mxu0 0.0
        %1634 = vmatprep.subr.mxu0 0.0
        %1635 = vmatpush1.msra.mxu0 0.0
        %1636 = vmatprep.subr.mxu0 0.0
        %1637 = vmatpush1.msra.mxu0 0.0
        %1638 = vmatprep.subr.mxu0 0.0
        %1639 = vmatpush1.msra.mxu0 0.0
        %1640 = vmatprep.subr.mxu0 0.0
        %1641 = vmatpush1.msra.mxu0 0.0
        %1642 = vmatprep.subr.mxu0 0.0
        %1643 = vmatpush1.msra.mxu0 0.0
        %1644 = vmatprep.subr.mxu0 0.0
        %1645 = vmatpush1.msra.mxu0 0.0
        %1646 = vmatprep.subr.mxu0 0.0
        %1647 = vmatpush1.msra.mxu0 0.0
        %1648 = vmatprep.subr.mxu0 0.0
        %1649 = vmatpush1.msra.mxu0 0.0
        %1650 = vmatprep.mubr.f32.mxu0 0.0
        %1651 = vmatmul.mubr.f32.gmra.mrb[0].mxu0 %v989
        %v1652 = vpop.f32.mrb[0].mxu0
        %v1653 = vadd.f32 0.0, %v1652
        %v1654 = vpop.f32.mrb[0].mxu0
        %v1655 = vadd.f32 0.0, %v1654
        %1656 = vdwg.mxu0
        %v1657 = vadd.f32 %v1385, %v1653
        %v1658 = vadd.f32 %v1387, %v1655
        %v1659 = vtanh.pop %v1657
        %v1660 = vtanh.pop %v1658
        %v1661 = vsub.f32 1.0, %v1477
        %v1662 = vsub.f32 1.0, %v1479
        %v1663 = vmul.f32 %v1661, %v1086
        %v1664 = vmul.f32 %v1662, %v1087
        %v1667 = vrot.slane %v1659, 4
        %v1668 = vrot.slane %v1660, 4
        %v1671 = vmul.f32 %v1477, %v1667
        %v1672 = vmul.f32 %v1479, %v1668
        %v1673 = vadd.f32 %v1663, %v1671
        %v1674 = vadd.f32 %v1664, %v1672
        %v1677 = vcombine.high %v1673, %v1674
        %s1679 = scalar_lea.vmem %s380, 8 [#allocation11]
        %1680 = vst [vmem:[%s1679] sm:$0xff] %v1677
        %s1681 = scalar_lea.vmem %s328, 16 [#allocation3]
        %v1682 = vld [vmem:[%s1681] sm:$0xff]
        %v1684 = vcombine.high %v1682, %v1682
        %1686 = vrot.lane.b32.xlu0 %v1682, 17
        %v1687 = vpop.permute.xlu0 %1686
        %1688 = vrot.lane.b32.xlu0 %v1684, 17
        %v1689 = vpop.permute.xlu0 %1688
        %v1690 = vsel %vm410, %v1687, %v1689
        %v1691 = vsel %vm410, %v1689, %v1687
        %v1692 = vmul.f32 %v1691, %v416
        %v1693 = vmul.f32 %v1690, %v420
        %1694 = vrot.lane.b32.xlu0 %v1682, 16
        %v1695 = vpop.permute.xlu0 %1694
        %1696 = vrot.lane.b32.xlu0 %v1684, 16
        %v1697 = vpop.permute.xlu0 %1696
        %v1698 = vsel %vm427, %v1695, %v1697
        %v1699 = vsel %vm427, %v1697, %v1695
        %v1700 = vmul.f32 %v1699, %v433
        %v1701 = vmul.f32 %v1698, %v437
        %1702 = vrot.lane.b32.xlu0 %v1682, 15
        %v1703 = vpop.permute.xlu0 %1702
        %1704 = vrot.lane.b32.xlu0 %v1684, 15
        %v1705 = vpop.permute.xlu0 %1704
        %v1706 = vsel %vm444, %v1703, %v1705
        %v1707 = vsel %vm444, %v1705, %v1703
        %v1708 = vmul.f32 %v1707, %v450
        %v1709 = vmul.f32 %v1706, %v454
        %1710 = vrot.lane.b32.xlu0 %v1682, 1
        %v1711 = vpop.permute.xlu0 %1710
        %1712 = vrot.lane.b32.xlu0 %v1684, 1
        %v1713 = vpop.permute.xlu0 %1712
        %v1714 = vsel %vm461, %v1711, %v1713
        %v1715 = vsel %vm461, %v1713, %v1711
        %v1716 = vmul.f32 %v1715, %v467
        %v1717 = vmul.f32 %v1714, %v471
        %v1718 = vmul.f32 %v1682, %v484
        %1719 = vrot.lane.b32.xlu0 %v1682, 127
        %v1720 = vpop.permute.xlu0 %1719
        %1721 = vrot.lane.b32.xlu0 %v1684, 127
        %v1722 = vpop.permute.xlu0 %1721
        %v1723 = vsel %vm491, %v1720, %v1722
        %v1724 = vsel %vm491, %v1722, %v1720
        %v1725 = vmul.f32 %v1723, %v497
        %v1726 = vmul.f32 %v1724, %v501
        %1727 = vrot.lane.b32.xlu0 %v1682, 113
        %v1728 = vpop.permute.xlu0 %1727
        %1729 = vrot.lane.b32.xlu0 %v1684, 113
        %v1730 = vpop.permute.xlu0 %1729
        %v1731 = vsel %vm508, %v1728, %v1730
        %v1732 = vsel %vm508, %v1730, %v1728
        %v1733 = vmul.f32 %v1731, %v514
        %v1734 = vmul.f32 %v1732, %v518
        %1735 = vrot.lane.b32.xlu0 %v1682, 112
        %v1736 = vpop.permute.xlu0 %1735
        %1737 = vrot.lane.b32.xlu0 %v1684, 112
        %v1738 = vpop.permute.xlu0 %1737
        %v1739 = vsel %vm525, %v1736, %v1738
        %v1740 = vsel %vm525, %v1738, %v1736
        %v1741 = vmul.f32 %v1739, %v531
        %v1742 = vmul.f32 %v1740, %v535
        %1743 = vrot.lane.b32.xlu0 %v1682, 111
        %v1744 = vpop.permute.xlu0 %1743
        %1745 = vrot.lane.b32.xlu0 %v1684, 111
        %v1746 = vpop.permute.xlu0 %1745
        %v1747 = vsel %vm542, %v1744, %v1746
        %v1748 = vsel %vm542, %v1746, %v1744
        %v1749 = vmul.f32 %v1747, %v548
        %v1750 = vmul.f32 %v1748, %v552
        %v1753 = vrot.slane %v1700, 4
        %v1754 = vrot.slane %v1701, 4
        %v1759 = vrot.slane %v1716, 4
        %v1760 = vrot.slane %v1717, 4
        %v1764 = vcombine.high %v1718, %v1718
        %v1768 = vrot.slane %v1725, 4
        %v1769 = vrot.slane %v1726, 4
        %v1774 = vrot.slane %v1741, 4
        %v1775 = vrot.slane %v1742, 4
        %v1778 = vsel %vm582, %v1692, %v1753
        %v1779 = vsel %vm582, %v1693, %v1754
        %v1780 = vsel %vm582, %v1708, %v1759
        %v1781 = vsel %vm582, %v1709, %v1760
        %v1782 = vsel %vm582, %v1718, %v1768
        %v1783 = vsel %vm582, %v1764, %v1769
        %v1784 = vsel %vm582, %v1733, %v1774
        %v1785 = vsel %vm582, %v1734, %v1775
        %v1786 = vrot.slane %v1673, 4
        %v1787 = vrot.slane %v1674, 4
        %1790 = vrot.lane.b32.xlu0 %v1786, 17
        %v1791 = vpop.permute.xlu0 %1790
        %1792 = vrot.lane.b32.xlu0 %v1787, 17
        %v1793 = vpop.permute.xlu0 %1792
        %v1794 = vsel %vm410, %v1791, %v1793
        %v1795 = vsel %vm410, %v1793, %v1791
        %v1796 = vmul.f32 %v1795, %v416
        %v1797 = vmul.f32 %v1794, %v420
        %1798 = vrot.lane.b32.xlu0 %v1786, 16
        %v1799 = vpop.permute.xlu0 %1798
        %1800 = vrot.lane.b32.xlu0 %v1787, 16
        %v1801 = vpop.permute.xlu0 %1800
        %v1802 = vsel %vm427, %v1799, %v1801
        %v1803 = vsel %vm427, %v1801, %v1799
        %v1804 = vmul.f32 %v1803, %v433
        %v1805 = vmul.f32 %v1802, %v437
        %1806 = vrot.lane.b32.xlu0 %v1786, 15
        %v1807 = vpop.permute.xlu0 %1806
        %1808 = vrot.lane.b32.xlu0 %v1787, 15
        %v1809 = vpop.permute.xlu0 %1808
        %v1810 = vsel %vm444, %v1807, %v1809
        %v1811 = vsel %vm444, %v1809, %v1807
        %v1812 = vmul.f32 %v1811, %v450
        %v1813 = vmul.f32 %v1810, %v454
        %1814 = vrot.lane.b32.xlu0 %v1786, 1
        %v1815 = vpop.permute.xlu0 %1814
        %1816 = vrot.lane.b32.xlu0 %v1787, 1
        %v1817 = vpop.permute.xlu0 %1816
        %v1818 = vsel %vm461, %v1815, %v1817
        %v1819 = vsel %vm461, %v1817, %v1815
        %v1820 = vmul.f32 %v1819, %v467
        %v1821 = vmul.f32 %v1818, %v471
        %v1822 = vmul.f32 %v1673, %v477
        %v1823 = vmul.f32 %v1674, %v481
        %1824 = vrot.lane.b32.xlu0 %v1786, 127
        %v1825 = vpop.permute.xlu0 %1824
        %1826 = vrot.lane.b32.xlu0 %v1787, 127
        %v1827 = vpop.permute.xlu0 %1826
        %v1828 = vsel %vm491, %v1825, %v1827
        %v1829 = vsel %vm491, %v1827, %v1825
        %v1830 = vmul.f32 %v1828, %v497
        %v1831 = vmul.f32 %v1829, %v501
        %1832 = vrot.lane.b32.xlu0 %v1786, 113
        %v1833 = vpop.permute.xlu0 %1832
        %1834 = vrot.lane.b32.xlu0 %v1787, 113
        %v1835 = vpop.permute.xlu0 %1834
        %v1836 = vsel %vm508, %v1833, %v1835
        %v1837 = vsel %vm508, %v1835, %v1833
        %v1838 = vmul.f32 %v1836, %v514
        %v1839 = vmul.f32 %v1837, %v518
        %1840 = vrot.lane.b32.xlu0 %v1786, 112
        %v1841 = vpop.permute.xlu0 %1840
        %1842 = vrot.lane.b32.xlu0 %v1787, 112
        %v1843 = vpop.permute.xlu0 %1842
        %v1844 = vsel %vm525, %v1841, %v1843
        %v1845 = vsel %vm525, %v1843, %v1841
        %v1846 = vmul.f32 %v1844, %v531
        %v1847 = vmul.f32 %v1845, %v535
        %1848 = vrot.lane.b32.xlu0 %v1786, 111
        %v1849 = vpop.permute.xlu0 %1848
        %1850 = vrot.lane.b32.xlu0 %v1787, 111
        %v1851 = vpop.permute.xlu0 %1850
        %v1852 = vsel %vm542, %v1849, %v1851
        %v1853 = vsel %vm542, %v1851, %v1849
        %v1854 = vmul.f32 %v1852, %v548
        %v1855 = vmul.f32 %v1853, %v552
        %v1858 = vrot.slane %v1804, 4
        %v1859 = vrot.slane %v1805, 4
        %v1864 = vrot.slane %v1820, 4
        %v1865 = vrot.slane %v1821, 4
        %v1870 = vrot.slane %v1822, 4
        %v1871 = vrot.slane %v1823, 4
        %v1876 = vrot.slane %v1830, 4
        %v1877 = vrot.slane %v1831, 4
        %v1882 = vrot.slane %v1846, 4
        %v1883 = vrot.slane %v1847, 4
        %v1886 = vsel %vm582, %v1796, %v1858
        %v1887 = vsel %vm582, %v1797, %v1859
        %v1888 = vsel %vm582, %v1812, %v1864
        %v1889 = vsel %vm582, %v1813, %v1865
        %v1890 = vsel %vm582, %v1870, %v1876
        %v1891 = vsel %vm582, %v1871, %v1877
        %v1892 = vsel %vm582, %v1838, %v1882
        %v1893 = vsel %vm582, %v1839, %v1883
        %v1895 = vsel %vm582, %v1749, 0
        %v1898 = vsel %vm582, %v1750, 0
        %1900 = vmatprep.subr.mxu0 %v1779
        %1901 = vmatpush1.msra.mxu0 %v1778
        %1902 = vmatprep.subr.mxu0 %v1781
        %1903 = vmatpush1.msra.mxu0 %v1780
        %1904 = vmatprep.subr.mxu0 %v1783
        %1905 = vmatpush1.msra.mxu0 %v1782
        %1906 = vmatprep.subr.mxu0 %v1785
        %1907 = vmatpush1.msra.mxu0 %v1784
        %1908 = vmatprep.subr.mxu0 %v1898
        %1909 = vmatpush1.msra.mxu0 %v1895
        %1910 = vmatprep.subr.mxu0 0.0
        %1911 = vmatpush1.msra.mxu0 0.0
        %1912 = vmatprep.subr.mxu0 0.0
        %1913 = vmatpush1.msra.mxu0 0.0
        %1914 = vmatprep.subr.mxu0 0.0
        %1915 = vmatpush1.msra.mxu0 0.0
        %1916 = vmatprep.subr.mxu0 0.0
        %1917 = vmatpush1.msra.mxu0 0.0
        %1918 = vmatprep.subr.mxu0 0.0
        %1919 = vmatpush1.msra.mxu0 0.0
        %1920 = vmatprep.subr.mxu0 0.0
        %1921 = vmatpush1.msra.mxu0 0.0
        %1922 = vmatprep.subr.mxu0 0.0
        %1923 = vmatpush1.msra.mxu0 0.0
        %1924 = vmatprep.subr.mxu0 0.0
        %1925 = vmatpush1.msra.mxu0 0.0
        %1926 = vmatprep.subr.mxu0 0.0
        %1927 = vmatpush1.msra.mxu0 0.0
        %1928 = vmatprep.subr.mxu0 0.0
        %1929 = vmatpush1.msra.mxu0 0.0
        %1930 = vmatprep.subr.mxu0 0.0
        %1931 = vmatpush1.msra.mxu0 0.0
        %1932 = vmatprep.subr.mxu0 0.0
        %1933 = vmatpush1.msra.mxu0 0.0
        %1934 = vmatprep.subr.mxu0 0.0
        %1935 = vmatpush1.msra.mxu0 0.0
        %1936 = vmatprep.subr.mxu0 0.0
        %1937 = vmatpush1.msra.mxu0 0.0
        %1938 = vmatprep.subr.mxu0 0.0
        %1939 = vmatpush1.msra.mxu0 0.0
        %1940 = vmatprep.subr.mxu0 0.0
        %1941 = vmatpush1.msra.mxu0 0.0
        %1942 = vmatprep.subr.mxu0 0.0
        %1943 = vmatpush1.msra.mxu0 0.0
        %1944 = vmatprep.subr.mxu0 0.0
        %1945 = vmatpush1.msra.mxu0 0.0
        %1946 = vmatprep.subr.mxu0 0.0
        %1947 = vmatpush1.msra.mxu0 0.0
        %1948 = vmatprep.subr.mxu0 0.0
        %1949 = vmatpush1.msra.mxu0 0.0
        %1950 = vmatprep.subr.mxu0 0.0
        %1951 = vmatpush1.msra.mxu0 0.0
        %1952 = vmatprep.subr.mxu0 0.0
        %1953 = vmatpush1.msra.mxu0 0.0
        %1954 = vmatprep.subr.mxu0 0.0
        %1955 = vmatpush1.msra.mxu0 0.0
        %1956 = vmatprep.subr.mxu0 0.0
        %1957 = vmatpush1.msra.mxu0 0.0
        %1958 = vmatprep.subr.mxu0 0.0
        %1959 = vmatpush1.msra.mxu0 0.0
        %1960 = vmatprep.subr.mxu0 0.0
        %1961 = vmatpush1.msra.mxu0 0.0
        %1962 = vmatprep.subr.mxu0 0.0
        %1963 = vmatpush1.msra.mxu0 0.0
        %1964 = vmatprep.mubr.f32.mxu0 0.0
        %1965 = vmatmul.mubr.f32.gmra.mrb[0].mxu0 %v706
        %v1966 = vpop.f32.mrb[0].mxu0
        %v1967 = vadd.f32 %v697, %v1966
        %v1968 = vpop.f32.mrb[0].mxu0
        %v1969 = vadd.f32 %v697, %v1968
        %1970 = vmatprep.mubr.f32.mxu0 0.0
        %1971 = vmatmul.mubr.f32.gmra.mrb[0].mxu0 %v709
        %v1972 = vpop.f32.mrb[0].mxu0
        %v1973 = vadd.f32 %v702, %v1972
        %v1974 = vpop.f32.mrb[0].mxu0
        %v1975 = vadd.f32 %v702, %v1974
        %1976 = vdwg.mxu0
        %v1978 = vsel %vm582, %v1854, 0
        %v1981 = vsel %vm582, %v1855, 0
        %1983 = vmatprep.subr.mxu0 %v1887
        %1984 = vmatpush1.msra.mxu0 %v1886
        %1985 = vmatprep.subr.mxu0 %v1889
        %1986 = vmatpush1.msra.mxu0 %v1888
        %1987 = vmatprep.subr.mxu0 %v1891
        %1988 = vmatpush1.msra.mxu0 %v1890
        %1989 = vmatprep.subr.mxu0 %v1893
        %1990 = vmatpush1.msra.mxu0 %v1892
        %1991 = vmatprep.subr.mxu0 %v1981
        %1992 = vmatpush1.msra.mxu0 %v1978
        %1993 = vmatprep.subr.mxu0 0.0
        %1994 = vmatpush1.msra.mxu0 0.0
        %1995 = vmatprep.subr.mxu0 0.0
        %1996 = vmatpush1.msra.mxu0 0.0
        %1997 = vmatprep.subr.mxu0 0.0
        %1998 = vmatpush1.msra.mxu0 0.0
        %1999 = vmatprep.subr.mxu0 0.0
        %2000 = vmatpush1.msra.mxu0 0.0
        %2001 = vmatprep.subr.mxu0 0.0
        %2002 = vmatpush1.msra.mxu0 0.0
        %2003 = vmatprep.subr.mxu0 0.0
        %2004 = vmatpush1.msra.mxu0 0.0
        %2005 = vmatprep.subr.mxu0 0.0
        %2006 = vmatpush1.msra.mxu0 0.0
        %2007 = vmatprep.subr.mxu0 0.0
        %2008 = vmatpush1.msra.mxu0 0.0
        %2009 = vmatprep.subr.mxu0 0.0
        %2010 = vmatpush1.msra.mxu0 0.0
        %2011 = vmatprep.subr.mxu0 0.0
        %2012 = vmatpush1.msra.mxu0 0.0
        %2013 = vmatprep.subr.mxu0 0.0
        %2014 = vmatpush1.msra.mxu0 0.0
        %2015 = vmatprep.subr.mxu0 0.0
        %2016 = vmatpush1.msra.mxu0 0.0
        %2017 = vmatprep.subr.mxu0 0.0
        %2018 = vmatpush1.msra.mxu0 0.0
        %2019 = vmatprep.subr.mxu0 0.0
        %2020 = vmatpush1.msra.mxu0 0.0
        %2021 = vmatprep.subr.mxu0 0.0
        %2022 = vmatpush1.msra.mxu0 0.0
        %2023 = vmatprep.subr.mxu0 0.0
        %2024 = vmatpush1.msra.mxu0 0.0
        %2025 = vmatprep.subr.mxu0 0.0
        %2026 = vmatpush1.msra.mxu0 0.0
        %2027 = vmatprep.subr.mxu0 0.0
        %2028 = vmatpush1.msra.mxu0 0.0
        %2029 = vmatprep.subr.mxu0 0.0
        %2030 = vmatpush1.msra.mxu0 0.0
        %2031 = vmatprep.subr.mxu0 0.0
        %2032 = vmatpush1.msra.mxu0 0.0
        %2033 = vmatprep.subr.mxu0 0.0
        %2034 = vmatpush1.msra.mxu0 0.0
        %2035 = vmatprep.subr.mxu0 0.0
        %2036 = vmatpush1.msra.mxu0 0.0
        %2037 = vmatprep.subr.mxu0 0.0
        %2038 = vmatpush1.msra.mxu0 0.0
        %2039 = vmatprep.subr.mxu0 0.0
        %2040 = vmatpush1.msra.mxu0 0.0
        %2041 = vmatprep.subr.mxu0 0.0
        %2042 = vmatpush1.msra.mxu0 0.0
        %2043 = vmatprep.subr.mxu0 0.0
        %2044 = vmatpush1.msra.mxu0 0.0
        %2045 = vmatprep.subr.mxu0 0.0
        %2046 = vmatpush1.msra.mxu0 0.0
        %2047 = vmatprep.mubr.f32.mxu0 0.0
        %2048 = vmatmul.mubr.f32.gmra.mrb[0].mxu0 %v795
        %v2049 = vpop.f32.mrb[0].mxu0
        %v2050 = vadd.f32 0.0, %v2049
        %v2051 = vpop.f32.mrb[0].mxu0
        %v2052 = vadd.f32 0.0, %v2051
        %2053 = vdwg.mxu0
        %v2054 = vadd.f32 %v1967, %v2050
        %v2055 = vadd.f32 %v1969, %v2052
        %v2056 = vsub.f32 0.0, %v2054
        %v2057 = vsub.f32 0.0, %v2055
        %v2058 = vmul.f32 %v2056, 1.442695
        %v2059 = vpow.pop %v2058
        %v2060 = vmul.f32 %v2057, 1.442695
        %v2061 = vpow.pop %v2060
        %v2062 = vadd.f32 %v2059, 1.0
        %v2063 = vadd.f32 %v2061, 1.0
        %v2064 = vrcp.pop %v2062
        %v2065 = vmul.f32 1.0, %v2064
        %v2066 = vrcp.pop %v2063
        %v2067 = vmul.f32 1.0, %v2066
        %v2068 = vmul.f32 %v2065, %v1786
        %v2069 = vmul.f32 %v2067, %v1787
        %2070 = vrot.lane.b32.xlu0 %v2068, 17
        %v2071 = vpop.permute.xlu0 %2070
        %2072 = vrot.lane.b32.xlu0 %v2069, 17
        %v2073 = vpop.permute.xlu0 %2072
        %v2074 = vsel %vm410, %v2071, %v2073
        %v2075 = vsel %vm410, %v2073, %v2071
        %v2076 = vmul.f32 %v2075, %v416
        %v2077 = vmul.f32 %v2074, %v420
        %2078 = vrot.lane.b32.xlu0 %v2068, 16
        %v2079 = vpop.permute.xlu0 %2078
        %2080 = vrot.lane.b32.xlu0 %v2069, 16
        %v2081 = vpop.permute.xlu0 %2080
        %v2082 = vsel %vm427, %v2079, %v2081
        %v2083 = vsel %vm427, %v2081, %v2079
        %v2084 = vmul.f32 %v2083, %v433
        %v2085 = vmul.f32 %v2082, %v437
        %2086 = vrot.lane.b32.xlu0 %v2068, 15
        %v2087 = vpop.permute.xlu0 %2086
        %2088 = vrot.lane.b32.xlu0 %v2069, 15
        %v2089 = vpop.permute.xlu0 %2088
        %v2090 = vsel %vm444, %v2087, %v2089
        %v2091 = vsel %vm444, %v2089, %v2087
        %v2092 = vmul.f32 %v2091, %v450
        %v2093 = vmul.f32 %v2090, %v454
        %2094 = vrot.lane.b32.xlu0 %v2068, 1
        %v2095 = vpop.permute.xlu0 %2094
        %2096 = vrot.lane.b32.xlu0 %v2069, 1
        %v2097 = vpop.permute.xlu0 %2096
        %v2098 = vsel %vm461, %v2095, %v2097
        %v2099 = vsel %vm461, %v2097, %v2095
        %v2100 = vmul.f32 %v2099, %v467
        %v2101 = vmul.f32 %v2098, %v471
        %v2102 = vmul.f32 %v2068, %v477
        %v2103 = vmul.f32 %v2069, %v481
        %2104 = vrot.lane.b32.xlu0 %v2068, 127
        %v2105 = vpop.permute.xlu0 %2104
        %2106 = vrot.lane.b32.xlu0 %v2069, 127
        %v2107 = vpop.permute.xlu0 %2106
        %v2108 = vsel %vm491, %v2105, %v2107
        %v2109 = vsel %vm491, %v2107, %v2105
        %v2110 = vmul.f32 %v2108, %v497
        %v2111 = vmul.f32 %v2109, %v501
        %2112 = vrot.lane.b32.xlu0 %v2068, 113
        %v2113 = vpop.permute.xlu0 %2112
        %2114 = vrot.lane.b32.xlu0 %v2069, 113
        %v2115 = vpop.permute.xlu0 %2114
        %v2116 = vsel %vm508, %v2113, %v2115
        %v2117 = vsel %vm508, %v2115, %v2113
        %v2118 = vmul.f32 %v2116, %v514
        %v2119 = vmul.f32 %v2117, %v518
        %2120 = vrot.lane.b32.xlu0 %v2068, 112
        %v2121 = vpop.permute.xlu0 %2120
        %2122 = vrot.lane.b32.xlu0 %v2069, 112
        %v2123 = vpop.permute.xlu0 %2122
        %v2124 = vsel %vm525, %v2121, %v2123
        %v2125 = vsel %vm525, %v2123, %v2121
        %v2126 = vmul.f32 %v2124, %v531
        %v2127 = vmul.f32 %v2125, %v535
        %2128 = vrot.lane.b32.xlu0 %v2068, 111
        %v2129 = vpop.permute.xlu0 %2128
        %2130 = vrot.lane.b32.xlu0 %v2069, 111
        %v2131 = vpop.permute.xlu0 %2130
        %v2132 = vsel %vm542, %v2129, %v2131
        %v2133 = vsel %vm542, %v2131, %v2129
        %v2134 = vmul.f32 %v2132, %v548
        %v2135 = vmul.f32 %v2133, %v552
        %v2138 = vrot.slane %v2084, 4
        %v2139 = vrot.slane %v2085, 4
        %v2144 = vrot.slane %v2100, 4
        %v2145 = vrot.slane %v2101, 4
        %v2150 = vrot.slane %v2110, 4
        %v2151 = vrot.slane %v2111, 4
        %v2156 = vrot.slane %v2126, 4
        %v2157 = vrot.slane %v2127, 4
        %v2160 = vsel %vm582, %v2076, %v2138
        %v2161 = vsel %vm582, %v2077, %v2139
        %v2162 = vsel %vm582, %v2092, %v2144
        %v2163 = vsel %vm582, %v2093, %v2145
        %v2164 = vsel %vm582, %v2102, %v2150
        %v2165 = vsel %vm582, %v2103, %v2151
        %v2166 = vsel %vm582, %v2118, %v2156
        %v2167 = vsel %vm582, %v2119, %v2157
        %v2169 = vsel %vm582, %v2134, 0
        %v2172 = vsel %vm582, %v2135, 0
        %2174 = vmatprep.subr.mxu0 %v2161
        %2175 = vmatpush1.msra.mxu0 %v2160
        %2176 = vmatprep.subr.mxu0 %v2163
        %2177 = vmatpush1.msra.mxu0 %v2162
        %2178 = vmatprep.subr.mxu0 %v2165
        %2179 = vmatpush1.msra.mxu0 %v2164
        %2180 = vmatprep.subr.mxu0 %v2167
        %2181 = vmatpush1.msra.mxu0 %v2166
        %2182 = vmatprep.subr.mxu0 %v2172
        %2183 = vmatpush1.msra.mxu0 %v2169
        %2184 = vmatprep.subr.mxu0 0.0
        %2185 = vmatpush1.msra.mxu0 0.0
        %2186 = vmatprep.subr.mxu0 0.0
        %2187 = vmatpush1.msra.mxu0 0.0
        %2188 = vmatprep.subr.mxu0 0.0
        %2189 = vmatpush1.msra.mxu0 0.0
        %2190 = vmatprep.subr.mxu0 0.0
        %2191 = vmatpush1.msra.mxu0 0.0
        %2192 = vmatprep.subr.mxu0 0.0
        %2193 = vmatpush1.msra.mxu0 0.0
        %2194 = vmatprep.subr.mxu0 0.0
        %2195 = vmatpush1.msra.mxu0 0.0
        %2196 = vmatprep.subr.mxu0 0.0
        %2197 = vmatpush1.msra.mxu0 0.0
        %2198 = vmatprep.subr.mxu0 0.0
        %2199 = vmatpush1.msra.mxu0 0.0
        %2200 = vmatprep.subr.mxu0 0.0
        %2201 = vmatpush1.msra.mxu0 0.0
        %2202 = vmatprep.subr.mxu0 0.0
        %2203 = vmatpush1.msra.mxu0 0.0
        %2204 = vmatprep.subr.mxu0 0.0
        %2205 = vmatpush1.msra.mxu0 0.0
        %2206 = vmatprep.subr.mxu0 0.0
        %2207 = vmatpush1.msra.mxu0 0.0
        %2208 = vmatprep.subr.mxu0 0.0
        %2209 = vmatpush1.msra.mxu0 0.0
        %2210 = vmatprep.subr.mxu0 0.0
        %2211 = vmatpush1.msra.mxu0 0.0
        %2212 = vmatprep.subr.mxu0 0.0
        %2213 = vmatpush1.msra.mxu0 0.0
        %2214 = vmatprep.subr.mxu0 0.0
        %2215 = vmatpush1.msra.mxu0 0.0
        %2216 = vmatprep.subr.mxu0 0.0
        %2217 = vmatpush1.msra.mxu0 0.0
        %2218 = vmatprep.subr.mxu0 0.0
        %2219 = vmatpush1.msra.mxu0 0.0
        %2220 = vmatprep.subr.mxu0 0.0
        %2221 = vmatpush1.msra.mxu0 0.0
        %2222 = vmatprep.subr.mxu0 0.0
        %2223 = vmatpush1.msra.mxu0 0.0
        %2224 = vmatprep.subr.mxu0 0.0
        %2225 = vmatpush1.msra.mxu0 0.0
        %2226 = vmatprep.subr.mxu0 0.0
        %2227 = vmatpush1.msra.mxu0 0.0
        %2228 = vmatprep.subr.mxu0 0.0
        %2229 = vmatpush1.msra.mxu0 0.0
        %2230 = vmatprep.subr.mxu0 0.0
        %2231 = vmatpush1.msra.mxu0 0.0
        %2232 = vmatprep.subr.mxu0 0.0
        %2233 = vmatpush1.msra.mxu0 0.0
        %2234 = vmatprep.subr.mxu0 0.0
        %2235 = vmatpush1.msra.mxu0 0.0
        %2236 = vmatprep.subr.mxu0 0.0
        %2237 = vmatpush1.msra.mxu0 0.0
        %2238 = vmatprep.mubr.f32.mxu0 0.0
        %2239 = vmatmul.mubr.f32.gmra.mrb[0].mxu0 %v989
        %v2240 = vpop.f32.mrb[0].mxu0
        %v2241 = vadd.f32 0.0, %v2240
        %v2242 = vpop.f32.mrb[0].mxu0
        %v2243 = vadd.f32 0.0, %v2242
        %2244 = vdwg.mxu0
        %v2245 = vadd.f32 %v1973, %v2241
        %v2246 = vadd.f32 %v1975, %v2243
        %v2247 = vtanh.pop %v2245
        %v2248 = vtanh.pop %v2246
        %v2249 = vsub.f32 1.0, %v2065
        %v2250 = vsub.f32 1.0, %v2067
        %v2251 = vmul.f32 %v2249, %v1673
        %v2252 = vmul.f32 %v2250, %v1674
        %v2255 = vrot.slane %v2247, 4
        %v2256 = vrot.slane %v2248, 4
        %v2259 = vmul.f32 %v2065, %v2255
        %v2260 = vmul.f32 %v2067, %v2256
        %v2261 = vadd.f32 %v2251, %v2259
        %v2262 = vadd.f32 %v2252, %v2260
        %v2265 = vcombine.high %v2261, %v2262
        %s2267 = scalar_lea.vmem %s380, 16 [#allocation11]
        %2268 = vst [vmem:[%s2267] sm:$0xff] %v2265
        %s2269 = scalar_lea.vmem %s328, 24 [#allocation3]
        %v2270 = vld [vmem:[%s2269] sm:$0xff]
        %v2272 = vcombine.high %v2270, %v2270
        %2274 = vrot.lane.b32.xlu0 %v2270, 17
        %v2275 = vpop.permute.xlu0 %2274
        %2276 = vrot.lane.b32.xlu0 %v2272, 17
        %v2277 = vpop.permute.xlu0 %2276
        %v2278 = vsel %vm410, %v2275, %v2277
        %v2279 = vsel %vm410, %v2277, %v2275
        %v2280 = vmul.f32 %v2279, %v416
        %v2281 = vmul.f32 %v2278, %v420
        %2282 = vrot.lane.b32.xlu0 %v2270, 16
        %v2283 = vpop.permute.xlu0 %2282
        %2284 = vrot.lane.b32.xlu0 %v2272, 16
        %v2285 = vpop.permute.xlu0 %2284
        %v2286 = vsel %vm427, %v2283, %v2285
        %v2287 = vsel %vm427, %v2285, %v2283
        %v2288 = vmul.f32 %v2287, %v433
        %v2289 = vmul.f32 %v2286, %v437
        %2290 = vrot.lane.b32.xlu0 %v2270, 15
        %v2291 = vpop.permute.xlu0 %2290
        %2292 = vrot.lane.b32.xlu0 %v2272, 15
        %v2293 = vpop.permute.xlu0 %2292
        %v2294 = vsel %vm444, %v2291, %v2293
        %v2295 = vsel %vm444, %v2293, %v2291
        %v2296 = vmul.f32 %v2295, %v450
        %v2297 = vmul.f32 %v2294, %v454
        %2298 = vrot.lane.b32.xlu0 %v2270, 1
        %v2299 = vpop.permute.xlu0 %2298
        %2300 = vrot.lane.b32.xlu0 %v2272, 1
        %v2301 = vpop.permute.xlu0 %2300
        %v2302 = vsel %vm461, %v2299, %v2301
        %v2303 = vsel %vm461, %v2301, %v2299
        %v2304 = vmul.f32 %v2303, %v467
        %v2305 = vmul.f32 %v2302, %v471
        %v2306 = vmul.f32 %v2270, %v484
        %2307 = vrot.lane.b32.xlu0 %v2270, 127
        %v2308 = vpop.permute.xlu0 %2307
        %2309 = vrot.lane.b32.xlu0 %v2272, 127
        %v2310 = vpop.permute.xlu0 %2309
        %v2311 = vsel %vm491, %v2308, %v2310
        %v2312 = vsel %vm491, %v2310, %v2308
        %v2313 = vmul.f32 %v2311, %v497
        %v2314 = vmul.f32 %v2312, %v501
        %2315 = vrot.lane.b32.xlu0 %v2270, 113
        %v2316 = vpop.permute.xlu0 %2315
        %2317 = vrot.lane.b32.xlu0 %v2272, 113
        %v2318 = vpop.permute.xlu0 %2317
        %v2319 = vsel %vm508, %v2316, %v2318
        %v2320 = vsel %vm508, %v2318, %v2316
        %v2321 = vmul.f32 %v2319, %v514
        %v2322 = vmul.f32 %v2320, %v518
        %2323 = vrot.lane.b32.xlu0 %v2270, 112
        %v2324 = vpop.permute.xlu0 %2323
        %2325 = vrot.lane.b32.xlu0 %v2272, 112
        %v2326 = vpop.permute.xlu0 %2325
        %v2327 = vsel %vm525, %v2324, %v2326
        %v2328 = vsel %vm525, %v2326, %v2324
        %v2329 = vmul.f32 %v2327, %v531
        %v2330 = vmul.f32 %v2328, %v535
        %2331 = vrot.lane.b32.xlu0 %v2270, 111
        %v2332 = vpop.permute.xlu0 %2331
        %2333 = vrot.lane.b32.xlu0 %v2272, 111
        %v2334 = vpop.permute.xlu0 %2333
        %v2335 = vsel %vm542, %v2332, %v2334
        %v2336 = vsel %vm542, %v2334, %v2332
        %v2337 = vmul.f32 %v2335, %v548
        %v2338 = vmul.f32 %v2336, %v552
        %v2341 = vrot.slane %v2288, 4
        %v2342 = vrot.slane %v2289, 4
        %v2347 = vrot.slane %v2304, 4
        %v2348 = vrot.slane %v2305, 4
        %v2352 = vcombine.high %v2306, %v2306
        %v2356 = vrot.slane %v2313, 4
        %v2357 = vrot.slane %v2314, 4
        %v2362 = vrot.slane %v2329, 4
        %v2363 = vrot.slane %v2330, 4
        %v2366 = vsel %vm582, %v2280, %v2341
        %v2367 = vsel %vm582, %v2281, %v2342
        %v2368 = vsel %vm582, %v2296, %v2347
        %v2369 = vsel %vm582, %v2297, %v2348
        %v2370 = vsel %vm582, %v2306, %v2356
        %v2371 = vsel %vm582, %v2352, %v2357
        %v2372 = vsel %vm582, %v2321, %v2362
        %v2373 = vsel %vm582, %v2322, %v2363
        %v2374 = vrot.slane %v2261, 4
        %v2375 = vrot.slane %v2262, 4
        %2378 = vrot.lane.b32.xlu0 %v2374, 17
        %v2379 = vpop.permute.xlu0 %2378
        %2380 = vrot.lane.b32.xlu0 %v2375, 17
        %v2381 = vpop.permute.xlu0 %2380
        %v2382 = vsel %vm410, %v2379, %v2381
        %v2383 = vsel %vm410, %v2381, %v2379
        %v2384 = vmul.f32 %v2383, %v416
        %v2385 = vmul.f32 %v2382, %v420
        %2386 = vrot.lane.b32.xlu0 %v2374, 16
        %v2387 = vpop.permute.xlu0 %2386
        %2388 = vrot.lane.b32.xlu0 %v2375, 16
        %v2389 = vpop.permute.xlu0 %2388
        %v2390 = vsel %vm427, %v2387, %v2389
        %v2391 = vsel %vm427, %v2389, %v2387
        %v2392 = vmul.f32 %v2391, %v433
        %v2393 = vmul.f32 %v2390, %v437
        %2394 = vrot.lane.b32.xlu0 %v2374, 15
        %v2395 = vpop.permute.xlu0 %2394
        %2396 = vrot.lane.b32.xlu0 %v2375, 15
        %v2397 = vpop.permute.xlu0 %2396
        %v2398 = vsel %vm444, %v2395, %v2397
        %v2399 = vsel %vm444, %v2397, %v2395
        %v2400 = vmul.f32 %v2399, %v450
        %v2401 = vmul.f32 %v2398, %v454
        %2402 = vrot.lane.b32.xlu0 %v2374, 1
        %v2403 = vpop.permute.xlu0 %2402
        %2404 = vrot.lane.b32.xlu0 %v2375, 1
        %v2405 = vpop.permute.xlu0 %2404
        %v2406 = vsel %vm461, %v2403, %v2405
        %v2407 = vsel %vm461, %v2405, %v2403
        %v2408 = vmul.f32 %v2407, %v467
        %v2409 = vmul.f32 %v2406, %v471
        %v2410 = vmul.f32 %v2261, %v477
        %v2411 = vmul.f32 %v2262, %v481
        %2412 = vrot.lane.b32.xlu0 %v2374, 127
        %v2413 = vpop.permute.xlu0 %2412
        %2414 = vrot.lane.b32.xlu0 %v2375, 127
        %v2415 = vpop.permute.xlu0 %2414
        %v2416 = vsel %vm491, %v2413, %v2415
        %v2417 = vsel %vm491, %v2415, %v2413
        %v2418 = vmul.f32 %v2416, %v497
        %v2419 = vmul.f32 %v2417, %v501
        %2420 = vrot.lane.b32.xlu0 %v2374, 113
        %v2421 = vpop.permute.xlu0 %2420
        %2422 = vrot.lane.b32.xlu0 %v2375, 113
        %v2423 = vpop.permute.xlu0 %2422
        %v2424 = vsel %vm508, %v2421, %v2423
        %v2425 = vsel %vm508, %v2423, %v2421
        %v2426 = vmul.f32 %v2424, %v514
        %v2427 = vmul.f32 %v2425, %v518
        %2428 = vrot.lane.b32.xlu0 %v2374, 112
        %v2429 = vpop.permute.xlu0 %2428
        %2430 = vrot.lane.b32.xlu0 %v2375, 112
        %v2431 = vpop.permute.xlu0 %2430
        %v2432 = vsel %vm525, %v2429, %v2431
        %v2433 = vsel %vm525, %v2431, %v2429
        %v2434 = vmul.f32 %v2432, %v531
        %v2435 = vmul.f32 %v2433, %v535
        %2436 = vrot.lane.b32.xlu0 %v2374, 111
        %v2437 = vpop.permute.xlu0 %2436
        %2438 = vrot.lane.b32.xlu0 %v2375, 111
        %v2439 = vpop.permute.xlu0 %2438
        %v2440 = vsel %vm542, %v2437, %v2439
        %v2441 = vsel %vm542, %v2439, %v2437
        %v2442 = vmul.f32 %v2440, %v548
        %v2443 = vmul.f32 %v2441, %v552
        %v2446 = vrot.slane %v2392, 4
        %v2447 = vrot.slane %v2393, 4
        %v2452 = vrot.slane %v2408, 4
        %v2453 = vrot.slane %v2409, 4
        %v2458 = vrot.slane %v2410, 4
        %v2459 = vrot.slane %v2411, 4
        %v2464 = vrot.slane %v2418, 4
        %v2465 = vrot.slane %v2419, 4
        %v2470 = vrot.slane %v2434, 4
        %v2471 = vrot.slane %v2435, 4
        %v2474 = vsel %vm582, %v2384, %v2446
        %v2475 = vsel %vm582, %v2385, %v2447
        %v2476 = vsel %vm582, %v2400, %v2452
        %v2477 = vsel %vm582, %v2401, %v2453
        %v2478 = vsel %vm582, %v2458, %v2464
        %v2479 = vsel %vm582, %v2459, %v2465
        %v2480 = vsel %vm582, %v2426, %v2470
        %v2481 = vsel %vm582, %v2427, %v2471
        %v2483 = vsel %vm582, %v2337, 0
        %v2486 = vsel %vm582, %v2338, 0
        %2488 = vmatprep.subr.mxu0 %v2367
        %2489 = vmatpush1.msra.mxu0 %v2366
        %2490 = vmatprep.subr.mxu0 %v2369
        %2491 = vmatpush1.msra.mxu0 %v2368
        %2492 = vmatprep.subr.mxu0 %v2371
        %2493 = vmatpush1.msra.mxu0 %v2370
        %2494 = vmatprep.subr.mxu0 %v2373
        %2495 = vmatpush1.msra.mxu0 %v2372
        %2496 = vmatprep.subr.mxu0 %v2486
        %2497 = vmatpush1.msra.mxu0 %v2483
        %2498 = vmatprep.subr.mxu0 0.0
        %2499 = vmatpush1.msra.mxu0 0.0
        %2500 = vmatprep.subr.mxu0 0.0
        %2501 = vmatpush1.msra.mxu0 0.0
        %2502 = vmatprep.subr.mxu0 0.0
        %2503 = vmatpush1.msra.mxu0 0.0
        %2504 = vmatprep.subr.mxu0 0.0
        %2505 = vmatpush1.msra.mxu0 0.0
        %2506 = vmatprep.subr.mxu0 0.0
        %2507 = vmatpush1.msra.mxu0 0.0
        %2508 = vmatprep.subr.mxu0 0.0
        %2509 = vmatpush1.msra.mxu0 0.0
        %2510 = vmatprep.subr.mxu0 0.0
        %2511 = vmatpush1.msra.mxu0 0.0
        %2512 = vmatprep.subr.mxu0 0.0
        %2513 = vmatpush1.msra.mxu0 0.0
        %2514 = vmatprep.subr.mxu0 0.0
        %2515 = vmatpush1.msra.mxu0 0.0
        %2516 = vmatprep.subr.mxu0 0.0
        %2517 = vmatpush1.msra.mxu0 0.0
        %2518 = vmatprep.subr.mxu0 0.0
        %2519 = vmatpush1.msra.mxu0 0.0
        %2520 = vmatprep.subr.mxu0 0.0
        %2521 = vmatpush1.msra.mxu0 0.0
        %2522 = vmatprep.subr.mxu0 0.0
        %2523 = vmatpush1.msra.mxu0 0.0
        %2524 = vmatprep.subr.mxu0 0.0
        %2525 = vmatpush1.msra.mxu0 0.0
        %2526 = vmatprep.subr.mxu0 0.0
        %2527 = vmatpush1.msra.mxu0 0.0
        %2528 = vmatprep.subr.mxu0 0.0
        %2529 = vmatpush1.msra.mxu0 0.0
        %2530 = vmatprep.subr.mxu0 0.0
        %2531 = vmatpush1.msra.mxu0 0.0
        %2532 = vmatprep.subr.mxu0 0.0
        %2533 = vmatpush1.msra.mxu0 0.0
        %2534 = vmatprep.subr.mxu0 0.0
        %2535 = vmatpush1.msra.mxu0 0.0
        %2536 = vmatprep.subr.mxu0 0.0
        %2537 = vmatpush1.msra.mxu0 0.0
        %2538 = vmatprep.subr.mxu0 0.0
        %2539 = vmatpush1.msra.mxu0 0.0
        %2540 = vmatprep.subr.mxu0 0.0
        %2541 = vmatpush1.msra.mxu0 0.0
        %2542 = vmatprep.subr.mxu0 0.0
        %2543 = vmatpush1.msra.mxu0 0.0
        %2544 = vmatprep.subr.mxu0 0.0
        %2545 = vmatpush1.msra.mxu0 0.0
        %2546 = vmatprep.subr.mxu0 0.0
        %2547 = vmatpush1.msra.mxu0 0.0
        %2548 = vmatprep.subr.mxu0 0.0
        %2549 = vmatpush1.msra.mxu0 0.0
        %2550 = vmatprep.subr.mxu0 0.0
        %2551 = vmatpush1.msra.mxu0 0.0
        %2552 = vmatprep.mubr.f32.mxu0 0.0
        %2553 = vmatmul.mubr.f32.gmra.mrb[0].mxu0 %v706
        %v2554 = vpop.f32.mrb[0].mxu0
        %v2555 = vadd.f32 %v697, %v2554
        %v2556 = vpop.f32.mrb[0].mxu0
        %v2557 = vadd.f32 %v697, %v2556
        %2558 = vmatprep.mubr.f32.mxu0 0.0
        %2559 = vmatmul.mubr.f32.gmra.mrb[0].mxu0 %v709
        %v2560 = vpop.f32.mrb[0].mxu0
        %v2561 = vadd.f32 %v702, %v2560
        %v2562 = vpop.f32.mrb[0].mxu0
        %v2563 = vadd.f32 %v702, %v2562
        %2564 = vdwg.mxu0
        %v2566 = vsel %vm582, %v2442, 0
        %v2569 = vsel %vm582, %v2443, 0
        %2571 = vmatprep.subr.mxu0 %v2475
        %2572 = vmatpush1.msra.mxu0 %v2474
        %2573 = vmatprep.subr.mxu0 %v2477
        %2574 = vmatpush1.msra.mxu0 %v2476
        %2575 = vmatprep.subr.mxu0 %v2479
        %2576 = vmatpush1.msra.mxu0 %v2478
        %2577 = vmatprep.subr.mxu0 %v2481
        %2578 = vmatpush1.msra.mxu0 %v2480
        %2579 = vmatprep.subr.mxu0 %v2569
        %2580 = vmatpush1.msra.mxu0 %v2566
        %2581 = vmatprep.subr.mxu0 0.0
        %2582 = vmatpush1.msra.mxu0 0.0
        %2583 = vmatprep.subr.mxu0 0.0
        %2584 = vmatpush1.msra.mxu0 0.0
        %2585 = vmatprep.subr.mxu0 0.0
        %2586 = vmatpush1.msra.mxu0 0.0
        %2587 = vmatprep.subr.mxu0 0.0
        %2588 = vmatpush1.msra.mxu0 0.0
        %2589 = vmatprep.subr.mxu0 0.0
        %2590 = vmatpush1.msra.mxu0 0.0
        %2591 = vmatprep.subr.mxu0 0.0
        %2592 = vmatpush1.msra.mxu0 0.0
        %2593 = vmatprep.subr.mxu0 0.0
        %2594 = vmatpush1.msra.mxu0 0.0
        %2595 = vmatprep.subr.mxu0 0.0
        %2596 = vmatpush1.msra.mxu0 0.0
        %2597 = vmatprep.subr.mxu0 0.0
        %2598 = vmatpush1.msra.mxu0 0.0
        %2599 = vmatprep.subr.mxu0 0.0
        %2600 = vmatpush1.msra.mxu0 0.0
        %2601 = vmatprep.subr.mxu0 0.0
        %2602 = vmatpush1.msra.mxu0 0.0
        %2603 = vmatprep.subr.mxu0 0.0
        %2604 = vmatpush1.msra.mxu0 0.0
        %2605 = vmatprep.subr.mxu0 0.0
        %2606 = vmatpush1.msra.mxu0 0.0
        %2607 = vmatprep.subr.mxu0 0.0
        %2608 = vmatpush1.msra.mxu0 0.0
        %2609 = vmatprep.subr.mxu0 0.0
        %2610 = vmatpush1.msra.mxu0 0.0
        %2611 = vmatprep.subr.mxu0 0.0
        %2612 = vmatpush1.msra.mxu0 0.0
        %2613 = vmatprep.subr.mxu0 0.0
        %2614 = vmatpush1.msra.mxu0 0.0
        %2615 = vmatprep.subr.mxu0 0.0
        %2616 = vmatpush1.msra.mxu0 0.0
        %2617 = vmatprep.subr.mxu0 0.0
        %2618 = vmatpush1.msra.mxu0 0.0
        %2619 = vmatprep.subr.mxu0 0.0
        %2620 = vmatpush1.msra.mxu0 0.0
        %2621 = vmatprep.subr.mxu0 0.0
        %2622 = vmatpush1.msra.mxu0 0.0
        %2623 = vmatprep.subr.mxu0 0.0
        %2624 = vmatpush1.msra.mxu0 0.0
        %2625 = vmatprep.subr.mxu0 0.0
        %2626 = vmatpush1.msra.mxu0 0.0
        %2627 = vmatprep.subr.mxu0 0.0
        %2628 = vmatpush1.msra.mxu0 0.0
        %2629 = vmatprep.subr.mxu0 0.0
        %2630 = vmatpush1.msra.mxu0 0.0
        %2631 = vmatprep.subr.mxu0 0.0
        %2632 = vmatpush1.msra.mxu0 0.0
        %2633 = vmatprep.subr.mxu0 0.0
        %2634 = vmatpush1.msra.mxu0 0.0
        %2635 = vmatprep.mubr.f32.mxu0 0.0
        %2636 = vmatmul.mubr.f32.gmra.mrb[0].mxu0 %v795
        %v2637 = vpop.f32.mrb[0].mxu0
        %v2638 = vadd.f32 0.0, %v2637
        %v2639 = vpop.f32.mrb[0].mxu0
        %v2640 = vadd.f32 0.0, %v2639
        %2641 = vdwg.mxu0
        %v2642 = vadd.f32 %v2555, %v2638
        %v2643 = vadd.f32 %v2557, %v2640
        %v2644 = vsub.f32 0.0, %v2642
        %v2645 = vsub.f32 0.0, %v2643
        %v2646 = vmul.f32 %v2644, 1.442695
        %v2647 = vpow.pop %v2646
        %v2648 = vmul.f32 %v2645, 1.442695
        %v2649 = vpow.pop %v2648
        %v2650 = vadd.f32 %v2647, 1.0
        %v2651 = vadd.f32 %v2649, 1.0
        %v2652 = vrcp.pop %v2650
        %v2653 = vmul.f32 1.0, %v2652
        %v2654 = vrcp.pop %v2651
        %v2655 = vmul.f32 1.0, %v2654
        %v2656 = vmul.f32 %v2653, %v2374
        %v2657 = vmul.f32 %v2655, %v2375
        %2658 = vrot.lane.b32.xlu0 %v2656, 17
        %v2659 = vpop.permute.xlu0 %2658
        %2660 = vrot.lane.b32.xlu0 %v2657, 17
        %v2661 = vpop.permute.xlu0 %2660
        %v2662 = vsel %vm410, %v2659, %v2661
        %v2663 = vsel %vm410, %v2661, %v2659
        %v2664 = vmul.f32 %v2663, %v416
        %v2665 = vmul.f32 %v2662, %v420
        %2666 = vrot.lane.b32.xlu0 %v2656, 16
        %v2667 = vpop.permute.xlu0 %2666
        %2668 = vrot.lane.b32.xlu0 %v2657, 16
        %v2669 = vpop.permute.xlu0 %2668
        %v2670 = vsel %vm427, %v2667, %v2669
        %v2671 = vsel %vm427, %v2669, %v2667
        %v2672 = vmul.f32 %v2671, %v433
        %v2673 = vmul.f32 %v2670, %v437
        %2674 = vrot.lane.b32.xlu0 %v2656, 15
        %v2675 = vpop.permute.xlu0 %2674
        %2676 = vrot.lane.b32.xlu0 %v2657, 15
        %v2677 = vpop.permute.xlu0 %2676
        %v2678 = vsel %vm444, %v2675, %v2677
        %v2679 = vsel %vm444, %v2677, %v2675
        %v2680 = vmul.f32 %v2679, %v450
        %v2681 = vmul.f32 %v2678, %v454
        %2682 = vrot.lane.b32.xlu0 %v2656, 1
        %v2683 = vpop.permute.xlu0 %2682
        %2684 = vrot.lane.b32.xlu0 %v2657, 1
        %v2685 = vpop.permute.xlu0 %2684
        %v2686 = vsel %vm461, %v2683, %v2685
        %v2687 = vsel %vm461, %v2685, %v2683
        %v2688 = vmul.f32 %v2687, %v467
        %v2689 = vmul.f32 %v2686, %v471
        %v2690 = vmul.f32 %v2656, %v477
        %v2691 = vmul.f32 %v2657, %v481
        %2692 = vrot.lane.b32.xlu0 %v2656, 127
        %v2693 = vpop.permute.xlu0 %2692
        %2694 = vrot.lane.b32.xlu0 %v2657, 127
        %v2695 = vpop.permute.xlu0 %2694
        %v2696 = vsel %vm491, %v2693, %v2695
        %v2697 = vsel %vm491, %v2695, %v2693
        %v2698 = vmul.f32 %v2696, %v497
        %v2699 = vmul.f32 %v2697, %v501
        %2700 = vrot.lane.b32.xlu0 %v2656, 113
        %v2701 = vpop.permute.xlu0 %2700
        %2702 = vrot.lane.b32.xlu0 %v2657, 113
        %v2703 = vpop.permute.xlu0 %2702
        %v2704 = vsel %vm508, %v2701, %v2703
        %v2705 = vsel %vm508, %v2703, %v2701
        %v2706 = vmul.f32 %v2704, %v514
        %v2707 = vmul.f32 %v2705, %v518
        %2708 = vrot.lane.b32.xlu0 %v2656, 112
        %v2709 = vpop.permute.xlu0 %2708
        %2710 = vrot.lane.b32.xlu0 %v2657, 112
        %v2711 = vpop.permute.xlu0 %2710
        %v2712 = vsel %vm525, %v2709, %v2711
        %v2713 = vsel %vm525, %v2711, %v2709
        %v2714 = vmul.f32 %v2712, %v531
        %v2715 = vmul.f32 %v2713, %v535
        %2716 = vrot.lane.b32.xlu0 %v2656, 111
        %v2717 = vpop.permute.xlu0 %2716
        %2718 = vrot.lane.b32.xlu0 %v2657, 111
        %v2719 = vpop.permute.xlu0 %2718
        %v2720 = vsel %vm542, %v2717, %v2719
        %v2721 = vsel %vm542, %v2719, %v2717
        %v2722 = vmul.f32 %v2720, %v548
        %v2723 = vmul.f32 %v2721, %v552
        %v2726 = vrot.slane %v2672, 4
        %v2727 = vrot.slane %v2673, 4
        %v2732 = vrot.slane %v2688, 4
        %v2733 = vrot.slane %v2689, 4
        %v2738 = vrot.slane %v2698, 4
        %v2739 = vrot.slane %v2699, 4
        %v2744 = vrot.slane %v2714, 4
        %v2745 = vrot.slane %v2715, 4
        %v2748 = vsel %vm582, %v2664, %v2726
        %v2749 = vsel %vm582, %v2665, %v2727
        %v2750 = vsel %vm582, %v2680, %v2732
        %v2751 = vsel %vm582, %v2681, %v2733
        %v2752 = vsel %vm582, %v2690, %v2738
        %v2753 = vsel %vm582, %v2691, %v2739
        %v2754 = vsel %vm582, %v2706, %v2744
        %v2755 = vsel %vm582, %v2707, %v2745
        %v2757 = vsel %vm582, %v2722, 0
        %v2760 = vsel %vm582, %v2723, 0
        %2762 = vmatprep.subr.mxu0 %v2749
        %2763 = vmatpush1.msra.mxu0 %v2748
        %2764 = vmatprep.subr.mxu0 %v2751
        %2765 = vmatpush1.msra.mxu0 %v2750
        %2766 = vmatprep.subr.mxu0 %v2753
        %2767 = vmatpush1.msra.mxu0 %v2752
        %2768 = vmatprep.subr.mxu0 %v2755
        %2769 = vmatpush1.msra.mxu0 %v2754
        %2770 = vmatprep.subr.mxu0 %v2760
        %2771 = vmatpush1.msra.mxu0 %v2757
        %2772 = vmatprep.subr.mxu0 0.0
        %2773 = vmatpush1.msra.mxu0 0.0
        %2774 = vmatprep.subr.mxu0 0.0
        %2775 = vmatpush1.msra.mxu0 0.0
        %2776 = vmatprep.subr.mxu0 0.0
        %2777 = vmatpush1.msra.mxu0 0.0
        %2778 = vmatprep.subr.mxu0 0.0
        %2779 = vmatpush1.msra.mxu0 0.0
        %2780 = vmatprep.subr.mxu0 0.0
        %2781 = vmatpush1.msra.mxu0 0.0
        %2782 = vmatprep.subr.mxu0 0.0
        %2783 = vmatpush1.msra.mxu0 0.0
        %2784 = vmatprep.subr.mxu0 0.0
        %2785 = vmatpush1.msra.mxu0 0.0
        %2786 = vmatprep.subr.mxu0 0.0
        %2787 = vmatpush1.msra.mxu0 0.0
        %2788 = vmatprep.subr.mxu0 0.0
        %2789 = vmatpush1.msra.mxu0 0.0
        %2790 = vmatprep.subr.mxu0 0.0
        %2791 = vmatpush1.msra.mxu0 0.0
        %2792 = vmatprep.subr.mxu0 0.0
        %2793 = vmatpush1.msra.mxu0 0.0
        %2794 = vmatprep.subr.mxu0 0.0
        %2795 = vmatpush1.msra.mxu0 0.0
        %2796 = vmatprep.subr.mxu0 0.0
        %2797 = vmatpush1.msra.mxu0 0.0
        %2798 = vmatprep.subr.mxu0 0.0
        %2799 = vmatpush1.msra.mxu0 0.0
        %2800 = vmatprep.subr.mxu0 0.0
        %2801 = vmatpush1.msra.mxu0 0.0
        %2802 = vmatprep.subr.mxu0 0.0
        %2803 = vmatpush1.msra.mxu0 0.0
        %2804 = vmatprep.subr.mxu0 0.0
        %2805 = vmatpush1.msra.mxu0 0.0
        %2806 = vmatprep.subr.mxu0 0.0
        %2807 = vmatpush1.msra.mxu0 0.0
        %2808 = vmatprep.subr.mxu0 0.0
        %2809 = vmatpush1.msra.mxu0 0.0
        %2810 = vmatprep.subr.mxu0 0.0
        %2811 = vmatpush1.msra.mxu0 0.0
        %2812 = vmatprep.subr.mxu0 0.0
        %2813 = vmatpush1.msra.mxu0 0.0
        %2814 = vmatprep.subr.mxu0 0.0
        %2815 = vmatpush1.msra.mxu0 0.0
        %2816 = vmatprep.subr.mxu0 0.0
        %2817 = vmatpush1.msra.mxu0 0.0
        %2818 = vmatprep.subr.mxu0 0.0
        %2819 = vmatpush1.msra.mxu0 0.0
        %2820 = vmatprep.subr.mxu0 0.0
        %2821 = vmatpush1.msra.mxu0 0.0
        %2822 = vmatprep.subr.mxu0 0.0
        %2823 = vmatpush1.msra.mxu0 0.0
        %2824 = vmatprep.subr.mxu0 0.0
        %2825 = vmatpush1.msra.mxu0 0.0
        %2826 = vmatprep.mubr.f32.mxu0 0.0
        %2827 = vmatmul.mubr.f32.gmra.mrb[0].mxu0 %v989
        %v2828 = vpop.f32.mrb[0].mxu0
        %v2829 = vadd.f32 0.0, %v2828
        %v2830 = vpop.f32.mrb[0].mxu0
        %v2831 = vadd.f32 0.0, %v2830
        %2832 = vdwg.mxu0
        %v2833 = vadd.f32 %v2561, %v2829
        %v2834 = vadd.f32 %v2563, %v2831
        %v2835 = vtanh.pop %v2833
        %v2836 = vtanh.pop %v2834
        %v2837 = vsub.f32 1.0, %v2653
        %v2838 = vsub.f32 1.0, %v2655
        %v2839 = vmul.f32 %v2837, %v2261
        %v2840 = vmul.f32 %v2838, %v2262
        %v2843 = vrot.slane %v2835, 4
        %v2844 = vrot.slane %v2836, 4
        %v2847 = vmul.f32 %v2653, %v2843
        %v2848 = vmul.f32 %v2655, %v2844
        %v2849 = vadd.f32 %v2839, %v2847
        %v2850 = vadd.f32 %v2840, %v2848
        %v2853 = vcombine.high %v2849, %v2850
        %s2855 = scalar_lea.vmem %s380, 24 [#allocation11]
        %2856 = vst [vmem:[%s2855] sm:$0xff] %v2853
        %s2857 = scalar_lea.vmem %s328, 32 [#allocation3]
        %v2858 = vld [vmem:[%s2857] sm:$0xff]
        %v2860 = vcombine.high %v2858, %v2858
        %2862 = vrot.lane.b32.xlu0 %v2858, 17
        %v2863 = vpop.permute.xlu0 %2862
        %2864 = vrot.lane.b32.xlu0 %v2860, 17
        %v2865 = vpop.permute.xlu0 %2864
        %v2866 = vsel %vm410, %v2863, %v2865
        %v2867 = vsel %vm410, %v2865, %v2863
        %v2868 = vmul.f32 %v2867, %v416
        %v2869 = vmul.f32 %v2866, %v420
        %2870 = vrot.lane.b32.xlu0 %v2858, 16
        %v2871 = vpop.permute.xlu0 %2870
        %2872 = vrot.lane.b32.xlu0 %v2860, 16
        %v2873 = vpop.permute.xlu0 %2872
        %v2874 = vsel %vm427, %v2871, %v2873
        %v2875 = vsel %vm427, %v2873, %v2871
        %v2876 = vmul.f32 %v2875, %v433
        %v2877 = vmul.f32 %v2874, %v437
        %2878 = vrot.lane.b32.xlu0 %v2858, 15
        %v2879 = vpop.permute.xlu0 %2878
        %2880 = vrot.lane.b32.xlu0 %v2860, 15
        %v2881 = vpop.permute.xlu0 %2880
        %v2882 = vsel %vm444, %v2879, %v2881
        %v2883 = vsel %vm444, %v2881, %v2879
        %v2884 = vmul.f32 %v2883, %v450
        %v2885 = vmul.f32 %v2882, %v454
        %2886 = vrot.lane.b32.xlu0 %v2858, 1
        %v2887 = vpop.permute.xlu0 %2886
        %2888 = vrot.lane.b32.xlu0 %v2860, 1
        %v2889 = vpop.permute.xlu0 %2888
        %v2890 = vsel %vm461, %v2887, %v2889
        %v2891 = vsel %vm461, %v2889, %v2887
        %v2892 = vmul.f32 %v2891, %v467
        %v2893 = vmul.f32 %v2890, %v471
        %v2894 = vmul.f32 %v2858, %v484
        %2895 = vrot.lane.b32.xlu0 %v2858, 127
        %v2896 = vpop.permute.xlu0 %2895
        %2897 = vrot.lane.b32.xlu0 %v2860, 127
        %v2898 = vpop.permute.xlu0 %2897
        %v2899 = vsel %vm491, %v2896, %v2898
        %v2900 = vsel %vm491, %v2898, %v2896
        %v2901 = vmul.f32 %v2899, %v497
        %v2902 = vmul.f32 %v2900, %v501
        %2903 = vrot.lane.b32.xlu0 %v2858, 113
        %v2904 = vpop.permute.xlu0 %2903
        %2905 = vrot.lane.b32.xlu0 %v2860, 113
        %v2906 = vpop.permute.xlu0 %2905
        %v2907 = vsel %vm508, %v2904, %v2906
        %v2908 = vsel %vm508, %v2906, %v2904
        %v2909 = vmul.f32 %v2907, %v514
        %v2910 = vmul.f32 %v2908, %v518
        %2911 = vrot.lane.b32.xlu0 %v2858, 112
        %v2912 = vpop.permute.xlu0 %2911
        %2913 = vrot.lane.b32.xlu0 %v2860, 112
        %v2914 = vpop.permute.xlu0 %2913
        %v2915 = vsel %vm525, %v2912, %v2914
        %v2916 = vsel %vm525, %v2914, %v2912
        %v2917 = vmul.f32 %v2915, %v531
        %v2918 = vmul.f32 %v2916, %v535
        %2919 = vrot.lane.b32.xlu0 %v2858, 111
        %v2920 = vpop.permute.xlu0 %2919
        %2921 = vrot.lane.b32.xlu0 %v2860, 111
        %v2922 = vpop.permute.xlu0 %2921
        %v2923 = vsel %vm542, %v2920, %v2922
        %v2924 = vsel %vm542, %v2922, %v2920
        %v2925 = vmul.f32 %v2923, %v548
        %v2926 = vmul.f32 %v2924, %v552
        %v2929 = vrot.slane %v2876, 4
        %v2930 = vrot.slane %v2877, 4
        %v2935 = vrot.slane %v2892, 4
        %v2936 = vrot.slane %v2893, 4
        %v2940 = vcombine.high %v2894, %v2894
        %v2944 = vrot.slane %v2901, 4
        %v2945 = vrot.slane %v2902, 4
        %v2950 = vrot.slane %v2917, 4
        %v2951 = vrot.slane %v2918, 4
        %v2954 = vsel %vm582, %v2868, %v2929
        %v2955 = vsel %vm582, %v2869, %v2930
        %v2956 = vsel %vm582, %v2884, %v2935
        %v2957 = vsel %vm582, %v2885, %v2936
        %v2958 = vsel %vm582, %v2894, %v2944
        %v2959 = vsel %vm582, %v2940, %v2945
        %v2960 = vsel %vm582, %v2909, %v2950
        %v2961 = vsel %vm582, %v2910, %v2951
        %v2962 = vrot.slane %v2849, 4
        %v2963 = vrot.slane %v2850, 4
        %2966 = vrot.lane.b32.xlu0 %v2962, 17
        %v2967 = vpop.permute.xlu0 %2966
        %2968 = vrot.lane.b32.xlu0 %v2963, 17
        %v2969 = vpop.permute.xlu0 %2968
        %v2970 = vsel %vm410, %v2967, %v2969
        %v2971 = vsel %vm410, %v2969, %v2967
        %v2972 = vmul.f32 %v2971, %v416
        %v2973 = vmul.f32 %v2970, %v420
        %2974 = vrot.lane.b32.xlu0 %v2962, 16
        %v2975 = vpop.permute.xlu0 %2974
        %2976 = vrot.lane.b32.xlu0 %v2963, 16
        %v2977 = vpop.permute.xlu0 %2976
        %v2978 = vsel %vm427, %v2975, %v2977
        %v2979 = vsel %vm427, %v2977, %v2975
        %v2980 = vmul.f32 %v2979, %v433
        %v2981 = vmul.f32 %v2978, %v437
        %2982 = vrot.lane.b32.xlu0 %v2962, 15
        %v2983 = vpop.permute.xlu0 %2982
        %2984 = vrot.lane.b32.xlu0 %v2963, 15
        %v2985 = vpop.permute.xlu0 %2984
        %v2986 = vsel %vm444, %v2983, %v2985
        %v2987 = vsel %vm444, %v2985, %v2983
        %v2988 = vmul.f32 %v2987, %v450
        %v2989 = vmul.f32 %v2986, %v454
        %2990 = vrot.lane.b32.xlu0 %v2962, 1
        %v2991 = vpop.permute.xlu0 %2990
        %2992 = vrot.lane.b32.xlu0 %v2963, 1
        %v2993 = vpop.permute.xlu0 %2992
        %v2994 = vsel %vm461, %v2991, %v2993
        %v2995 = vsel %vm461, %v2993, %v2991
        %v2996 = vmul.f32 %v2995, %v467
        %v2997 = vmul.f32 %v2994, %v471
        %v2998 = vmul.f32 %v2849, %v477
        %v2999 = vmul.f32 %v2850, %v481
        %3000 = vrot.lane.b32.xlu0 %v2962, 127
        %v3001 = vpop.permute.xlu0 %3000
        %3002 = vrot.lane.b32.xlu0 %v2963, 127
        %v3003 = vpop.permute.xlu0 %3002
        %v3004 = vsel %vm491, %v3001, %v3003
        %v3005 = vsel %vm491, %v3003, %v3001
        %v3006 = vmul.f32 %v3004, %v497
        %v3007 = vmul.f32 %v3005, %v501
        %3008 = vrot.lane.b32.xlu0 %v2962, 113
        %v3009 = vpop.permute.xlu0 %3008
        %3010 = vrot.lane.b32.xlu0 %v2963, 113
        %v3011 = vpop.permute.xlu0 %3010
        %v3012 = vsel %vm508, %v3009, %v3011
        %v3013 = vsel %vm508, %v3011, %v3009
        %v3014 = vmul.f32 %v3012, %v514
        %v3015 = vmul.f32 %v3013, %v518
        %3016 = vrot.lane.b32.xlu0 %v2962, 112
        %v3017 = vpop.permute.xlu0 %3016
        %3018 = vrot.lane.b32.xlu0 %v2963, 112
        %v3019 = vpop.permute.xlu0 %3018
        %v3020 = vsel %vm525, %v3017, %v3019
        %v3021 = vsel %vm525, %v3019, %v3017
        %v3022 = vmul.f32 %v3020, %v531
        %v3023 = vmul.f32 %v3021, %v535
        %3024 = vrot.lane.b32.xlu0 %v2962, 111
        %v3025 = vpop.permute.xlu0 %3024
        %3026 = vrot.lane.b32.xlu0 %v2963, 111
        %v3027 = vpop.permute.xlu0 %3026
        %v3028 = vsel %vm542, %v3025, %v3027
        %v3029 = vsel %vm542, %v3027, %v3025
        %v3030 = vmul.f32 %v3028, %v548
        %v3031 = vmul.f32 %v3029, %v552
        %v3034 = vrot.slane %v2980, 4
        %v3035 = vrot.slane %v2981, 4
        %v3040 = vrot.slane %v2996, 4
        %v3041 = vrot.slane %v2997, 4
        %v3046 = vrot.slane %v2998, 4
        %v3047 = vrot.slane %v2999, 4
        %v3052 = vrot.slane %v3006, 4
        %v3053 = vrot.slane %v3007, 4
        %v3058 = vrot.slane %v3022, 4
        %v3059 = vrot.slane %v3023, 4
        %v3062 = vsel %vm582, %v2972, %v3034
        %v3063 = vsel %vm582, %v2973, %v3035
        %v3064 = vsel %vm582, %v2988, %v3040
        %v3065 = vsel %vm582, %v2989, %v3041
        %v3066 = vsel %vm582, %v3046, %v3052
        %v3067 = vsel %vm582, %v3047, %v3053
        %v3068 = vsel %vm582, %v3014, %v3058
        %v3069 = vsel %vm582, %v3015, %v3059
        %v3071 = vsel %vm582, %v2925, 0
        %v3074 = vsel %vm582, %v2926, 0
        %3076 = vmatprep.subr.mxu0 %v2955
        %3077 = vmatpush1.msra.mxu0 %v2954
        %3078 = vmatprep.subr.mxu0 %v2957
        %3079 = vmatpush1.msra.mxu0 %v2956
        %3080 = vmatprep.subr.mxu0 %v2959
        %3081 = vmatpush1.msra.mxu0 %v2958
        %3082 = vmatprep.subr.mxu0 %v2961
        %3083 = vmatpush1.msra.mxu0 %v2960
        %3084 = vmatprep.subr.mxu0 %v3074
        %3085 = vmatpush1.msra.mxu0 %v3071
        %3086 = vmatprep.subr.mxu0 0.0
        %3087 = vmatpush1.msra.mxu0 0.0
        %3088 = vmatprep.subr.mxu0 0.0
        %3089 = vmatpush1.msra.mxu0 0.0
        %3090 = vmatprep.subr.mxu0 0.0
        %3091 = vmatpush1.msra.mxu0 0.0
        %3092 = vmatprep.subr.mxu0 0.0
        %3093 = vmatpush1.msra.mxu0 0.0
        %3094 = vmatprep.subr.mxu0 0.0
        %3095 = vmatpush1.msra.mxu0 0.0
        %3096 = vmatprep.subr.mxu0 0.0
        %3097 = vmatpush1.msra.mxu0 0.0
        %3098 = vmatprep.subr.mxu0 0.0
        %3099 = vmatpush1.msra.mxu0 0.0
        %3100 = vmatprep.subr.mxu0 0.0
        %3101 = vmatpush1.msra.mxu0 0.0
        %3102 = vmatprep.subr.mxu0 0.0
        %3103 = vmatpush1.msra.mxu0 0.0
        %3104 = vmatprep.subr.mxu0 0.0
        %3105 = vmatpush1.msra.mxu0 0.0
        %3106 = vmatprep.subr.mxu0 0.0
        %3107 = vmatpush1.msra.mxu0 0.0
        %3108 = vmatprep.subr.mxu0 0.0
        %3109 = vmatpush1.msra.mxu0 0.0
        %3110 = vmatprep.subr.mxu0 0.0
        %3111 = vmatpush1.msra.mxu0 0.0
        %3112 = vmatprep.subr.mxu0 0.0
        %3113 = vmatpush1.msra.mxu0 0.0
        %3114 = vmatprep.subr.mxu0 0.0
        %3115 = vmatpush1.msra.mxu0 0.0
        %3116 = vmatprep.subr.mxu0 0.0
        %3117 = vmatpush1.msra.mxu0 0.0
        %3118 = vmatprep.subr.mxu0 0.0
        %3119 = vmatpush1.msra.mxu0 0.0
        %3120 = vmatprep.subr.mxu0 0.0
        %3121 = vmatpush1.msra.mxu0 0.0
        %3122 = vmatprep.subr.mxu0 0.0
        %3123 = vmatpush1.msra.mxu0 0.0
        %3124 = vmatprep.subr.mxu0 0.0
        %3125 = vmatpush1.msra.mxu0 0.0
        %3126 = vmatprep.subr.mxu0 0.0
        %3127 = vmatpush1.msra.mxu0 0.0
        %3128 = vmatprep.subr.mxu0 0.0
        %3129 = vmatpush1.msra.mxu0 0.0
        %3130 = vmatprep.subr.mxu0 0.0
        %3131 = vmatpush1.msra.mxu0 0.0
        %3132 = vmatprep.subr.mxu0 0.0
        %3133 = vmatpush1.msra.mxu0 0.0
        %3134 = vmatprep.subr.mxu0 0.0
        %3135 = vmatpush1.msra.mxu0 0.0
        %3136 = vmatprep.subr.mxu0 0.0
        %3137 = vmatpush1.msra.mxu0 0.0
        %3138 = vmatprep.subr.mxu0 0.0
        %3139 = vmatpush1.msra.mxu0 0.0
        %3140 = vmatprep.mubr.f32.mxu0 0.0
        %3141 = vmatmul.mubr.f32.gmra.mrb[0].mxu0 %v706
        %v3142 = vpop.f32.mrb[0].mxu0
        %v3143 = vadd.f32 %v697, %v3142
        %v3144 = vpop.f32.mrb[0].mxu0
        %v3145 = vadd.f32 %v697, %v3144
        %3146 = vmatprep.mubr.f32.mxu0 0.0
        %3147 = vmatmul.mubr.f32.gmra.mrb[0].mxu0 %v709
        %v3148 = vpop.f32.mrb[0].mxu0
        %v3149 = vadd.f32 %v702, %v3148
        %v3150 = vpop.f32.mrb[0].mxu0
        %v3151 = vadd.f32 %v702, %v3150
        %3152 = vdwg.mxu0
        %v3154 = vsel %vm582, %v3030, 0
        %v3157 = vsel %vm582, %v3031, 0
        %3159 = vmatprep.subr.mxu0 %v3063
        %3160 = vmatpush1.msra.mxu0 %v3062
        %3161 = vmatprep.subr.mxu0 %v3065
        %3162 = vmatpush1.msra.mxu0 %v3064
        %3163 = vmatprep.subr.mxu0 %v3067
        %3164 = vmatpush1.msra.mxu0 %v3066
        %3165 = vmatprep.subr.mxu0 %v3069
        %3166 = vmatpush1.msra.mxu0 %v3068
        %3167 = vmatprep.subr.mxu0 %v3157
        %3168 = vmatpush1.msra.mxu0 %v3154
        %3169 = vmatprep.subr.mxu0 0.0
        %3170 = vmatpush1.msra.mxu0 0.0
        %3171 = vmatprep.subr.mxu0 0.0
        %3172 = vmatpush1.msra.mxu0 0.0
        %3173 = vmatprep.subr.mxu0 0.0
        %3174 = vmatpush1.msra.mxu0 0.0
        %3175 = vmatprep.subr.mxu0 0.0
        %3176 = vmatpush1.msra.mxu0 0.0
        %3177 = vmatprep.subr.mxu0 0.0
        %3178 = vmatpush1.msra.mxu0 0.0
        %3179 = vmatprep.subr.mxu0 0.0
        %3180 = vmatpush1.msra.mxu0 0.0
        %3181 = vmatprep.subr.mxu0 0.0
        %3182 = vmatpush1.msra.mxu0 0.0
        %3183 = vmatprep.subr.mxu0 0.0
        %3184 = vmatpush1.msra.mxu0 0.0
        %3185 = vmatprep.subr.mxu0 0.0
        %3186 = vmatpush1.msra.mxu0 0.0
        %3187 = vmatprep.subr.mxu0 0.0
        %3188 = vmatpush1.msra.mxu0 0.0
        %3189 = vmatprep.subr.mxu0 0.0
        %3190 = vmatpush1.msra.mxu0 0.0
        %3191 = vmatprep.subr.mxu0 0.0
        %3192 = vmatpush1.msra.mxu0 0.0
        %3193 = vmatprep.subr.mxu0 0.0
        %3194 = vmatpush1.msra.mxu0 0.0
        %3195 = vmatprep.subr.mxu0 0.0
        %3196 = vmatpush1.msra.mxu0 0.0
        %3197 = vmatprep.subr.mxu0 0.0
        %3198 = vmatpush1.msra.mxu0 0.0
        %3199 = vmatprep.subr.mxu0 0.0
        %3200 = vmatpush1.msra.mxu0 0.0
        %3201 = vmatprep.subr.mxu0 0.0
        %3202 = vmatpush1.msra.mxu0 0.0
        %3203 = vmatprep.subr.mxu0 0.0
        %3204 = vmatpush1.msra.mxu0 0.0
        %3205 = vmatprep.subr.mxu0 0.0
        %3206 = vmatpush1.msra.mxu0 0.0
        %3207 = vmatprep.subr.mxu0 0.0
        %3208 = vmatpush1.msra.mxu0 0.0
        %3209 = vmatprep.subr.mxu0 0.0
        %3210 = vmatpush1.msra.mxu0 0.0
        %3211 = vmatprep.subr.mxu0 0.0
        %3212 = vmatpush1.msra.mxu0 0.0
        %3213 = vmatprep.subr.mxu0 0.0
        %3214 = vmatpush1.msra.mxu0 0.0
        %3215 = vmatprep.subr.mxu0 0.0
        %3216 = vmatpush1.msra.mxu0 0.0
        %3217 = vmatprep.subr.mxu0 0.0
        %3218 = vmatpush1.msra.mxu0 0.0
        %3219 = vmatprep.subr.mxu0 0.0
        %3220 = vmatpush1.msra.mxu0 0.0
        %3221 = vmatprep.subr.mxu0 0.0
        %3222 = vmatpush1.msra.mxu0 0.0
        %3223 = vmatprep.mubr.f32.mxu0 0.0
        %3224 = vmatmul.mubr.f32.gmra.mrb[0].mxu0 %v795
        %v3225 = vpop.f32.mrb[0].mxu0
        %v3226 = vadd.f32 0.0, %v3225
        %v3227 = vpop.f32.mrb[0].mxu0
        %v3228 = vadd.f32 0.0, %v3227
        %3229 = vdwg.mxu0
        %v3230 = vadd.f32 %v3143, %v3226
        %v3231 = vadd.f32 %v3145, %v3228
        %v3232 = vsub.f32 0.0, %v3230
        %v3233 = vsub.f32 0.0, %v3231
        %v3234 = vmul.f32 %v3232, 1.442695
        %v3235 = vpow.pop %v3234
        %v3236 = vmul.f32 %v3233, 1.442695
        %v3237 = vpow.pop %v3236
        %v3238 = vadd.f32 %v3235, 1.0
        %v3239 = vadd.f32 %v3237, 1.0
        %v3240 = vrcp.pop %v3238
        %v3241 = vmul.f32 1.0, %v3240
        %v3242 = vrcp.pop %v3239
        %v3243 = vmul.f32 1.0, %v3242
        %v3244 = vmul.f32 %v3241, %v2962
        %v3245 = vmul.f32 %v3243, %v2963
        %3246 = vrot.lane.b32.xlu0 %v3244, 17
        %v3247 = vpop.permute.xlu0 %3246
        %3248 = vrot.lane.b32.xlu0 %v3245, 17
        %v3249 = vpop.permute.xlu0 %3248
        %v3250 = vsel %vm410, %v3247, %v3249
        %v3251 = vsel %vm410, %v3249, %v3247
        %v3252 = vmul.f32 %v3251, %v416
        %v3253 = vmul.f32 %v3250, %v420
        %3254 = vrot.lane.b32.xlu0 %v3244, 16
        %v3255 = vpop.permute.xlu0 %3254
        %3256 = vrot.lane.b32.xlu0 %v3245, 16
        %v3257 = vpop.permute.xlu0 %3256
        %v3258 = vsel %vm427, %v3255, %v3257
        %v3259 = vsel %vm427, %v3257, %v3255
        %v3260 = vmul.f32 %v3259, %v433
        %v3261 = vmul.f32 %v3258, %v437
        %3262 = vrot.lane.b32.xlu0 %v3244, 15
        %v3263 = vpop.permute.xlu0 %3262
        %3264 = vrot.lane.b32.xlu0 %v3245, 15
        %v3265 = vpop.permute.xlu0 %3264
        %v3266 = vsel %vm444, %v3263, %v3265
        %v3267 = vsel %vm444, %v3265, %v3263
        %v3268 = vmul.f32 %v3267, %v450
        %v3269 = vmul.f32 %v3266, %v454
        %3270 = vrot.lane.b32.xlu0 %v3244, 1
        %v3271 = vpop.permute.xlu0 %3270
        %3272 = vrot.lane.b32.xlu0 %v3245, 1
        %v3273 = vpop.permute.xlu0 %3272
        %v3274 = vsel %vm461, %v3271, %v3273
        %v3275 = vsel %vm461, %v3273, %v3271
        %v3276 = vmul.f32 %v3275, %v467
        %v3277 = vmul.f32 %v3274, %v471
        %v3278 = vmul.f32 %v3244, %v477
        %v3279 = vmul.f32 %v3245, %v481
        %3280 = vrot.lane.b32.xlu0 %v3244, 127
        %v3281 = vpop.permute.xlu0 %3280
        %3282 = vrot.lane.b32.xlu0 %v3245, 127
        %v3283 = vpop.permute.xlu0 %3282
        %v3284 = vsel %vm491, %v3281, %v3283
        %v3285 = vsel %vm491, %v3283, %v3281
        %v3286 = vmul.f32 %v3284, %v497
        %v3287 = vmul.f32 %v3285, %v501
        %3288 = vrot.lane.b32.xlu0 %v3244, 113
        %v3289 = vpop.permute.xlu0 %3288
        %3290 = vrot.lane.b32.xlu0 %v3245, 113
        %v3291 = vpop.permute.xlu0 %3290
        %v3292 = vsel %vm508, %v3289, %v3291
        %v3293 = vsel %vm508, %v3291, %v3289
        %v3294 = vmul.f32 %v3292, %v514
        %v3295 = vmul.f32 %v3293, %v518
        %3296 = vrot.lane.b32.xlu0 %v3244, 112
        %v3297 = vpop.permute.xlu0 %3296
        %3298 = vrot.lane.b32.xlu0 %v3245, 112
        %v3299 = vpop.permute.xlu0 %3298
        %v3300 = vsel %vm525, %v3297, %v3299
        %v3301 = vsel %vm525, %v3299, %v3297
        %v3302 = vmul.f32 %v3300, %v531
        %v3303 = vmul.f32 %v3301, %v535
        %3304 = vrot.lane.b32.xlu0 %v3244, 111
        %v3305 = vpop.permute.xlu0 %3304
        %3306 = vrot.lane.b32.xlu0 %v3245, 111
        %v3307 = vpop.permute.xlu0 %3306
        %v3308 = vsel %vm542, %v3305, %v3307
        %v3309 = vsel %vm542, %v3307, %v3305
        %v3310 = vmul.f32 %v3308, %v548
        %v3311 = vmul.f32 %v3309, %v552
        %v3314 = vrot.slane %v3260, 4
        %v3315 = vrot.slane %v3261, 4
        %v3320 = vrot.slane %v3276, 4
        %v3321 = vrot.slane %v3277, 4
        %v3326 = vrot.slane %v3286, 4
        %v3327 = vrot.slane %v3287, 4
        %v3332 = vrot.slane %v3302, 4
        %v3333 = vrot.slane %v3303, 4
        %v3336 = vsel %vm582, %v3252, %v3314
        %v3337 = vsel %vm582, %v3253, %v3315
        %v3338 = vsel %vm582, %v3268, %v3320
        %v3339 = vsel %vm582, %v3269, %v3321
        %v3340 = vsel %vm582, %v3278, %v3326
        %v3341 = vsel %vm582, %v3279, %v3327
        %v3342 = vsel %vm582, %v3294, %v3332
        %v3343 = vsel %vm582, %v3295, %v3333
        %v3345 = vsel %vm582, %v3310, 0
        %v3348 = vsel %vm582, %v3311, 0
        %3350 = vmatprep.subr.mxu0 %v3337
        %3351 = vmatpush1.msra.mxu0 %v3336
        %3352 = vmatprep.subr.mxu0 %v3339
        %3353 = vmatpush1.msra.mxu0 %v3338
        %3354 = vmatprep.subr.mxu0 %v3341
        %3355 = vmatpush1.msra.mxu0 %v3340
        %3356 = vmatprep.subr.mxu0 %v3343
        %3357 = vmatpush1.msra.mxu0 %v3342
        %3358 = vmatprep.subr.mxu0 %v3348
        %3359 = vmatpush1.msra.mxu0 %v3345
        %3360 = vmatprep.subr.mxu0 0.0
        %3361 = vmatpush1.msra.mxu0 0.0
        %3362 = vmatprep.subr.mxu0 0.0
        %3363 = vmatpush1.msra.mxu0 0.0
        %3364 = vmatprep.subr.mxu0 0.0
        %3365 = vmatpush1.msra.mxu0 0.0
        %3366 = vmatprep.subr.mxu0 0.0
        %3367 = vmatpush1.msra.mxu0 0.0
        %3368 = vmatprep.subr.mxu0 0.0
        %3369 = vmatpush1.msra.mxu0 0.0
        %3370 = vmatprep.subr.mxu0 0.0
        %3371 = vmatpush1.msra.mxu0 0.0
        %3372 = vmatprep.subr.mxu0 0.0
        %3373 = vmatpush1.msra.mxu0 0.0
        %3374 = vmatprep.subr.mxu0 0.0
        %3375 = vmatpush1.msra.mxu0 0.0
        %3376 = vmatprep.subr.mxu0 0.0
        %3377 = vmatpush1.msra.mxu0 0.0
        %3378 = vmatprep.subr.mxu0 0.0
        %3379 = vmatpush1.msra.mxu0 0.0
        %3380 = vmatprep.subr.mxu0 0.0
        %3381 = vmatpush1.msra.mxu0 0.0
        %3382 = vmatprep.subr.mxu0 0.0
        %3383 = vmatpush1.msra.mxu0 0.0
        %3384 = vmatprep.subr.mxu0 0.0
        %3385 = vmatpush1.msra.mxu0 0.0
        %3386 = vmatprep.subr.mxu0 0.0
        %3387 = vmatpush1.msra.mxu0 0.0
        %3388 = vmatprep.subr.mxu0 0.0
        %3389 = vmatpush1.msra.mxu0 0.0
        %3390 = vmatprep.subr.mxu0 0.0
        %3391 = vmatpush1.msra.mxu0 0.0
        %3392 = vmatprep.subr.mxu0 0.0
        %3393 = vmatpush1.msra.mxu0 0.0
        %3394 = vmatprep.subr.mxu0 0.0
        %3395 = vmatpush1.msra.mxu0 0.0
        %3396 = vmatprep.subr.mxu0 0.0
        %3397 = vmatpush1.msra.mxu0 0.0
        %3398 = vmatprep.subr.mxu0 0.0
        %3399 = vmatpush1.msra.mxu0 0.0
        %3400 = vmatprep.subr.mxu0 0.0
        %3401 = vmatpush1.msra.mxu0 0.0
        %3402 = vmatprep.subr.mxu0 0.0
        %3403 = vmatpush1.msra.mxu0 0.0
        %3404 = vmatprep.subr.mxu0 0.0
        %3405 = vmatpush1.msra.mxu0 0.0
        %3406 = vmatprep.subr.mxu0 0.0
        %3407 = vmatpush1.msra.mxu0 0.0
        %3408 = vmatprep.subr.mxu0 0.0
        %3409 = vmatpush1.msra.mxu0 0.0
        %3410 = vmatprep.subr.mxu0 0.0
        %3411 = vmatpush1.msra.mxu0 0.0
        %3412 = vmatprep.subr.mxu0 0.0
        %3413 = vmatpush1.msra.mxu0 0.0
        %3414 = vmatprep.mubr.f32.mxu0 0.0
        %3415 = vmatmul.mubr.f32.gmra.mrb[0].mxu0 %v989
        %v3416 = vpop.f32.mrb[0].mxu0
        %v3417 = vadd.f32 0.0, %v3416
        %v3418 = vpop.f32.mrb[0].mxu0
        %v3419 = vadd.f32 0.0, %v3418
        %3420 = vdwg.mxu0
        %v3421 = vadd.f32 %v3149, %v3417
        %v3422 = vadd.f32 %v3151, %v3419
        %v3423 = vtanh.pop %v3421
        %v3424 = vtanh.pop %v3422
        %v3425 = vsub.f32 1.0, %v3241
        %v3426 = vsub.f32 1.0, %v3243
        %v3427 = vmul.f32 %v3425, %v2849
        %v3428 = vmul.f32 %v3426, %v2850
        %v3431 = vrot.slane %v3423, 4
        %v3432 = vrot.slane %v3424, 4
        %v3435 = vmul.f32 %v3241, %v3431
        %v3436 = vmul.f32 %v3243, %v3432
        %v3437 = vadd.f32 %v3427, %v3435
        %v3438 = vadd.f32 %v3428, %v3436
        %v3441 = vcombine.high %v3437, %v3438
        %s3443 = scalar_lea.vmem %s380, 32 [#allocation11]
        %3444 = vst [vmem:[%s3443] sm:$0xff] %v3441
        %s3445 = scalar_lea.vmem %s328, 40 [#allocation3]
        %v3446 = vld [vmem:[%s3445] sm:$0xff]
        %v3448 = vcombine.high %v3446, %v3446
        %3450 = vrot.lane.b32.xlu0 %v3446, 17
        %v3451 = vpop.permute.xlu0 %3450
        %3452 = vrot.lane.b32.xlu0 %v3448, 17
        %v3453 = vpop.permute.xlu0 %3452
        %v3454 = vsel %vm410, %v3451, %v3453
        %v3455 = vsel %vm410, %v3453, %v3451
        %v3456 = vmul.f32 %v3455, %v416
        %v3457 = vmul.f32 %v3454, %v420
        %3458 = vrot.lane.b32.xlu0 %v3446, 16
        %v3459 = vpop.permute.xlu0 %3458
        %3460 = vrot.lane.b32.xlu0 %v3448, 16
        %v3461 = vpop.permute.xlu0 %3460
        %v3462 = vsel %vm427, %v3459, %v3461
        %v3463 = vsel %vm427, %v3461, %v3459
        %v3464 = vmul.f32 %v3463, %v433
        %v3465 = vmul.f32 %v3462, %v437
        %3466 = vrot.lane.b32.xlu0 %v3446, 15
        %v3467 = vpop.permute.xlu0 %3466
        %3468 = vrot.lane.b32.xlu0 %v3448, 15
        %v3469 = vpop.permute.xlu0 %3468
        %v3470 = vsel %vm444, %v3467, %v3469
        %v3471 = vsel %vm444, %v3469, %v3467
        %v3472 = vmul.f32 %v3471, %v450
        %v3473 = vmul.f32 %v3470, %v454
        %3474 = vrot.lane.b32.xlu0 %v3446, 1
        %v3475 = vpop.permute.xlu0 %3474
        %3476 = vrot.lane.b32.xlu0 %v3448, 1
        %v3477 = vpop.permute.xlu0 %3476
        %v3478 = vsel %vm461, %v3475, %v3477
        %v3479 = vsel %vm461, %v3477, %v3475
        %v3480 = vmul.f32 %v3479, %v467
        %v3481 = vmul.f32 %v3478, %v471
        %v3482 = vmul.f32 %v3446, %v484
        %3483 = vrot.lane.b32.xlu0 %v3446, 127
        %v3484 = vpop.permute.xlu0 %3483
        %3485 = vrot.lane.b32.xlu0 %v3448, 127
        %v3486 = vpop.permute.xlu0 %3485
        %v3487 = vsel %vm491, %v3484, %v3486
        %v3488 = vsel %vm491, %v3486, %v3484
        %v3489 = vmul.f32 %v3487, %v497
        %v3490 = vmul.f32 %v3488, %v501
        %3491 = vrot.lane.b32.xlu0 %v3446, 113
        %v3492 = vpop.permute.xlu0 %3491
        %3493 = vrot.lane.b32.xlu0 %v3448, 113
        %v3494 = vpop.permute.xlu0 %3493
        %v3495 = vsel %vm508, %v3492, %v3494
        %v3496 = vsel %vm508, %v3494, %v3492
        %v3497 = vmul.f32 %v3495, %v514
        %v3498 = vmul.f32 %v3496, %v518
        %3499 = vrot.lane.b32.xlu0 %v3446, 112
        %v3500 = vpop.permute.xlu0 %3499
        %3501 = vrot.lane.b32.xlu0 %v3448, 112
        %v3502 = vpop.permute.xlu0 %3501
        %v3503 = vsel %vm525, %v3500, %v3502
        %v3504 = vsel %vm525, %v3502, %v3500
        %v3505 = vmul.f32 %v3503, %v531
        %v3506 = vmul.f32 %v3504, %v535
        %3507 = vrot.lane.b32.xlu0 %v3446, 111
        %v3508 = vpop.permute.xlu0 %3507
        %3509 = vrot.lane.b32.xlu0 %v3448, 111
        %v3510 = vpop.permute.xlu0 %3509
        %v3511 = vsel %vm542, %v3508, %v3510
        %v3512 = vsel %vm542, %v3510, %v3508
        %v3513 = vmul.f32 %v3511, %v548
        %v3514 = vmul.f32 %v3512, %v552
        %v3517 = vrot.slane %v3464, 4
        %v3518 = vrot.slane %v3465, 4
        %v3523 = vrot.slane %v3480, 4
        %v3524 = vrot.slane %v3481, 4
        %v3528 = vcombine.high %v3482, %v3482
        %v3532 = vrot.slane %v3489, 4
        %v3533 = vrot.slane %v3490, 4
        %v3538 = vrot.slane %v3505, 4
        %v3539 = vrot.slane %v3506, 4
        %v3542 = vsel %vm582, %v3456, %v3517
        %v3543 = vsel %vm582, %v3457, %v3518
        %v3544 = vsel %vm582, %v3472, %v3523
        %v3545 = vsel %vm582, %v3473, %v3524
        %v3546 = vsel %vm582, %v3482, %v3532
        %v3547 = vsel %vm582, %v3528, %v3533
        %v3548 = vsel %vm582, %v3497, %v3538
        %v3549 = vsel %vm582, %v3498, %v3539
        %v3550 = vrot.slane %v3437, 4
        %v3551 = vrot.slane %v3438, 4
        %3554 = vrot.lane.b32.xlu0 %v3550, 17
        %v3555 = vpop.permute.xlu0 %3554
        %3556 = vrot.lane.b32.xlu0 %v3551, 17
        %v3557 = vpop.permute.xlu0 %3556
        %v3558 = vsel %vm410, %v3555, %v3557
        %v3559 = vsel %vm410, %v3557, %v3555
        %v3560 = vmul.f32 %v3559, %v416
        %v3561 = vmul.f32 %v3558, %v420
        %3562 = vrot.lane.b32.xlu0 %v3550, 16
        %v3563 = vpop.permute.xlu0 %3562
        %3564 = vrot.lane.b32.xlu0 %v3551, 16
        %v3565 = vpop.permute.xlu0 %3564
        %v3566 = vsel %vm427, %v3563, %v3565
        %v3567 = vsel %vm427, %v3565, %v3563
        %v3568 = vmul.f32 %v3567, %v433
        %v3569 = vmul.f32 %v3566, %v437
        %3570 = vrot.lane.b32.xlu0 %v3550, 15
        %v3571 = vpop.permute.xlu0 %3570
        %3572 = vrot.lane.b32.xlu0 %v3551, 15
        %v3573 = vpop.permute.xlu0 %3572
        %v3574 = vsel %vm444, %v3571, %v3573
        %v3575 = vsel %vm444, %v3573, %v3571
        %v3576 = vmul.f32 %v3575, %v450
        %v3577 = vmul.f32 %v3574, %v454
        %3578 = vrot.lane.b32.xlu0 %v3550, 1
        %v3579 = vpop.permute.xlu0 %3578
        %3580 = vrot.lane.b32.xlu0 %v3551, 1
        %v3581 = vpop.permute.xlu0 %3580
        %v3582 = vsel %vm461, %v3579, %v3581
        %v3583 = vsel %vm461, %v3581, %v3579
        %v3584 = vmul.f32 %v3583, %v467
        %v3585 = vmul.f32 %v3582, %v471
        %v3586 = vmul.f32 %v3437, %v477
        %v3587 = vmul.f32 %v3438, %v481
        %3588 = vrot.lane.b32.xlu0 %v3550, 127
        %v3589 = vpop.permute.xlu0 %3588
        %3590 = vrot.lane.b32.xlu0 %v3551, 127
        %v3591 = vpop.permute.xlu0 %3590
        %v3592 = vsel %vm491, %v3589, %v3591
        %v3593 = vsel %vm491, %v3591, %v3589
        %v3594 = vmul.f32 %v3592, %v497
        %v3595 = vmul.f32 %v3593, %v501
        %3596 = vrot.lane.b32.xlu0 %v3550, 113
        %v3597 = vpop.permute.xlu0 %3596
        %3598 = vrot.lane.b32.xlu0 %v3551, 113
        %v3599 = vpop.permute.xlu0 %3598
        %v3600 = vsel %vm508, %v3597, %v3599
        %v3601 = vsel %vm508, %v3599, %v3597
        %v3602 = vmul.f32 %v3600, %v514
        %v3603 = vmul.f32 %v3601, %v518
        %3604 = vrot.lane.b32.xlu0 %v3550, 112
        %v3605 = vpop.permute.xlu0 %3604
        %3606 = vrot.lane.b32.xlu0 %v3551, 112
        %v3607 = vpop.permute.xlu0 %3606
        %v3608 = vsel %vm525, %v3605, %v3607
        %v3609 = vsel %vm525, %v3607, %v3605
        %v3610 = vmul.f32 %v3608, %v531
        %v3611 = vmul.f32 %v3609, %v535
        %3612 = vrot.lane.b32.xlu0 %v3550, 111
        %v3613 = vpop.permute.xlu0 %3612
        %3614 = vrot.lane.b32.xlu0 %v3551, 111
        %v3615 = vpop.permute.xlu0 %3614
        %v3616 = vsel %vm542, %v3613, %v3615
        %v3617 = vsel %vm542, %v3615, %v3613
        %v3618 = vmul.f32 %v3616, %v548
        %v3619 = vmul.f32 %v3617, %v552
        %v3622 = vrot.slane %v3568, 4
        %v3623 = vrot.slane %v3569, 4
        %v3628 = vrot.slane %v3584, 4
        %v3629 = vrot.slane %v3585, 4
        %v3634 = vrot.slane %v3586, 4
        %v3635 = vrot.slane %v3587, 4
        %v3640 = vrot.slane %v3594, 4
        %v3641 = vrot.slane %v3595, 4
        %v3646 = vrot.slane %v3610, 4
        %v3647 = vrot.slane %v3611, 4
        %v3650 = vsel %vm582, %v3560, %v3622
        %v3651 = vsel %vm582, %v3561, %v3623
        %v3652 = vsel %vm582, %v3576, %v3628
        %v3653 = vsel %vm582, %v3577, %v3629
        %v3654 = vsel %vm582, %v3634, %v3640
        %v3655 = vsel %vm582, %v3635, %v3641
        %v3656 = vsel %vm582, %v3602, %v3646
        %v3657 = vsel %vm582, %v3603, %v3647
        %v3659 = vsel %vm582, %v3513, 0
        %v3662 = vsel %vm582, %v3514, 0
        %3664 = vmatprep.subr.mxu0 %v3543
        %3665 = vmatpush1.msra.mxu0 %v3542
        %3666 = vmatprep.subr.mxu0 %v3545
        %3667 = vmatpush1.msra.mxu0 %v3544
        %3668 = vmatprep.subr.mxu0 %v3547
        %3669 = vmatpush1.msra.mxu0 %v3546
        %3670 = vmatprep.subr.mxu0 %v3549
        %3671 = vmatpush1.msra.mxu0 %v3548
        %3672 = vmatprep.subr.mxu0 %v3662
        %3673 = vmatpush1.msra.mxu0 %v3659
        %3674 = vmatprep.subr.mxu0 0.0
        %3675 = vmatpush1.msra.mxu0 0.0
        %3676 = vmatprep.subr.mxu0 0.0
        %3677 = vmatpush1.msra.mxu0 0.0
        %3678 = vmatprep.subr.mxu0 0.0
        %3679 = vmatpush1.msra.mxu0 0.0
        %3680 = vmatprep.subr.mxu0 0.0
        %3681 = vmatpush1.msra.mxu0 0.0
        %3682 = vmatprep.subr.mxu0 0.0
        %3683 = vmatpush1.msra.mxu0 0.0
        %3684 = vmatprep.subr.mxu0 0.0
        %3685 = vmatpush1.msra.mxu0 0.0
        %3686 = vmatprep.subr.mxu0 0.0
        %3687 = vmatpush1.msra.mxu0 0.0
        %3688 = vmatprep.subr.mxu0 0.0
        %3689 = vmatpush1.msra.mxu0 0.0
        %3690 = vmatprep.subr.mxu0 0.0
        %3691 = vmatpush1.msra.mxu0 0.0
        %3692 = vmatprep.subr.mxu0 0.0
        %3693 = vmatpush1.msra.mxu0 0.0
        %3694 = vmatprep.subr.mxu0 0.0
        %3695 = vmatpush1.msra.mxu0 0.0
        %3696 = vmatprep.subr.mxu0 0.0
        %3697 = vmatpush1.msra.mxu0 0.0
        %3698 = vmatprep.subr.mxu0 0.0
        %3699 = vmatpush1.msra.mxu0 0.0
        %3700 = vmatprep.subr.mxu0 0.0
        %3701 = vmatpush1.msra.mxu0 0.0
        %3702 = vmatprep.subr.mxu0 0.0
        %3703 = vmatpush1.msra.mxu0 0.0
        %3704 = vmatprep.subr.mxu0 0.0
        %3705 = vmatpush1.msra.mxu0 0.0
        %3706 = vmatprep.subr.mxu0 0.0
        %3707 = vmatpush1.msra.mxu0 0.0
        %3708 = vmatprep.subr.mxu0 0.0
        %3709 = vmatpush1.msra.mxu0 0.0
        %3710 = vmatprep.subr.mxu0 0.0
        %3711 = vmatpush1.msra.mxu0 0.0
        %3712 = vmatprep.subr.mxu0 0.0
        %3713 = vmatpush1.msra.mxu0 0.0
        %3714 = vmatprep.subr.mxu0 0.0
        %3715 = vmatpush1.msra.mxu0 0.0
        %3716 = vmatprep.subr.mxu0 0.0
        %3717 = vmatpush1.msra.mxu0 0.0
        %3718 = vmatprep.subr.mxu0 0.0
        %3719 = vmatpush1.msra.mxu0 0.0
        %3720 = vmatprep.subr.mxu0 0.0
        %3721 = vmatpush1.msra.mxu0 0.0
        %3722 = vmatprep.subr.mxu0 0.0
        %3723 = vmatpush1.msra.mxu0 0.0
        %3724 = vmatprep.subr.mxu0 0.0
        %3725 = vmatpush1.msra.mxu0 0.0
        %3726 = vmatprep.subr.mxu0 0.0
        %3727 = vmatpush1.msra.mxu0 0.0
        %3728 = vmatprep.mubr.f32.mxu0 0.0
        %3729 = vmatmul.mubr.f32.gmra.mrb[0].mxu0 %v706
        %v3730 = vpop.f32.mrb[0].mxu0
        %v3731 = vadd.f32 %v697, %v3730
        %v3732 = vpop.f32.mrb[0].mxu0
        %v3733 = vadd.f32 %v697, %v3732
        %3734 = vmatprep.mubr.f32.mxu0 0.0
        %3735 = vmatmul.mubr.f32.gmra.mrb[0].mxu0 %v709
        %v3736 = vpop.f32.mrb[0].mxu0
        %v3737 = vadd.f32 %v702, %v3736
        %v3738 = vpop.f32.mrb[0].mxu0
        %v3739 = vadd.f32 %v702, %v3738
        %3740 = vdwg.mxu0
        %v3742 = vsel %vm582, %v3618, 0
        %v3745 = vsel %vm582, %v3619, 0
        %3747 = vmatprep.subr.mxu0 %v3651
        %3748 = vmatpush1.msra.mxu0 %v3650
        %3749 = vmatprep.subr.mxu0 %v3653
        %3750 = vmatpush1.msra.mxu0 %v3652
        %3751 = vmatprep.subr.mxu0 %v3655
        %3752 = vmatpush1.msra.mxu0 %v3654
        %3753 = vmatprep.subr.mxu0 %v3657
        %3754 = vmatpush1.msra.mxu0 %v3656
        %3755 = vmatprep.subr.mxu0 %v3745
        %3756 = vmatpush1.msra.mxu0 %v3742
        %3757 = vmatprep.subr.mxu0 0.0
        %3758 = vmatpush1.msra.mxu0 0.0
        %3759 = vmatprep.subr.mxu0 0.0
        %3760 = vmatpush1.msra.mxu0 0.0
        %3761 = vmatprep.subr.mxu0 0.0
        %3762 = vmatpush1.msra.mxu0 0.0
        %3763 = vmatprep.subr.mxu0 0.0
        %3764 = vmatpush1.msra.mxu0 0.0
        %3765 = vmatprep.subr.mxu0 0.0
        %3766 = vmatpush1.msra.mxu0 0.0
        %3767 = vmatprep.subr.mxu0 0.0
        %3768 = vmatpush1.msra.mxu0 0.0
        %3769 = vmatprep.subr.mxu0 0.0
        %3770 = vmatpush1.msra.mxu0 0.0
        %3771 = vmatprep.subr.mxu0 0.0
        %3772 = vmatpush1.msra.mxu0 0.0
        %3773 = vmatprep.subr.mxu0 0.0
        %3774 = vmatpush1.msra.mxu0 0.0
        %3775 = vmatprep.subr.mxu0 0.0
        %3776 = vmatpush1.msra.mxu0 0.0
        %3777 = vmatprep.subr.mxu0 0.0
        %3778 = vmatpush1.msra.mxu0 0.0
        %3779 = vmatprep.subr.mxu0 0.0
        %3780 = vmatpush1.msra.mxu0 0.0
        %3781 = vmatprep.subr.mxu0 0.0
        %3782 = vmatpush1.msra.mxu0 0.0
        %3783 = vmatprep.subr.mxu0 0.0
        %3784 = vmatpush1.msra.mxu0 0.0
        %3785 = vmatprep.subr.mxu0 0.0
        %3786 = vmatpush1.msra.mxu0 0.0
        %3787 = vmatprep.subr.mxu0 0.0
        %3788 = vmatpush1.msra.mxu0 0.0
        %3789 = vmatprep.subr.mxu0 0.0
        %3790 = vmatpush1.msra.mxu0 0.0
        %3791 = vmatprep.subr.mxu0 0.0
        %3792 = vmatpush1.msra.mxu0 0.0
        %3793 = vmatprep.subr.mxu0 0.0
        %3794 = vmatpush1.msra.mxu0 0.0
        %3795 = vmatprep.subr.mxu0 0.0
        %3796 = vmatpush1.msra.mxu0 0.0
        %3797 = vmatprep.subr.mxu0 0.0
        %3798 = vmatpush1.msra.mxu0 0.0
        %3799 = vmatprep.subr.mxu0 0.0
        %3800 = vmatpush1.msra.mxu0 0.0
        %3801 = vmatprep.subr.mxu0 0.0
        %3802 = vmatpush1.msra.mxu0 0.0
        %3803 = vmatprep.subr.mxu0 0.0
        %3804 = vmatpush1.msra.mxu0 0.0
        %3805 = vmatprep.subr.mxu0 0.0
        %3806 = vmatpush1.msra.mxu0 0.0
        %3807 = vmatprep.subr.mxu0 0.0
        %3808 = vmatpush1.msra.mxu0 0.0
        %3809 = vmatprep.subr.mxu0 0.0
        %3810 = vmatpush1.msra.mxu0 0.0
        %3811 = vmatprep.mubr.f32.mxu0 0.0
        %3812 = vmatmul.mubr.f32.gmra.mrb[0].mxu0 %v795
        %v3813 = vpop.f32.mrb[0].mxu0
        %v3814 = vadd.f32 0.0, %v3813
        %v3815 = vpop.f32.mrb[0].mxu0
        %v3816 = vadd.f32 0.0, %v3815
        %3817 = vdwg.mxu0
        %v3818 = vadd.f32 %v3731, %v3814
        %v3819 = vadd.f32 %v3733, %v3816
        %v3820 = vsub.f32 0.0, %v3818
        %v3821 = vsub.f32 0.0, %v3819
        %v3822 = vmul.f32 %v3820, 1.442695
        %v3823 = vpow.pop %v3822
        %v3824 = vmul.f32 %v3821, 1.442695
        %v3825 = vpow.pop %v3824
        %v3826 = vadd.f32 %v3823, 1.0
        %v3827 = vadd.f32 %v3825, 1.0
        %v3828 = vrcp.pop %v3826
        %v3829 = vmul.f32 1.0, %v3828
        %v3830 = vrcp.pop %v3827
        %v3831 = vmul.f32 1.0, %v3830
        %v3832 = vmul.f32 %v3829, %v3550
        %v3833 = vmul.f32 %v3831, %v3551
        %3834 = vrot.lane.b32.xlu0 %v3832, 17
        %v3835 = vpop.permute.xlu0 %3834
        %3836 = vrot.lane.b32.xlu0 %v3833, 17
        %v3837 = vpop.permute.xlu0 %3836
        %v3838 = vsel %vm410, %v3835, %v3837
        %v3839 = vsel %vm410, %v3837, %v3835
        %v3840 = vmul.f32 %v3839, %v416
        %v3841 = vmul.f32 %v3838, %v420
        %3842 = vrot.lane.b32.xlu0 %v3832, 16
        %v3843 = vpop.permute.xlu0 %3842
        %3844 = vrot.lane.b32.xlu0 %v3833, 16
        %v3845 = vpop.permute.xlu0 %3844
        %v3846 = vsel %vm427, %v3843, %v3845
        %v3847 = vsel %vm427, %v3845, %v3843
        %v3848 = vmul.f32 %v3847, %v433
        %v3849 = vmul.f32 %v3846, %v437
        %3850 = vrot.lane.b32.xlu0 %v3832, 15
        %v3851 = vpop.permute.xlu0 %3850
        %3852 = vrot.lane.b32.xlu0 %v3833, 15
        %v3853 = vpop.permute.xlu0 %3852
        %v3854 = vsel %vm444, %v3851, %v3853
        %v3855 = vsel %vm444, %v3853, %v3851
        %v3856 = vmul.f32 %v3855, %v450
        %v3857 = vmul.f32 %v3854, %v454
        %3858 = vrot.lane.b32.xlu0 %v3832, 1
        %v3859 = vpop.permute.xlu0 %3858
        %3860 = vrot.lane.b32.xlu0 %v3833, 1
        %v3861 = vpop.permute.xlu0 %3860
        %v3862 = vsel %vm461, %v3859, %v3861
        %v3863 = vsel %vm461, %v3861, %v3859
        %v3864 = vmul.f32 %v3863, %v467
        %v3865 = vmul.f32 %v3862, %v471
        %v3866 = vmul.f32 %v3832, %v477
        %v3867 = vmul.f32 %v3833, %v481
        %3868 = vrot.lane.b32.xlu0 %v3832, 127
        %v3869 = vpop.permute.xlu0 %3868
        %3870 = vrot.lane.b32.xlu0 %v3833, 127
        %v3871 = vpop.permute.xlu0 %3870
        %v3872 = vsel %vm491, %v3869, %v3871
        %v3873 = vsel %vm491, %v3871, %v3869
        %v3874 = vmul.f32 %v3872, %v497
        %v3875 = vmul.f32 %v3873, %v501
        %3876 = vrot.lane.b32.xlu0 %v3832, 113
        %v3877 = vpop.permute.xlu0 %3876
        %3878 = vrot.lane.b32.xlu0 %v3833, 113
        %v3879 = vpop.permute.xlu0 %3878
        %v3880 = vsel %vm508, %v3877, %v3879
        %v3881 = vsel %vm508, %v3879, %v3877
        %v3882 = vmul.f32 %v3880, %v514
        %v3883 = vmul.f32 %v3881, %v518
        %3884 = vrot.lane.b32.xlu0 %v3832, 112
        %v3885 = vpop.permute.xlu0 %3884
        %3886 = vrot.lane.b32.xlu0 %v3833, 112
        %v3887 = vpop.permute.xlu0 %3886
        %v3888 = vsel %vm525, %v3885, %v3887
        %v3889 = vsel %vm525, %v3887, %v3885
        %v3890 = vmul.f32 %v3888, %v531
        %v3891 = vmul.f32 %v3889, %v535
        %3892 = vrot.lane.b32.xlu0 %v3832, 111
        %v3893 = vpop.permute.xlu0 %3892
        %3894 = vrot.lane.b32.xlu0 %v3833, 111
        %v3895 = vpop.permute.xlu0 %3894
        %v3896 = vsel %vm542, %v3893, %v3895
        %v3897 = vsel %vm542, %v3895, %v3893
        %v3898 = vmul.f32 %v3896, %v548
        %v3899 = vmul.f32 %v3897, %v552
        %v3902 = vrot.slane %v3848, 4
        %v3903 = vrot.slane %v3849, 4
        %v3908 = vrot.slane %v3864, 4
        %v3909 = vrot.slane %v3865, 4
        %v3914 = vrot.slane %v3874, 4
        %v3915 = vrot.slane %v3875, 4
        %v3920 = vrot.slane %v3890, 4
        %v3921 = vrot.slane %v3891, 4
        %v3924 = vsel %vm582, %v3840, %v3902
        %v3925 = vsel %vm582, %v3841, %v3903
        %v3926 = vsel %vm582, %v3856, %v3908
        %v3927 = vsel %vm582, %v3857, %v3909
        %v3928 = vsel %vm582, %v3866, %v3914
        %v3929 = vsel %vm582, %v3867, %v3915
        %v3930 = vsel %vm582, %v3882, %v3920
        %v3931 = vsel %vm582, %v3883, %v3921
        %v3933 = vsel %vm582, %v3898, 0
        %v3936 = vsel %vm582, %v3899, 0
        %3938 = vmatprep.subr.mxu0 %v3925
        %3939 = vmatpush1.msra.mxu0 %v3924
        %3940 = vmatprep.subr.mxu0 %v3927
        %3941 = vmatpush1.msra.mxu0 %v3926
        %3942 = vmatprep.subr.mxu0 %v3929
        %3943 = vmatpush1.msra.mxu0 %v3928
        %3944 = vmatprep.subr.mxu0 %v3931
        %3945 = vmatpush1.msra.mxu0 %v3930
        %3946 = vmatprep.subr.mxu0 %v3936
        %3947 = vmatpush1.msra.mxu0 %v3933
        %3948 = vmatprep.subr.mxu0 0.0
        %3949 = vmatpush1.msra.mxu0 0.0
        %3950 = vmatprep.subr.mxu0 0.0
        %3951 = vmatpush1.msra.mxu0 0.0
        %3952 = vmatprep.subr.mxu0 0.0
        %3953 = vmatpush1.msra.mxu0 0.0
        %3954 = vmatprep.subr.mxu0 0.0
        %3955 = vmatpush1.msra.mxu0 0.0
        %3956 = vmatprep.subr.mxu0 0.0
        %3957 = vmatpush1.msra.mxu0 0.0
        %3958 = vmatprep.subr.mxu0 0.0
        %3959 = vmatpush1.msra.mxu0 0.0
        %3960 = vmatprep.subr.mxu0 0.0
        %3961 = vmatpush1.msra.mxu0 0.0
        %3962 = vmatprep.subr.mxu0 0.0
        %3963 = vmatpush1.msra.mxu0 0.0
        %3964 = vmatprep.subr.mxu0 0.0
        %3965 = vmatpush1.msra.mxu0 0.0
        %3966 = vmatprep.subr.mxu0 0.0
        %3967 = vmatpush1.msra.mxu0 0.0
        %3968 = vmatprep.subr.mxu0 0.0
        %3969 = vmatpush1.msra.mxu0 0.0
        %3970 = vmatprep.subr.mxu0 0.0
        %3971 = vmatpush1.msra.mxu0 0.0
        %3972 = vmatprep.subr.mxu0 0.0
        %3973 = vmatpush1.msra.mxu0 0.0
        %3974 = vmatprep.subr.mxu0 0.0
        %3975 = vmatpush1.msra.mxu0 0.0
        %3976 = vmatprep.subr.mxu0 0.0
        %3977 = vmatpush1.msra.mxu0 0.0
        %3978 = vmatprep.subr.mxu0 0.0
        %3979 = vmatpush1.msra.mxu0 0.0
        %3980 = vmatprep.subr.mxu0 0.0
        %3981 = vmatpush1.msra.mxu0 0.0
        %3982 = vmatprep.subr.mxu0 0.0
        %3983 = vmatpush1.msra.mxu0 0.0
        %3984 = vmatprep.subr.mxu0 0.0
        %3985 = vmatpush1.msra.mxu0 0.0
        %3986 = vmatprep.subr.mxu0 0.0
        %3987 = vmatpush1.msra.mxu0 0.0
        %3988 = vmatprep.subr.mxu0 0.0
        %3989 = vmatpush1.msra.mxu0 0.0
        %3990 = vmatprep.subr.mxu0 0.0
        %3991 = vmatpush1.msra.mxu0 0.0
        %3992 = vmatprep.subr.mxu0 0.0
        %3993 = vmatpush1.msra.mxu0 0.0
        %3994 = vmatprep.subr.mxu0 0.0
        %3995 = vmatpush1.msra.mxu0 0.0
        %3996 = vmatprep.subr.mxu0 0.0
        %3997 = vmatpush1.msra.mxu0 0.0
        %3998 = vmatprep.subr.mxu0 0.0
        %3999 = vmatpush1.msra.mxu0 0.0
        %4000 = vmatprep.subr.mxu0 0.0
        %4001 = vmatpush1.msra.mxu0 0.0
        %4002 = vmatprep.mubr.f32.mxu0 0.0
        %4003 = vmatmul.mubr.f32.gmra.mrb[0].mxu0 %v989
        %v4004 = vpop.f32.mrb[0].mxu0
        %v4005 = vadd.f32 0.0, %v4004
        %v4006 = vpop.f32.mrb[0].mxu0
        %v4007 = vadd.f32 0.0, %v4006
        %4008 = vdwg.mxu0
        %v4009 = vadd.f32 %v3737, %v4005
        %v4010 = vadd.f32 %v3739, %v4007
        %v4011 = vtanh.pop %v4009
        %v4012 = vtanh.pop %v4010
        %v4013 = vsub.f32 1.0, %v3829
        %v4014 = vsub.f32 1.0, %v3831
        %v4015 = vmul.f32 %v4013, %v3437
        %v4016 = vmul.f32 %v4014, %v3438
        %v4019 = vrot.slane %v4011, 4
        %v4020 = vrot.slane %v4012, 4
        %v4023 = vmul.f32 %v3829, %v4019
        %v4024 = vmul.f32 %v3831, %v4020
        %v4025 = vadd.f32 %v4015, %v4023
        %v4026 = vadd.f32 %v4016, %v4024
        %v4029 = vcombine.high %v4025, %v4026
        %s4031 = scalar_lea.vmem %s380, 40 [#allocation11]
        %4032 = vst [vmem:[%s4031] sm:$0xff] %v4029
        %s4033 = scalar_lea.vmem %s328, 48 [#allocation3]
        %v4034 = vld [vmem:[%s4033] sm:$0xff]
        %v4036 = vcombine.high %v4034, %v4034
        %4038 = vrot.lane.b32.xlu0 %v4034, 17
        %v4039 = vpop.permute.xlu0 %4038
        %4040 = vrot.lane.b32.xlu0 %v4036, 17
        %v4041 = vpop.permute.xlu0 %4040
        %v4042 = vsel %vm410, %v4039, %v4041
        %v4043 = vsel %vm410, %v4041, %v4039
        %v4044 = vmul.f32 %v4043, %v416
        %v4045 = vmul.f32 %v4042, %v420
        %4046 = vrot.lane.b32.xlu0 %v4034, 16
        %v4047 = vpop.permute.xlu0 %4046
        %4048 = vrot.lane.b32.xlu0 %v4036, 16
        %v4049 = vpop.permute.xlu0 %4048
        %v4050 = vsel %vm427, %v4047, %v4049
        %v4051 = vsel %vm427, %v4049, %v4047
        %v4052 = vmul.f32 %v4051, %v433
        %v4053 = vmul.f32 %v4050, %v437
        %4054 = vrot.lane.b32.xlu0 %v4034, 15
        %v4055 = vpop.permute.xlu0 %4054
        %4056 = vrot.lane.b32.xlu0 %v4036, 15
        %v4057 = vpop.permute.xlu0 %4056
        %v4058 = vsel %vm444, %v4055, %v4057
        %v4059 = vsel %vm444, %v4057, %v4055
        %v4060 = vmul.f32 %v4059, %v450
        %v4061 = vmul.f32 %v4058, %v454
        %4062 = vrot.lane.b32.xlu0 %v4034, 1
        %v4063 = vpop.permute.xlu0 %4062
        %4064 = vrot.lane.b32.xlu0 %v4036, 1
        %v4065 = vpop.permute.xlu0 %4064
        %v4066 = vsel %vm461, %v4063, %v4065
        %v4067 = vsel %vm461, %v4065, %v4063
        %v4068 = vmul.f32 %v4067, %v467
        %v4069 = vmul.f32 %v4066, %v471
        %v4070 = vmul.f32 %v4034, %v484
        %4071 = vrot.lane.b32.xlu0 %v4034, 127
        %v4072 = vpop.permute.xlu0 %4071
        %4073 = vrot.lane.b32.xlu0 %v4036, 127
        %v4074 = vpop.permute.xlu0 %4073
        %v4075 = vsel %vm491, %v4072, %v4074
        %v4076 = vsel %vm491, %v4074, %v4072
        %v4077 = vmul.f32 %v4075, %v497
        %v4078 = vmul.f32 %v4076, %v501
        %4079 = vrot.lane.b32.xlu0 %v4034, 113
        %v4080 = vpop.permute.xlu0 %4079
        %4081 = vrot.lane.b32.xlu0 %v4036, 113
        %v4082 = vpop.permute.xlu0 %4081
        %v4083 = vsel %vm508, %v4080, %v4082
        %v4084 = vsel %vm508, %v4082, %v4080
        %v4085 = vmul.f32 %v4083, %v514
        %v4086 = vmul.f32 %v4084, %v518
        %4087 = vrot.lane.b32.xlu0 %v4034, 112
        %v4088 = vpop.permute.xlu0 %4087
        %4089 = vrot.lane.b32.xlu0 %v4036, 112
        %v4090 = vpop.permute.xlu0 %4089
        %v4091 = vsel %vm525, %v4088, %v4090
        %v4092 = vsel %vm525, %v4090, %v4088
        %v4093 = vmul.f32 %v4091, %v531
        %v4094 = vmul.f32 %v4092, %v535
        %4095 = vrot.lane.b32.xlu0 %v4034, 111
        %v4096 = vpop.permute.xlu0 %4095
        %4097 = vrot.lane.b32.xlu0 %v4036, 111
        %v4098 = vpop.permute.xlu0 %4097
        %v4099 = vsel %vm542, %v4096, %v4098
        %v4100 = vsel %vm542, %v4098, %v4096
        %v4101 = vmul.f32 %v4099, %v548
        %v4102 = vmul.f32 %v4100, %v552
        %v4105 = vrot.slane %v4052, 4
        %v4106 = vrot.slane %v4053, 4
        %v4111 = vrot.slane %v4068, 4
        %v4112 = vrot.slane %v4069, 4
        %v4116 = vcombine.high %v4070, %v4070
        %v4120 = vrot.slane %v4077, 4
        %v4121 = vrot.slane %v4078, 4
        %v4126 = vrot.slane %v4093, 4
        %v4127 = vrot.slane %v4094, 4
        %v4130 = vsel %vm582, %v4044, %v4105
        %v4131 = vsel %vm582, %v4045, %v4106
        %v4132 = vsel %vm582, %v4060, %v4111
        %v4133 = vsel %vm582, %v4061, %v4112
        %v4134 = vsel %vm582, %v4070, %v4120
        %v4135 = vsel %vm582, %v4116, %v4121
        %v4136 = vsel %vm582, %v4085, %v4126
        %v4137 = vsel %vm582, %v4086, %v4127
        %v4138 = vrot.slane %v4025, 4
        %v4139 = vrot.slane %v4026, 4
        %4142 = vrot.lane.b32.xlu0 %v4138, 17
        %v4143 = vpop.permute.xlu0 %4142
        %4144 = vrot.lane.b32.xlu0 %v4139, 17
        %v4145 = vpop.permute.xlu0 %4144
        %v4146 = vsel %vm410, %v4143, %v4145
        %v4147 = vsel %vm410, %v4145, %v4143
        %v4148 = vmul.f32 %v4147, %v416
        %v4149 = vmul.f32 %v4146, %v420
        %4150 = vrot.lane.b32.xlu0 %v4138, 16
        %v4151 = vpop.permute.xlu0 %4150
        %4152 = vrot.lane.b32.xlu0 %v4139, 16
        %v4153 = vpop.permute.xlu0 %4152
        %v4154 = vsel %vm427, %v4151, %v4153
        %v4155 = vsel %vm427, %v4153, %v4151
        %v4156 = vmul.f32 %v4155, %v433
        %v4157 = vmul.f32 %v4154, %v437
        %4158 = vrot.lane.b32.xlu0 %v4138, 15
        %v4159 = vpop.permute.xlu0 %4158
        %4160 = vrot.lane.b32.xlu0 %v4139, 15
        %v4161 = vpop.permute.xlu0 %4160
        %v4162 = vsel %vm444, %v4159, %v4161
        %v4163 = vsel %vm444, %v4161, %v4159
        %v4164 = vmul.f32 %v4163, %v450
        %v4165 = vmul.f32 %v4162, %v454
        %4166 = vrot.lane.b32.xlu0 %v4138, 1
        %v4167 = vpop.permute.xlu0 %4166
        %4168 = vrot.lane.b32.xlu0 %v4139, 1
        %v4169 = vpop.permute.xlu0 %4168
        %v4170 = vsel %vm461, %v4167, %v4169
        %v4171 = vsel %vm461, %v4169, %v4167
        %v4172 = vmul.f32 %v4171, %v467
        %v4173 = vmul.f32 %v4170, %v471
        %v4174 = vmul.f32 %v4025, %v477
        %v4175 = vmul.f32 %v4026, %v481
        %4176 = vrot.lane.b32.xlu0 %v4138, 127
        %v4177 = vpop.permute.xlu0 %4176
        %4178 = vrot.lane.b32.xlu0 %v4139, 127
        %v4179 = vpop.permute.xlu0 %4178
        %v4180 = vsel %vm491, %v4177, %v4179
        %v4181 = vsel %vm491, %v4179, %v4177
        %v4182 = vmul.f32 %v4180, %v497
        %v4183 = vmul.f32 %v4181, %v501
        %4184 = vrot.lane.b32.xlu0 %v4138, 113
        %v4185 = vpop.permute.xlu0 %4184
        %4186 = vrot.lane.b32.xlu0 %v4139, 113
        %v4187 = vpop.permute.xlu0 %4186
        %v4188 = vsel %vm508, %v4185, %v4187
        %v4189 = vsel %vm508, %v4187, %v4185
        %v4190 = vmul.f32 %v4188, %v514
        %v4191 = vmul.f32 %v4189, %v518
        %4192 = vrot.lane.b32.xlu0 %v4138, 112
        %v4193 = vpop.permute.xlu0 %4192
        %4194 = vrot.lane.b32.xlu0 %v4139, 112
        %v4195 = vpop.permute.xlu0 %4194
        %v4196 = vsel %vm525, %v4193, %v4195
        %v4197 = vsel %vm525, %v4195, %v4193
        %v4198 = vmul.f32 %v4196, %v531
        %v4199 = vmul.f32 %v4197, %v535
        %4200 = vrot.lane.b32.xlu0 %v4138, 111
        %v4201 = vpop.permute.xlu0 %4200
        %4202 = vrot.lane.b32.xlu0 %v4139, 111
        %v4203 = vpop.permute.xlu0 %4202
        %v4204 = vsel %vm542, %v4201, %v4203
        %v4205 = vsel %vm542, %v4203, %v4201
        %v4206 = vmul.f32 %v4204, %v548
        %v4207 = vmul.f32 %v4205, %v552
        %v4210 = vrot.slane %v4156, 4
        %v4211 = vrot.slane %v4157, 4
        %v4216 = vrot.slane %v4172, 4
        %v4217 = vrot.slane %v4173, 4
        %v4222 = vrot.slane %v4174, 4
        %v4223 = vrot.slane %v4175, 4
        %v4228 = vrot.slane %v4182, 4
        %v4229 = vrot.slane %v4183, 4
        %v4234 = vrot.slane %v4198, 4
        %v4235 = vrot.slane %v4199, 4
        %v4238 = vsel %vm582, %v4148, %v4210
        %v4239 = vsel %vm582, %v4149, %v4211
        %v4240 = vsel %vm582, %v4164, %v4216
        %v4241 = vsel %vm582, %v4165, %v4217
        %v4242 = vsel %vm582, %v4222, %v4228
        %v4243 = vsel %vm582, %v4223, %v4229
        %v4244 = vsel %vm582, %v4190, %v4234
        %v4245 = vsel %vm582, %v4191, %v4235
        %v4247 = vsel %vm582, %v4101, 0
        %v4250 = vsel %vm582, %v4102, 0
        %4252 = vmatprep.subr.mxu0 %v4131
        %4253 = vmatpush1.msra.mxu0 %v4130
        %4254 = vmatprep.subr.mxu0 %v4133
        %4255 = vmatpush1.msra.mxu0 %v4132
        %4256 = vmatprep.subr.mxu0 %v4135
        %4257 = vmatpush1.msra.mxu0 %v4134
        %4258 = vmatprep.subr.mxu0 %v4137
        %4259 = vmatpush1.msra.mxu0 %v4136
        %4260 = vmatprep.subr.mxu0 %v4250
        %4261 = vmatpush1.msra.mxu0 %v4247
        %4262 = vmatprep.subr.mxu0 0.0
        %4263 = vmatpush1.msra.mxu0 0.0
        %4264 = vmatprep.subr.mxu0 0.0
        %4265 = vmatpush1.msra.mxu0 0.0
        %4266 = vmatprep.subr.mxu0 0.0
        %4267 = vmatpush1.msra.mxu0 0.0
        %4268 = vmatprep.subr.mxu0 0.0
        %4269 = vmatpush1.msra.mxu0 0.0
        %4270 = vmatprep.subr.mxu0 0.0
        %4271 = vmatpush1.msra.mxu0 0.0
        %4272 = vmatprep.subr.mxu0 0.0
        %4273 = vmatpush1.msra.mxu0 0.0
        %4274 = vmatprep.subr.mxu0 0.0
        %4275 = vmatpush1.msra.mxu0 0.0
        %4276 = vmatprep.subr.mxu0 0.0
        %4277 = vmatpush1.msra.mxu0 0.0
        %4278 = vmatprep.subr.mxu0 0.0
        %4279 = vmatpush1.msra.mxu0 0.0
        %4280 = vmatprep.subr.mxu0 0.0
        %4281 = vmatpush1.msra.mxu0 0.0
        %4282 = vmatprep.subr.mxu0 0.0
        %4283 = vmatpush1.msra.mxu0 0.0
        %4284 = vmatprep.subr.mxu0 0.0
        %4285 = vmatpush1.msra.mxu0 0.0
        %4286 = vmatprep.subr.mxu0 0.0
        %4287 = vmatpush1.msra.mxu0 0.0
        %4288 = vmatprep.subr.mxu0 0.0
        %4289 = vmatpush1.msra.mxu0 0.0
        %4290 = vmatprep.subr.mxu0 0.0
        %4291 = vmatpush1.msra.mxu0 0.0
        %4292 = vmatprep.subr.mxu0 0.0
        %4293 = vmatpush1.msra.mxu0 0.0
        %4294 = vmatprep.subr.mxu0 0.0
        %4295 = vmatpush1.msra.mxu0 0.0
        %4296 = vmatprep.subr.mxu0 0.0
        %4297 = vmatpush1.msra.mxu0 0.0
        %4298 = vmatprep.subr.mxu0 0.0
        %4299 = vmatpush1.msra.mxu0 0.0
        %4300 = vmatprep.subr.mxu0 0.0
        %4301 = vmatpush1.msra.mxu0 0.0
        %4302 = vmatprep.subr.mxu0 0.0
        %4303 = vmatpush1.msra.mxu0 0.0
        %4304 = vmatprep.subr.mxu0 0.0
        %4305 = vmatpush1.msra.mxu0 0.0
        %4306 = vmatprep.subr.mxu0 0.0
        %4307 = vmatpush1.msra.mxu0 0.0
        %4308 = vmatprep.subr.mxu0 0.0
        %4309 = vmatpush1.msra.mxu0 0.0
        %4310 = vmatprep.subr.mxu0 0.0
        %4311 = vmatpush1.msra.mxu0 0.0
        %4312 = vmatprep.subr.mxu0 0.0
        %4313 = vmatpush1.msra.mxu0 0.0
        %4314 = vmatprep.subr.mxu0 0.0
        %4315 = vmatpush1.msra.mxu0 0.0
        %4316 = vmatprep.mubr.f32.mxu0 0.0
        %4317 = vmatmul.mubr.f32.gmra.mrb[0].mxu0 %v706
        %v4318 = vpop.f32.mrb[0].mxu0
        %v4319 = vadd.f32 %v697, %v4318
        %v4320 = vpop.f32.mrb[0].mxu0
        %v4321 = vadd.f32 %v697, %v4320
        %4322 = vmatprep.mubr.f32.mxu0 0.0
        %4323 = vmatmul.mubr.f32.gmra.mrb[0].mxu0 %v709
        %v4324 = vpop.f32.mrb[0].mxu0
        %v4325 = vadd.f32 %v702, %v4324
        %v4326 = vpop.f32.mrb[0].mxu0
        %v4327 = vadd.f32 %v702, %v4326
        %4328 = vdwg.mxu0
        %v4330 = vsel %vm582, %v4206, 0
        %v4333 = vsel %vm582, %v4207, 0
        %4335 = vmatprep.subr.mxu0 %v4239
        %4336 = vmatpush1.msra.mxu0 %v4238
        %4337 = vmatprep.subr.mxu0 %v4241
        %4338 = vmatpush1.msra.mxu0 %v4240
        %4339 = vmatprep.subr.mxu0 %v4243
        %4340 = vmatpush1.msra.mxu0 %v4242
        %4341 = vmatprep.subr.mxu0 %v4245
        %4342 = vmatpush1.msra.mxu0 %v4244
        %4343 = vmatprep.subr.mxu0 %v4333
        %4344 = vmatpush1.msra.mxu0 %v4330
        %4345 = vmatprep.subr.mxu0 0.0
        %4346 = vmatpush1.msra.mxu0 0.0
        %4347 = vmatprep.subr.mxu0 0.0
        %4348 = vmatpush1.msra.mxu0 0.0
        %4349 = vmatprep.subr.mxu0 0.0
        %4350 = vmatpush1.msra.mxu0 0.0
        %4351 = vmatprep.subr.mxu0 0.0
        %4352 = vmatpush1.msra.mxu0 0.0
        %4353 = vmatprep.subr.mxu0 0.0
        %4354 = vmatpush1.msra.mxu0 0.0
        %4355 = vmatprep.subr.mxu0 0.0
        %4356 = vmatpush1.msra.mxu0 0.0
        %4357 = vmatprep.subr.mxu0 0.0
        %4358 = vmatpush1.msra.mxu0 0.0
        %4359 = vmatprep.subr.mxu0 0.0
        %4360 = vmatpush1.msra.mxu0 0.0
        %4361 = vmatprep.subr.mxu0 0.0
        %4362 = vmatpush1.msra.mxu0 0.0
        %4363 = vmatprep.subr.mxu0 0.0
        %4364 = vmatpush1.msra.mxu0 0.0
        %4365 = vmatprep.subr.mxu0 0.0
        %4366 = vmatpush1.msra.mxu0 0.0
        %4367 = vmatprep.subr.mxu0 0.0
        %4368 = vmatpush1.msra.mxu0 0.0
        %4369 = vmatprep.subr.mxu0 0.0
        %4370 = vmatpush1.msra.mxu0 0.0
        %4371 = vmatprep.subr.mxu0 0.0
        %4372 = vmatpush1.msra.mxu0 0.0
        %4373 = vmatprep.subr.mxu0 0.0
        %4374 = vmatpush1.msra.mxu0 0.0
        %4375 = vmatprep.subr.mxu0 0.0
        %4376 = vmatpush1.msra.mxu0 0.0
        %4377 = vmatprep.subr.mxu0 0.0
        %4378 = vmatpush1.msra.mxu0 0.0
        %4379 = vmatprep.subr.mxu0 0.0
        %4380 = vmatpush1.msra.mxu0 0.0
        %4381 = vmatprep.subr.mxu0 0.0
        %4382 = vmatpush1.msra.mxu0 0.0
        %4383 = vmatprep.subr.mxu0 0.0
        %4384 = vmatpush1.msra.mxu0 0.0
        %4385 = vmatprep.subr.mxu0 0.0
        %4386 = vmatpush1.msra.mxu0 0.0
        %4387 = vmatprep.subr.mxu0 0.0
        %4388 = vmatpush1.msra.mxu0 0.0
        %4389 = vmatprep.subr.mxu0 0.0
        %4390 = vmatpush1.msra.mxu0 0.0
        %4391 = vmatprep.subr.mxu0 0.0
        %4392 = vmatpush1.msra.mxu0 0.0
        %4393 = vmatprep.subr.mxu0 0.0
        %4394 = vmatpush1.msra.mxu0 0.0
        %4395 = vmatprep.subr.mxu0 0.0
        %4396 = vmatpush1.msra.mxu0 0.0
        %4397 = vmatprep.subr.mxu0 0.0
        %4398 = vmatpush1.msra.mxu0 0.0
        %4399 = vmatprep.mubr.f32.mxu0 0.0
        %4400 = vmatmul.mubr.f32.gmra.mrb[0].mxu0 %v795
        %v4401 = vpop.f32.mrb[0].mxu0
        %v4402 = vadd.f32 0.0, %v4401
        %v4403 = vpop.f32.mrb[0].mxu0
        %v4404 = vadd.f32 0.0, %v4403
        %4405 = vdwg.mxu0
        %v4406 = vadd.f32 %v4319, %v4402
        %v4407 = vadd.f32 %v4321, %v4404
        %v4408 = vsub.f32 0.0, %v4406
        %v4409 = vsub.f32 0.0, %v4407
        %v4410 = vmul.f32 %v4408, 1.442695
        %v4411 = vpow.pop %v4410
        %v4412 = vmul.f32 %v4409, 1.442695
        %v4413 = vpow.pop %v4412
        %v4414 = vadd.f32 %v4411, 1.0
        %v4415 = vadd.f32 %v4413, 1.0
        %v4416 = vrcp.pop %v4414
        %v4417 = vmul.f32 1.0, %v4416
        %v4418 = vrcp.pop %v4415
        %v4419 = vmul.f32 1.0, %v4418
        %v4420 = vmul.f32 %v4417, %v4138
        %v4421 = vmul.f32 %v4419, %v4139
        %4422 = vrot.lane.b32.xlu0 %v4420, 17
        %v4423 = vpop.permute.xlu0 %4422
        %4424 = vrot.lane.b32.xlu0 %v4421, 17
        %v4425 = vpop.permute.xlu0 %4424
        %v4426 = vsel %vm410, %v4423, %v4425
        %v4427 = vsel %vm410, %v4425, %v4423
        %v4428 = vmul.f32 %v4427, %v416
        %v4429 = vmul.f32 %v4426, %v420
        %4430 = vrot.lane.b32.xlu0 %v4420, 16
        %v4431 = vpop.permute.xlu0 %4430
        %4432 = vrot.lane.b32.xlu0 %v4421, 16
        %v4433 = vpop.permute.xlu0 %4432
        %v4434 = vsel %vm427, %v4431, %v4433
        %v4435 = vsel %vm427, %v4433, %v4431
        %v4436 = vmul.f32 %v4435, %v433
        %v4437 = vmul.f32 %v4434, %v437
        %4438 = vrot.lane.b32.xlu0 %v4420, 15
        %v4439 = vpop.permute.xlu0 %4438
        %4440 = vrot.lane.b32.xlu0 %v4421, 15
        %v4441 = vpop.permute.xlu0 %4440
        %v4442 = vsel %vm444, %v4439, %v4441
        %v4443 = vsel %vm444, %v4441, %v4439
        %v4444 = vmul.f32 %v4443, %v450
        %v4445 = vmul.f32 %v4442, %v454
        %4446 = vrot.lane.b32.xlu0 %v4420, 1
        %v4447 = vpop.permute.xlu0 %4446
        %4448 = vrot.lane.b32.xlu0 %v4421, 1
        %v4449 = vpop.permute.xlu0 %4448
        %v4450 = vsel %vm461, %v4447, %v4449
        %v4451 = vsel %vm461, %v4449, %v4447
        %v4452 = vmul.f32 %v4451, %v467
        %v4453 = vmul.f32 %v4450, %v471
        %v4454 = vmul.f32 %v4420, %v477
        %v4455 = vmul.f32 %v4421, %v481
        %4456 = vrot.lane.b32.xlu0 %v4420, 127
        %v4457 = vpop.permute.xlu0 %4456
        %4458 = vrot.lane.b32.xlu0 %v4421, 127
        %v4459 = vpop.permute.xlu0 %4458
        %v4460 = vsel %vm491, %v4457, %v4459
        %v4461 = vsel %vm491, %v4459, %v4457
        %v4462 = vmul.f32 %v4460, %v497
        %v4463 = vmul.f32 %v4461, %v501
        %4464 = vrot.lane.b32.xlu0 %v4420, 113
        %v4465 = vpop.permute.xlu0 %4464
        %4466 = vrot.lane.b32.xlu0 %v4421, 113
        %v4467 = vpop.permute.xlu0 %4466
        %v4468 = vsel %vm508, %v4465, %v4467
        %v4469 = vsel %vm508, %v4467, %v4465
        %v4470 = vmul.f32 %v4468, %v514
        %v4471 = vmul.f32 %v4469, %v518
        %4472 = vrot.lane.b32.xlu0 %v4420, 112
        %v4473 = vpop.permute.xlu0 %4472
        %4474 = vrot.lane.b32.xlu0 %v4421, 112
        %v4475 = vpop.permute.xlu0 %4474
        %v4476 = vsel %vm525, %v4473, %v4475
        %v4477 = vsel %vm525, %v4475, %v4473
        %v4478 = vmul.f32 %v4476, %v531
        %v4479 = vmul.f32 %v4477, %v535
        %4480 = vrot.lane.b32.xlu0 %v4420, 111
        %v4481 = vpop.permute.xlu0 %4480
        %4482 = vrot.lane.b32.xlu0 %v4421, 111
        %v4483 = vpop.permute.xlu0 %4482
        %v4484 = vsel %vm542, %v4481, %v4483
        %v4485 = vsel %vm542, %v4483, %v4481
        %v4486 = vmul.f32 %v4484, %v548
        %v4487 = vmul.f32 %v4485, %v552
        %v4490 = vrot.slane %v4436, 4
        %v4491 = vrot.slane %v4437, 4
        %v4496 = vrot.slane %v4452, 4
        %v4497 = vrot.slane %v4453, 4
        %v4502 = vrot.slane %v4462, 4
        %v4503 = vrot.slane %v4463, 4
        %v4508 = vrot.slane %v4478, 4
        %v4509 = vrot.slane %v4479, 4
        %v4512 = vsel %vm582, %v4428, %v4490
        %v4513 = vsel %vm582, %v4429, %v4491
        %v4514 = vsel %vm582, %v4444, %v4496
        %v4515 = vsel %vm582, %v4445, %v4497
        %v4516 = vsel %vm582, %v4454, %v4502
        %v4517 = vsel %vm582, %v4455, %v4503
        %v4518 = vsel %vm582, %v4470, %v4508
        %v4519 = vsel %vm582, %v4471, %v4509
        %v4521 = vsel %vm582, %v4486, 0
        %v4524 = vsel %vm582, %v4487, 0
        %4526 = vmatprep.subr.mxu0 %v4513
        %4527 = vmatpush1.msra.mxu0 %v4512
        %4528 = vmatprep.subr.mxu0 %v4515
        %4529 = vmatpush1.msra.mxu0 %v4514
        %4530 = vmatprep.subr.mxu0 %v4517
        %4531 = vmatpush1.msra.mxu0 %v4516
        %4532 = vmatprep.subr.mxu0 %v4519
        %4533 = vmatpush1.msra.mxu0 %v4518
        %4534 = vmatprep.subr.mxu0 %v4524
        %4535 = vmatpush1.msra.mxu0 %v4521
        %4536 = vmatprep.subr.mxu0 0.0
        %4537 = vmatpush1.msra.mxu0 0.0
        %4538 = vmatprep.subr.mxu0 0.0
        %4539 = vmatpush1.msra.mxu0 0.0
        %4540 = vmatprep.subr.mxu0 0.0
        %4541 = vmatpush1.msra.mxu0 0.0
        %4542 = vmatprep.subr.mxu0 0.0
        %4543 = vmatpush1.msra.mxu0 0.0
        %4544 = vmatprep.subr.mxu0 0.0
        %4545 = vmatpush1.msra.mxu0 0.0
        %4546 = vmatprep.subr.mxu0 0.0
        %4547 = vmatpush1.msra.mxu0 0.0
        %4548 = vmatprep.subr.mxu0 0.0
        %4549 = vmatpush1.msra.mxu0 0.0
        %4550 = vmatprep.subr.mxu0 0.0
        %4551 = vmatpush1.msra.mxu0 0.0
        %4552 = vmatprep.subr.mxu0 0.0
        %4553 = vmatpush1.msra.mxu0 0.0
        %4554 = vmatprep.subr.mxu0 0.0
        %4555 = vmatpush1.msra.mxu0 0.0
        %4556 = vmatprep.subr.mxu0 0.0
        %4557 = vmatpush1.msra.mxu0 0.0
        %4558 = vmatprep.subr.mxu0 0.0
        %4559 = vmatpush1.msra.mxu0 0.0
        %4560 = vmatprep.subr.mxu0 0.0
        %4561 = vmatpush1.msra.mxu0 0.0
        %4562 = vmatprep.subr.mxu0 0.0
        %4563 = vmatpush1.msra.mxu0 0.0
        %4564 = vmatprep.subr.mxu0 0.0
        %4565 = vmatpush1.msra.mxu0 0.0
        %4566 = vmatprep.subr.mxu0 0.0
        %4567 = vmatpush1.msra.mxu0 0.0
        %4568 = vmatprep.subr.mxu0 0.0
        %4569 = vmatpush1.msra.mxu0 0.0
        %4570 = vmatprep.subr.mxu0 0.0
        %4571 = vmatpush1.msra.mxu0 0.0
        %4572 = vmatprep.subr.mxu0 0.0
        %4573 = vmatpush1.msra.mxu0 0.0
        %4574 = vmatprep.subr.mxu0 0.0
        %4575 = vmatpush1.msra.mxu0 0.0
        %4576 = vmatprep.subr.mxu0 0.0
        %4577 = vmatpush1.msra.mxu0 0.0
        %4578 = vmatprep.subr.mxu0 0.0
        %4579 = vmatpush1.msra.mxu0 0.0
        %4580 = vmatprep.subr.mxu0 0.0
        %4581 = vmatpush1.msra.mxu0 0.0
        %4582 = vmatprep.subr.mxu0 0.0
        %4583 = vmatpush1.msra.mxu0 0.0
        %4584 = vmatprep.subr.mxu0 0.0
        %4585 = vmatpush1.msra.mxu0 0.0
        %4586 = vmatprep.subr.mxu0 0.0
        %4587 = vmatpush1.msra.mxu0 0.0
        %4588 = vmatprep.subr.mxu0 0.0
        %4589 = vmatpush1.msra.mxu0 0.0
        %4590 = vmatprep.mubr.f32.mxu0 0.0
        %4591 = vmatmul.mubr.f32.gmra.mrb[0].mxu0 %v989
        %v4592 = vpop.f32.mrb[0].mxu0
        %v4593 = vadd.f32 0.0, %v4592
        %v4594 = vpop.f32.mrb[0].mxu0
        %v4595 = vadd.f32 0.0, %v4594
        %4596 = vdwg.mxu0
        %v4597 = vadd.f32 %v4325, %v4593
        %v4598 = vadd.f32 %v4327, %v4595
        %v4599 = vtanh.pop %v4597
        %v4600 = vtanh.pop %v4598
        %v4601 = vsub.f32 1.0, %v4417
        %v4602 = vsub.f32 1.0, %v4419
        %v4603 = vmul.f32 %v4601, %v4025
        %v4604 = vmul.f32 %v4602, %v4026
        %v4607 = vrot.slane %v4599, 4
        %v4608 = vrot.slane %v4600, 4
        %v4611 = vmul.f32 %v4417, %v4607
        %v4612 = vmul.f32 %v4419, %v4608
        %v4613 = vadd.f32 %v4603, %v4611
        %v4614 = vadd.f32 %v4604, %v4612
        %v4617 = vcombine.high %v4613, %v4614
        %s4619 = scalar_lea.vmem %s380, 48 [#allocation11]
        %4620 = vst [vmem:[%s4619] sm:$0xff] %v4617
        %s4621 = scalar_lea.vmem %s328, 56 [#allocation3]
        %v4622 = vld [vmem:[%s4621] sm:$0xff]
        %v4624 = vcombine.high %v4622, %v4622
        %4626 = vrot.lane.b32.xlu0 %v4622, 17
        %v4627 = vpop.permute.xlu0 %4626
        %4628 = vrot.lane.b32.xlu0 %v4624, 17
        %v4629 = vpop.permute.xlu0 %4628
        %v4630 = vsel %vm410, %v4627, %v4629
        %v4631 = vsel %vm410, %v4629, %v4627
        %v4632 = vmul.f32 %v4631, %v416
        %v4633 = vmul.f32 %v4630, %v420
        %4634 = vrot.lane.b32.xlu0 %v4622, 16
        %v4635 = vpop.permute.xlu0 %4634
        %4636 = vrot.lane.b32.xlu0 %v4624, 16
        %v4637 = vpop.permute.xlu0 %4636
        %v4638 = vsel %vm427, %v4635, %v4637
        %v4639 = vsel %vm427, %v4637, %v4635
        %v4640 = vmul.f32 %v4639, %v433
        %v4641 = vmul.f32 %v4638, %v437
        %4642 = vrot.lane.b32.xlu0 %v4622, 15
        %v4643 = vpop.permute.xlu0 %4642
        %4644 = vrot.lane.b32.xlu0 %v4624, 15
        %v4645 = vpop.permute.xlu0 %4644
        %v4646 = vsel %vm444, %v4643, %v4645
        %v4647 = vsel %vm444, %v4645, %v4643
        %v4648 = vmul.f32 %v4647, %v450
        %v4649 = vmul.f32 %v4646, %v454
        %4650 = vrot.lane.b32.xlu0 %v4622, 1
        %v4651 = vpop.permute.xlu0 %4650
        %4652 = vrot.lane.b32.xlu0 %v4624, 1
        %v4653 = vpop.permute.xlu0 %4652
        %v4654 = vsel %vm461, %v4651, %v4653
        %v4655 = vsel %vm461, %v4653, %v4651
        %v4656 = vmul.f32 %v4655, %v467
        %v4657 = vmul.f32 %v4654, %v471
        %v4658 = vmul.f32 %v4622, %v484
        %4659 = vrot.lane.b32.xlu0 %v4622, 127
        %v4660 = vpop.permute.xlu0 %4659
        %4661 = vrot.lane.b32.xlu0 %v4624, 127
        %v4662 = vpop.permute.xlu0 %4661
        %v4663 = vsel %vm491, %v4660, %v4662
        %v4664 = vsel %vm491, %v4662, %v4660
        %v4665 = vmul.f32 %v4663, %v497
        %v4666 = vmul.f32 %v4664, %v501
        %4667 = vrot.lane.b32.xlu0 %v4622, 113
        %v4668 = vpop.permute.xlu0 %4667
        %4669 = vrot.lane.b32.xlu0 %v4624, 113
        %v4670 = vpop.permute.xlu0 %4669
        %v4671 = vsel %vm508, %v4668, %v4670
        %v4672 = vsel %vm508, %v4670, %v4668
        %v4673 = vmul.f32 %v4671, %v514
        %v4674 = vmul.f32 %v4672, %v518
        %4675 = vrot.lane.b32.xlu0 %v4622, 112
        %v4676 = vpop.permute.xlu0 %4675
        %4677 = vrot.lane.b32.xlu0 %v4624, 112
        %v4678 = vpop.permute.xlu0 %4677
        %v4679 = vsel %vm525, %v4676, %v4678
        %v4680 = vsel %vm525, %v4678, %v4676
        %v4681 = vmul.f32 %v4679, %v531
        %v4682 = vmul.f32 %v4680, %v535
        %4683 = vrot.lane.b32.xlu0 %v4622, 111
        %v4684 = vpop.permute.xlu0 %4683
        %4685 = vrot.lane.b32.xlu0 %v4624, 111
        %v4686 = vpop.permute.xlu0 %4685
        %v4687 = vsel %vm542, %v4684, %v4686
        %v4688 = vsel %vm542, %v4686, %v4684
        %v4689 = vmul.f32 %v4687, %v548
        %v4690 = vmul.f32 %v4688, %v552
        %v4693 = vrot.slane %v4640, 4
        %v4694 = vrot.slane %v4641, 4
        %v4699 = vrot.slane %v4656, 4
        %v4700 = vrot.slane %v4657, 4
        %v4704 = vcombine.high %v4658, %v4658
        %v4708 = vrot.slane %v4665, 4
        %v4709 = vrot.slane %v4666, 4
        %v4714 = vrot.slane %v4681, 4
        %v4715 = vrot.slane %v4682, 4
        %v4718 = vsel %vm582, %v4632, %v4693
        %v4719 = vsel %vm582, %v4633, %v4694
        %v4720 = vsel %vm582, %v4648, %v4699
        %v4721 = vsel %vm582, %v4649, %v4700
        %v4722 = vsel %vm582, %v4658, %v4708
        %v4723 = vsel %vm582, %v4704, %v4709
        %v4724 = vsel %vm582, %v4673, %v4714
        %v4725 = vsel %vm582, %v4674, %v4715
        %v4726 = vrot.slane %v4613, 4
        %v4727 = vrot.slane %v4614, 4
        %4730 = vrot.lane.b32.xlu0 %v4726, 17
        %v4731 = vpop.permute.xlu0 %4730
        %4732 = vrot.lane.b32.xlu0 %v4727, 17
        %v4733 = vpop.permute.xlu0 %4732
        %v4734 = vsel %vm410, %v4731, %v4733
        %v4735 = vsel %vm410, %v4733, %v4731
        %v4736 = vmul.f32 %v4735, %v416
        %v4737 = vmul.f32 %v4734, %v420
        %4738 = vrot.lane.b32.xlu0 %v4726, 16
        %v4739 = vpop.permute.xlu0 %4738
        %4740 = vrot.lane.b32.xlu0 %v4727, 16
        %v4741 = vpop.permute.xlu0 %4740
        %v4742 = vsel %vm427, %v4739, %v4741
        %v4743 = vsel %vm427, %v4741, %v4739
        %v4744 = vmul.f32 %v4743, %v433
        %v4745 = vmul.f32 %v4742, %v437
        %4746 = vrot.lane.b32.xlu0 %v4726, 15
        %v4747 = vpop.permute.xlu0 %4746
        %4748 = vrot.lane.b32.xlu0 %v4727, 15
        %v4749 = vpop.permute.xlu0 %4748
        %v4750 = vsel %vm444, %v4747, %v4749
        %v4751 = vsel %vm444, %v4749, %v4747
        %v4752 = vmul.f32 %v4751, %v450
        %v4753 = vmul.f32 %v4750, %v454
        %4754 = vrot.lane.b32.xlu0 %v4726, 1
        %v4755 = vpop.permute.xlu0 %4754
        %4756 = vrot.lane.b32.xlu0 %v4727, 1
        %v4757 = vpop.permute.xlu0 %4756
        %v4758 = vsel %vm461, %v4755, %v4757
        %v4759 = vsel %vm461, %v4757, %v4755
        %v4760 = vmul.f32 %v4759, %v467
        %v4761 = vmul.f32 %v4758, %v471
        %v4762 = vmul.f32 %v4613, %v477
        %v4763 = vmul.f32 %v4614, %v481
        %4764 = vrot.lane.b32.xlu0 %v4726, 127
        %v4765 = vpop.permute.xlu0 %4764
        %4766 = vrot.lane.b32.xlu0 %v4727, 127
        %v4767 = vpop.permute.xlu0 %4766
        %v4768 = vsel %vm491, %v4765, %v4767
        %v4769 = vsel %vm491, %v4767, %v4765
        %v4770 = vmul.f32 %v4768, %v497
        %v4771 = vmul.f32 %v4769, %v501
        %4772 = vrot.lane.b32.xlu0 %v4726, 113
        %v4773 = vpop.permute.xlu0 %4772
        %4774 = vrot.lane.b32.xlu0 %v4727, 113
        %v4775 = vpop.permute.xlu0 %4774
        %v4776 = vsel %vm508, %v4773, %v4775
        %v4777 = vsel %vm508, %v4775, %v4773
        %v4778 = vmul.f32 %v4776, %v514
        %v4779 = vmul.f32 %v4777, %v518
        %4780 = vrot.lane.b32.xlu0 %v4726, 112
        %v4781 = vpop.permute.xlu0 %4780
        %4782 = vrot.lane.b32.xlu0 %v4727, 112
        %v4783 = vpop.permute.xlu0 %4782
        %v4784 = vsel %vm525, %v4781, %v4783
        %v4785 = vsel %vm525, %v4783, %v4781
        %v4786 = vmul.f32 %v4784, %v531
        %v4787 = vmul.f32 %v4785, %v535
        %4788 = vrot.lane.b32.xlu0 %v4726, 111
        %v4789 = vpop.permute.xlu0 %4788
        %4790 = vrot.lane.b32.xlu0 %v4727, 111
        %v4791 = vpop.permute.xlu0 %4790
        %v4792 = vsel %vm542, %v4789, %v4791
        %v4793 = vsel %vm542, %v4791, %v4789
        %v4794 = vmul.f32 %v4792, %v548
        %v4795 = vmul.f32 %v4793, %v552
        %v4798 = vrot.slane %v4744, 4
        %v4799 = vrot.slane %v4745, 4
        %v4804 = vrot.slane %v4760, 4
        %v4805 = vrot.slane %v4761, 4
        %v4810 = vrot.slane %v4762, 4
        %v4811 = vrot.slane %v4763, 4
        %v4816 = vrot.slane %v4770, 4
        %v4817 = vrot.slane %v4771, 4
        %v4822 = vrot.slane %v4786, 4
        %v4823 = vrot.slane %v4787, 4
        %v4826 = vsel %vm582, %v4736, %v4798
        %v4827 = vsel %vm582, %v4737, %v4799
        %v4828 = vsel %vm582, %v4752, %v4804
        %v4829 = vsel %vm582, %v4753, %v4805
        %v4830 = vsel %vm582, %v4810, %v4816
        %v4831 = vsel %vm582, %v4811, %v4817
        %v4832 = vsel %vm582, %v4778, %v4822
        %v4833 = vsel %vm582, %v4779, %v4823
        %v4835 = vsel %vm582, %v4689, 0
        %v4838 = vsel %vm582, %v4690, 0
        %4840 = vmatprep.subr.mxu0 %v4719
        %4841 = vmatpush1.msra.mxu0 %v4718
        %4842 = vmatprep.subr.mxu0 %v4721
        %4843 = vmatpush1.msra.mxu0 %v4720
        %4844 = vmatprep.subr.mxu0 %v4723
        %4845 = vmatpush1.msra.mxu0 %v4722
        %4846 = vmatprep.subr.mxu0 %v4725
        %4847 = vmatpush1.msra.mxu0 %v4724
        %4848 = vmatprep.subr.mxu0 %v4838
        %4849 = vmatpush1.msra.mxu0 %v4835
        %4850 = vmatprep.subr.mxu0 0.0
        %4851 = vmatpush1.msra.mxu0 0.0
        %4852 = vmatprep.subr.mxu0 0.0
        %4853 = vmatpush1.msra.mxu0 0.0
        %4854 = vmatprep.subr.mxu0 0.0
        %4855 = vmatpush1.msra.mxu0 0.0
        %4856 = vmatprep.subr.mxu0 0.0
        %4857 = vmatpush1.msra.mxu0 0.0
        %4858 = vmatprep.subr.mxu0 0.0
        %4859 = vmatpush1.msra.mxu0 0.0
        %4860 = vmatprep.subr.mxu0 0.0
        %4861 = vmatpush1.msra.mxu0 0.0
        %4862 = vmatprep.subr.mxu0 0.0
        %4863 = vmatpush1.msra.mxu0 0.0
        %4864 = vmatprep.subr.mxu0 0.0
        %4865 = vmatpush1.msra.mxu0 0.0
        %4866 = vmatprep.subr.mxu0 0.0
        %4867 = vmatpush1.msra.mxu0 0.0
        %4868 = vmatprep.subr.mxu0 0.0
        %4869 = vmatpush1.msra.mxu0 0.0
        %4870 = vmatprep.subr.mxu0 0.0
        %4871 = vmatpush1.msra.mxu0 0.0
        %4872 = vmatprep.subr.mxu0 0.0
        %4873 = vmatpush1.msra.mxu0 0.0
        %4874 = vmatprep.subr.mxu0 0.0
        %4875 = vmatpush1.msra.mxu0 0.0
        %4876 = vmatprep.subr.mxu0 0.0
        %4877 = vmatpush1.msra.mxu0 0.0
        %4878 = vmatprep.subr.mxu0 0.0
        %4879 = vmatpush1.msra.mxu0 0.0
        %4880 = vmatprep.subr.mxu0 0.0
        %4881 = vmatpush1.msra.mxu0 0.0
        %4882 = vmatprep.subr.mxu0 0.0
        %4883 = vmatpush1.msra.mxu0 0.0
        %4884 = vmatprep.subr.mxu0 0.0
        %4885 = vmatpush1.msra.mxu0 0.0
        %4886 = vmatprep.subr.mxu0 0.0
        %4887 = vmatpush1.msra.mxu0 0.0
        %4888 = vmatprep.subr.mxu0 0.0
        %4889 = vmatpush1.msra.mxu0 0.0
        %4890 = vmatprep.subr.mxu0 0.0
        %4891 = vmatpush1.msra.mxu0 0.0
        %4892 = vmatprep.subr.mxu0 0.0
        %4893 = vmatpush1.msra.mxu0 0.0
        %4894 = vmatprep.subr.mxu0 0.0
        %4895 = vmatpush1.msra.mxu0 0.0
        %4896 = vmatprep.subr.mxu0 0.0
        %4897 = vmatpush1.msra.mxu0 0.0
        %4898 = vmatprep.subr.mxu0 0.0
        %4899 = vmatpush1.msra.mxu0 0.0
        %4900 = vmatprep.subr.mxu0 0.0
        %4901 = vmatpush1.msra.mxu0 0.0
        %4902 = vmatprep.subr.mxu0 0.0
        %4903 = vmatpush1.msra.mxu0 0.0
        %4904 = vmatprep.mubr.f32.mxu0 0.0
        %4905 = vmatmul.mubr.f32.gmra.mrb[0].mxu0 %v706
        %v4906 = vpop.f32.mrb[0].mxu0
        %v4907 = vadd.f32 %v697, %v4906
        %v4908 = vpop.f32.mrb[0].mxu0
        %v4909 = vadd.f32 %v697, %v4908
        %4910 = vmatprep.mubr.f32.mxu0 0.0
        %4911 = vmatmul.mubr.f32.gmra.mrb[0].mxu0 %v709
        %v4912 = vpop.f32.mrb[0].mxu0
        %v4913 = vadd.f32 %v702, %v4912
        %v4914 = vpop.f32.mrb[0].mxu0
        %v4915 = vadd.f32 %v702, %v4914
        %4916 = vdwg.mxu0
        %v4918 = vsel %vm582, %v4794, 0
        %v4921 = vsel %vm582, %v4795, 0
        %4923 = vmatprep.subr.mxu0 %v4827
        %4924 = vmatpush1.msra.mxu0 %v4826
        %4925 = vmatprep.subr.mxu0 %v4829
        %4926 = vmatpush1.msra.mxu0 %v4828
        %4927 = vmatprep.subr.mxu0 %v4831
        %4928 = vmatpush1.msra.mxu0 %v4830
        %4929 = vmatprep.subr.mxu0 %v4833
        %4930 = vmatpush1.msra.mxu0 %v4832
        %4931 = vmatprep.subr.mxu0 %v4921
        %4932 = vmatpush1.msra.mxu0 %v4918
        %4933 = vmatprep.subr.mxu0 0.0
        %4934 = vmatpush1.msra.mxu0 0.0
        %4935 = vmatprep.subr.mxu0 0.0
        %4936 = vmatpush1.msra.mxu0 0.0
        %4937 = vmatprep.subr.mxu0 0.0
        %4938 = vmatpush1.msra.mxu0 0.0
        %4939 = vmatprep.subr.mxu0 0.0
        %4940 = vmatpush1.msra.mxu0 0.0
        %4941 = vmatprep.subr.mxu0 0.0
        %4942 = vmatpush1.msra.mxu0 0.0
        %4943 = vmatprep.subr.mxu0 0.0
        %4944 = vmatpush1.msra.mxu0 0.0
        %4945 = vmatprep.subr.mxu0 0.0
        %4946 = vmatpush1.msra.mxu0 0.0
        %4947 = vmatprep.subr.mxu0 0.0
        %4948 = vmatpush1.msra.mxu0 0.0
        %4949 = vmatprep.subr.mxu0 0.0
        %4950 = vmatpush1.msra.mxu0 0.0
        %4951 = vmatprep.subr.mxu0 0.0
        %4952 = vmatpush1.msra.mxu0 0.0
        %4953 = vmatprep.subr.mxu0 0.0
        %4954 = vmatpush1.msra.mxu0 0.0
        %4955 = vmatprep.subr.mxu0 0.0
        %4956 = vmatpush1.msra.mxu0 0.0
        %4957 = vmatprep.subr.mxu0 0.0
        %4958 = vmatpush1.msra.mxu0 0.0
        %4959 = vmatprep.subr.mxu0 0.0
        %4960 = vmatpush1.msra.mxu0 0.0
        %4961 = vmatprep.subr.mxu0 0.0
        %4962 = vmatpush1.msra.mxu0 0.0
        %4963 = vmatprep.subr.mxu0 0.0
        %4964 = vmatpush1.msra.mxu0 0.0
        %4965 = vmatprep.subr.mxu0 0.0
        %4966 = vmatpush1.msra.mxu0 0.0
        %4967 = vmatprep.subr.mxu0 0.0
        %4968 = vmatpush1.msra.mxu0 0.0
        %4969 = vmatprep.subr.mxu0 0.0
        %4970 = vmatpush1.msra.mxu0 0.0
        %4971 = vmatprep.subr.mxu0 0.0
        %4972 = vmatpush1.msra.mxu0 0.0
        %4973 = vmatprep.subr.mxu0 0.0
        %4974 = vmatpush1.msra.mxu0 0.0
        %4975 = vmatprep.subr.mxu0 0.0
        %4976 = vmatpush1.msra.mxu0 0.0
        %4977 = vmatprep.subr.mxu0 0.0
        %4978 = vmatpush1.msra.mxu0 0.0
        %4979 = vmatprep.subr.mxu0 0.0
        %4980 = vmatpush1.msra.mxu0 0.0
        %4981 = vmatprep.subr.mxu0 0.0
        %4982 = vmatpush1.msra.mxu0 0.0
        %4983 = vmatprep.subr.mxu0 0.0
        %4984 = vmatpush1.msra.mxu0 0.0
        %4985 = vmatprep.subr.mxu0 0.0
        %4986 = vmatpush1.msra.mxu0 0.0
        %4987 = vmatprep.mubr.f32.mxu0 0.0
        %4988 = vmatmul.mubr.f32.gmra.mrb[0].mxu0 %v795
        %v4989 = vpop.f32.mrb[0].mxu0
        %v4990 = vadd.f32 0.0, %v4989
        %v4991 = vpop.f32.mrb[0].mxu0
        %v4992 = vadd.f32 0.0, %v4991
        %4993 = vdwg.mxu0
        %v4994 = vadd.f32 %v4907, %v4990
        %v4995 = vadd.f32 %v4909, %v4992
        %v4996 = vsub.f32 0.0, %v4994
        %v4997 = vsub.f32 0.0, %v4995
        %v4998 = vmul.f32 %v4996, 1.442695
        %v4999 = vpow.pop %v4998
        %v5000 = vmul.f32 %v4997, 1.442695
        %v5001 = vpow.pop %v5000
        %v5002 = vadd.f32 %v4999, 1.0
        %v5003 = vadd.f32 %v5001, 1.0
        %v5004 = vrcp.pop %v5002
        %v5005 = vmul.f32 1.0, %v5004
        %v5006 = vrcp.pop %v5003
        %v5007 = vmul.f32 1.0, %v5006
        %v5008 = vmul.f32 %v5005, %v4726
        %v5009 = vmul.f32 %v5007, %v4727
        %5010 = vrot.lane.b32.xlu0 %v5008, 17
        %v5011 = vpop.permute.xlu0 %5010
        %5012 = vrot.lane.b32.xlu0 %v5009, 17
        %v5013 = vpop.permute.xlu0 %5012
        %v5014 = vsel %vm410, %v5011, %v5013
        %v5015 = vsel %vm410, %v5013, %v5011
        %v5016 = vmul.f32 %v5015, %v416
        %v5017 = vmul.f32 %v5014, %v420
        %5018 = vrot.lane.b32.xlu0 %v5008, 16
        %v5019 = vpop.permute.xlu0 %5018
        %5020 = vrot.lane.b32.xlu0 %v5009, 16
        %v5021 = vpop.permute.xlu0 %5020
        %v5022 = vsel %vm427, %v5019, %v5021
        %v5023 = vsel %vm427, %v5021, %v5019
        %v5024 = vmul.f32 %v5023, %v433
        %v5025 = vmul.f32 %v5022, %v437
        %5026 = vrot.lane.b32.xlu0 %v5008, 15
        %v5027 = vpop.permute.xlu0 %5026
        %5028 = vrot.lane.b32.xlu0 %v5009, 15
        %v5029 = vpop.permute.xlu0 %5028
        %v5030 = vsel %vm444, %v5027, %v5029
        %v5031 = vsel %vm444, %v5029, %v5027
        %v5032 = vmul.f32 %v5031, %v450
        %v5033 = vmul.f32 %v5030, %v454
        %5034 = vrot.lane.b32.xlu0 %v5008, 1
        %v5035 = vpop.permute.xlu0 %5034
        %5036 = vrot.lane.b32.xlu0 %v5009, 1
        %v5037 = vpop.permute.xlu0 %5036
        %v5038 = vsel %vm461, %v5035, %v5037
        %v5039 = vsel %vm461, %v5037, %v5035
        %v5040 = vmul.f32 %v5039, %v467
        %v5041 = vmul.f32 %v5038, %v471
        %v5042 = vmul.f32 %v5008, %v477
        %v5043 = vmul.f32 %v5009, %v481
        %5044 = vrot.lane.b32.xlu0 %v5008, 127
        %v5045 = vpop.permute.xlu0 %5044
        %5046 = vrot.lane.b32.xlu0 %v5009, 127
        %v5047 = vpop.permute.xlu0 %5046
        %v5048 = vsel %vm491, %v5045, %v5047
        %v5049 = vsel %vm491, %v5047, %v5045
        %v5050 = vmul.f32 %v5048, %v497
        %v5051 = vmul.f32 %v5049, %v501
        %5052 = vrot.lane.b32.xlu0 %v5008, 113
        %v5053 = vpop.permute.xlu0 %5052
        %5054 = vrot.lane.b32.xlu0 %v5009, 113
        %v5055 = vpop.permute.xlu0 %5054
        %v5056 = vsel %vm508, %v5053, %v5055
        %v5057 = vsel %vm508, %v5055, %v5053
        %v5058 = vmul.f32 %v5056, %v514
        %v5059 = vmul.f32 %v5057, %v518
        %5060 = vrot.lane.b32.xlu0 %v5008, 112
        %v5061 = vpop.permute.xlu0 %5060
        %5062 = vrot.lane.b32.xlu0 %v5009, 112
        %v5063 = vpop.permute.xlu0 %5062
        %v5064 = vsel %vm525, %v5061, %v5063
        %v5065 = vsel %vm525, %v5063, %v5061
        %v5066 = vmul.f32 %v5064, %v531
        %v5067 = vmul.f32 %v5065, %v535
        %5068 = vrot.lane.b32.xlu0 %v5008, 111
        %v5069 = vpop.permute.xlu0 %5068
        %5070 = vrot.lane.b32.xlu0 %v5009, 111
        %v5071 = vpop.permute.xlu0 %5070
        %v5072 = vsel %vm542, %v5069, %v5071
        %v5073 = vsel %vm542, %v5071, %v5069
        %v5074 = vmul.f32 %v5072, %v548
        %v5075 = vmul.f32 %v5073, %v552
        %v5078 = vrot.slane %v5024, 4
        %v5079 = vrot.slane %v5025, 4
        %v5084 = vrot.slane %v5040, 4
        %v5085 = vrot.slane %v5041, 4
        %v5090 = vrot.slane %v5050, 4
        %v5091 = vrot.slane %v5051, 4
        %v5096 = vrot.slane %v5066, 4
        %v5097 = vrot.slane %v5067, 4
        %v5100 = vsel %vm582, %v5016, %v5078
        %v5101 = vsel %vm582, %v5017, %v5079
        %v5102 = vsel %vm582, %v5032, %v5084
        %v5103 = vsel %vm582, %v5033, %v5085
        %v5104 = vsel %vm582, %v5042, %v5090
        %v5105 = vsel %vm582, %v5043, %v5091
        %v5106 = vsel %vm582, %v5058, %v5096
        %v5107 = vsel %vm582, %v5059, %v5097
        %v5109 = vsel %vm582, %v5074, 0
        %v5112 = vsel %vm582, %v5075, 0
        %5114 = vmatprep.subr.mxu0 %v5101
        %5115 = vmatpush1.msra.mxu0 %v5100
        %5116 = vmatprep.subr.mxu0 %v5103
        %5117 = vmatpush1.msra.mxu0 %v5102
        %5118 = vmatprep.subr.mxu0 %v5105
        %5119 = vmatpush1.msra.mxu0 %v5104
        %5120 = vmatprep.subr.mxu0 %v5107
        %5121 = vmatpush1.msra.mxu0 %v5106
        %5122 = vmatprep.subr.mxu0 %v5112
        %5123 = vmatpush1.msra.mxu0 %v5109
        %5124 = vmatprep.subr.mxu0 0.0
        %5125 = vmatpush1.msra.mxu0 0.0
        %5126 = vmatprep.subr.mxu0 0.0
        %5127 = vmatpush1.msra.mxu0 0.0
        %5128 = vmatprep.subr.mxu0 0.0
        %5129 = vmatpush1.msra.mxu0 0.0
        %5130 = vmatprep.subr.mxu0 0.0
        %5131 = vmatpush1.msra.mxu0 0.0
        %5132 = vmatprep.subr.mxu0 0.0
        %5133 = vmatpush1.msra.mxu0 0.0
        %5134 = vmatprep.subr.mxu0 0.0
        %5135 = vmatpush1.msra.mxu0 0.0
        %5136 = vmatprep.subr.mxu0 0.0
        %5137 = vmatpush1.msra.mxu0 0.0
        %5138 = vmatprep.subr.mxu0 0.0
        %5139 = vmatpush1.msra.mxu0 0.0
        %5140 = vmatprep.subr.mxu0 0.0
        %5141 = vmatpush1.msra.mxu0 0.0
        %5142 = vmatprep.subr.mxu0 0.0
        %5143 = vmatpush1.msra.mxu0 0.0
        %5144 = vmatprep.subr.mxu0 0.0
        %5145 = vmatpush1.msra.mxu0 0.0
        %5146 = vmatprep.subr.mxu0 0.0
        %5147 = vmatpush1.msra.mxu0 0.0
        %5148 = vmatprep.subr.mxu0 0.0
        %5149 = vmatpush1.msra.mxu0 0.0
        %5150 = vmatprep.subr.mxu0 0.0
        %5151 = vmatpush1.msra.mxu0 0.0
        %5152 = vmatprep.subr.mxu0 0.0
        %5153 = vmatpush1.msra.mxu0 0.0
        %5154 = vmatprep.subr.mxu0 0.0
        %5155 = vmatpush1.msra.mxu0 0.0
        %5156 = vmatprep.subr.mxu0 0.0
        %5157 = vmatpush1.msra.mxu0 0.0
        %5158 = vmatprep.subr.mxu0 0.0
        %5159 = vmatpush1.msra.mxu0 0.0
        %5160 = vmatprep.subr.mxu0 0.0
        %5161 = vmatpush1.msra.mxu0 0.0
        %5162 = vmatprep.subr.mxu0 0.0
        %5163 = vmatpush1.msra.mxu0 0.0
        %5164 = vmatprep.subr.mxu0 0.0
        %5165 = vmatpush1.msra.mxu0 0.0
        %5166 = vmatprep.subr.mxu0 0.0
        %5167 = vmatpush1.msra.mxu0 0.0
        %5168 = vmatprep.subr.mxu0 0.0
        %5169 = vmatpush1.msra.mxu0 0.0
        %5170 = vmatprep.subr.mxu0 0.0
        %5171 = vmatpush1.msra.mxu0 0.0
        %5172 = vmatprep.subr.mxu0 0.0
        %5173 = vmatpush1.msra.mxu0 0.0
        %5174 = vmatprep.subr.mxu0 0.0
        %5175 = vmatpush1.msra.mxu0 0.0
        %5176 = vmatprep.subr.mxu0 0.0
        %5177 = vmatpush1.msra.mxu0 0.0
        %5178 = vmatprep.mubr.f32.mxu0 0.0
        %5179 = vmatmul.mubr.f32.gmra.mrb[0].mxu0 %v989
        %v5180 = vpop.f32.mrb[0].mxu0
        %v5181 = vadd.f32 0.0, %v5180
        %v5182 = vpop.f32.mrb[0].mxu0
        %v5183 = vadd.f32 0.0, %v5182
        %5184 = vdwg.mxu0
        %v5185 = vadd.f32 %v4913, %v5181
        %v5186 = vadd.f32 %v4915, %v5183
        %v5187 = vtanh.pop %v5185
        %v5188 = vtanh.pop %v5186
        %v5189 = vsub.f32 1.0, %v5005
        %v5190 = vsub.f32 1.0, %v5007
        %v5191 = vmul.f32 %v5189, %v4613
        %v5192 = vmul.f32 %v5190, %v4614
        %v5195 = vrot.slane %v5187, 4
        %v5196 = vrot.slane %v5188, 4
        %v5199 = vmul.f32 %v5005, %v5195
        %v5200 = vmul.f32 %v5007, %v5196
        %v5201 = vadd.f32 %v5191, %v5199
        %v5202 = vadd.f32 %v5192, %v5200
        %v5205 = vcombine.high %v5201, %v5202
        %s5207 = scalar_lea.vmem %s380, 56 [#allocation11]
        %5208 = vst [vmem:[%s5207] sm:$0xff] %v5205
        %5209 = vst [vmem:[#allocation2] sm:$0xff] %v5205
        %s5210 = sand.u32 %s209, 1
        %s5211 = scalar_lea.sflag [#allocation5], %s5210
        %s5212 = sand.u32 %s209, 1
        %s5213 = smul.addr %s5212, 64
        %s5214 = scalar_lea.vmem [#allocation11], %s5213
        // Predicated region
        $region69: #{tpu_custom_call.1} parent=47 // pred_check
          %p5215 = pneg %p219
        $region70: #{tpu_custom_call.1} parent=47 // pred_check_branch
          %5217 = sbr.rel (%p5215) target = $region72
        $region71: #{tpu_custom_call.1} parent=47 // pred_region
          %s5218 = smul.u32 8, %s33
          %s5220 = ssub.s32 1024, 1024
          %5221 = vsyncadd %s5211, %s5220
          %s5222 = smul.addr %s5218, 2
          %s5223 = smul.addr %s32, 16
          %s5224 = sadd.s32 %s5222, %s5223
          %s5225 = smul.addr %s5224, 64
          %s5226 = scalar_lea.hbm %s7, %s5225
          %s5227 = sshll.u32 %s5214, 4
          %s5228 = int_to_ptr.vmem [resolvable:$true] %s5227
          %5233 = dma.vmem_to_hbm [thread:$0]  %s5228, 1024, %s5226, %s5211, 128, 128, 8
        $region72: #{tpu_custom_call.1} parent=47 // pred_fallthru
          _
      $region48: #{tpu_custom_call.1} parent=5 // pred_fallthru
        _
      %p5234 = scmp.le.s32.totalorder 2, %s23
      // Predicated region
      $region73: #{tpu_custom_call.1} parent=5 // pred_check
        %p5235 = pneg %p5234
      $region74: #{tpu_custom_call.1} parent=5 // pred_check_branch
        %5237 = sbr.rel (%p5235) target = $region76
      $region75: #{tpu_custom_call.1} parent=5 // pred_region
        %s5238 = ssub.s32 %s23, 2
        // Predicated region
        $region77: #{tpu_custom_call.1} parent=75 // pred_check
          %p5239 = pneg %p225
        $region78: #{tpu_custom_call.1} parent=75 // pred_check_branch
          %5241 = sbr.rel (%p5239) target = $region80
        $region79: #{tpu_custom_call.1} parent=75 // pred_region
          %s5242 = sand.u32 %s210, 1
          %s5243 = scalar_lea.sflag [#allocation5], %s5242
          %s5244 = sand.u32 %s210, 1
          %s5245 = smul.addr %s5244, 64
          %s5246 = scalar_lea.vmem [#allocation11], %s5245
          %5247 = dma.done %s5243, 1024
        $region80: #{tpu_custom_call.1} parent=75 // pred_fallthru
          _
      $region76: #{tpu_custom_call.1} parent=5 // pred_fallthru
        _
    $region6: #{tpu_custom_call.1} parent=1 // loop_footer
      %s27 = sadd.s32 1, %s23
    $region7: #{tpu_custom_call.1} parent=1 // loop_footer_branch
      %22 = sbr.rel target = $region3
    $region8: #{tpu_custom_call.1} parent=1 // loop_exit
      _
    %5248 = vsyncpa [#allocation4], 1
    %s5249 = scalar_lea.sflag [#allocation4], 1
    %5250 = vsyncpa %s5249, 1
    %5251 = vsyncpa [#allocation7], 1
    %s5252 = scalar_lea.sflag [#allocation7], 1
    %5253 = vsyncpa %s5252, 1
    %5254 = vsyncpa [#allocation10], 1
    %5255 = vsyncpa [#allocation5], 1
    %s5256 = scalar_lea.sflag [#allocation5], 1
    %5257 = vsyncpa %s5256, 1

</llo_original>
